<compile_context>
chip_gen: v7x
topology: tpu7x:2x2x1
jax: 0.10.0
libtpu: 0.0.40
codegen_flags: <defaults>
</compile_context>

<pallas_src>
import math
from functools import partial

import jax
import jax.numpy as jnp
from jax.experimental import pallas as pl
from jax.experimental.pallas import tpu as pltpu

LN_EPS = 1e-12  # BERT default layer_norm_eps

# ----------------------------------------------------------------------------
# Hardware-aware knobs (cached, feature-detected)
# ----------------------------------------------------------------------------
_UNSET = object()
_WEIGHT_PIPELINE_MODE = _UNSET
_VMEM_CAP = _UNSET


def _vmem_cap():
    """Generation-aware VMEM budget: ~3/4 of physical VMEM, capped at 100 MiB
    (=> ~48 MiB on v7x's 64 MiB, ~96 MiB on v5e/v6e's 128 MiB)."""
    global _VMEM_CAP
    if _VMEM_CAP is _UNSET:
        try:
            phys = int(pltpu.get_tpu_info().vmem_capacity_bytes)
        except Exception:
            phys = 64 << 20  # conservative (v7x-sized) fallback
        _VMEM_CAP = max(32 << 20, min(phys * 3 // 4, 100 << 20))
    return _VMEM_CAP


def _weights_pipeline_mode():
    """pl.Buffered(1) for constant-index weight blocks (halves weight-resident
    VMEM) if the installed JAX/Mosaic lowers it; otherwise None (default
    double-buffering).  Detection is a tiny AOT compile, done once."""
    global _WEIGHT_PIPELINE_MODE
    if _WEIGHT_PIPELINE_MODE is _UNSET:
        try:
            mode = pl.Buffered(1)
            w_spec = pl.BlockSpec((8, 128), lambda i: (0, 0),
                                  pipeline_mode=mode)

            def _probe(w_ref, x_ref, o_ref):
                o_ref[...] = x_ref[...] + w_ref[...]

            fn = pl.pallas_call(
                _probe,
                out_shape=jax.ShapeDtypeStruct((8, 128), jnp.float32),
                grid=(2,),
                in_specs=[w_spec, pl.BlockSpec((8, 128), lambda i: (0, 0))],
                out_specs=pl.BlockSpec((8, 128), lambda i: (0, 0)))
            sds = jax.ShapeDtypeStruct((8, 128), jnp.float32)
            jax.jit(fn).lower(sds, sds).compile()
            _WEIGHT_PIPELINE_MODE = mode
        except Exception:
            _WEIGHT_PIPELINE_MODE = None
    return _WEIGHT_PIPELINE_MODE


def _estimate_vmem(Sb, L, D, Dff, weight_bytes, weight_buffers):
    """Per-grid-step VMEM footprint incl. f32 intermediates."""
    rows = Sb * L
    act = 0
    act += 2 * rows * D * 2          # x block, double buffered, bf16
    act += 2 * rows * D * 2          # out block, double buffered, bf16
    act += 2 * Sb * L * 4            # mask block
    act += 4 * Sb * D * 2            # station in + cls out blocks
    act += rows * D * 2              # attention lane-offset scratch (bf16)
    tmp = 0
    tmp += rows * 3 * D * (4 + 2)    # qkv f32 + bf16 copy
    tmp += Sb * L * L * (4 + 2)      # one head of scores f32 + P bf16
    tmp += 3 * rows * D * 4          # x32 / attn / h1 (f32)
    tmp += rows * Dff * (4 + 2)      # FFN intermediate f32 + bf16
    return weight_buffers * weight_bytes + act + tmp + (2 << 20)


def _pick_block_s(S, L, D, Dff, weight_bytes, weight_buffers, cap,
                  target_rows=512):
    """Largest divisor of S with block_s*L <= target_rows that fits VMEM."""
    best = 1
    for bs in range(1, S + 1):
        if S % bs:
            continue
        if bs > 1 and bs * L > target_rows:
            break
        if _estimate_vmem(bs, L, D, Dff, weight_bytes, weight_buffers) <= cap:
            best = bs
    return best


# ----------------------------------------------------------------------------
# Kernel
# ----------------------------------------------------------------------------
def _layer_norm(x, gamma, beta):
    mu = jnp.mean(x, axis=-1, keepdims=True)
    var = jnp.mean(jnp.square(x - mu), axis=-1, keepdims=True)
    return (x - mu) * jax.lax.rsqrt(var + LN_EPS) * gamma + beta


def _bert_layer_kernel(num_heads, has_station, emit_cls,
                       x_ref, m_ref, *rest):
    attn_sc = rest[-1]                      # (Sb, L, D) bf16 VMEM scratch
    rest = rest[:-1]
    i = 0
    stat_ref = None
    if has_station:
        stat_ref = rest[0]
        i = 1
    (wqkv_ref, bqkv_ref, wo_ref, bo_ref, g1_ref, b1_ref,
     wi_ref, bi_ref, wo2_ref, bo2_ref, g2_ref, b2_ref) = rest[i:i + 12]
    out_ref = rest[i + 12]
    cls_ref = rest[i + 13] if emit_cls else None

    Sb, L, D = x_ref.shape
    dh = D // num_heads

    x = x_ref[...]                                        # (Sb, L, D) bf16
    if has_station:
        # Deferred station writeback from the previous info layer: replace
        # row 0 of every block before computing this layer.
        row0 = jax.lax.broadcasted_iota(jnp.int32, (Sb, L, 1), 1) == 0
        x = jnp.where(row0, stat_ref[...], x)

    xf = x.reshape(Sb * L, D)                             # bf16
    x32 = xf.astype(jnp.float32)

    # ---- fused QKV projection (Q pre-scaled by 1/sqrt(dh) at pack time) -----
    qkv = jnp.dot(xf, wqkv_ref[...], preferred_element_type=jnp.float32)
    qkv = (qkv + bqkv_ref[...]).astype(jnp.bfloat16)      # (Sb*L, 3D)
    qkv3 = qkv.reshape(Sb, L, 3 * D)

    mask = m_ref[...]                                     # (Sb, 1, L) f32

    # ---- multi-head self attention ------------------------------------------
    # Per head: matmuls are batched over the Sb sequences; the head context is
    # written at its lane offset into attn_sc, so W_O is ONE full-K matmul.
    for h in range(num_heads):
        qh = qkv3[:, :, h * dh:(h + 1) * dh]                      # (Sb, L, dh)
        kh = qkv3[:, :, D + h * dh:D + (h + 1) * dh]
        vh = qkv3[:, :, 2 * D + h * dh:2 * D + (h + 1) * dh]
        s = jnp.einsum('bqd,bkd->bqk', qh, kh,
                       preferred_element_type=jnp.float32)        # (Sb, L, L)
        s = s + mask
        s = s - jnp.max(s, axis=-1, keepdims=True)
        p = jnp.exp(s)
        p = p * pl.reciprocal(jnp.sum(p, axis=-1, keepdims=True), approx=True)
        ctx = jnp.einsum('bqk,bkd->bqd', p.astype(jnp.bfloat16), vh,
                         preferred_element_type=jnp.float32)      # (Sb, L, dh)
        attn_sc[:, :, h * dh:(h + 1) * dh] = ctx.astype(jnp.bfloat16)

    attn_flat = attn_sc[...].reshape(Sb * L, D)                   # bf16
    attn = jnp.dot(attn_flat, wo_ref[...],
                   preferred_element_type=jnp.float32) + bo_ref[...]
    h1 = _layer_norm(attn + x32, g1_ref[...], b1_ref[...])        # f32

    # ---- feed forward --------------------------------------------------------
    # TODO(synk): HF BERT default "gelu" is the exact erf form; tanh
    # approximation is used to avoid relying on an erf lowering in-kernel.
    inter = jnp.dot(h1.astype(jnp.bfloat16), wi_ref[...],
                    preferred_element_type=jnp.float32) + bi_ref[...]
    inter = jax.nn.gelu(inter, approximate=True)
    ffn = jnp.dot(inter.astype(jnp.bfloat16), wo2_ref[...],
                  preferred_element_type=jnp.float32) + bo2_ref[...]
    out = _layer_norm(ffn + h1, g2_ref[...], b2_ref[...])

    out3 = out.reshape(Sb, L, D).astype(out_ref.dtype)
    out_ref[...] = out3
    if emit_cls:
        cls_ref[...] = out3[:, 1:2, :]


# ----------------------------------------------------------------------------
# Wrapper
# ----------------------------------------------------------------------------
def run_bert_layer(x, mask, packed, num_heads, *, station=None,
                   emit_cls=False, block_s=None):
    """One BertLayer forward.

    x: (S, L, D); mask: (S, L) additive f32; station: optional (S, D) tokens
    that replace row 0 of each sequence inside the kernel.  When emit_cls is
    True a second output (S, 1, D) with token 1 of every sequence is returned.
    """
    S, L, D = x.shape
    Dff = packed[6].shape[1]
    weight_bytes = sum(int(p.size) * p.dtype.itemsize for p in packed)

    cap = _vmem_cap()
    wmode = _weights_pipeline_mode()
    wbuf = 1 if wmode is not None else 2

    if block_s is None:
        block_s = _pick_block_s(S, L, D, Dff, weight_bytes, wbuf, cap)
    assert S % block_s == 0

    xb = x.astype(jnp.bfloat16)
    mask3 = mask.astype(jnp.float32).reshape(S, 1, L)

    in_specs = [pl.BlockSpec((block_s, L, D), lambda s: (s, 0, 0)),
                pl.BlockSpec((block_s, 1, L), lambda s: (s, 0, 0))]
    args = [xb, mask3]
    if station is not None:
        args.append(station.astype(jnp.bfloat16).reshape(S, 1, D))
        in_specs.append(pl.BlockSpec((block_s, 1, D), lambda s: (s, 0, 0)))

    def const_spec(a):
        nd = a.ndim
        idx = lambda s, nd=nd: (0,) * nd
        if wmode is not None:
            return pl.BlockSpec(a.shape, idx, pipeline_mode=wmode)
        return pl.BlockSpec(a.shape, idx)

    in_specs += [const_spec(p) for p in packed]
    args += list(packed)

    out_shapes = [jax.ShapeDtypeStruct((S, L, D), jnp.bfloat16)]
    out_specs = [pl.BlockSpec((block_s, L, D), lambda s: (s, 0, 0))]
    if emit_cls:
        out_shapes.append(jax.ShapeDtypeStruct((S, 1, D), jnp.bfloat16))
        out_specs.append(pl.BlockSpec((block_s, 1, D), lambda s: (s, 0, 0)))

    needed = _estimate_vmem(block_s, L, D, Dff, weight_bytes, wbuf)
    vmem_limit = int(min(max(needed, 32 << 20), cap))

    flops = int(2 * S * L * D * (4 * D + 2 * Dff) + 4 * S * L * L * D)
    transc = int(S * L * (num_heads * L + Dff))
    bytes_accessed = int(2 * S * L * D * 2 + S * L * 4 + weight_bytes)

    return pl.pallas_call(
        partial(_bert_layer_kernel, num_heads, station is not None, emit_cls),
        out_shape=tuple(out_shapes) if emit_cls else out_shapes[0],
        grid=(S // block_s,),
        in_specs=in_specs,
        out_specs=tuple(out_specs) if emit_cls else out_specs[0],
        scratch_shapes=[pltpu.VMEM((block_s, L, D), jnp.bfloat16)],
        compiler_params=pltpu.CompilerParams(
            dimension_semantics=("parallel",),
            vmem_limit_bytes=vmem_limit),
        cost_estimate=pl.CostEstimate(flops=flops, transcendentals=transc,
                                      bytes_accessed=bytes_accessed),
    )(*args)


# ----------------------------------------------------------------------------
# Parameters
# ----------------------------------------------------------------------------
def init_bert_layer_params(key, D, Dff):
    ks = jax.random.split(key, 6)

    def lin(k, fi, fo):
        return jax.random.normal(k, (fi, fo), jnp.float32) * 0.02

    wq, wk, wv = lin(ks[0], D, D), lin(ks[1], D, D), lin(ks[2], D, D)
    wo, wi, wo2 = lin(ks[3], D, D), lin(ks[4], D, Dff), lin(ks[5], Dff, D)
    zD = jnp.zeros((1, D), jnp.float32)
    zF = jnp.zeros((1, Dff), jnp.float32)
    oD = jnp.ones((1, D), jnp.float32)
    # order: wq bq wk bk wv bv wo bo g1 b1 wi bi wo2 bo2 g2 b2
    return (wq, zD, wk, zD, wv, zD, wo, zD, oD, zD, wi, zF, wo2, zD, oD, zD)


def pack_bert_layer_params(p, num_heads):
    """Fuse QKV (with 1/sqrt(dh) folded into Q) and cast matmul weights to
    bf16; biases / LN params stay f32."""
    (wq, bq, wk, bk, wv, bv, wo, bo, g1, b1, wi, bi, wo2, bo2, g2, b2) = p
    D = wq.shape[0]
    scale = 1.0 / math.sqrt(D // num_heads)
    bf16, f32 = jnp.bfloat16, jnp.float32
    wqkv = jnp.concatenate([wq * scale, wk, wv], axis=1).astype(bf16)  # (D,3D)
    bqkv = jnp.concatenate([bq * scale, bk, bv], axis=1).astype(f32)   # (1,3D)
    return (wqkv, bqkv, wo.astype(bf16), bo.astype(f32),
            g1.astype(f32), b1.astype(f32),
            wi.astype(bf16), bi.astype(f32),
            wo2.astype(bf16), bo2.astype(f32),
            g2.astype(f32), b2.astype(f32))


# ----------------------------------------------------------------------------
# Encoder
# ----------------------------------------------------------------------------
def block_level_contextaware_encoder(hidden_states, attention_mask,
                                     reduce_hidden_states, node_mask,
                                     text_layers, info_layers, num_heads,
                                     ablation=None):
    if ablation is None:
        ablation = {'inter_block_encoder': True, 'doc_token': True}
    BN, L, D = hidden_states.shape
    B = node_mask.shape[0]
    N = node_mask.shape[-1] - 1
    assert D % num_heads == 0

    attn_mask = attention_mask[:, 0, 0, :].astype(jnp.float32)   # (B*N, L)
    nmask = node_mask[:, 0, 0, :].astype(jnp.float32)            # (B, N+1)

    text_packed = [pack_bert_layer_params(p, num_heads) for p in text_layers]
    info_packed = [pack_bert_layer_params(p, num_heads) for p in info_layers]

    hidden_states = hidden_states.astype(jnp.bfloat16)
    reduce = reduce_hidden_states                                 # (1, D)
    pending_station = None                                        # (B*N, D)
    use_info = ablation['inter_block_encoder']

    for i in range(len(text_packed)):
        if i > 0 or not use_info:
            mask_i = attn_mask
        else:
            mask_i = attn_mask.at[:, 0].set(-10000.0)
            reduce = jnp.broadcast_to(
                reduce_hidden_states.astype(jnp.bfloat16)[None, :, :],
                (B, 1, D))

        layer_out = run_bert_layer(hidden_states, mask_i, text_packed[i],
                                   num_heads, station=pending_station,
                                   emit_cls=use_info)
        pending_station = None
        if use_info:
            hidden_states, cls = layer_out                          # cls: (B*N,1,D)
            reduce_cls = jnp.concatenate(
                [reduce.astype(jnp.bfloat16), cls.reshape(B, N, D)], axis=1)
            station = run_bert_layer(reduce_cls, nmask, info_packed[i],
                                     num_heads)
            reduce = station[:, :1, :]
            pending_station = station[:, 1:, :].reshape(B * N, D)
        else:
            hidden_states = layer_out

    if pending_station is not None:
        # Single HBM writeback after the last layer (earlier writebacks were
        # folded into the following text-layer kernel as an extra input).
        hidden_states = hidden_states.at[:, 0, :].set(pending_station)
    return reduce, hidden_states


# ----------------------------------------------------------------------------
if __name__ == "__main__":
    B, N, L, D, H, Dff, num_layers = 2, 3, 8, 64, 4, 128, 2
    # NOTE: toy shapes (D=64 < 128 lanes) are for correctness only; benchmark
    # at production D>=128 lane-dense shapes before drawing perf conclusions.

    # Warm the cached hardware probes eagerly, outside jit.
    _vmem_cap()
    _weights_pipeline_mode()

    key = jax.random.PRNGKey(0)
    k_h, k_r, k_p = jax.random.split(key, 3)

    hidden_states = jax.random.normal(k_h, (B * N, L, D), jnp.float32)
    reduce_hidden_states = jax.random.normal(k_r, (1, D), jnp.float32)

    # additive masks: 0 = attend, -10000 = padding.  Mask out the last token
    # of every second block, keep all nodes visible.
    attention_mask = jnp.zeros((B * N, 1, 1, L), jnp.float32)
    attention_mask = attention_mask.at[::2, :, :, L - 1].set(-10000.0)
    node_mask = jnp.zeros((B, 1, 1, N + 1), jnp.float32)

    layer_keys = jax.random.split(k_p, 2 * num_layers)
    text_layers = [init_bert_layer_params(layer_keys[i], D, Dff)
                   for i in range(num_layers)]
    info_layers = [init_bert_layer_params(layer_keys[num_layers + i], D, Dff)
                   for i in range(num_layers)]

    encoder = jax.jit(
        lambda hs, am, rhs, nm, tl, il: block_level_contextaware_encoder(
            hs, am, rhs, nm, tl, il, num_heads=H))

    reduce_out, hidden_out = encoder(hidden_states, attention_mask,
                                     reduce_hidden_states, node_mask,
                                     text_layers, info_layers)
    jax.block_until_ready((reduce_out, hidden_out))

    assert reduce_out.shape == (B, 1, D)
    assert hidden_out.shape == (B * N, L, D)
    assert bool(jnp.isfinite(reduce_out.astype(jnp.float32)).all())
    assert bool(jnp.isfinite(hidden_out.astype(jnp.float32)).all())
    print("KERNEL_OK")
</pallas_src>

<mosaic_0001>
module attributes {stable_mosaic.version = 11 : i64} {
  func.func @_bert_layer_kernel(%arg0: i32, %arg1: memref<6x8x64xbf16, #tpu.memory_space<vmem>>, %arg2: memref<6x1x8xf32, #tpu.memory_space<vmem>>, %arg3: memref<64x192xbf16, #tpu.memory_space<vmem>>, %arg4: memref<1x192xf32, #tpu.memory_space<vmem>>, %arg5: memref<64x64xbf16, #tpu.memory_space<vmem>>, %arg6: memref<1x64xf32, #tpu.memory_space<vmem>>, %arg7: memref<1x64xf32, #tpu.memory_space<vmem>>, %arg8: memref<1x64xf32, #tpu.memory_space<vmem>>, %arg9: memref<64x128xbf16, #tpu.memory_space<vmem>>, %arg10: memref<1x128xf32, #tpu.memory_space<vmem>>, %arg11: memref<128x64xbf16, #tpu.memory_space<vmem>>, %arg12: memref<1x64xf32, #tpu.memory_space<vmem>>, %arg13: memref<1x64xf32, #tpu.memory_space<vmem>>, %arg14: memref<1x64xf32, #tpu.memory_space<vmem>>, %arg15: memref<6x8x64xbf16, #tpu.memory_space<vmem>>, %arg16: memref<6x1x64xbf16, #tpu.memory_space<vmem>>, %arg17: memref<6x8x64xbf16, #tpu.memory_space<vmem>>) attributes {dimension_semantics = [#tpu.dimension_semantics<parallel>], iteration_bounds = array<i64: 1>, scalar_prefetch = 0 : i64, scratch_operands = 1 : i64, tpu.core_type = #tpu.core_type<tc>, window_params = [{transform_indices = @transform_0, window_bounds = array<i64: 6, 8, 64>}, {transform_indices = @transform_1, window_bounds = array<i64: 6, 1, 8>}, {pipeline_mode = #tpu.pipeline_mode<synchronous>, transform_indices = @transform_2, window_bounds = array<i64: 64, 192>}, {pipeline_mode = #tpu.pipeline_mode<synchronous>, transform_indices = @transform_3, window_bounds = array<i64: 1, 192>}, {pipeline_mode = #tpu.pipeline_mode<synchronous>, transform_indices = @transform_4, window_bounds = array<i64: 64, 64>}, {pipeline_mode = #tpu.pipeline_mode<synchronous>, transform_indices = @transform_5, window_bounds = array<i64: 1, 64>}, {pipeline_mode = #tpu.pipeline_mode<synchronous>, transform_indices = @transform_6, window_bounds = array<i64: 1, 64>}, {pipeline_mode = #tpu.pipeline_mode<synchronous>, transform_indices = @transform_7, window_bounds = array<i64: 1, 64>}, {pipeline_mode = #tpu.pipeline_mode<synchronous>, transform_indices = @transform_8, window_bounds = array<i64: 64, 128>}, {pipeline_mode = #tpu.pipeline_mode<synchronous>, transform_indices = @transform_9, window_bounds = array<i64: 1, 128>}, {pipeline_mode = #tpu.pipeline_mode<synchronous>, transform_indices = @transform_10, window_bounds = array<i64: 128, 64>}, {pipeline_mode = #tpu.pipeline_mode<synchronous>, transform_indices = @transform_11, window_bounds = array<i64: 1, 64>}, {pipeline_mode = #tpu.pipeline_mode<synchronous>, transform_indices = @transform_12, window_bounds = array<i64: 1, 64>}, {pipeline_mode = #tpu.pipeline_mode<synchronous>, transform_indices = @transform_13, window_bounds = array<i64: 1, 64>}, {transform_indices = @transform_14, window_bounds = array<i64: 6, 8, 64>}, {transform_indices = @transform_15, window_bounds = array<i64: 6, 1, 64>}]} {
    %c0 = arith.constant 0 : index
    %c0_0 = arith.constant 0 : index
    %c0_1 = arith.constant 0 : index
    %0 = vector.load %arg1[%c0, %c0_0, %c0_1] : memref<6x8x64xbf16, #tpu.memory_space<vmem>>, vector<6x8x64xbf16>
    %1 = vector.shape_cast %0 : vector<6x8x64xbf16> to vector<48x64xbf16>
    %2 = arith.extf %1 : vector<48x64xbf16> to vector<48x64xf32>
    %c0_2 = arith.constant 0 : index
    %c0_3 = arith.constant 0 : index
    %3 = vector.load %arg3[%c0_2, %c0_3] : memref<64x192xbf16, #tpu.memory_space<vmem>>, vector<64x192xbf16>
    %cst = arith.constant dense<0.000000e+00> : vector<48x192xf32>
    %4 = tpu.matmul %1, %3, %cst {dimension_numbers = #tpu.dot_dimension_numbers<[1], [0], [0], [1], [0, 0, 1, 1], [], []>} : vector<48x64xbf16>, vector<64x192xbf16>, vector<48x192xf32> -> vector<48x192xf32>
    %c0_4 = arith.constant 0 : index
    %c0_5 = arith.constant 0 : index
    %5 = vector.load %arg4[%c0_4, %c0_5] : memref<1x192xf32, #tpu.memory_space<vmem>>, vector<1x192xf32>
    %6 = vector.broadcast %5 : vector<1x192xf32> to vector<48x192xf32>
    %7 = arith.addf %4, %6 : vector<48x192xf32>
    %8 = arith.truncf %7 : vector<48x192xf32> to vector<48x192xbf16>
    %9 = vector.shape_cast %8 : vector<48x192xbf16> to vector<6x8x192xbf16>
    %c0_6 = arith.constant 0 : index
    %c0_7 = arith.constant 0 : index
    %c0_8 = arith.constant 0 : index
    %10 = vector.load %arg2[%c0_6, %c0_7, %c0_8] : memref<6x1x8xf32, #tpu.memory_space<vmem>>, vector<6x1x8xf32>
    %11 = vector.extract_strided_slice %9 {offsets = [0, 0, 0], sizes = [6, 8, 16], strides = [1, 1, 1]} : vector<6x8x192xbf16> to vector<6x8x16xbf16>
    %12 = vector.extract_strided_slice %9 {offsets = [0, 0, 64], sizes = [6, 8, 16], strides = [1, 1, 1]} : vector<6x8x192xbf16> to vector<6x8x16xbf16>
    %13 = vector.extract_strided_slice %9 {offsets = [0, 0, 128], sizes = [6, 8, 16], strides = [1, 1, 1]} : vector<6x8x192xbf16> to vector<6x8x16xbf16>
    "tpu.trace_start"() <{level = 10 : i32, message = "bqd,bkd->bqk"}> : () -> ()
    %cst_9 = arith.constant dense<0.000000e+00> : vector<6x8x8xf32>
    %14 = tpu.matmul %11, %12, %cst_9 {dimension_numbers = #tpu.dot_dimension_numbers<[2], [2], [1], [1], [0, 0, 0, 1, 1, 1], [0], [0]>} : vector<6x8x16xbf16>, vector<6x8x16xbf16>, vector<6x8x8xf32> -> vector<6x8x8xf32>
    "tpu.trace_stop"() : () -> ()
    %15 = vector.broadcast %10 : vector<6x1x8xf32> to vector<6x8x8xf32>
    %16 = arith.addf %14, %15 : vector<6x8x8xf32>
    %cst_10 = arith.constant dense<0xFF800000> : vector<6x8xf32>
    %17 = vector.multi_reduction <maximumf>, %16, %cst_10 [2] : vector<6x8x8xf32> to vector<6x8xf32>
    %18 = vector.shape_cast %17 : vector<6x8xf32> to vector<6x8x1xf32>
    %19 = vector.broadcast %18 : vector<6x8x1xf32> to vector<6x8x8xf32>
    %20 = arith.subf %16, %19 : vector<6x8x8xf32>
    %21 = math.exp %20 : vector<6x8x8xf32>
    %cst_11 = arith.constant dense<0.000000e+00> : vector<6x8xf32>
    %22 = vector.multi_reduction <add>, %21, %cst_11 [2] : vector<6x8x8xf32> to vector<6x8xf32>
    %23 = vector.shape_cast %22 : vector<6x8xf32> to vector<6x8x1xf32>
    %24 = tpu.reciprocal %23 {approx = true} : vector<6x8x1xf32> -> vector<6x8x1xf32>
    %25 = vector.broadcast %24 : vector<6x8x1xf32> to vector<6x8x8xf32>
    %26 = arith.mulf %21, %25 : vector<6x8x8xf32>
    %27 = arith.truncf %26 : vector<6x8x8xf32> to vector<6x8x8xbf16>
    "tpu.trace_start"() <{level = 10 : i32, message = "bqk,bkd->bqd"}> : () -> ()
    %cst_12 = arith.constant dense<0.000000e+00> : vector<6x8x16xf32>
    %28 = tpu.matmul %27, %13, %cst_12 {dimension_numbers = #tpu.dot_dimension_numbers<[2], [1], [1], [2], [0, 0, 0, 1, 1, 2], [0], [0]>} : vector<6x8x8xbf16>, vector<6x8x16xbf16>, vector<6x8x16xf32> -> vector<6x8x16xf32>
    "tpu.trace_stop"() : () -> ()
    %29 = arith.truncf %28 : vector<6x8x16xf32> to vector<6x8x16xbf16>
    %c0_13 = arith.constant 0 : index
    %c0_14 = arith.constant 0 : index
    %c0_15 = arith.constant 0 : index
    %30 = vector.load %arg17[%c0_13, %c0_14, %c0_15] : memref<6x8x64xbf16, #tpu.memory_space<vmem>>, vector<6x8x16xbf16>
    tpu.vector_store %arg17[%c0_13, %c0_14, %c0_15], %29 {strides = array<i32>} : memref<6x8x64xbf16, #tpu.memory_space<vmem>>, vector<6x8x16xbf16>,
    %31 = vector.extract_strided_slice %9 {offsets = [0, 0, 16], sizes = [6, 8, 16], strides = [1, 1, 1]} : vector<6x8x192xbf16> to vector<6x8x16xbf16>
    %32 = vector.extract_strided_slice %9 {offsets = [0, 0, 80], sizes = [6, 8, 16], strides = [1, 1, 1]} : vector<6x8x192xbf16> to vector<6x8x16xbf16>
    %33 = vector.extract_strided_slice %9 {offsets = [0, 0, 144], sizes = [6, 8, 16], strides = [1, 1, 1]} : vector<6x8x192xbf16> to vector<6x8x16xbf16>
    "tpu.trace_start"() <{level = 10 : i32, message = "bqd,bkd->bqk"}> : () -> ()
    %cst_16 = arith.constant dense<0.000000e+00> : vector<6x8x8xf32>
    %34 = tpu.matmul %31, %32, %cst_16 {dimension_numbers = #tpu.dot_dimension_numbers<[2], [2], [1], [1], [0, 0, 0, 1, 1, 1], [0], [0]>} : vector<6x8x16xbf16>, vector<6x8x16xbf16>, vector<6x8x8xf32> -> vector<6x8x8xf32>
    "tpu.trace_stop"() : () -> ()
    %35 = vector.broadcast %10 : vector<6x1x8xf32> to vector<6x8x8xf32>
    %36 = arith.addf %34, %35 : vector<6x8x8xf32>
    %cst_17 = arith.constant dense<0xFF800000> : vector<6x8xf32>
    %37 = vector.multi_reduction <maximumf>, %36, %cst_17 [2] : vector<6x8x8xf32> to vector<6x8xf32>
    %38 = vector.shape_cast %37 : vector<6x8xf32> to vector<6x8x1xf32>
    %39 = vector.broadcast %38 : vector<6x8x1xf32> to vector<6x8x8xf32>
    %40 = arith.subf %36, %39 : vector<6x8x8xf32>
    %41 = math.exp %40 : vector<6x8x8xf32>
    %cst_18 = arith.constant dense<0.000000e+00> : vector<6x8xf32>
    %42 = vector.multi_reduction <add>, %41, %cst_18 [2] : vector<6x8x8xf32> to vector<6x8xf32>
    %43 = vector.shape_cast %42 : vector<6x8xf32> to vector<6x8x1xf32>
    %44 = tpu.reciprocal %43 {approx = true} : vector<6x8x1xf32> -> vector<6x8x1xf32>
    %45 = vector.broadcast %44 : vector<6x8x1xf32> to vector<6x8x8xf32>
    %46 = arith.mulf %41, %45 : vector<6x8x8xf32>
    %47 = arith.truncf %46 : vector<6x8x8xf32> to vector<6x8x8xbf16>
    "tpu.trace_start"() <{level = 10 : i32, message = "bqk,bkd->bqd"}> : () -> ()
    %cst_19 = arith.constant dense<0.000000e+00> : vector<6x8x16xf32>
    %48 = tpu.matmul %47, %33, %cst_19 {dimension_numbers = #tpu.dot_dimension_numbers<[2], [1], [1], [2], [0, 0, 0, 1, 1, 2], [0], [0]>} : vector<6x8x8xbf16>, vector<6x8x16xbf16>, vector<6x8x16xf32> -> vector<6x8x16xf32>
    "tpu.trace_stop"() : () -> ()
    %49 = arith.truncf %48 : vector<6x8x16xf32> to vector<6x8x16xbf16>
    %c0_20 = arith.constant 0 : index
    %c0_21 = arith.constant 0 : index
    %c16 = arith.constant 16 : index
    %50 = vector.load %arg17[%c0_20, %c0_21, %c16] : memref<6x8x64xbf16, #tpu.memory_space<vmem>>, vector<6x8x16xbf16>
    tpu.vector_store %arg17[%c0_20, %c0_21, %c16], %49 {strides = array<i32>} : memref<6x8x64xbf16, #tpu.memory_space<vmem>>, vector<6x8x16xbf16>,
    %51 = vector.extract_strided_slice %9 {offsets = [0, 0, 32], sizes = [6, 8, 16], strides = [1, 1, 1]} : vector<6x8x192xbf16> to vector<6x8x16xbf16>
    %52 = vector.extract_strided_slice %9 {offsets = [0, 0, 96], sizes = [6, 8, 16], strides = [1, 1, 1]} : vector<6x8x192xbf16> to vector<6x8x16xbf16>
    %53 = vector.extract_strided_slice %9 {offsets = [0, 0, 160], sizes = [6, 8, 16], strides = [1, 1, 1]} : vector<6x8x192xbf16> to vector<6x8x16xbf16>
    "tpu.trace_start"() <{level = 10 : i32, message = "bqd,bkd->bqk"}> : () -> ()
    %cst_22 = arith.constant dense<0.000000e+00> : vector<6x8x8xf32>
    %54 = tpu.matmul %51, %52, %cst_22 {dimension_numbers = #tpu.dot_dimension_numbers<[2], [2], [1], [1], [0, 0, 0, 1, 1, 1], [0], [0]>} : vector<6x8x16xbf16>, vector<6x8x16xbf16>, vector<6x8x8xf32> -> vector<6x8x8xf32>
    "tpu.trace_stop"() : () -> ()
    %55 = vector.broadcast %10 : vector<6x1x8xf32> to vector<6x8x8xf32>
    %56 = arith.addf %54, %55 : vector<6x8x8xf32>
    %cst_23 = arith.constant dense<0xFF800000> : vector<6x8xf32>
    %57 = vector.multi_reduction <maximumf>, %56, %cst_23 [2] : vector<6x8x8xf32> to vector<6x8xf32>
    %58 = vector.shape_cast %57 : vector<6x8xf32> to vector<6x8x1xf32>
    %59 = vector.broadcast %58 : vector<6x8x1xf32> to vector<6x8x8xf32>
    %60 = arith.subf %56, %59 : vector<6x8x8xf32>
    %61 = math.exp %60 : vector<6x8x8xf32>
    %cst_24 = arith.constant dense<0.000000e+00> : vector<6x8xf32>
    %62 = vector.multi_reduction <add>, %61, %cst_24 [2] : vector<6x8x8xf32> to vector<6x8xf32>
    %63 = vector.shape_cast %62 : vector<6x8xf32> to vector<6x8x1xf32>
    %64 = tpu.reciprocal %63 {approx = true} : vector<6x8x1xf32> -> vector<6x8x1xf32>
    %65 = vector.broadcast %64 : vector<6x8x1xf32> to vector<6x8x8xf32>
    %66 = arith.mulf %61, %65 : vector<6x8x8xf32>
    %67 = arith.truncf %66 : vector<6x8x8xf32> to vector<6x8x8xbf16>
    "tpu.trace_start"() <{level = 10 : i32, message = "bqk,bkd->bqd"}> : () -> ()
    %cst_25 = arith.constant dense<0.000000e+00> : vector<6x8x16xf32>
    %68 = tpu.matmul %67, %53, %cst_25 {dimension_numbers = #tpu.dot_dimension_numbers<[2], [1], [1], [2], [0, 0, 0, 1, 1, 2], [0], [0]>} : vector<6x8x8xbf16>, vector<6x8x16xbf16>, vector<6x8x16xf32> -> vector<6x8x16xf32>
    "tpu.trace_stop"() : () -> ()
    %69 = arith.truncf %68 : vector<6x8x16xf32> to vector<6x8x16xbf16>
    %c0_26 = arith.constant 0 : index
    %c0_27 = arith.constant 0 : index
    %c32 = arith.constant 32 : index
    %70 = vector.load %arg17[%c0_26, %c0_27, %c32] : memref<6x8x64xbf16, #tpu.memory_space<vmem>>, vector<6x8x16xbf16>
    tpu.vector_store %arg17[%c0_26, %c0_27, %c32], %69 {strides = array<i32>} : memref<6x8x64xbf16, #tpu.memory_space<vmem>>, vector<6x8x16xbf16>,
    %71 = vector.extract_strided_slice %9 {offsets = [0, 0, 48], sizes = [6, 8, 16], strides = [1, 1, 1]} : vector<6x8x192xbf16> to vector<6x8x16xbf16>
    %72 = vector.extract_strided_slice %9 {offsets = [0, 0, 112], sizes = [6, 8, 16], strides = [1, 1, 1]} : vector<6x8x192xbf16> to vector<6x8x16xbf16>
    %73 = vector.extract_strided_slice %9 {offsets = [0, 0, 176], sizes = [6, 8, 16], strides = [1, 1, 1]} : vector<6x8x192xbf16> to vector<6x8x16xbf16>
    "tpu.trace_start"() <{level = 10 : i32, message = "bqd,bkd->bqk"}> : () -> ()
    %cst_28 = arith.constant dense<0.000000e+00> : vector<6x8x8xf32>
    %74 = tpu.matmul %71, %72, %cst_28 {dimension_numbers = #tpu.dot_dimension_numbers<[2], [2], [1], [1], [0, 0, 0, 1, 1, 1], [0], [0]>} : vector<6x8x16xbf16>, vector<6x8x16xbf16>, vector<6x8x8xf32> -> vector<6x8x8xf32>
    "tpu.trace_stop"() : () -> ()
    %75 = vector.broadcast %10 : vector<6x1x8xf32> to vector<6x8x8xf32>
    %76 = arith.addf %74, %75 : vector<6x8x8xf32>
    %cst_29 = arith.constant dense<0xFF800000> : vector<6x8xf32>
    %77 = vector.multi_reduction <maximumf>, %76, %cst_29 [2] : vector<6x8x8xf32> to vector<6x8xf32>
    %78 = vector.shape_cast %77 : vector<6x8xf32> to vector<6x8x1xf32>
    %79 = vector.broadcast %78 : vector<6x8x1xf32> to vector<6x8x8xf32>
    %80 = arith.subf %76, %79 : vector<6x8x8xf32>
    %81 = math.exp %80 : vector<6x8x8xf32>
    %cst_30 = arith.constant dense<0.000000e+00> : vector<6x8xf32>
    %82 = vector.multi_reduction <add>, %81, %cst_30 [2] : vector<6x8x8xf32> to vector<6x8xf32>
    %83 = vector.shape_cast %82 : vector<6x8xf32> to vector<6x8x1xf32>
    %84 = tpu.reciprocal %83 {approx = true} : vector<6x8x1xf32> -> vector<6x8x1xf32>
    %85 = vector.broadcast %84 : vector<6x8x1xf32> to vector<6x8x8xf32>
    %86 = arith.mulf %81, %85 : vector<6x8x8xf32>
    %87 = arith.truncf %86 : vector<6x8x8xf32> to vector<6x8x8xbf16>
    "tpu.trace_start"() <{level = 10 : i32, message = "bqk,bkd->bqd"}> : () -> ()
    %cst_31 = arith.constant dense<0.000000e+00> : vector<6x8x16xf32>
    %88 = tpu.matmul %87, %73, %cst_31 {dimension_numbers = #tpu.dot_dimension_numbers<[2], [1], [1], [2], [0, 0, 0, 1, 1, 2], [0], [0]>} : vector<6x8x8xbf16>, vector<6x8x16xbf16>, vector<6x8x16xf32> -> vector<6x8x16xf32>
    "tpu.trace_stop"() : () -> ()
    %89 = arith.truncf %88 : vector<6x8x16xf32> to vector<6x8x16xbf16>
    %c0_32 = arith.constant 0 : index
    %c0_33 = arith.constant 0 : index
    %c48 = arith.constant 48 : index
    %90 = vector.load %arg17[%c0_32, %c0_33, %c48] : memref<6x8x64xbf16, #tpu.memory_space<vmem>>, vector<6x8x16xbf16>
    tpu.vector_store %arg17[%c0_32, %c0_33, %c48], %89 {strides = array<i32>} : memref<6x8x64xbf16, #tpu.memory_space<vmem>>, vector<6x8x16xbf16>,
    %c0_34 = arith.constant 0 : index
    %c0_35 = arith.constant 0 : index
    %c0_36 = arith.constant 0 : index
    %91 = vector.load %arg17[%c0_34, %c0_35, %c0_36] : memref<6x8x64xbf16, #tpu.memory_space<vmem>>, vector<6x8x64xbf16>
    %92 = vector.shape_cast %91 : vector<6x8x64xbf16> to vector<48x64xbf16>
    %c0_37 = arith.constant 0 : index
    %c0_38 = arith.constant 0 : index
    %93 = vector.load %arg5[%c0_37, %c0_38] : memref<64x64xbf16, #tpu.memory_space<vmem>>, vector<64x64xbf16>
    %cst_39 = arith.constant dense<0.000000e+00> : vector<48x64xf32>
    %94 = tpu.matmul %92, %93, %cst_39 {dimension_numbers = #tpu.dot_dimension_numbers<[1], [0], [0], [1], [0, 0, 1, 1], [], []>} : vector<48x64xbf16>, vector<64x64xbf16>, vector<48x64xf32> -> vector<48x64xf32>
    %c0_40 = arith.constant 0 : index
    %c0_41 = arith.constant 0 : index
    %95 = vector.load %arg6[%c0_40, %c0_41] : memref<1x64xf32, #tpu.memory_space<vmem>>, vector<1x64xf32>
    %96 = vector.broadcast %95 : vector<1x64xf32> to vector<48x64xf32>
    %97 = arith.addf %94, %96 : vector<48x64xf32>
    %98 = arith.addf %97, %2 : vector<48x64xf32>
    %c0_42 = arith.constant 0 : index
    %c0_43 = arith.constant 0 : index
    %99 = vector.load %arg7[%c0_42, %c0_43] : memref<1x64xf32, #tpu.memory_space<vmem>>, vector<1x64xf32>
    %c0_44 = arith.constant 0 : index
    %c0_45 = arith.constant 0 : index
    %100 = vector.load %arg8[%c0_44, %c0_45] : memref<1x64xf32, #tpu.memory_space<vmem>>, vector<1x64xf32>
    %cst_46 = arith.constant dense<0.000000e+00> : vector<48xf32>
    %101 = vector.multi_reduction <add>, %98, %cst_46 [1] : vector<48x64xf32> to vector<48xf32>
    %102 = vector.shape_cast %101 : vector<48xf32> to vector<48x1xf32>
    %cst_47 = arith.constant 6.400000e+01 : f32
    %103 = vector.broadcast %cst_47 : f32 to vector<48x1xf32>
    %104 = arith.divf %102, %103 : vector<48x1xf32>
    %105 = vector.broadcast %104 : vector<48x1xf32> to vector<48x64xf32>
    %106 = arith.subf %98, %105 : vector<48x64xf32>
    %107 = arith.mulf %106, %106 : vector<48x64xf32>
    %cst_48 = arith.constant dense<0.000000e+00> : vector<48xf32>
    %108 = vector.multi_reduction <add>, %107, %cst_48 [1] : vector<48x64xf32> to vector<48xf32>
    %109 = vector.shape_cast %108 : vector<48xf32> to vector<48x1xf32>
    %cst_49 = arith.constant 6.400000e+01 : f32
    %110 = vector.broadcast %cst_49 : f32 to vector<48x1xf32>
    %111 = arith.divf %109, %110 : vector<48x1xf32>
    %112 = vector.broadcast %104 : vector<48x1xf32> to vector<48x64xf32>
    %113 = arith.subf %98, %112 : vector<48x64xf32>
    %cst_50 = arith.constant 9.99999996E-13 : f32
    %114 = vector.broadcast %cst_50 : f32 to vector<48x1xf32>
    %115 = arith.addf %111, %114 : vector<48x1xf32>
    %116 = math.rsqrt %115 : vector<48x1xf32>
    %117 = vector.broadcast %116 : vector<48x1xf32> to vector<48x64xf32>
    %118 = arith.mulf %113, %117 : vector<48x64xf32>
    %119 = vector.broadcast %99 : vector<1x64xf32> to vector<48x64xf32>
    %120 = arith.mulf %118, %119 : vector<48x64xf32>
    %121 = vector.broadcast %100 : vector<1x64xf32> to vector<48x64xf32>
    %122 = arith.addf %120, %121 : vector<48x64xf32>
    %123 = arith.truncf %122 : vector<48x64xf32> to vector<48x64xbf16>
    %c0_51 = arith.constant 0 : index
    %c0_52 = arith.constant 0 : index
    %124 = vector.load %arg9[%c0_51, %c0_52] : memref<64x128xbf16, #tpu.memory_space<vmem>>, vector<64x128xbf16>
    %cst_53 = arith.constant dense<0.000000e+00> : vector<48x128xf32>
    %125 = tpu.matmul %123, %124, %cst_53 {dimension_numbers = #tpu.dot_dimension_numbers<[1], [0], [0], [1], [0, 0, 1, 1], [], []>} : vector<48x64xbf16>, vector<64x128xbf16>, vector<48x128xf32> -> vector<48x128xf32>
    %c0_54 = arith.constant 0 : index
    %c0_55 = arith.constant 0 : index
    %126 = vector.load %arg10[%c0_54, %c0_55] : memref<1x128xf32, #tpu.memory_space<vmem>>, vector<1x128xf32>
    %127 = vector.broadcast %126 : vector<1x128xf32> to vector<48x128xf32>
    %128 = arith.addf %125, %127 : vector<48x128xf32>
    %129 = arith.mulf %128, %128 : vector<48x128xf32>
    %130 = arith.mulf %128, %129 : vector<48x128xf32>
    %cst_56 = arith.constant 4.471500e-02 : f32
    %131 = vector.broadcast %cst_56 : f32 to vector<48x128xf32>
    %132 = arith.mulf %131, %130 : vector<48x128xf32>
    %133 = arith.addf %128, %132 : vector<48x128xf32>
    %cst_57 = arith.constant 0.797884583 : f32
    %134 = vector.broadcast %cst_57 : f32 to vector<48x128xf32>
    %135 = arith.mulf %134, %133 : vector<48x128xf32>
    %136 = math.tanh %135 : vector<48x128xf32>
    %cst_58 = arith.constant 1.000000e+00 : f32
    %137 = vector.broadcast %cst_58 : f32 to vector<48x128xf32>
    %138 = arith.addf %137, %136 : vector<48x128xf32>
    %cst_59 = arith.constant 5.000000e-01 : f32
    %139 = vector.broadcast %cst_59 : f32 to vector<48x128xf32>
    %140 = arith.mulf %139, %138 : vector<48x128xf32>
    %141 = arith.mulf %128, %140 : vector<48x128xf32>
    %142 = arith.truncf %141 : vector<48x128xf32> to vector<48x128xbf16>
    %c0_60 = arith.constant 0 : index
    %c0_61 = arith.constant 0 : index
    %143 = vector.load %arg11[%c0_60, %c0_61] : memref<128x64xbf16, #tpu.memory_space<vmem>>, vector<128x64xbf16>
    %cst_62 = arith.constant dense<0.000000e+00> : vector<48x64xf32>
    %144 = tpu.matmul %142, %143, %cst_62 {dimension_numbers = #tpu.dot_dimension_numbers<[1], [0], [0], [1], [0, 0, 1, 1], [], []>} : vector<48x128xbf16>, vector<128x64xbf16>, vector<48x64xf32> -> vector<48x64xf32>
    %c0_63 = arith.constant 0 : index
    %c0_64 = arith.constant 0 : index
    %145 = vector.load %arg12[%c0_63, %c0_64] : memref<1x64xf32, #tpu.memory_space<vmem>>, vector<1x64xf32>
    %146 = vector.broadcast %145 : vector<1x64xf32> to vector<48x64xf32>
    %147 = arith.addf %144, %146 : vector<48x64xf32>
    %148 = arith.addf %147, %122 : vector<48x64xf32>
    %c0_65 = arith.constant 0 : index
    %c0_66 = arith.constant 0 : index
    %149 = vector.load %arg13[%c0_65, %c0_66] : memref<1x64xf32, #tpu.memory_space<vmem>>, vector<1x64xf32>
    %c0_67 = arith.constant 0 : index
    %c0_68 = arith.constant 0 : index
    %150 = vector.load %arg14[%c0_67, %c0_68] : memref<1x64xf32, #tpu.memory_space<vmem>>, vector<1x64xf32>
    %cst_69 = arith.constant dense<0.000000e+00> : vector<48xf32>
    %151 = vector.multi_reduction <add>, %148, %cst_69 [1] : vector<48x64xf32> to vector<48xf32>
    %152 = vector.shape_cast %151 : vector<48xf32> to vector<48x1xf32>
    %cst_70 = arith.constant 6.400000e+01 : f32
    %153 = vector.broadcast %cst_70 : f32 to vector<48x1xf32>
    %154 = arith.divf %152, %153 : vector<48x1xf32>
    %155 = vector.broadcast %154 : vector<48x1xf32> to vector<48x64xf32>
    %156 = arith.subf %148, %155 : vector<48x64xf32>
    %157 = arith.mulf %156, %156 : vector<48x64xf32>
    %cst_71 = arith.constant dense<0.000000e+00> : vector<48xf32>
    %158 = vector.multi_reduction <add>, %157, %cst_71 [1] : vector<48x64xf32> to vector<48xf32>
    %159 = vector.shape_cast %158 : vector<48xf32> to vector<48x1xf32>
    %cst_72 = arith.constant 6.400000e+01 : f32
    %160 = vector.broadcast %cst_72 : f32 to vector<48x1xf32>
    %161 = arith.divf %159, %160 : vector<48x1xf32>
    %162 = vector.broadcast %154 : vector<48x1xf32> to vector<48x64xf32>
    %163 = arith.subf %148, %162 : vector<48x64xf32>
    %cst_73 = arith.constant 9.99999996E-13 : f32
    %164 = vector.broadcast %cst_73 : f32 to vector<48x1xf32>
    %165 = arith.addf %161, %164 : vector<48x1xf32>
    %166 = math.rsqrt %165 : vector<48x1xf32>
    %167 = vector.broadcast %166 : vector<48x1xf32> to vector<48x64xf32>
    %168 = arith.mulf %163, %167 : vector<48x64xf32>
    %169 = vector.broadcast %149 : vector<1x64xf32> to vector<48x64xf32>
    %170 = arith.mulf %168, %169 : vector<48x64xf32>
    %171 = vector.broadcast %150 : vector<1x64xf32> to vector<48x64xf32>
    %172 = arith.addf %170, %171 : vector<48x64xf32>
    %173 = vector.shape_cast %172 : vector<48x64xf32> to vector<6x8x64xf32>
    %174 = arith.truncf %173 : vector<6x8x64xf32> to vector<6x8x64xbf16>
    %c0_74 = arith.constant 0 : index
    %c0_75 = arith.constant 0 : index
    %c0_76 = arith.constant 0 : index
    %175 = vector.load %arg15[%c0_74, %c0_75, %c0_76] : memref<6x8x64xbf16, #tpu.memory_space<vmem>>, vector<6x8x64xbf16>
    tpu.vector_store %arg15[%c0_74, %c0_75, %c0_76], %174 {strides = array<i32>} : memref<6x8x64xbf16, #tpu.memory_space<vmem>>, vector<6x8x64xbf16>,
    %176 = vector.extract_strided_slice %174 {offsets = [0, 1, 0], sizes = [6, 1, 64], strides = [1, 1, 1]} : vector<6x8x64xbf16> to vector<6x1x64xbf16>
    %c0_77 = arith.constant 0 : index
    %c0_78 = arith.constant 0 : index
    %c0_79 = arith.constant 0 : index
    %177 = vector.load %arg16[%c0_77, %c0_78, %c0_79] : memref<6x1x64xbf16, #tpu.memory_space<vmem>>, vector<6x1x64xbf16>
    tpu.vector_store %arg16[%c0_77, %c0_78, %c0_79], %176 {strides = array<i32>} : memref<6x1x64xbf16, #tpu.memory_space<vmem>>, vector<6x1x64xbf16>,
    return
  }
  func.func @transform_0(%arg0: i32) -> (i32, i32, i32) {
    %c0_i32 = arith.constant 0 : i32
    %c0_i32_0 = arith.constant 0 : i32
    %c0_i32_1 = arith.constant 0 : i32
    return %arg0, %c0_i32, %c0_i32_0 : i32, i32, i32
  }
  func.func @transform_1(%arg0: i32) -> (i32, i32, i32) {
    %c0_i32 = arith.constant 0 : i32
    %c0_i32_0 = arith.constant 0 : i32
    %c0_i32_1 = arith.constant 0 : i32
    return %arg0, %c0_i32, %c0_i32_0 : i32, i32, i32
  }
  func.func @transform_2(%arg0: i32) -> (i32, i32) {
    %c0_i32 = arith.constant 0 : i32
    %c0_i32_0 = arith.constant 0 : i32
    %c0_i32_1 = arith.constant 0 : i32
    return %c0_i32, %c0_i32_0 : i32, i32
  }
  func.func @transform_3(%arg0: i32) -> (i32, i32) {
    %c0_i32 = arith.constant 0 : i32
    %c0_i32_0 = arith.constant 0 : i32
    %c0_i32_1 = arith.constant 0 : i32
    return %c0_i32, %c0_i32_0 : i32, i32
  }
  func.func @transform_4(%arg0: i32) -> (i32, i32) {
    %c0_i32 = arith.constant 0 : i32
    %c0_i32_0 = arith.constant 0 : i32
    %c0_i32_1 = arith.constant 0 : i32
    return %c0_i32, %c0_i32_0 : i32, i32
  }
  func.func @transform_5(%arg0: i32) -> (i32, i32) {
    %c0_i32 = arith.constant 0 : i32
    %c0_i32_0 = arith.constant 0 : i32
    %c0_i32_1 = arith.constant 0 : i32
    return %c0_i32, %c0_i32_0 : i32, i32
  }
  func.func @transform_6(%arg0: i32) -> (i32, i32) {
    %c0_i32 = arith.constant 0 : i32
    %c0_i32_0 = arith.constant 0 : i32
    %c0_i32_1 = arith.constant 0 : i32
    return %c0_i32, %c0_i32_0 : i32, i32
  }
  func.func @transform_7(%arg0: i32) -> (i32, i32) {
    %c0_i32 = arith.constant 0 : i32
    %c0_i32_0 = arith.constant 0 : i32
    %c0_i32_1 = arith.constant 0 : i32
    return %c0_i32, %c0_i32_0 : i32, i32
  }
  func.func @transform_8(%arg0: i32) -> (i32, i32) {
    %c0_i32 = arith.constant 0 : i32
    %c0_i32_0 = arith.constant 0 : i32
    %c0_i32_1 = arith.constant 0 : i32
    return %c0_i32, %c0_i32_0 : i32, i32
  }
  func.func @transform_9(%arg0: i32) -> (i32, i32) {
    %c0_i32 = arith.constant 0 : i32
    %c0_i32_0 = arith.constant 0 : i32
    %c0_i32_1 = arith.constant 0 : i32
    return %c0_i32, %c0_i32_0 : i32, i32
  }
  func.func @transform_10(%arg0: i32) -> (i32, i32) {
    %c0_i32 = arith.constant 0 : i32
    %c0_i32_0 = arith.constant 0 : i32
    %c0_i32_1 = arith.constant 0 : i32
    return %c0_i32, %c0_i32_0 : i32, i32
  }
  func.func @transform_11(%arg0: i32) -> (i32, i32) {
    %c0_i32 = arith.constant 0 : i32
    %c0_i32_0 = arith.constant 0 : i32
    %c0_i32_1 = arith.constant 0 : i32
    return %c0_i32, %c0_i32_0 : i32, i32
  }
  func.func @transform_12(%arg0: i32) -> (i32, i32) {
    %c0_i32 = arith.constant 0 : i32
    %c0_i32_0 = arith.constant 0 : i32
    %c0_i32_1 = arith.constant 0 : i32
    return %c0_i32, %c0_i32_0 : i32, i32
  }
  func.func @transform_13(%arg0: i32) -> (i32, i32) {
    %c0_i32 = arith.constant 0 : i32
    %c0_i32_0 = arith.constant 0 : i32
    %c0_i32_1 = arith.constant 0 : i32
    return %c0_i32, %c0_i32_0 : i32, i32
  }
  func.func @transform_14(%arg0: i32) -> (i32, i32, i32) {
    %c0_i32 = arith.constant 0 : i32
    %c0_i32_0 = arith.constant 0 : i32
    %c0_i32_1 = arith.constant 0 : i32
    return %arg0, %c0_i32, %c0_i32_0 : i32, i32, i32
  }
  func.func @transform_15(%arg0: i32) -> (i32, i32, i32) {
    %c0_i32 = arith.constant 0 : i32
    %c0_i32_0 = arith.constant 0 : i32
    %c0_i32_1 = arith.constant 0 : i32
    return %arg0, %c0_i32, %c0_i32_0 : i32, i32, i32
  }
}

module attributes {stable_mosaic.version = 11 : i64} {
  func.func @_bert_layer_kernel(%arg0: i32, %arg1: memref<2x4x64xbf16, #tpu.memory_space<vmem>>, %arg2: memref<2x1x4xf32, #tpu.memory_space<vmem>>, %arg3: memref<64x192xbf16, #tpu.memory_space<vmem>>, %arg4: memref<1x192xf32, #tpu.memory_space<vmem>>, %arg5: memref<64x64xbf16, #tpu.memory_space<vmem>>, %arg6: memref<1x64xf32, #tpu.memory_space<vmem>>, %arg7: memref<1x64xf32, #tpu.memory_space<vmem>>, %arg8: memref<1x64xf32, #tpu.memory_space<vmem>>, %arg9: memref<64x128xbf16, #tpu.memory_space<vmem>>, %arg10: memref<1x128xf32, #tpu.memory_space<vmem>>, %arg11: memref<128x64xbf16, #tpu.memory_space<vmem>>, %arg12: memref<1x64xf32, #tpu.memory_space<vmem>>, %arg13: memref<1x64xf32, #tpu.memory_space<vmem>>, %arg14: memref<1x64xf32, #tpu.memory_space<vmem>>, %arg15: memref<2x4x64xbf16, #tpu.memory_space<vmem>>, %arg16: memref<2x4x64xbf16, #tpu.memory_space<vmem>>) attributes {dimension_semantics = [#tpu.dimension_semantics<parallel>], iteration_bounds = array<i64: 1>, scalar_prefetch = 0 : i64, scratch_operands = 1 : i64, tpu.core_type = #tpu.core_type<tc>, window_params = [{transform_indices = @transform_0, window_bounds = array<i64: 2, 4, 64>}, {transform_indices = @transform_1, window_bounds = array<i64: 2, 1, 4>}, {pipeline_mode = #tpu.pipeline_mode<synchronous>, transform_indices = @transform_2, window_bounds = array<i64: 64, 192>}, {pipeline_mode = #tpu.pipeline_mode<synchronous>, transform_indices = @transform_3, window_bounds = array<i64: 1, 192>}, {pipeline_mode = #tpu.pipeline_mode<synchronous>, transform_indices = @transform_4, window_bounds = array<i64: 64, 64>}, {pipeline_mode = #tpu.pipeline_mode<synchronous>, transform_indices = @transform_5, window_bounds = array<i64: 1, 64>}, {pipeline_mode = #tpu.pipeline_mode<synchronous>, transform_indices = @transform_6, window_bounds = array<i64: 1, 64>}, {pipeline_mode = #tpu.pipeline_mode<synchronous>, transform_indices = @transform_7, window_bounds = array<i64: 1, 64>}, {pipeline_mode = #tpu.pipeline_mode<synchronous>, transform_indices = @transform_8, window_bounds = array<i64: 64, 128>}, {pipeline_mode = #tpu.pipeline_mode<synchronous>, transform_indices = @transform_9, window_bounds = array<i64: 1, 128>}, {pipeline_mode = #tpu.pipeline_mode<synchronous>, transform_indices = @transform_10, window_bounds = array<i64: 128, 64>}, {pipeline_mode = #tpu.pipeline_mode<synchronous>, transform_indices = @transform_11, window_bounds = array<i64: 1, 64>}, {pipeline_mode = #tpu.pipeline_mode<synchronous>, transform_indices = @transform_12, window_bounds = array<i64: 1, 64>}, {pipeline_mode = #tpu.pipeline_mode<synchronous>, transform_indices = @transform_13, window_bounds = array<i64: 1, 64>}, {transform_indices = @transform_14, window_bounds = array<i64: 2, 4, 64>}]} {
    %c0 = arith.constant 0 : index
    %c0_0 = arith.constant 0 : index
    %c0_1 = arith.constant 0 : index
    %0 = vector.load %arg1[%c0, %c0_0, %c0_1] : memref<2x4x64xbf16, #tpu.memory_space<vmem>>, vector<2x4x64xbf16>
    %1 = vector.shape_cast %0 : vector<2x4x64xbf16> to vector<8x64xbf16>
    %2 = arith.extf %1 : vector<8x64xbf16> to vector<8x64xf32>
    %c0_2 = arith.constant 0 : index
    %c0_3 = arith.constant 0 : index
    %3 = vector.load %arg3[%c0_2, %c0_3] : memref<64x192xbf16, #tpu.memory_space<vmem>>, vector<64x192xbf16>
    %cst = arith.constant dense<0.000000e+00> : vector<8x192xf32>
    %4 = tpu.matmul %1, %3, %cst {dimension_numbers = #tpu.dot_dimension_numbers<[1], [0], [0], [1], [0, 0, 1, 1], [], []>} : vector<8x64xbf16>, vector<64x192xbf16>, vector<8x192xf32> -> vector<8x192xf32>
    %c0_4 = arith.constant 0 : index
    %c0_5 = arith.constant 0 : index
    %5 = vector.load %arg4[%c0_4, %c0_5] : memref<1x192xf32, #tpu.memory_space<vmem>>, vector<1x192xf32>
    %6 = vector.broadcast %5 : vector<1x192xf32> to vector<8x192xf32>
    %7 = arith.addf %4, %6 : vector<8x192xf32>
    %8 = arith.truncf %7 : vector<8x192xf32> to vector<8x192xbf16>
    %9 = vector.shape_cast %8 : vector<8x192xbf16> to vector<2x4x192xbf16>
    %c0_6 = arith.constant 0 : index
    %c0_7 = arith.constant 0 : index
    %c0_8 = arith.constant 0 : index
    %10 = vector.load %arg2[%c0_6, %c0_7, %c0_8] : memref<2x1x4xf32, #tpu.memory_space<vmem>>, vector<2x1x4xf32>
    %11 = vector.extract_strided_slice %9 {offsets = [0, 0, 0], sizes = [2, 4, 16], strides = [1, 1, 1]} : vector<2x4x192xbf16> to vector<2x4x16xbf16>
    %12 = vector.extract_strided_slice %9 {offsets = [0, 0, 64], sizes = [2, 4, 16], strides = [1, 1, 1]} : vector<2x4x192xbf16> to vector<2x4x16xbf16>
    %13 = vector.extract_strided_slice %9 {offsets = [0, 0, 128], sizes = [2, 4, 16], strides = [1, 1, 1]} : vector<2x4x192xbf16> to vector<2x4x16xbf16>
    "tpu.trace_start"() <{level = 10 : i32, message = "bqd,bkd->bqk"}> : () -> ()
    %cst_9 = arith.constant dense<0.000000e+00> : vector<2x4x4xf32>
    %14 = tpu.matmul %11, %12, %cst_9 {dimension_numbers = #tpu.dot_dimension_numbers<[2], [2], [1], [1], [0, 0, 0, 1, 1, 1], [0], [0]>} : vector<2x4x16xbf16>, vector<2x4x16xbf16>, vector<2x4x4xf32> -> vector<2x4x4xf32>
    "tpu.trace_stop"() : () -> ()
    %15 = vector.broadcast %10 : vector<2x1x4xf32> to vector<2x4x4xf32>
    %16 = arith.addf %14, %15 : vector<2x4x4xf32>
    %cst_10 = arith.constant dense<0xFF800000> : vector<2x4xf32>
    %17 = vector.multi_reduction <maximumf>, %16, %cst_10 [2] : vector<2x4x4xf32> to vector<2x4xf32>
    %18 = vector.shape_cast %17 : vector<2x4xf32> to vector<2x4x1xf32>
    %19 = vector.broadcast %18 : vector<2x4x1xf32> to vector<2x4x4xf32>
    %20 = arith.subf %16, %19 : vector<2x4x4xf32>
    %21 = math.exp %20 : vector<2x4x4xf32>
    %cst_11 = arith.constant dense<0.000000e+00> : vector<2x4xf32>
    %22 = vector.multi_reduction <add>, %21, %cst_11 [2] : vector<2x4x4xf32> to vector<2x4xf32>
    %23 = vector.shape_cast %22 : vector<2x4xf32> to vector<2x4x1xf32>
    %24 = tpu.reciprocal %23 {approx = true} : vector<2x4x1xf32> -> vector<2x4x1xf32>
    %25 = vector.broadcast %24 : vector<2x4x1xf32> to vector<2x4x4xf32>
    %26 = arith.mulf %21, %25 : vector<2x4x4xf32>
    %27 = arith.truncf %26 : vector<2x4x4xf32> to vector<2x4x4xbf16>
    "tpu.trace_start"() <{level = 10 : i32, message = "bqk,bkd->bqd"}> : () -> ()
    %cst_12 = arith.constant dense<0.000000e+00> : vector<2x4x16xf32>
    %28 = tpu.matmul %27, %13, %cst_12 {dimension_numbers = #tpu.dot_dimension_numbers<[2], [1], [1], [2], [0, 0, 0, 1, 1, 2], [0], [0]>} : vector<2x4x4xbf16>, vector<2x4x16xbf16>, vector<2x4x16xf32> -> vector<2x4x16xf32>
    "tpu.trace_stop"() : () -> ()
    %29 = arith.truncf %28 : vector<2x4x16xf32> to vector<2x4x16xbf16>
    %c0_13 = arith.constant 0 : index
    %c0_14 = arith.constant 0 : index
    %c0_15 = arith.constant 0 : index
    %30 = vector.load %arg16[%c0_13, %c0_14, %c0_15] : memref<2x4x64xbf16, #tpu.memory_space<vmem>>, vector<2x4x16xbf16>
    tpu.vector_store %arg16[%c0_13, %c0_14, %c0_15], %29 {strides = array<i32>} : memref<2x4x64xbf16, #tpu.memory_space<vmem>>, vector<2x4x16xbf16>,
    %31 = vector.extract_strided_slice %9 {offsets = [0, 0, 16], sizes = [2, 4, 16], strides = [1, 1, 1]} : vector<2x4x192xbf16> to vector<2x4x16xbf16>
    %32 = vector.extract_strided_slice %9 {offsets = [0, 0, 80], sizes = [2, 4, 16], strides = [1, 1, 1]} : vector<2x4x192xbf16> to vector<2x4x16xbf16>
    %33 = vector.extract_strided_slice %9 {offsets = [0, 0, 144], sizes = [2, 4, 16], strides = [1, 1, 1]} : vector<2x4x192xbf16> to vector<2x4x16xbf16>
    "tpu.trace_start"() <{level = 10 : i32, message = "bqd,bkd->bqk"}> : () -> ()
    %cst_16 = arith.constant dense<0.000000e+00> : vector<2x4x4xf32>
    %34 = tpu.matmul %31, %32, %cst_16 {dimension_numbers = #tpu.dot_dimension_numbers<[2], [2], [1], [1], [0, 0, 0, 1, 1, 1], [0], [0]>} : vector<2x4x16xbf16>, vector<2x4x16xbf16>, vector<2x4x4xf32> -> vector<2x4x4xf32>
    "tpu.trace_stop"() : () -> ()
    %35 = vector.broadcast %10 : vector<2x1x4xf32> to vector<2x4x4xf32>
    %36 = arith.addf %34, %35 : vector<2x4x4xf32>
    %cst_17 = arith.constant dense<0xFF800000> : vector<2x4xf32>
    %37 = vector.multi_reduction <maximumf>, %36, %cst_17 [2] : vector<2x4x4xf32> to vector<2x4xf32>
    %38 = vector.shape_cast %37 : vector<2x4xf32> to vector<2x4x1xf32>
    %39 = vector.broadcast %38 : vector<2x4x1xf32> to vector<2x4x4xf32>
    %40 = arith.subf %36, %39 : vector<2x4x4xf32>
    %41 = math.exp %40 : vector<2x4x4xf32>
    %cst_18 = arith.constant dense<0.000000e+00> : vector<2x4xf32>
    %42 = vector.multi_reduction <add>, %41, %cst_18 [2] : vector<2x4x4xf32> to vector<2x4xf32>
    %43 = vector.shape_cast %42 : vector<2x4xf32> to vector<2x4x1xf32>
    %44 = tpu.reciprocal %43 {approx = true} : vector<2x4x1xf32> -> vector<2x4x1xf32>
    %45 = vector.broadcast %44 : vector<2x4x1xf32> to vector<2x4x4xf32>
    %46 = arith.mulf %41, %45 : vector<2x4x4xf32>
    %47 = arith.truncf %46 : vector<2x4x4xf32> to vector<2x4x4xbf16>
    "tpu.trace_start"() <{level = 10 : i32, message = "bqk,bkd->bqd"}> : () -> ()
    %cst_19 = arith.constant dense<0.000000e+00> : vector<2x4x16xf32>
    %48 = tpu.matmul %47, %33, %cst_19 {dimension_numbers = #tpu.dot_dimension_numbers<[2], [1], [1], [2], [0, 0, 0, 1, 1, 2], [0], [0]>} : vector<2x4x4xbf16>, vector<2x4x16xbf16>, vector<2x4x16xf32> -> vector<2x4x16xf32>
    "tpu.trace_stop"() : () -> ()
    %49 = arith.truncf %48 : vector<2x4x16xf32> to vector<2x4x16xbf16>
    %c0_20 = arith.constant 0 : index
    %c0_21 = arith.constant 0 : index
    %c16 = arith.constant 16 : index
    %50 = vector.load %arg16[%c0_20, %c0_21, %c16] : memref<2x4x64xbf16, #tpu.memory_space<vmem>>, vector<2x4x16xbf16>
    tpu.vector_store %arg16[%c0_20, %c0_21, %c16], %49 {strides = array<i32>} : memref<2x4x64xbf16, #tpu.memory_space<vmem>>, vector<2x4x16xbf16>,
    %51 = vector.extract_strided_slice %9 {offsets = [0, 0, 32], sizes = [2, 4, 16], strides = [1, 1, 1]} : vector<2x4x192xbf16> to vector<2x4x16xbf16>
    %52 = vector.extract_strided_slice %9 {offsets = [0, 0, 96], sizes = [2, 4, 16], strides = [1, 1, 1]} : vector<2x4x192xbf16> to vector<2x4x16xbf16>
    %53 = vector.extract_strided_slice %9 {offsets = [0, 0, 160], sizes = [2, 4, 16], strides = [1, 1, 1]} : vector<2x4x192xbf16> to vector<2x4x16xbf16>
    "tpu.trace_start"() <{level = 10 : i32, message = "bqd,bkd->bqk"}> : () -> ()
    %cst_22 = arith.constant dense<0.000000e+00> : vector<2x4x4xf32>
    %54 = tpu.matmul %51, %52, %cst_22 {dimension_numbers = #tpu.dot_dimension_numbers<[2], [2], [1], [1], [0, 0, 0, 1, 1, 1], [0], [0]>} : vector<2x4x16xbf16>, vector<2x4x16xbf16>, vector<2x4x4xf32> -> vector<2x4x4xf32>
    "tpu.trace_stop"() : () -> ()
    %55 = vector.broadcast %10 : vector<2x1x4xf32> to vector<2x4x4xf32>
    %56 = arith.addf %54, %55 : vector<2x4x4xf32>
    %cst_23 = arith.constant dense<0xFF800000> : vector<2x4xf32>
    %57 = vector.multi_reduction <maximumf>, %56, %cst_23 [2] : vector<2x4x4xf32> to vector<2x4xf32>
    %58 = vector.shape_cast %57 : vector<2x4xf32> to vector<2x4x1xf32>
    %59 = vector.broadcast %58 : vector<2x4x1xf32> to vector<2x4x4xf32>
    %60 = arith.subf %56, %59 : vector<2x4x4xf32>
    %61 = math.exp %60 : vector<2x4x4xf32>
    %cst_24 = arith.constant dense<0.000000e+00> : vector<2x4xf32>
    %62 = vector.multi_reduction <add>, %61, %cst_24 [2] : vector<2x4x4xf32> to vector<2x4xf32>
    %63 = vector.shape_cast %62 : vector<2x4xf32> to vector<2x4x1xf32>
    %64 = tpu.reciprocal %63 {approx = true} : vector<2x4x1xf32> -> vector<2x4x1xf32>
    %65 = vector.broadcast %64 : vector<2x4x1xf32> to vector<2x4x4xf32>
    %66 = arith.mulf %61, %65 : vector<2x4x4xf32>
    %67 = arith.truncf %66 : vector<2x4x4xf32> to vector<2x4x4xbf16>
    "tpu.trace_start"() <{level = 10 : i32, message = "bqk,bkd->bqd"}> : () -> ()
    %cst_25 = arith.constant dense<0.000000e+00> : vector<2x4x16xf32>
    %68 = tpu.matmul %67, %53, %cst_25 {dimension_numbers = #tpu.dot_dimension_numbers<[2], [1], [1], [2], [0, 0, 0, 1, 1, 2], [0], [0]>} : vector<2x4x4xbf16>, vector<2x4x16xbf16>, vector<2x4x16xf32> -> vector<2x4x16xf32>
    "tpu.trace_stop"() : () -> ()
    %69 = arith.truncf %68 : vector<2x4x16xf32> to vector<2x4x16xbf16>
    %c0_26 = arith.constant 0 : index
    %c0_27 = arith.constant 0 : index
    %c32 = arith.constant 32 : index
    %70 = vector.load %arg16[%c0_26, %c0_27, %c32] : memref<2x4x64xbf16, #tpu.memory_space<vmem>>, vector<2x4x16xbf16>
    tpu.vector_store %arg16[%c0_26, %c0_27, %c32], %69 {strides = array<i32>} : memref<2x4x64xbf16, #tpu.memory_space<vmem>>, vector<2x4x16xbf16>,
    %71 = vector.extract_strided_slice %9 {offsets = [0, 0, 48], sizes = [2, 4, 16], strides = [1, 1, 1]} : vector<2x4x192xbf16> to vector<2x4x16xbf16>
    %72 = vector.extract_strided_slice %9 {offsets = [0, 0, 112], sizes = [2, 4, 16], strides = [1, 1, 1]} : vector<2x4x192xbf16> to vector<2x4x16xbf16>
    %73 = vector.extract_strided_slice %9 {offsets = [0, 0, 176], sizes = [2, 4, 16], strides = [1, 1, 1]} : vector<2x4x192xbf16> to vector<2x4x16xbf16>
    "tpu.trace_start"() <{level = 10 : i32, message = "bqd,bkd->bqk"}> : () -> ()
    %cst_28 = arith.constant dense<0.000000e+00> : vector<2x4x4xf32>
    %74 = tpu.matmul %71, %72, %cst_28 {dimension_numbers = #tpu.dot_dimension_numbers<[2], [2], [1], [1], [0, 0, 0, 1, 1, 1], [0], [0]>} : vector<2x4x16xbf16>, vector<2x4x16xbf16>, vector<2x4x4xf32> -> vector<2x4x4xf32>
    "tpu.trace_stop"() : () -> ()
    %75 = vector.broadcast %10 : vector<2x1x4xf32> to vector<2x4x4xf32>
    %76 = arith.addf %74, %75 : vector<2x4x4xf32>
    %cst_29 = arith.constant dense<0xFF800000> : vector<2x4xf32>
    %77 = vector.multi_reduction <maximumf>, %76, %cst_29 [2] : vector<2x4x4xf32> to vector<2x4xf32>
    %78 = vector.shape_cast %77 : vector<2x4xf32> to vector<2x4x1xf32>
    %79 = vector.broadcast %78 : vector<2x4x1xf32> to vector<2x4x4xf32>
    %80 = arith.subf %76, %79 : vector<2x4x4xf32>
    %81 = math.exp %80 : vector<2x4x4xf32>
    %cst_30 = arith.constant dense<0.000000e+00> : vector<2x4xf32>
    %82 = vector.multi_reduction <add>, %81, %cst_30 [2] : vector<2x4x4xf32> to vector<2x4xf32>
    %83 = vector.shape_cast %82 : vector<2x4xf32> to vector<2x4x1xf32>
    %84 = tpu.reciprocal %83 {approx = true} : vector<2x4x1xf32> -> vector<2x4x1xf32>
    %85 = vector.broadcast %84 : vector<2x4x1xf32> to vector<2x4x4xf32>
    %86 = arith.mulf %81, %85 : vector<2x4x4xf32>
    %87 = arith.truncf %86 : vector<2x4x4xf32> to vector<2x4x4xbf16>
    "tpu.trace_start"() <{level = 10 : i32, message = "bqk,bkd->bqd"}> : () -> ()
    %cst_31 = arith.constant dense<0.000000e+00> : vector<2x4x16xf32>
    %88 = tpu.matmul %87, %73, %cst_31 {dimension_numbers = #tpu.dot_dimension_numbers<[2], [1], [1], [2], [0, 0, 0, 1, 1, 2], [0], [0]>} : vector<2x4x4xbf16>, vector<2x4x16xbf16>, vector<2x4x16xf32> -> vector<2x4x16xf32>
    "tpu.trace_stop"() : () -> ()
    %89 = arith.truncf %88 : vector<2x4x16xf32> to vector<2x4x16xbf16>
    %c0_32 = arith.constant 0 : index
    %c0_33 = arith.constant 0 : index
    %c48 = arith.constant 48 : index
    %90 = vector.load %arg16[%c0_32, %c0_33, %c48] : memref<2x4x64xbf16, #tpu.memory_space<vmem>>, vector<2x4x16xbf16>
    tpu.vector_store %arg16[%c0_32, %c0_33, %c48], %89 {strides = array<i32>} : memref<2x4x64xbf16, #tpu.memory_space<vmem>>, vector<2x4x16xbf16>,
    %c0_34 = arith.constant 0 : index
    %c0_35 = arith.constant 0 : index
    %c0_36 = arith.constant 0 : index
    %91 = vector.load %arg16[%c0_34, %c0_35, %c0_36] : memref<2x4x64xbf16, #tpu.memory_space<vmem>>, vector<2x4x64xbf16>
    %92 = vector.shape_cast %91 : vector<2x4x64xbf16> to vector<8x64xbf16>
    %c0_37 = arith.constant 0 : index
    %c0_38 = arith.constant 0 : index
    %93 = vector.load %arg5[%c0_37, %c0_38] : memref<64x64xbf16, #tpu.memory_space<vmem>>, vector<64x64xbf16>
    %cst_39 = arith.constant dense<0.000000e+00> : vector<8x64xf32>
    %94 = tpu.matmul %92, %93, %cst_39 {dimension_numbers = #tpu.dot_dimension_numbers<[1], [0], [0], [1], [0, 0, 1, 1], [], []>} : vector<8x64xbf16>, vector<64x64xbf16>, vector<8x64xf32> -> vector<8x64xf32>
    %c0_40 = arith.constant 0 : index
    %c0_41 = arith.constant 0 : index
    %95 = vector.load %arg6[%c0_40, %c0_41] : memref<1x64xf32, #tpu.memory_space<vmem>>, vector<1x64xf32>
    %96 = vector.broadcast %95 : vector<1x64xf32> to vector<8x64xf32>
    %97 = arith.addf %94, %96 : vector<8x64xf32>
    %98 = arith.addf %97, %2 : vector<8x64xf32>
    %c0_42 = arith.constant 0 : index
    %c0_43 = arith.constant 0 : index
    %99 = vector.load %arg7[%c0_42, %c0_43] : memref<1x64xf32, #tpu.memory_space<vmem>>, vector<1x64xf32>
    %c0_44 = arith.constant 0 : index
    %c0_45 = arith.constant 0 : index
    %100 = vector.load %arg8[%c0_44, %c0_45] : memref<1x64xf32, #tpu.memory_space<vmem>>, vector<1x64xf32>
    %cst_46 = arith.constant dense<0.000000e+00> : vector<8xf32>
    %101 = vector.multi_reduction <add>, %98, %cst_46 [1] : vector<8x64xf32> to vector<8xf32>
    %102 = vector.shape_cast %101 : vector<8xf32> to vector<8x1xf32>
    %cst_47 = arith.constant 6.400000e+01 : f32
    %103 = vector.broadcast %cst_47 : f32 to vector<8x1xf32>
    %104 = arith.divf %102, %103 : vector<8x1xf32>
    %105 = vector.broadcast %104 : vector<8x1xf32> to vector<8x64xf32>
    %106 = arith.subf %98, %105 : vector<8x64xf32>
    %107 = arith.mulf %106, %106 : vector<8x64xf32>
    %cst_48 = arith.constant dense<0.000000e+00> : vector<8xf32>
    %108 = vector.multi_reduction <add>, %107, %cst_48 [1] : vector<8x64xf32> to vector<8xf32>
    %109 = vector.shape_cast %108 : vector<8xf32> to vector<8x1xf32>
    %cst_49 = arith.constant 6.400000e+01 : f32
    %110 = vector.broadcast %cst_49 : f32 to vector<8x1xf32>
    %111 = arith.divf %109, %110 : vector<8x1xf32>
    %112 = vector.broadcast %104 : vector<8x1xf32> to vector<8x64xf32>
    %113 = arith.subf %98, %112 : vector<8x64xf32>
    %cst_50 = arith.constant 9.99999996E-13 : f32
    %114 = vector.broadcast %cst_50 : f32 to vector<8x1xf32>
    %115 = arith.addf %111, %114 : vector<8x1xf32>
    %116 = math.rsqrt %115 : vector<8x1xf32>
    %117 = vector.broadcast %116 : vector<8x1xf32> to vector<8x64xf32>
    %118 = arith.mulf %113, %117 : vector<8x64xf32>
    %119 = vector.broadcast %99 : vector<1x64xf32> to vector<8x64xf32>
    %120 = arith.mulf %118, %119 : vector<8x64xf32>
    %121 = vector.broadcast %100 : vector<1x64xf32> to vector<8x64xf32>
    %122 = arith.addf %120, %121 : vector<8x64xf32>
    %123 = arith.truncf %122 : vector<8x64xf32> to vector<8x64xbf16>
    %c0_51 = arith.constant 0 : index
    %c0_52 = arith.constant 0 : index
    %124 = vector.load %arg9[%c0_51, %c0_52] : memref<64x128xbf16, #tpu.memory_space<vmem>>, vector<64x128xbf16>
    %cst_53 = arith.constant dense<0.000000e+00> : vector<8x128xf32>
    %125 = tpu.matmul %123, %124, %cst_53 {dimension_numbers = #tpu.dot_dimension_numbers<[1], [0], [0], [1], [0, 0, 1, 1], [], []>} : vector<8x64xbf16>, vector<64x128xbf16>, vector<8x128xf32> -> vector<8x128xf32>
    %c0_54 = arith.constant 0 : index
    %c0_55 = arith.constant 0 : index
    %126 = vector.load %arg10[%c0_54, %c0_55] : memref<1x128xf32, #tpu.memory_space<vmem>>, vector<1x128xf32>
    %127 = vector.broadcast %126 : vector<1x128xf32> to vector<8x128xf32>
    %128 = arith.addf %125, %127 : vector<8x128xf32>
    %129 = arith.mulf %128, %128 : vector<8x128xf32>
    %130 = arith.mulf %128, %129 : vector<8x128xf32>
    %cst_56 = arith.constant 4.471500e-02 : f32
    %131 = vector.broadcast %cst_56 : f32 to vector<8x128xf32>
    %132 = arith.mulf %131, %130 : vector<8x128xf32>
    %133 = arith.addf %128, %132 : vector<8x128xf32>
    %cst_57 = arith.constant 0.797884583 : f32
    %134 = vector.broadcast %cst_57 : f32 to vector<8x128xf32>
    %135 = arith.mulf %134, %133 : vector<8x128xf32>
    %136 = math.tanh %135 : vector<8x128xf32>
    %cst_58 = arith.constant 1.000000e+00 : f32
    %137 = vector.broadcast %cst_58 : f32 to vector<8x128xf32>
    %138 = arith.addf %137, %136 : vector<8x128xf32>
    %cst_59 = arith.constant 5.000000e-01 : f32
    %139 = vector.broadcast %cst_59 : f32 to vector<8x128xf32>
    %140 = arith.mulf %139, %138 : vector<8x128xf32>
    %141 = arith.mulf %128, %140 : vector<8x128xf32>
    %142 = arith.truncf %141 : vector<8x128xf32> to vector<8x128xbf16>
    %c0_60 = arith.constant 0 : index
    %c0_61 = arith.constant 0 : index
    %143 = vector.load %arg11[%c0_60, %c0_61] : memref<128x64xbf16, #tpu.memory_space<vmem>>, vector<128x64xbf16>
    %cst_62 = arith.constant dense<0.000000e+00> : vector<8x64xf32>
    %144 = tpu.matmul %142, %143, %cst_62 {dimension_numbers = #tpu.dot_dimension_numbers<[1], [0], [0], [1], [0, 0, 1, 1], [], []>} : vector<8x128xbf16>, vector<128x64xbf16>, vector<8x64xf32> -> vector<8x64xf32>
    %c0_63 = arith.constant 0 : index
    %c0_64 = arith.constant 0 : index
    %145 = vector.load %arg12[%c0_63, %c0_64] : memref<1x64xf32, #tpu.memory_space<vmem>>, vector<1x64xf32>
    %146 = vector.broadcast %145 : vector<1x64xf32> to vector<8x64xf32>
    %147 = arith.addf %144, %146 : vector<8x64xf32>
    %148 = arith.addf %147, %122 : vector<8x64xf32>
    %c0_65 = arith.constant 0 : index
    %c0_66 = arith.constant 0 : index
    %149 = vector.load %arg13[%c0_65, %c0_66] : memref<1x64xf32, #tpu.memory_space<vmem>>, vector<1x64xf32>
    %c0_67 = arith.constant 0 : index
    %c0_68 = arith.constant 0 : index
    %150 = vector.load %arg14[%c0_67, %c0_68] : memref<1x64xf32, #tpu.memory_space<vmem>>, vector<1x64xf32>
    %cst_69 = arith.constant dense<0.000000e+00> : vector<8xf32>
    %151 = vector.multi_reduction <add>, %148, %cst_69 [1] : vector<8x64xf32> to vector<8xf32>
    %152 = vector.shape_cast %151 : vector<8xf32> to vector<8x1xf32>
    %cst_70 = arith.constant 6.400000e+01 : f32
    %153 = vector.broadcast %cst_70 : f32 to vector<8x1xf32>
    %154 = arith.divf %152, %153 : vector<8x1xf32>
    %155 = vector.broadcast %154 : vector<8x1xf32> to vector<8x64xf32>
    %156 = arith.subf %148, %155 : vector<8x64xf32>
    %157 = arith.mulf %156, %156 : vector<8x64xf32>
    %cst_71 = arith.constant dense<0.000000e+00> : vector<8xf32>
    %158 = vector.multi_reduction <add>, %157, %cst_71 [1] : vector<8x64xf32> to vector<8xf32>
    %159 = vector.shape_cast %158 : vector<8xf32> to vector<8x1xf32>
    %cst_72 = arith.constant 6.400000e+01 : f32
    %160 = vector.broadcast %cst_72 : f32 to vector<8x1xf32>
    %161 = arith.divf %159, %160 : vector<8x1xf32>
    %162 = vector.broadcast %154 : vector<8x1xf32> to vector<8x64xf32>
    %163 = arith.subf %148, %162 : vector<8x64xf32>
    %cst_73 = arith.constant 9.99999996E-13 : f32
    %164 = vector.broadcast %cst_73 : f32 to vector<8x1xf32>
    %165 = arith.addf %161, %164 : vector<8x1xf32>
    %166 = math.rsqrt %165 : vector<8x1xf32>
    %167 = vector.broadcast %166 : vector<8x1xf32> to vector<8x64xf32>
    %168 = arith.mulf %163, %167 : vector<8x64xf32>
    %169 = vector.broadcast %149 : vector<1x64xf32> to vector<8x64xf32>
    %170 = arith.mulf %168, %169 : vector<8x64xf32>
    %171 = vector.broadcast %150 : vector<1x64xf32> to vector<8x64xf32>
    %172 = arith.addf %170, %171 : vector<8x64xf32>
    %173 = vector.shape_cast %172 : vector<8x64xf32> to vector<2x4x64xf32>
    %174 = arith.truncf %173 : vector<2x4x64xf32> to vector<2x4x64xbf16>
    %c0_74 = arith.constant 0 : index
    %c0_75 = arith.constant 0 : index
    %c0_76 = arith.constant 0 : index
    %175 = vector.load %arg15[%c0_74, %c0_75, %c0_76] : memref<2x4x64xbf16, #tpu.memory_space<vmem>>, vector<2x4x64xbf16>
    tpu.vector_store %arg15[%c0_74, %c0_75, %c0_76], %174 {strides = array<i32>} : memref<2x4x64xbf16, #tpu.memory_space<vmem>>, vector<2x4x64xbf16>,
    return
  }
  func.func @transform_0(%arg0: i32) -> (i32, i32, i32) {
    %c0_i32 = arith.constant 0 : i32
    %c0_i32_0 = arith.constant 0 : i32
    %c0_i32_1 = arith.constant 0 : i32
    return %arg0, %c0_i32, %c0_i32_0 : i32, i32, i32
  }
  func.func @transform_1(%arg0: i32) -> (i32, i32, i32) {
    %c0_i32 = arith.constant 0 : i32
    %c0_i32_0 = arith.constant 0 : i32
    %c0_i32_1 = arith.constant 0 : i32
    return %arg0, %c0_i32, %c0_i32_0 : i32, i32, i32
  }
  func.func @transform_2(%arg0: i32) -> (i32, i32) {
    %c0_i32 = arith.constant 0 : i32
    %c0_i32_0 = arith.constant 0 : i32
    %c0_i32_1 = arith.constant 0 : i32
    return %c0_i32, %c0_i32_0 : i32, i32
  }
  func.func @transform_3(%arg0: i32) -> (i32, i32) {
    %c0_i32 = arith.constant 0 : i32
    %c0_i32_0 = arith.constant 0 : i32
    %c0_i32_1 = arith.constant 0 : i32
    return %c0_i32, %c0_i32_0 : i32, i32
  }
  func.func @transform_4(%arg0: i32) -> (i32, i32) {
    %c0_i32 = arith.constant 0 : i32
    %c0_i32_0 = arith.constant 0 : i32
    %c0_i32_1 = arith.constant 0 : i32
    return %c0_i32, %c0_i32_0 : i32, i32
  }
  func.func @transform_5(%arg0: i32) -> (i32, i32) {
    %c0_i32 = arith.constant 0 : i32
    %c0_i32_0 = arith.constant 0 : i32
    %c0_i32_1 = arith.constant 0 : i32
    return %c0_i32, %c0_i32_0 : i32, i32
  }
  func.func @transform_6(%arg0: i32) -> (i32, i32) {
    %c0_i32 = arith.constant 0 : i32
    %c0_i32_0 = arith.constant 0 : i32
    %c0_i32_1 = arith.constant 0 : i32
    return %c0_i32, %c0_i32_0 : i32, i32
  }
  func.func @transform_7(%arg0: i32) -> (i32, i32) {
    %c0_i32 = arith.constant 0 : i32
    %c0_i32_0 = arith.constant 0 : i32
    %c0_i32_1 = arith.constant 0 : i32
    return %c0_i32, %c0_i32_0 : i32, i32
  }
  func.func @transform_8(%arg0: i32) -> (i32, i32) {
    %c0_i32 = arith.constant 0 : i32
    %c0_i32_0 = arith.constant 0 : i32
    %c0_i32_1 = arith.constant 0 : i32
    return %c0_i32, %c0_i32_0 : i32, i32
  }
  func.func @transform_9(%arg0: i32) -> (i32, i32) {
    %c0_i32 = arith.constant 0 : i32
    %c0_i32_0 = arith.constant 0 : i32
    %c0_i32_1 = arith.constant 0 : i32
    return %c0_i32, %c0_i32_0 : i32, i32
  }
  func.func @transform_10(%arg0: i32) -> (i32, i32) {
    %c0_i32 = arith.constant 0 : i32
    %c0_i32_0 = arith.constant 0 : i32
    %c0_i32_1 = arith.constant 0 : i32
    return %c0_i32, %c0_i32_0 : i32, i32
  }
  func.func @transform_11(%arg0: i32) -> (i32, i32) {
    %c0_i32 = arith.constant 0 : i32
    %c0_i32_0 = arith.constant 0 : i32
    %c0_i32_1 = arith.constant 0 : i32
    return %c0_i32, %c0_i32_0 : i32, i32
  }
  func.func @transform_12(%arg0: i32) -> (i32, i32) {
    %c0_i32 = arith.constant 0 : i32
    %c0_i32_0 = arith.constant 0 : i32
    %c0_i32_1 = arith.constant 0 : i32
    return %c0_i32, %c0_i32_0 : i32, i32
  }
  func.func @transform_13(%arg0: i32) -> (i32, i32) {
    %c0_i32 = arith.constant 0 : i32
    %c0_i32_0 = arith.constant 0 : i32
    %c0_i32_1 = arith.constant 0 : i32
    return %c0_i32, %c0_i32_0 : i32, i32
  }
  func.func @transform_14(%arg0: i32) -> (i32, i32, i32) {
    %c0_i32 = arith.constant 0 : i32
    %c0_i32_0 = arith.constant 0 : i32
    %c0_i32_1 = arith.constant 0 : i32
    return %arg0, %c0_i32, %c0_i32_0 : i32, i32, i32
  }
}

module attributes {stable_mosaic.version = 11 : i64} {
  func.func @_bert_layer_kernel(%arg0: i32, %arg1: memref<6x8x64xbf16, #tpu.memory_space<vmem>>, %arg2: memref<6x1x8xf32, #tpu.memory_space<vmem>>, %arg3: memref<6x1x64xbf16, #tpu.memory_space<vmem>>, %arg4: memref<64x192xbf16, #tpu.memory_space<vmem>>, %arg5: memref<1x192xf32, #tpu.memory_space<vmem>>, %arg6: memref<64x64xbf16, #tpu.memory_space<vmem>>, %arg7: memref<1x64xf32, #tpu.memory_space<vmem>>, %arg8: memref<1x64xf32, #tpu.memory_space<vmem>>, %arg9: memref<1x64xf32, #tpu.memory_space<vmem>>, %arg10: memref<64x128xbf16, #tpu.memory_space<vmem>>, %arg11: memref<1x128xf32, #tpu.memory_space<vmem>>, %arg12: memref<128x64xbf16, #tpu.memory_space<vmem>>, %arg13: memref<1x64xf32, #tpu.memory_space<vmem>>, %arg14: memref<1x64xf32, #tpu.memory_space<vmem>>, %arg15: memref<1x64xf32, #tpu.memory_space<vmem>>, %arg16: memref<6x8x64xbf16, #tpu.memory_space<vmem>>, %arg17: memref<6x1x64xbf16, #tpu.memory_space<vmem>>, %arg18: memref<6x8x64xbf16, #tpu.memory_space<vmem>>) attributes {dimension_semantics = [#tpu.dimension_semantics<parallel>], iteration_bounds = array<i64: 1>, scalar_prefetch = 0 : i64, scratch_operands = 1 : i64, tpu.core_type = #tpu.core_type<tc>, window_params = [{transform_indices = @transform_0, window_bounds = array<i64: 6, 8, 64>}, {transform_indices = @transform_1, window_bounds = array<i64: 6, 1, 8>}, {transform_indices = @transform_2, window_bounds = array<i64: 6, 1, 64>}, {pipeline_mode = #tpu.pipeline_mode<synchronous>, transform_indices = @transform_3, window_bounds = array<i64: 64, 192>}, {pipeline_mode = #tpu.pipeline_mode<synchronous>, transform_indices = @transform_4, window_bounds = array<i64: 1, 192>}, {pipeline_mode = #tpu.pipeline_mode<synchronous>, transform_indices = @transform_5, window_bounds = array<i64: 64, 64>}, {pipeline_mode = #tpu.pipeline_mode<synchronous>, transform_indices = @transform_6, window_bounds = array<i64: 1, 64>}, {pipeline_mode = #tpu.pipeline_mode<synchronous>, transform_indices = @transform_7, window_bounds = array<i64: 1, 64>}, {pipeline_mode = #tpu.pipeline_mode<synchronous>, transform_indices = @transform_8, window_bounds = array<i64: 1, 64>}, {pipeline_mode = #tpu.pipeline_mode<synchronous>, transform_indices = @transform_9, window_bounds = array<i64: 64, 128>}, {pipeline_mode = #tpu.pipeline_mode<synchronous>, transform_indices = @transform_10, window_bounds = array<i64: 1, 128>}, {pipeline_mode = #tpu.pipeline_mode<synchronous>, transform_indices = @transform_11, window_bounds = array<i64: 128, 64>}, {pipeline_mode = #tpu.pipeline_mode<synchronous>, transform_indices = @transform_12, window_bounds = array<i64: 1, 64>}, {pipeline_mode = #tpu.pipeline_mode<synchronous>, transform_indices = @transform_13, window_bounds = array<i64: 1, 64>}, {pipeline_mode = #tpu.pipeline_mode<synchronous>, transform_indices = @transform_14, window_bounds = array<i64: 1, 64>}, {transform_indices = @transform_15, window_bounds = array<i64: 6, 8, 64>}, {transform_indices = @transform_16, window_bounds = array<i64: 6, 1, 64>}]} {
    %c0 = arith.constant 0 : index
    %c0_0 = arith.constant 0 : index
    %c0_1 = arith.constant 0 : index
    %0 = vector.load %arg1[%c0, %c0_0, %c0_1] : memref<6x8x64xbf16, #tpu.memory_space<vmem>>, vector<6x8x64xbf16>
    %1 = tpu.iota {dimensions = array<i32: 1>} : vector<6x8x1xi32>
    %c0_i32 = arith.constant 0 : i32
    %2 = vector.broadcast %c0_i32 : i32 to vector<6x8x1xi32>
    %3 = arith.cmpi eq, %1, %2 : vector<6x8x1xi32>
    %c0_2 = arith.constant 0 : index
    %c0_3 = arith.constant 0 : index
    %c0_4 = arith.constant 0 : index
    %4 = vector.load %arg3[%c0_2, %c0_3, %c0_4] : memref<6x1x64xbf16, #tpu.memory_space<vmem>>, vector<6x1x64xbf16>
    %5 = vector.shape_cast %3 : vector<6x8x1xi1> to vector<6x8x1xi1>
    %6 = vector.broadcast %5 : vector<6x8x1xi1> to vector<6x8x64xi1>
    %7 = vector.shape_cast %4 : vector<6x1x64xbf16> to vector<6x1x64xbf16>
    %8 = vector.broadcast %7 : vector<6x1x64xbf16> to vector<6x8x64xbf16>
    %9 = arith.select %6, %8, %0 : vector<6x8x64xi1>, vector<6x8x64xbf16>
    %10 = vector.shape_cast %9 : vector<6x8x64xbf16> to vector<48x64xbf16>
    %11 = arith.extf %10 : vector<48x64xbf16> to vector<48x64xf32>
    %c0_5 = arith.constant 0 : index
    %c0_6 = arith.constant 0 : index
    %12 = vector.load %arg4[%c0_5, %c0_6] : memref<64x192xbf16, #tpu.memory_space<vmem>>, vector<64x192xbf16>
    %cst = arith.constant dense<0.000000e+00> : vector<48x192xf32>
    %13 = tpu.matmul %10, %12, %cst {dimension_numbers = #tpu.dot_dimension_numbers<[1], [0], [0], [1], [0, 0, 1, 1], [], []>} : vector<48x64xbf16>, vector<64x192xbf16>, vector<48x192xf32> -> vector<48x192xf32>
    %c0_7 = arith.constant 0 : index
    %c0_8 = arith.constant 0 : index
    %14 = vector.load %arg5[%c0_7, %c0_8] : memref<1x192xf32, #tpu.memory_space<vmem>>, vector<1x192xf32>
    %15 = vector.broadcast %14 : vector<1x192xf32> to vector<48x192xf32>
    %16 = arith.addf %13, %15 : vector<48x192xf32>
    %17 = arith.truncf %16 : vector<48x192xf32> to vector<48x192xbf16>
    %18 = vector.shape_cast %17 : vector<48x192xbf16> to vector<6x8x192xbf16>
    %c0_9 = arith.constant 0 : index
    %c0_10 = arith.constant 0 : index
    %c0_11 = arith.constant 0 : index
    %19 = vector.load %arg2[%c0_9, %c0_10, %c0_11] : memref<6x1x8xf32, #tpu.memory_space<vmem>>, vector<6x1x8xf32>
    %20 = vector.extract_strided_slice %18 {offsets = [0, 0, 0], sizes = [6, 8, 16], strides = [1, 1, 1]} : vector<6x8x192xbf16> to vector<6x8x16xbf16>
    %21 = vector.extract_strided_slice %18 {offsets = [0, 0, 64], sizes = [6, 8, 16], strides = [1, 1, 1]} : vector<6x8x192xbf16> to vector<6x8x16xbf16>
    %22 = vector.extract_strided_slice %18 {offsets = [0, 0, 128], sizes = [6, 8, 16], strides = [1, 1, 1]} : vector<6x8x192xbf16> to vector<6x8x16xbf16>
    "tpu.trace_start"() <{level = 10 : i32, message = "bqd,bkd->bqk"}> : () -> ()
    %cst_12 = arith.constant dense<0.000000e+00> : vector<6x8x8xf32>
    %23 = tpu.matmul %20, %21, %cst_12 {dimension_numbers = #tpu.dot_dimension_numbers<[2], [2], [1], [1], [0, 0, 0, 1, 1, 1], [0], [0]>} : vector<6x8x16xbf16>, vector<6x8x16xbf16>, vector<6x8x8xf32> -> vector<6x8x8xf32>
    "tpu.trace_stop"() : () -> ()
    %24 = vector.broadcast %19 : vector<6x1x8xf32> to vector<6x8x8xf32>
    %25 = arith.addf %23, %24 : vector<6x8x8xf32>
    %cst_13 = arith.constant dense<0xFF800000> : vector<6x8xf32>
    %26 = vector.multi_reduction <maximumf>, %25, %cst_13 [2] : vector<6x8x8xf32> to vector<6x8xf32>
    %27 = vector.shape_cast %26 : vector<6x8xf32> to vector<6x8x1xf32>
    %28 = vector.broadcast %27 : vector<6x8x1xf32> to vector<6x8x8xf32>
    %29 = arith.subf %25, %28 : vector<6x8x8xf32>
    %30 = math.exp %29 : vector<6x8x8xf32>
    %cst_14 = arith.constant dense<0.000000e+00> : vector<6x8xf32>
    %31 = vector.multi_reduction <add>, %30, %cst_14 [2] : vector<6x8x8xf32> to vector<6x8xf32>
    %32 = vector.shape_cast %31 : vector<6x8xf32> to vector<6x8x1xf32>
    %33 = tpu.reciprocal %32 {approx = true} : vector<6x8x1xf32> -> vector<6x8x1xf32>
    %34 = vector.broadcast %33 : vector<6x8x1xf32> to vector<6x8x8xf32>
    %35 = arith.mulf %30, %34 : vector<6x8x8xf32>
    %36 = arith.truncf %35 : vector<6x8x8xf32> to vector<6x8x8xbf16>
    "tpu.trace_start"() <{level = 10 : i32, message = "bqk,bkd->bqd"}> : () -> ()
    %cst_15 = arith.constant dense<0.000000e+00> : vector<6x8x16xf32>
    %37 = tpu.matmul %36, %22, %cst_15 {dimension_numbers = #tpu.dot_dimension_numbers<[2], [1], [1], [2], [0, 0, 0, 1, 1, 2], [0], [0]>} : vector<6x8x8xbf16>, vector<6x8x16xbf16>, vector<6x8x16xf32> -> vector<6x8x16xf32>
    "tpu.trace_stop"() : () -> ()
    %38 = arith.truncf %37 : vector<6x8x16xf32> to vector<6x8x16xbf16>
    %c0_16 = arith.constant 0 : index
    %c0_17 = arith.constant 0 : index
    %c0_18 = arith.constant 0 : index
    %39 = vector.load %arg18[%c0_16, %c0_17, %c0_18] : memref<6x8x64xbf16, #tpu.memory_space<vmem>>, vector<6x8x16xbf16>
    tpu.vector_store %arg18[%c0_16, %c0_17, %c0_18], %38 {strides = array<i32>} : memref<6x8x64xbf16, #tpu.memory_space<vmem>>, vector<6x8x16xbf16>,
    %40 = vector.extract_strided_slice %18 {offsets = [0, 0, 16], sizes = [6, 8, 16], strides = [1, 1, 1]} : vector<6x8x192xbf16> to vector<6x8x16xbf16>
    %41 = vector.extract_strided_slice %18 {offsets = [0, 0, 80], sizes = [6, 8, 16], strides = [1, 1, 1]} : vector<6x8x192xbf16> to vector<6x8x16xbf16>
    %42 = vector.extract_strided_slice %18 {offsets = [0, 0, 144], sizes = [6, 8, 16], strides = [1, 1, 1]} : vector<6x8x192xbf16> to vector<6x8x16xbf16>
    "tpu.trace_start"() <{level = 10 : i32, message = "bqd,bkd->bqk"}> : () -> ()
    %cst_19 = arith.constant dense<0.000000e+00> : vector<6x8x8xf32>
    %43 = tpu.matmul %40, %41, %cst_19 {dimension_numbers = #tpu.dot_dimension_numbers<[2], [2], [1], [1], [0, 0, 0, 1, 1, 1], [0], [0]>} : vector<6x8x16xbf16>, vector<6x8x16xbf16>, vector<6x8x8xf32> -> vector<6x8x8xf32>
    "tpu.trace_stop"() : () -> ()
    %44 = vector.broadcast %19 : vector<6x1x8xf32> to vector<6x8x8xf32>
    %45 = arith.addf %43, %44 : vector<6x8x8xf32>
    %cst_20 = arith.constant dense<0xFF800000> : vector<6x8xf32>
    %46 = vector.multi_reduction <maximumf>, %45, %cst_20 [2] : vector<6x8x8xf32> to vector<6x8xf32>
    %47 = vector.shape_cast %46 : vector<6x8xf32> to vector<6x8x1xf32>
    %48 = vector.broadcast %47 : vector<6x8x1xf32> to vector<6x8x8xf32>
    %49 = arith.subf %45, %48 : vector<6x8x8xf32>
    %50 = math.exp %49 : vector<6x8x8xf32>
    %cst_21 = arith.constant dense<0.000000e+00> : vector<6x8xf32>
    %51 = vector.multi_reduction <add>, %50, %cst_21 [2] : vector<6x8x8xf32> to vector<6x8xf32>
    %52 = vector.shape_cast %51 : vector<6x8xf32> to vector<6x8x1xf32>
    %53 = tpu.reciprocal %52 {approx = true} : vector<6x8x1xf32> -> vector<6x8x1xf32>
    %54 = vector.broadcast %53 : vector<6x8x1xf32> to vector<6x8x8xf32>
    %55 = arith.mulf %50, %54 : vector<6x8x8xf32>
    %56 = arith.truncf %55 : vector<6x8x8xf32> to vector<6x8x8xbf16>
    "tpu.trace_start"() <{level = 10 : i32, message = "bqk,bkd->bqd"}> : () -> ()
    %cst_22 = arith.constant dense<0.000000e+00> : vector<6x8x16xf32>
    %57 = tpu.matmul %56, %42, %cst_22 {dimension_numbers = #tpu.dot_dimension_numbers<[2], [1], [1], [2], [0, 0, 0, 1, 1, 2], [0], [0]>} : vector<6x8x8xbf16>, vector<6x8x16xbf16>, vector<6x8x16xf32> -> vector<6x8x16xf32>
    "tpu.trace_stop"() : () -> ()
    %58 = arith.truncf %57 : vector<6x8x16xf32> to vector<6x8x16xbf16>
    %c0_23 = arith.constant 0 : index
    %c0_24 = arith.constant 0 : index
    %c16 = arith.constant 16 : index
    %59 = vector.load %arg18[%c0_23, %c0_24, %c16] : memref<6x8x64xbf16, #tpu.memory_space<vmem>>, vector<6x8x16xbf16>
    tpu.vector_store %arg18[%c0_23, %c0_24, %c16], %58 {strides = array<i32>} : memref<6x8x64xbf16, #tpu.memory_space<vmem>>, vector<6x8x16xbf16>,
    %60 = vector.extract_strided_slice %18 {offsets = [0, 0, 32], sizes = [6, 8, 16], strides = [1, 1, 1]} : vector<6x8x192xbf16> to vector<6x8x16xbf16>
    %61 = vector.extract_strided_slice %18 {offsets = [0, 0, 96], sizes = [6, 8, 16], strides = [1, 1, 1]} : vector<6x8x192xbf16> to vector<6x8x16xbf16>
    %62 = vector.extract_strided_slice %18 {offsets = [0, 0, 160], sizes = [6, 8, 16], strides = [1, 1, 1]} : vector<6x8x192xbf16> to vector<6x8x16xbf16>
    "tpu.trace_start"() <{level = 10 : i32, message = "bqd,bkd->bqk"}> : () -> ()
    %cst_25 = arith.constant dense<0.000000e+00> : vector<6x8x8xf32>
    %63 = tpu.matmul %60, %61, %cst_25 {dimension_numbers = #tpu.dot_dimension_numbers<[2], [2], [1], [1], [0, 0, 0, 1, 1, 1], [0], [0]>} : vector<6x8x16xbf16>, vector<6x8x16xbf16>, vector<6x8x8xf32> -> vector<6x8x8xf32>
    "tpu.trace_stop"() : () -> ()
    %64 = vector.broadcast %19 : vector<6x1x8xf32> to vector<6x8x8xf32>
    %65 = arith.addf %63, %64 : vector<6x8x8xf32>
    %cst_26 = arith.constant dense<0xFF800000> : vector<6x8xf32>
    %66 = vector.multi_reduction <maximumf>, %65, %cst_26 [2] : vector<6x8x8xf32> to vector<6x8xf32>
    %67 = vector.shape_cast %66 : vector<6x8xf32> to vector<6x8x1xf32>
    %68 = vector.broadcast %67 : vector<6x8x1xf32> to vector<6x8x8xf32>
    %69 = arith.subf %65, %68 : vector<6x8x8xf32>
    %70 = math.exp %69 : vector<6x8x8xf32>
    %cst_27 = arith.constant dense<0.000000e+00> : vector<6x8xf32>
    %71 = vector.multi_reduction <add>, %70, %cst_27 [2] : vector<6x8x8xf32> to vector<6x8xf32>
    %72 = vector.shape_cast %71 : vector<6x8xf32> to vector<6x8x1xf32>
    %73 = tpu.reciprocal %72 {approx = true} : vector<6x8x1xf32> -> vector<6x8x1xf32>
    %74 = vector.broadcast %73 : vector<6x8x1xf32> to vector<6x8x8xf32>
    %75 = arith.mulf %70, %74 : vector<6x8x8xf32>
    %76 = arith.truncf %75 : vector<6x8x8xf32> to vector<6x8x8xbf16>
    "tpu.trace_start"() <{level = 10 : i32, message = "bqk,bkd->bqd"}> : () -> ()
    %cst_28 = arith.constant dense<0.000000e+00> : vector<6x8x16xf32>
    %77 = tpu.matmul %76, %62, %cst_28 {dimension_numbers = #tpu.dot_dimension_numbers<[2], [1], [1], [2], [0, 0, 0, 1, 1, 2], [0], [0]>} : vector<6x8x8xbf16>, vector<6x8x16xbf16>, vector<6x8x16xf32> -> vector<6x8x16xf32>
    "tpu.trace_stop"() : () -> ()
    %78 = arith.truncf %77 : vector<6x8x16xf32> to vector<6x8x16xbf16>
    %c0_29 = arith.constant 0 : index
    %c0_30 = arith.constant 0 : index
    %c32 = arith.constant 32 : index
    %79 = vector.load %arg18[%c0_29, %c0_30, %c32] : memref<6x8x64xbf16, #tpu.memory_space<vmem>>, vector<6x8x16xbf16>
    tpu.vector_store %arg18[%c0_29, %c0_30, %c32], %78 {strides = array<i32>} : memref<6x8x64xbf16, #tpu.memory_space<vmem>>, vector<6x8x16xbf16>,
    %80 = vector.extract_strided_slice %18 {offsets = [0, 0, 48], sizes = [6, 8, 16], strides = [1, 1, 1]} : vector<6x8x192xbf16> to vector<6x8x16xbf16>
    %81 = vector.extract_strided_slice %18 {offsets = [0, 0, 112], sizes = [6, 8, 16], strides = [1, 1, 1]} : vector<6x8x192xbf16> to vector<6x8x16xbf16>
    %82 = vector.extract_strided_slice %18 {offsets = [0, 0, 176], sizes = [6, 8, 16], strides = [1, 1, 1]} : vector<6x8x192xbf16> to vector<6x8x16xbf16>
    "tpu.trace_start"() <{level = 10 : i32, message = "bqd,bkd->bqk"}> : () -> ()
    %cst_31 = arith.constant dense<0.000000e+00> : vector<6x8x8xf32>
    %83 = tpu.matmul %80, %81, %cst_31 {dimension_numbers = #tpu.dot_dimension_numbers<[2], [2], [1], [1], [0, 0, 0, 1, 1, 1], [0], [0]>} : vector<6x8x16xbf16>, vector<6x8x16xbf16>, vector<6x8x8xf32> -> vector<6x8x8xf32>
    "tpu.trace_stop"() : () -> ()
    %84 = vector.broadcast %19 : vector<6x1x8xf32> to vector<6x8x8xf32>
    %85 = arith.addf %83, %84 : vector<6x8x8xf32>
    %cst_32 = arith.constant dense<0xFF800000> : vector<6x8xf32>
    %86 = vector.multi_reduction <maximumf>, %85, %cst_32 [2] : vector<6x8x8xf32> to vector<6x8xf32>
    %87 = vector.shape_cast %86 : vector<6x8xf32> to vector<6x8x1xf32>
    %88 = vector.broadcast %87 : vector<6x8x1xf32> to vector<6x8x8xf32>
    %89 = arith.subf %85, %88 : vector<6x8x8xf32>
    %90 = math.exp %89 : vector<6x8x8xf32>
    %cst_33 = arith.constant dense<0.000000e+00> : vector<6x8xf32>
    %91 = vector.multi_reduction <add>, %90, %cst_33 [2] : vector<6x8x8xf32> to vector<6x8xf32>
    %92 = vector.shape_cast %91 : vector<6x8xf32> to vector<6x8x1xf32>
    %93 = tpu.reciprocal %92 {approx = true} : vector<6x8x1xf32> -> vector<6x8x1xf32>
    %94 = vector.broadcast %93 : vector<6x8x1xf32> to vector<6x8x8xf32>
    %95 = arith.mulf %90, %94 : vector<6x8x8xf32>
    %96 = arith.truncf %95 : vector<6x8x8xf32> to vector<6x8x8xbf16>
    "tpu.trace_start"() <{level = 10 : i32, message = "bqk,bkd->bqd"}> : () -> ()
    %cst_34 = arith.constant dense<0.000000e+00> : vector<6x8x16xf32>
    %97 = tpu.matmul %96, %82, %cst_34 {dimension_numbers = #tpu.dot_dimension_numbers<[2], [1], [1], [2], [0, 0, 0, 1, 1, 2], [0], [0]>} : vector<6x8x8xbf16>, vector<6x8x16xbf16>, vector<6x8x16xf32> -> vector<6x8x16xf32>
    "tpu.trace_stop"() : () -> ()
    %98 = arith.truncf %97 : vector<6x8x16xf32> to vector<6x8x16xbf16>
    %c0_35 = arith.constant 0 : index
    %c0_36 = arith.constant 0 : index
    %c48 = arith.constant 48 : index
    %99 = vector.load %arg18[%c0_35, %c0_36, %c48] : memref<6x8x64xbf16, #tpu.memory_space<vmem>>, vector<6x8x16xbf16>
    tpu.vector_store %arg18[%c0_35, %c0_36, %c48], %98 {strides = array<i32>} : memref<6x8x64xbf16, #tpu.memory_space<vmem>>, vector<6x8x16xbf16>,
    %c0_37 = arith.constant 0 : index
    %c0_38 = arith.constant 0 : index
    %c0_39 = arith.constant 0 : index
    %100 = vector.load %arg18[%c0_37, %c0_38, %c0_39] : memref<6x8x64xbf16, #tpu.memory_space<vmem>>, vector<6x8x64xbf16>
    %101 = vector.shape_cast %100 : vector<6x8x64xbf16> to vector<48x64xbf16>
    %c0_40 = arith.constant 0 : index
    %c0_41 = arith.constant 0 : index
    %102 = vector.load %arg6[%c0_40, %c0_41] : memref<64x64xbf16, #tpu.memory_space<vmem>>, vector<64x64xbf16>
    %cst_42 = arith.constant dense<0.000000e+00> : vector<48x64xf32>
    %103 = tpu.matmul %101, %102, %cst_42 {dimension_numbers = #tpu.dot_dimension_numbers<[1], [0], [0], [1], [0, 0, 1, 1], [], []>} : vector<48x64xbf16>, vector<64x64xbf16>, vector<48x64xf32> -> vector<48x64xf32>
    %c0_43 = arith.constant 0 : index
    %c0_44 = arith.constant 0 : index
    %104 = vector.load %arg7[%c0_43, %c0_44] : memref<1x64xf32, #tpu.memory_space<vmem>>, vector<1x64xf32>
    %105 = vector.broadcast %104 : vector<1x64xf32> to vector<48x64xf32>
    %106 = arith.addf %103, %105 : vector<48x64xf32>
    %107 = arith.addf %106, %11 : vector<48x64xf32>
    %c0_45 = arith.constant 0 : index
    %c0_46 = arith.constant 0 : index
    %108 = vector.load %arg8[%c0_45, %c0_46] : memref<1x64xf32, #tpu.memory_space<vmem>>, vector<1x64xf32>
    %c0_47 = arith.constant 0 : index
    %c0_48 = arith.constant 0 : index
    %109 = vector.load %arg9[%c0_47, %c0_48] : memref<1x64xf32, #tpu.memory_space<vmem>>, vector<1x64xf32>
    %cst_49 = arith.constant dense<0.000000e+00> : vector<48xf32>
    %110 = vector.multi_reduction <add>, %107, %cst_49 [1] : vector<48x64xf32> to vector<48xf32>
    %111 = vector.shape_cast %110 : vector<48xf32> to vector<48x1xf32>
    %cst_50 = arith.constant 6.400000e+01 : f32
    %112 = vector.broadcast %cst_50 : f32 to vector<48x1xf32>
    %113 = arith.divf %111, %112 : vector<48x1xf32>
    %114 = vector.broadcast %113 : vector<48x1xf32> to vector<48x64xf32>
    %115 = arith.subf %107, %114 : vector<48x64xf32>
    %116 = arith.mulf %115, %115 : vector<48x64xf32>
    %cst_51 = arith.constant dense<0.000000e+00> : vector<48xf32>
    %117 = vector.multi_reduction <add>, %116, %cst_51 [1] : vector<48x64xf32> to vector<48xf32>
    %118 = vector.shape_cast %117 : vector<48xf32> to vector<48x1xf32>
    %cst_52 = arith.constant 6.400000e+01 : f32
    %119 = vector.broadcast %cst_52 : f32 to vector<48x1xf32>
    %120 = arith.divf %118, %119 : vector<48x1xf32>
    %121 = vector.broadcast %113 : vector<48x1xf32> to vector<48x64xf32>
    %122 = arith.subf %107, %121 : vector<48x64xf32>
    %cst_53 = arith.constant 9.99999996E-13 : f32
    %123 = vector.broadcast %cst_53 : f32 to vector<48x1xf32>
    %124 = arith.addf %120, %123 : vector<48x1xf32>
    %125 = math.rsqrt %124 : vector<48x1xf32>
    %126 = vector.broadcast %125 : vector<48x1xf32> to vector<48x64xf32>
    %127 = arith.mulf %122, %126 : vector<48x64xf32>
    %128 = vector.broadcast %108 : vector<1x64xf32> to vector<48x64xf32>
    %129 = arith.mulf %127, %128 : vector<48x64xf32>
    %130 = vector.broadcast %109 : vector<1x64xf32> to vector<48x64xf32>
    %131 = arith.addf %129, %130 : vector<48x64xf32>
    %132 = arith.truncf %131 : vector<48x64xf32> to vector<48x64xbf16>
    %c0_54 = arith.constant 0 : index
    %c0_55 = arith.constant 0 : index
    %133 = vector.load %arg10[%c0_54, %c0_55] : memref<64x128xbf16, #tpu.memory_space<vmem>>, vector<64x128xbf16>
    %cst_56 = arith.constant dense<0.000000e+00> : vector<48x128xf32>
    %134 = tpu.matmul %132, %133, %cst_56 {dimension_numbers = #tpu.dot_dimension_numbers<[1], [0], [0], [1], [0, 0, 1, 1], [], []>} : vector<48x64xbf16>, vector<64x128xbf16>, vector<48x128xf32> -> vector<48x128xf32>
    %c0_57 = arith.constant 0 : index
    %c0_58 = arith.constant 0 : index
    %135 = vector.load %arg11[%c0_57, %c0_58] : memref<1x128xf32, #tpu.memory_space<vmem>>, vector<1x128xf32>
    %136 = vector.broadcast %135 : vector<1x128xf32> to vector<48x128xf32>
    %137 = arith.addf %134, %136 : vector<48x128xf32>
    %138 = arith.mulf %137, %137 : vector<48x128xf32>
    %139 = arith.mulf %137, %138 : vector<48x128xf32>
    %cst_59 = arith.constant 4.471500e-02 : f32
    %140 = vector.broadcast %cst_59 : f32 to vector<48x128xf32>
    %141 = arith.mulf %140, %139 : vector<48x128xf32>
    %142 = arith.addf %137, %141 : vector<48x128xf32>
    %cst_60 = arith.constant 0.797884583 : f32
    %143 = vector.broadcast %cst_60 : f32 to vector<48x128xf32>
    %144 = arith.mulf %143, %142 : vector<48x128xf32>
    %145 = math.tanh %144 : vector<48x128xf32>
    %cst_61 = arith.constant 1.000000e+00 : f32
    %146 = vector.broadcast %cst_61 : f32 to vector<48x128xf32>
    %147 = arith.addf %146, %145 : vector<48x128xf32>
    %cst_62 = arith.constant 5.000000e-01 : f32
    %148 = vector.broadcast %cst_62 : f32 to vector<48x128xf32>
    %149 = arith.mulf %148, %147 : vector<48x128xf32>
    %150 = arith.mulf %137, %149 : vector<48x128xf32>
    %151 = arith.truncf %150 : vector<48x128xf32> to vector<48x128xbf16>
    %c0_63 = arith.constant 0 : index
    %c0_64 = arith.constant 0 : index
    %152 = vector.load %arg12[%c0_63, %c0_64] : memref<128x64xbf16, #tpu.memory_space<vmem>>, vector<128x64xbf16>
    %cst_65 = arith.constant dense<0.000000e+00> : vector<48x64xf32>
    %153 = tpu.matmul %151, %152, %cst_65 {dimension_numbers = #tpu.dot_dimension_numbers<[1], [0], [0], [1], [0, 0, 1, 1], [], []>} : vector<48x128xbf16>, vector<128x64xbf16>, vector<48x64xf32> -> vector<48x64xf32>
    %c0_66 = arith.constant 0 : index
    %c0_67 = arith.constant 0 : index
    %154 = vector.load %arg13[%c0_66, %c0_67] : memref<1x64xf32, #tpu.memory_space<vmem>>, vector<1x64xf32>
    %155 = vector.broadcast %154 : vector<1x64xf32> to vector<48x64xf32>
    %156 = arith.addf %153, %155 : vector<48x64xf32>
    %157 = arith.addf %156, %131 : vector<48x64xf32>
    %c0_68 = arith.constant 0 : index
    %c0_69 = arith.constant 0 : index
    %158 = vector.load %arg14[%c0_68, %c0_69] : memref<1x64xf32, #tpu.memory_space<vmem>>, vector<1x64xf32>
    %c0_70 = arith.constant 0 : index
    %c0_71 = arith.constant 0 : index
    %159 = vector.load %arg15[%c0_70, %c0_71] : memref<1x64xf32, #tpu.memory_space<vmem>>, vector<1x64xf32>
    %cst_72 = arith.constant dense<0.000000e+00> : vector<48xf32>
    %160 = vector.multi_reduction <add>, %157, %cst_72 [1] : vector<48x64xf32> to vector<48xf32>
    %161 = vector.shape_cast %160 : vector<48xf32> to vector<48x1xf32>
    %cst_73 = arith.constant 6.400000e+01 : f32
    %162 = vector.broadcast %cst_73 : f32 to vector<48x1xf32>
    %163 = arith.divf %161, %162 : vector<48x1xf32>
    %164 = vector.broadcast %163 : vector<48x1xf32> to vector<48x64xf32>
    %165 = arith.subf %157, %164 : vector<48x64xf32>
    %166 = arith.mulf %165, %165 : vector<48x64xf32>
    %cst_74 = arith.constant dense<0.000000e+00> : vector<48xf32>
    %167 = vector.multi_reduction <add>, %166, %cst_74 [1] : vector<48x64xf32> to vector<48xf32>
    %168 = vector.shape_cast %167 : vector<48xf32> to vector<48x1xf32>
    %cst_75 = arith.constant 6.400000e+01 : f32
    %169 = vector.broadcast %cst_75 : f32 to vector<48x1xf32>
    %170 = arith.divf %168, %169 : vector<48x1xf32>
    %171 = vector.broadcast %163 : vector<48x1xf32> to vector<48x64xf32>
    %172 = arith.subf %157, %171 : vector<48x64xf32>
    %cst_76 = arith.constant 9.99999996E-13 : f32
    %173 = vector.broadcast %cst_76 : f32 to vector<48x1xf32>
    %174 = arith.addf %170, %173 : vector<48x1xf32>
    %175 = math.rsqrt %174 : vector<48x1xf32>
    %176 = vector.broadcast %175 : vector<48x1xf32> to vector<48x64xf32>
    %177 = arith.mulf %172, %176 : vector<48x64xf32>
    %178 = vector.broadcast %158 : vector<1x64xf32> to vector<48x64xf32>
    %179 = arith.mulf %177, %178 : vector<48x64xf32>
    %180 = vector.broadcast %159 : vector<1x64xf32> to vector<48x64xf32>
    %181 = arith.addf %179, %180 : vector<48x64xf32>
    %182 = vector.shape_cast %181 : vector<48x64xf32> to vector<6x8x64xf32>
    %183 = arith.truncf %182 : vector<6x8x64xf32> to vector<6x8x64xbf16>
    %c0_77 = arith.constant 0 : index
    %c0_78 = arith.constant 0 : index
    %c0_79 = arith.constant 0 : index
    %184 = vector.load %arg16[%c0_77, %c0_78, %c0_79] : memref<6x8x64xbf16, #tpu.memory_space<vmem>>, vector<6x8x64xbf16>
    tpu.vector_store %arg16[%c0_77, %c0_78, %c0_79], %183 {strides = array<i32>} : memref<6x8x64xbf16, #tpu.memory_space<vmem>>, vector<6x8x64xbf16>,
    %185 = vector.extract_strided_slice %183 {offsets = [0, 1, 0], sizes = [6, 1, 64], strides = [1, 1, 1]} : vector<6x8x64xbf16> to vector<6x1x64xbf16>
    %c0_80 = arith.constant 0 : index
    %c0_81 = arith.constant 0 : index
    %c0_82 = arith.constant 0 : index
    %186 = vector.load %arg17[%c0_80, %c0_81, %c0_82] : memref<6x1x64xbf16, #tpu.memory_space<vmem>>, vector<6x1x64xbf16>
    tpu.vector_store %arg17[%c0_80, %c0_81, %c0_82], %185 {strides = array<i32>} : memref<6x1x64xbf16, #tpu.memory_space<vmem>>, vector<6x1x64xbf16>,
    return
  }
  func.func @transform_0(%arg0: i32) -> (i32, i32, i32) {
    %c0_i32 = arith.constant 0 : i32
    %c0_i32_0 = arith.constant 0 : i32
    %c0_i32_1 = arith.constant 0 : i32
    return %arg0, %c0_i32, %c0_i32_0 : i32, i32, i32
  }
  func.func @transform_1(%arg0: i32) -> (i32, i32, i32) {
    %c0_i32 = arith.constant 0 : i32
    %c0_i32_0 = arith.constant 0 : i32
    %c0_i32_1 = arith.constant 0 : i32
    return %arg0, %c0_i32, %c0_i32_0 : i32, i32, i32
  }
  func.func @transform_2(%arg0: i32) -> (i32, i32, i32) {
    %c0_i32 = arith.constant 0 : i32
    %c0_i32_0 = arith.constant 0 : i32
    %c0_i32_1 = arith.constant 0 : i32
    return %arg0, %c0_i32, %c0_i32_0 : i32, i32, i32
  }
  func.func @transform_3(%arg0: i32) -> (i32, i32) {
    %c0_i32 = arith.constant 0 : i32
    %c0_i32_0 = arith.constant 0 : i32
    %c0_i32_1 = arith.constant 0 : i32
    return %c0_i32, %c0_i32_0 : i32, i32
  }
  func.func @transform_4(%arg0: i32) -> (i32, i32) {
    %c0_i32 = arith.constant 0 : i32
    %c0_i32_0 = arith.constant 0 : i32
    %c0_i32_1 = arith.constant 0 : i32
    return %c0_i32, %c0_i32_0 : i32, i32
  }
  func.func @transform_5(%arg0: i32) -> (i32, i32) {
    %c0_i32 = arith.constant 0 : i32
    %c0_i32_0 = arith.constant 0 : i32
    %c0_i32_1 = arith.constant 0 : i32
    return %c0_i32, %c0_i32_0 : i32, i32
  }
  func.func @transform_6(%arg0: i32) -> (i32, i32) {
    %c0_i32 = arith.constant 0 : i32
    %c0_i32_0 = arith.constant 0 : i32
    %c0_i32_1 = arith.constant 0 : i32
    return %c0_i32, %c0_i32_0 : i32, i32
  }
  func.func @transform_7(%arg0: i32) -> (i32, i32) {
    %c0_i32 = arith.constant 0 : i32
    %c0_i32_0 = arith.constant 0 : i32
    %c0_i32_1 = arith.constant 0 : i32
    return %c0_i32, %c0_i32_0 : i32, i32
  }
  func.func @transform_8(%arg0: i32) -> (i32, i32) {
    %c0_i32 = arith.constant 0 : i32
    %c0_i32_0 = arith.constant 0 : i32
    %c0_i32_1 = arith.constant 0 : i32
    return %c0_i32, %c0_i32_0 : i32, i32
  }
  func.func @transform_9(%arg0: i32) -> (i32, i32) {
    %c0_i32 = arith.constant 0 : i32
    %c0_i32_0 = arith.constant 0 : i32
    %c0_i32_1 = arith.constant 0 : i32
    return %c0_i32, %c0_i32_0 : i32, i32
  }
  func.func @transform_10(%arg0: i32) -> (i32, i32) {
    %c0_i32 = arith.constant 0 : i32
    %c0_i32_0 = arith.constant 0 : i32
    %c0_i32_1 = arith.constant 0 : i32
    return %c0_i32, %c0_i32_0 : i32, i32
  }
  func.func @transform_11(%arg0: i32) -> (i32, i32) {
    %c0_i32 = arith.constant 0 : i32
    %c0_i32_0 = arith.constant 0 : i32
    %c0_i32_1 = arith.constant 0 : i32
    return %c0_i32, %c0_i32_0 : i32, i32
  }
  func.func @transform_12(%arg0: i32) -> (i32, i32) {
    %c0_i32 = arith.constant 0 : i32
    %c0_i32_0 = arith.constant 0 : i32
    %c0_i32_1 = arith.constant 0 : i32
    return %c0_i32, %c0_i32_0 : i32, i32
  }
  func.func @transform_13(%arg0: i32) -> (i32, i32) {
    %c0_i32 = arith.constant 0 : i32
    %c0_i32_0 = arith.constant 0 : i32
    %c0_i32_1 = arith.constant 0 : i32
    return %c0_i32, %c0_i32_0 : i32, i32
  }
  func.func @transform_14(%arg0: i32) -> (i32, i32) {
    %c0_i32 = arith.constant 0 : i32
    %c0_i32_0 = arith.constant 0 : i32
    %c0_i32_1 = arith.constant 0 : i32
    return %c0_i32, %c0_i32_0 : i32, i32
  }
  func.func @transform_15(%arg0: i32) -> (i32, i32, i32) {
    %c0_i32 = arith.constant 0 : i32
    %c0_i32_0 = arith.constant 0 : i32
    %c0_i32_1 = arith.constant 0 : i32
    return %arg0, %c0_i32, %c0_i32_0 : i32, i32, i32
  }
  func.func @transform_16(%arg0: i32) -> (i32, i32, i32) {
    %c0_i32 = arith.constant 0 : i32
    %c0_i32_0 = arith.constant 0 : i32
    %c0_i32_1 = arith.constant 0 : i32
    return %arg0, %c0_i32, %c0_i32_0 : i32, i32, i32
  }
}

</mosaic_0001>

<llo_original>
// kernel: _lambda_.5
$region0: #{_lambda_.5}
  #allocation0 [shape = 'u32[]', space=smem, size = 0x4, offset = 0x4, fixed_abs, tag = 'smem constant byte address 0x4 - core index']
  #allocation1 [shape = 'u32[144,128]{1,0:T(1,128)}', space=vmem, size = 0x12000, scoped, tag = 'internal scratch']
  #allocation2 [shape = 'bf16[2,4,64]{2,1,0:T(4,128)(2,1)}', space=vmem, size = 0x800, scoped, tag = 'scratch operand']
  %s0 = inlined_call_operand.vmem [shape: bf16[2,4,64], index: 0, kind: input, shape index: {}]
  %s1 = inlined_call_operand.vmem [shape: f32[2,1,4], index: 1, kind: input, shape index: {}]
  %s2 = inlined_call_operand.vmem [shape: bf16[64,192], index: 2, kind: input, shape index: {}]
  %s3 = inlined_call_operand.vmem [shape: f32[1,192], index: 3, kind: input, shape index: {}]
  %s4 = inlined_call_operand.vmem [shape: bf16[64,64], index: 4, kind: input, shape index: {}]
  %s5 = inlined_call_operand.vmem [shape: f32[1,64], index: 5, kind: input, shape index: {}]
  %s6 = inlined_call_operand.vmem [shape: f32[1,64], index: 6, kind: input, shape index: {}]
  %s7 = inlined_call_operand.vmem [shape: f32[1,64], index: 7, kind: input, shape index: {}]
  %s8 = inlined_call_operand.vmem [shape: bf16[64,128], index: 8, kind: input, shape index: {}]
  %s9 = inlined_call_operand.vmem [shape: f32[1,128], index: 9, kind: input, shape index: {}]
  %s10 = inlined_call_operand.vmem [shape: bf16[128,64], index: 10, kind: input, shape index: {}]
  %s11 = inlined_call_operand.vmem [shape: f32[1,64], index: 11, kind: input, shape index: {}]
  %s12 = inlined_call_operand.vmem [shape: f32[1,64], index: 12, kind: input, shape index: {}]
  %s13 = inlined_call_operand.vmem [shape: f32[1,64], index: 13, kind: input, shape index: {}]
  %s14 = inlined_call_operand.vmem [shape: bf16[2,4,64], index: 14, kind: output, shape index: {}]
  %s15 = sld [smem:[#allocation0]]
  $region66: #{_lambda_.5} parent=0
    _
  %s17 = ssub.s32 1, %s15
  %s18 = scalar_select 0, %s17, %s15
  // Predicated region
  $region2: #{_lambda_.5} parent=0 // pred_check
    _
  $region3: #{_lambda_.5} parent=0 // pred_check_branch
    %20 = sbr.rel (0) target = $region5
  $region4: #{_lambda_.5} parent=0 // pred_region
    _
  $region5: #{_lambda_.5} parent=0 // pred_fallthru
    _
  // Predicated region
  $region6: #{_lambda_.5} parent=0 // pred_check
    _
  $region7: #{_lambda_.5} parent=0 // pred_check_branch
    %22 = sbr.rel (0) target = $region9
  $region8: #{_lambda_.5} parent=0 // pred_region
    _
  $region9: #{_lambda_.5} parent=0 // pred_fallthru
    _
  // Predicated region
  $region10: #{_lambda_.5} parent=0 // pred_check
    _
  $region11: #{_lambda_.5} parent=0 // pred_check_branch
    %24 = sbr.rel (0) target = $region13
  $region12: #{_lambda_.5} parent=0 // pred_region
    _
  $region13: #{_lambda_.5} parent=0 // pred_fallthru
    _
  // Predicated region
  $region14: #{_lambda_.5} parent=0 // pred_check
    _
  $region15: #{_lambda_.5} parent=0 // pred_check_branch
    %26 = sbr.rel (0) target = $region17
  $region16: #{_lambda_.5} parent=0 // pred_region
    _
  $region17: #{_lambda_.5} parent=0 // pred_fallthru
    _
  // Predicated region
  $region18: #{_lambda_.5} parent=0 // pred_check
    _
  $region19: #{_lambda_.5} parent=0 // pred_check_branch
    %28 = sbr.rel (0) target = $region21
  $region20: #{_lambda_.5} parent=0 // pred_region
    _
  $region21: #{_lambda_.5} parent=0 // pred_fallthru
    _
  // Predicated region
  $region22: #{_lambda_.5} parent=0 // pred_check
    _
  $region23: #{_lambda_.5} parent=0 // pred_check_branch
    %30 = sbr.rel (0) target = $region25
  $region24: #{_lambda_.5} parent=0 // pred_region
    _
  $region25: #{_lambda_.5} parent=0 // pred_fallthru
    _
  // Predicated region
  $region26: #{_lambda_.5} parent=0 // pred_check
    _
  $region27: #{_lambda_.5} parent=0 // pred_check_branch
    %32 = sbr.rel (0) target = $region29
  $region28: #{_lambda_.5} parent=0 // pred_region
    _
  $region29: #{_lambda_.5} parent=0 // pred_fallthru
    _
  // Predicated region
  $region30: #{_lambda_.5} parent=0 // pred_check
    _
  $region31: #{_lambda_.5} parent=0 // pred_check_branch
    %34 = sbr.rel (0) target = $region33
  $region32: #{_lambda_.5} parent=0 // pred_region
    _
  $region33: #{_lambda_.5} parent=0 // pred_fallthru
    _
  // Predicated region
  $region34: #{_lambda_.5} parent=0 // pred_check
    _
  $region35: #{_lambda_.5} parent=0 // pred_check_branch
    %36 = sbr.rel (0) target = $region37
  $region36: #{_lambda_.5} parent=0 // pred_region
    _
  $region37: #{_lambda_.5} parent=0 // pred_fallthru
    _
  // Predicated region
  $region38: #{_lambda_.5} parent=0 // pred_check
    _
  $region39: #{_lambda_.5} parent=0 // pred_check_branch
    %38 = sbr.rel (0) target = $region41
  $region40: #{_lambda_.5} parent=0 // pred_region
    _
  $region41: #{_lambda_.5} parent=0 // pred_fallthru
    _
  // Predicated region
  $region42: #{_lambda_.5} parent=0 // pred_check
    _
  $region43: #{_lambda_.5} parent=0 // pred_check_branch
    %40 = sbr.rel (0) target = $region45
  $region44: #{_lambda_.5} parent=0 // pred_region
    _
  $region45: #{_lambda_.5} parent=0 // pred_fallthru
    _
  // Predicated region
  $region46: #{_lambda_.5} parent=0 // pred_check
    _
  $region47: #{_lambda_.5} parent=0 // pred_check_branch
    %42 = sbr.rel (0) target = $region49
  $region48: #{_lambda_.5} parent=0 // pred_region
    _
  $region49: #{_lambda_.5} parent=0 // pred_fallthru
    _
  // Predicated region
  $region50: #{_lambda_.5} parent=0 // pred_check
    _
  $region51: #{_lambda_.5} parent=0 // pred_check_branch
    %44 = sbr.rel (0) target = $region53
  $region52: #{_lambda_.5} parent=0 // pred_region
    _
  $region53: #{_lambda_.5} parent=0 // pred_fallthru
    _
  // Predicated region
  $region54: #{_lambda_.5} parent=0 // pred_check
    _
  $region55: #{_lambda_.5} parent=0 // pred_check_branch
    %46 = sbr.rel (0) target = $region57
  $region56: #{_lambda_.5} parent=0 // pred_region
    _
  $region57: #{_lambda_.5} parent=0 // pred_fallthru
    _
  %v48 = vld [vmem:[%s0] sm:$0x3]
  %v49 = vld [vmem:[%s0 + $0x2] sm:$0x3]
  %v50 = vunpack.c.l.bf16 %v48
  %v51 = vunpack.c.l.bf16 %v49
  %v52 = vld [vmem:[%s2] sm:$0xff]
  %v53 = vld [vmem:[%s2 + $0x8] sm:$0xff]
  %v54 = vld [vmem:[%s2 + $0x10] sm:$0xff]
  %v55 = vld [vmem:[%s2 + $0x18] sm:$0xff]
  %v56 = vld [vmem:[%s2 + $0x20] sm:$0xff]
  %v57 = vld [vmem:[%s2 + $0x28] sm:$0xff]
  %v58 = vld [vmem:[%s2 + $0x30] sm:$0xff]
  %v59 = vld [vmem:[%s2 + $0x38] sm:$0xff]
  %v60 = vld [vmem:[%s3] sm:$0x3]
  %v62 = vlaneseq
  %v63 = vshrl.u32 %v62, 7
  %v64 = vsub.s32 0, %v63
  %v65 = vrot.slane %v60, %v64
  %v66 = vlaneseq
  %v67 = vshrl.u32 %v66, 7
  %v68 = vsub.s32 1, %v67
  %v69 = vrot.slane %v60, %v68
  %v74 = vcombine.low %v48, %v49
  %v76 = vunpack.c.l.s4 1983009808
  %v77 = vunpack.c.0.s8 %v76
  %v78 = vlaneseq
  %v79 = vshrl.u32 %v78, 7
  %v80 = vsub.s32 %v77, %v79
  %v81 = vrot.slane %v74, %v80
  %v90 = vunpack.c.l.b16 %v52
  %v91 = vunpack.c.h.b16 %v52
  %v92 = vunpack.c.l.b16 %v53
  %v93 = vunpack.c.h.b16 %v53
  %v94 = vunpack.c.l.b16 %v54
  %v95 = vunpack.c.h.b16 %v54
  %v96 = vunpack.c.l.b16 %v55
  %v97 = vunpack.c.h.b16 %v55
  %v98 = vunpack.c.l.b16 %v56
  %v99 = vunpack.c.h.b16 %v56
  %v100 = vunpack.c.l.b16 %v57
  %v101 = vunpack.c.h.b16 %v57
  %v102 = vunpack.c.l.b16 %v58
  %v103 = vunpack.c.h.b16 %v58
  %v104 = vunpack.c.l.b16 %v59
  %v105 = vunpack.c.h.b16 %v59
  %v106 = vpack.c.b16 %v92, %v90
  %v107 = vpack.c.b16 %v93, %v91
  %v108 = vpack.c.b16 %v96, %v94
  %v109 = vpack.c.b16 %v97, %v95
  %v110 = vpack.c.b16 %v100, %v98
  %v111 = vpack.c.b16 %v101, %v99
  %v112 = vpack.c.b16 %v104, %v102
  %v113 = vpack.c.b16 %v105, %v103
  %vm122 = vcmask 523264
  %v124 = vsel %vm122, %v81, 0
  %126 = vmatprep.subr.bf16.mxu0 %v107
  %127 = vmatpush1.bf16.msra.mxu0 %v106
  %128 = vmatprep.subr.bf16.mxu0 %v109
  %129 = vmatpush1.bf16.msra.mxu0 %v108
  %130 = vmatprep.subr.bf16.mxu0 %v111
  %131 = vmatpush1.bf16.msra.mxu0 %v110
  %132 = vmatprep.subr.bf16.mxu0 %v113
  %133 = vmatpush1.bf16.msra.mxu0 %v112
  %134 = vmatprep.subr.bf16.mxu0 0
  %135 = vmatpush1.bf16.msra.mxu0 0
  %136 = vmatprep.subr.bf16.mxu0 0
  %137 = vmatpush1.bf16.msra.mxu0 0
  %138 = vmatprep.subr.bf16.mxu0 0
  %139 = vmatpush1.bf16.msra.mxu0 0
  %140 = vmatprep.subr.bf16.mxu0 0
  %141 = vmatpush1.bf16.msra.mxu0 0
  %142 = vmatprep.subr.bf16.mxu0 0
  %143 = vmatpush1.bf16.msra.mxu0 0
  %144 = vmatprep.subr.bf16.mxu0 0
  %145 = vmatpush1.bf16.msra.mxu0 0
  %146 = vmatprep.subr.bf16.mxu0 0
  %147 = vmatpush1.bf16.msra.mxu0 0
  %148 = vmatprep.subr.bf16.mxu0 0
  %149 = vmatpush1.bf16.msra.mxu0 0
  %150 = vmatprep.subr.bf16.mxu0 0
  %151 = vmatpush1.bf16.msra.mxu0 0
  %152 = vmatprep.subr.bf16.mxu0 0
  %153 = vmatpush1.bf16.msra.mxu0 0
  %154 = vmatprep.subr.bf16.mxu0 0
  %155 = vmatpush1.bf16.msra.mxu0 0
  %156 = vmatprep.subr.bf16.mxu0 0
  %157 = vmatpush1.bf16.msra.mxu0 0
  %158 = vmatprep.mubr.bf16.mxu0 0
  %159 = vmatmul.mubr.bf16.gmra.mrb[0].mxu0 %v124
  %v160 = vpop.f32.mrb[0].mxu0
  %v161 = vadd.f32 %v65, %v160
  %v162 = vpop.f32.mrb[0].mxu0
  %v163 = vadd.f32 %v69, %v162
  %v164 = vpop.f32.mrb[0].mxu0
  %v165 = vpop.f32.mrb[0].mxu0
  %166 = vdwg.mxu0
  %v167 = vpack.c.bf16 %v161, %v161
  %v168 = vpack.c.bf16 %v163, %v163
  %v171 = vcombine.low %v167, %v168
  %v173 = vunpack.c.l.s4 1983009808
  %v174 = vunpack.c.0.s8 %v173
  %v175 = vlaneseq
  %v176 = vshrl.u32 %v175, 7
  %v177 = vsub.s32 %v174, %v176
  %v178 = vrot.slane %v171, %v177
  %v179 = vcombine.high %v178, %v178
  %v180 = vld [vmem:[%s1] sm:$0x1]
  %v181 = vld [vmem:[%s1 + $0x1] sm:$0x1]
  %v184 = vlaneseq
  %v185 = vshrl.u32 %v184, 7
  %v186 = vsub.s32 0, %v185
  %v187 = vrot.slane %v180, %v186
  %v188 = vlaneseq
  %v189 = vshrl.u32 %v188, 7
  %v190 = vsub.s32 0, %v189
  %v191 = vrot.slane %v181, %v190
  %v195 = vunpack.c.l.s4 1983009808
  %v196 = vunpack.c.0.s8 %v195
  %v197 = vlaneseq
  %v198 = vshrl.u32 %v197, 7
  %v199 = vsub.s32 %v196, %v198
  %v200 = vrot.slane %v178, %v199
  %201 = vrot.lane.b32.xlu0 %v200, 64
  %v202 = vpop.permute.xlu0 %201
  %vm203 = vcmask 130048
  %v205 = vsel %vm203, %v178, 0
  %v208 = vsel %vm203, %v202, 0
  %210 = vmatprep.subr.bf16.mxu0 0
  %211 = vmatpush1.bf16.xpose.msra.mxu0 %v208
  %212 = vmatprep.subr.bf16.mxu0 0
  %213 = vmatpush1.bf16.xpose.msra.mxu0 0
  %214 = vmatprep.subr.bf16.mxu0 0
  %215 = vmatpush1.bf16.xpose.msra.mxu0 0
  %216 = vmatprep.subr.bf16.mxu0 0
  %217 = vmatpush1.bf16.xpose.msra.mxu0 0
  %218 = vmatprep.subr.bf16.mxu0 0
  %219 = vmatpush1.bf16.xpose.msra.mxu0 0
  %220 = vmatprep.subr.bf16.mxu0 0
  %221 = vmatpush1.bf16.xpose.msra.mxu0 0
  %222 = vmatprep.subr.bf16.mxu0 0
  %223 = vmatpush1.bf16.xpose.msra.mxu0 0
  %224 = vmatprep.subr.bf16.mxu0 0
  %225 = vmatpush1.bf16.xpose.msra.mxu0 0
  %226 = vmatprep.subr.bf16.mxu0 0
  %227 = vmatpush1.bf16.xpose.msra.mxu0 0
  %228 = vmatprep.subr.bf16.mxu0 0
  %229 = vmatpush1.bf16.xpose.msra.mxu0 0
  %230 = vmatprep.subr.bf16.mxu0 0
  %231 = vmatpush1.bf16.xpose.msra.mxu0 0
  %232 = vmatprep.subr.bf16.mxu0 0
  %233 = vmatpush1.bf16.xpose.msra.mxu0 0
  %234 = vmatprep.subr.bf16.mxu0 0
  %235 = vmatpush1.bf16.xpose.msra.mxu0 0
  %236 = vmatprep.subr.bf16.mxu0 0
  %237 = vmatpush1.bf16.xpose.msra.mxu0 0
  %238 = vmatprep.subr.bf16.mxu0 0
  %239 = vmatpush1.bf16.xpose.msra.mxu0 0
  %240 = vmatprep.subr.bf16.mxu0 0
  %241 = vmatpush1.bf16.xpose.msra.mxu0 0
  %242 = vmatprep.mubr.bf16.mxu0 0
  %243 = vmatmul.mubr.bf16.gmra.mrb[0].mxu0 %v205
  %v244 = vpop.f32.mrb[0].mxu0
  %v245 = vadd.f32 %v187, %v244
  %v246 = vpop.f32.mrb[0].mxu0
  %v247 = vpop.f32.mrb[0].mxu0
  %v248 = vpop.f32.mrb[0].mxu0
  %249 = vdwg.mxu0
  %v251 = vunpack.c.l.s4 1983009808
  %v252 = vunpack.c.0.s8 %v251
  %v253 = vlaneseq
  %v254 = vshrl.u32 %v253, 7
  %v255 = vsub.s32 %v252, %v254
  %v256 = vrot.slane %v179, %v255
  %257 = vrot.lane.b32.xlu0 %v256, 64
  %v258 = vpop.permute.xlu0 %257
  %v260 = vsel %vm203, %v179, 0
  %v263 = vsel %vm203, %v258, 0
  %265 = vmatprep.subr.bf16.mxu0 0
  %266 = vmatpush1.bf16.xpose.msra.mxu0 %v263
  %267 = vmatprep.subr.bf16.mxu0 0
  %268 = vmatpush1.bf16.xpose.msra.mxu0 0
  %269 = vmatprep.subr.bf16.mxu0 0
  %270 = vmatpush1.bf16.xpose.msra.mxu0 0
  %271 = vmatprep.subr.bf16.mxu0 0
  %272 = vmatpush1.bf16.xpose.msra.mxu0 0
  %273 = vmatprep.subr.bf16.mxu0 0
  %274 = vmatpush1.bf16.xpose.msra.mxu0 0
  %275 = vmatprep.subr.bf16.mxu0 0
  %276 = vmatpush1.bf16.xpose.msra.mxu0 0
  %277 = vmatprep.subr.bf16.mxu0 0
  %278 = vmatpush1.bf16.xpose.msra.mxu0 0
  %279 = vmatprep.subr.bf16.mxu0 0
  %280 = vmatpush1.bf16.xpose.msra.mxu0 0
  %281 = vmatprep.subr.bf16.mxu0 0
  %282 = vmatpush1.bf16.xpose.msra.mxu0 0
  %283 = vmatprep.subr.bf16.mxu0 0
  %284 = vmatpush1.bf16.xpose.msra.mxu0 0
  %285 = vmatprep.subr.bf16.mxu0 0
  %286 = vmatpush1.bf16.xpose.msra.mxu0 0
  %287 = vmatprep.subr.bf16.mxu0 0
  %288 = vmatpush1.bf16.xpose.msra.mxu0 0
  %289 = vmatprep.subr.bf16.mxu0 0
  %290 = vmatpush1.bf16.xpose.msra.mxu0 0
  %291 = vmatprep.subr.bf16.mxu0 0
  %292 = vmatpush1.bf16.xpose.msra.mxu0 0
  %293 = vmatprep.subr.bf16.mxu0 0
  %294 = vmatpush1.bf16.xpose.msra.mxu0 0
  %295 = vmatprep.subr.bf16.mxu0 0
  %296 = vmatpush1.bf16.xpose.msra.mxu0 0
  %297 = vmatprep.mubr.bf16.mxu0 0
  %298 = vmatmul.mubr.bf16.gmra.mrb[0].mxu0 %v260
  %v299 = vpop.f32.mrb[0].mxu0
  %v300 = vadd.f32 %v191, %v299
  %v301 = vpop.f32.mrb[0].mxu0
  %v302 = vpop.f32.mrb[0].mxu0
  %v303 = vpop.f32.mrb[0].mxu0
  %304 = vdwg.mxu0
  %vm305 = vcmask 27648
  %v306 = vsel %vm305, %v245, -inf
  %307 = vmax.xlane.f32.xlu0 %v306
  %v308 = vpop.xlane.xlu0 %307
  %v309 = vsel %vm305, %v300, -inf
  %310 = vmax.xlane.f32.xlu0 %v309
  %v311 = vpop.xlane.xlu0 %310
  %v312 = vsub.f32 %v245, %v308
  %v313 = vsub.f32 %v300, %v311
  %v314 = vmul.f32 %v312, 1.442695
  %v315 = vpow.pop %v314
  %v316 = vmul.f32 %v313, 1.442695
  %v317 = vpow.pop %v316
  %v318 = vsel %vm305, %v315, 0.0
  %319 = vadd.xlane.f32.xlu0 %v318
  %v320 = vpop.xlane.xlu0 %319
  %v321 = vsel %vm305, %v317, 0.0
  %322 = vadd.xlane.f32.xlu0 %v321
  %v323 = vpop.xlane.xlu0 %322
  %v324 = vrcp.pop %v320
  %v325 = vrcp.pop %v323
  %v326 = vmul.f32 %v315, %v324
  %v327 = vmul.f32 %v317, %v325
  %v328 = vpack.c.bf16 %v326, %v326
  %v329 = vpack.c.bf16 %v327, %v327
  %v330 = vrot.slane %v178, 2
  %vm331 = vcmask 31744
  %v333 = vsel %vm331, %v328, 0
  %vm335 = vcmask 1041408
  %v337 = vsel %vm335, %v330, 0
  %339 = vmatprep.subr.bf16.mxu0 0
  %340 = vmatpush1.bf16.msra.mxu0 %v337
  %341 = vmatprep.subr.bf16.mxu0 0
  %342 = vmatpush1.bf16.msra.mxu0 0
  %343 = vmatprep.subr.bf16.mxu0 0
  %344 = vmatpush1.bf16.msra.mxu0 0
  %345 = vmatprep.subr.bf16.mxu0 0
  %346 = vmatpush1.bf16.msra.mxu0 0
  %347 = vmatprep.subr.bf16.mxu0 0
  %348 = vmatpush1.bf16.msra.mxu0 0
  %349 = vmatprep.subr.bf16.mxu0 0
  %350 = vmatpush1.bf16.msra.mxu0 0
  %351 = vmatprep.subr.bf16.mxu0 0
  %352 = vmatpush1.bf16.msra.mxu0 0
  %353 = vmatprep.subr.bf16.mxu0 0
  %354 = vmatpush1.bf16.msra.mxu0 0
  %355 = vmatprep.subr.bf16.mxu0 0
  %356 = vmatpush1.bf16.msra.mxu0 0
  %357 = vmatprep.subr.bf16.mxu0 0
  %358 = vmatpush1.bf16.msra.mxu0 0
  %359 = vmatprep.subr.bf16.mxu0 0
  %360 = vmatpush1.bf16.msra.mxu0 0
  %361 = vmatprep.subr.bf16.mxu0 0
  %362 = vmatpush1.bf16.msra.mxu0 0
  %363 = vmatprep.subr.bf16.mxu0 0
  %364 = vmatpush1.bf16.msra.mxu0 0
  %365 = vmatprep.subr.bf16.mxu0 0
  %366 = vmatpush1.bf16.msra.mxu0 0
  %367 = vmatprep.subr.bf16.mxu0 0
  %368 = vmatpush1.bf16.msra.mxu0 0
  %369 = vmatprep.subr.bf16.mxu0 0
  %370 = vmatpush1.bf16.msra.mxu0 0
  %371 = vmatprep.mubr.bf16.mxu0 0
  %372 = vmatmul.mubr.bf16.gmra.mrb[0].mxu0 %v333
  %v373 = vpop.f32.mrb[0].mxu0
  %v374 = vadd.f32 0.0, %v373
  %v375 = vpop.f32.mrb[0].mxu0
  %v376 = vpop.f32.mrb[0].mxu0
  %v377 = vpop.f32.mrb[0].mxu0
  %378 = vdwg.mxu0
  %v379 = vrot.slane %v179, 2
  %v381 = vsel %vm331, %v329, 0
  %v384 = vsel %vm335, %v379, 0
  %386 = vmatprep.subr.bf16.mxu0 0
  %387 = vmatpush1.bf16.msra.mxu0 %v384
  %388 = vmatprep.subr.bf16.mxu0 0
  %389 = vmatpush1.bf16.msra.mxu0 0
  %390 = vmatprep.subr.bf16.mxu0 0
  %391 = vmatpush1.bf16.msra.mxu0 0
  %392 = vmatprep.subr.bf16.mxu0 0
  %393 = vmatpush1.bf16.msra.mxu0 0
  %394 = vmatprep.subr.bf16.mxu0 0
  %395 = vmatpush1.bf16.msra.mxu0 0
  %396 = vmatprep.subr.bf16.mxu0 0
  %397 = vmatpush1.bf16.msra.mxu0 0
  %398 = vmatprep.subr.bf16.mxu0 0
  %399 = vmatpush1.bf16.msra.mxu0 0
  %400 = vmatprep.subr.bf16.mxu0 0
  %401 = vmatpush1.bf16.msra.mxu0 0
  %402 = vmatprep.subr.bf16.mxu0 0
  %403 = vmatpush1.bf16.msra.mxu0 0
  %404 = vmatprep.subr.bf16.mxu0 0
  %405 = vmatpush1.bf16.msra.mxu0 0
  %406 = vmatprep.subr.bf16.mxu0 0
  %407 = vmatpush1.bf16.msra.mxu0 0
  %408 = vmatprep.subr.bf16.mxu0 0
  %409 = vmatpush1.bf16.msra.mxu0 0
  %410 = vmatprep.subr.bf16.mxu0 0
  %411 = vmatpush1.bf16.msra.mxu0 0
  %412 = vmatprep.subr.bf16.mxu0 0
  %413 = vmatpush1.bf16.msra.mxu0 0
  %414 = vmatprep.subr.bf16.mxu0 0
  %415 = vmatpush1.bf16.msra.mxu0 0
  %416 = vmatprep.subr.bf16.mxu0 0
  %417 = vmatpush1.bf16.msra.mxu0 0
  %418 = vmatprep.mubr.bf16.mxu0 0
  %419 = vmatmul.mubr.bf16.gmra.mrb[0].mxu0 %v381
  %v420 = vpop.f32.mrb[0].mxu0
  %v421 = vadd.f32 0.0, %v420
  %v422 = vpop.f32.mrb[0].mxu0
  %v423 = vpop.f32.mrb[0].mxu0
  %v424 = vpop.f32.mrb[0].mxu0
  %425 = vdwg.mxu0
  %v426 = vpack.c.bf16 %v374, %v374
  %v427 = vpack.c.bf16 %v421, %v421
  %vm428 = vcmask 123904
  %429 = vst.msk [vmem:[#allocation2] sm:$0x3] %vm428, %v426
  %430 = vst.msk [vmem:[#allocation2 + $0x2] sm:$0x3] %vm428, %v427
  %431 = vrot.lane.b32.xlu0 %v200, 112
  %v432 = vpop.permute.xlu0 %431
  %433 = vrot.lane.b32.xlu0 %v200, 48
  %v434 = vpop.permute.xlu0 %433
  %v436 = vsel %vm203, %v432, 0
  %v439 = vsel %vm203, %v434, 0
  %441 = vmatprep.subr.bf16.mxu0 0
  %442 = vmatpush1.bf16.xpose.msra.mxu0 %v439
  %443 = vmatprep.subr.bf16.mxu0 0
  %444 = vmatpush1.bf16.xpose.msra.mxu0 0
  %445 = vmatprep.subr.bf16.mxu0 0
  %446 = vmatpush1.bf16.xpose.msra.mxu0 0
  %447 = vmatprep.subr.bf16.mxu0 0
  %448 = vmatpush1.bf16.xpose.msra.mxu0 0
  %449 = vmatprep.subr.bf16.mxu0 0
  %450 = vmatpush1.bf16.xpose.msra.mxu0 0
  %451 = vmatprep.subr.bf16.mxu0 0
  %452 = vmatpush1.bf16.xpose.msra.mxu0 0
  %453 = vmatprep.subr.bf16.mxu0 0
  %454 = vmatpush1.bf16.xpose.msra.mxu0 0
  %455 = vmatprep.subr.bf16.mxu0 0
  %456 = vmatpush1.bf16.xpose.msra.mxu0 0
  %457 = vmatprep.subr.bf16.mxu0 0
  %458 = vmatpush1.bf16.xpose.msra.mxu0 0
  %459 = vmatprep.subr.bf16.mxu0 0
  %460 = vmatpush1.bf16.xpose.msra.mxu0 0
  %461 = vmatprep.subr.bf16.mxu0 0
  %462 = vmatpush1.bf16.xpose.msra.mxu0 0
  %463 = vmatprep.subr.bf16.mxu0 0
  %464 = vmatpush1.bf16.xpose.msra.mxu0 0
  %465 = vmatprep.subr.bf16.mxu0 0
  %466 = vmatpush1.bf16.xpose.msra.mxu0 0
  %467 = vmatprep.subr.bf16.mxu0 0
  %468 = vmatpush1.bf16.xpose.msra.mxu0 0
  %469 = vmatprep.subr.bf16.mxu0 0
  %470 = vmatpush1.bf16.xpose.msra.mxu0 0
  %471 = vmatprep.subr.bf16.mxu0 0
  %472 = vmatpush1.bf16.xpose.msra.mxu0 0
  %473 = vmatprep.mubr.bf16.mxu0 0
  %474 = vmatmul.mubr.bf16.gmra.mrb[0].mxu0 %v436
  %v475 = vpop.f32.mrb[0].mxu0
  %v476 = vadd.f32 %v187, %v475
  %v477 = vpop.f32.mrb[0].mxu0
  %v478 = vpop.f32.mrb[0].mxu0
  %v479 = vpop.f32.mrb[0].mxu0
  %480 = vdwg.mxu0
  %481 = vrot.lane.b32.xlu0 %v256, 112
  %v482 = vpop.permute.xlu0 %481
  %483 = vrot.lane.b32.xlu0 %v256, 48
  %v484 = vpop.permute.xlu0 %483
  %v486 = vsel %vm203, %v482, 0
  %v489 = vsel %vm203, %v484, 0
  %491 = vmatprep.subr.bf16.mxu0 0
  %492 = vmatpush1.bf16.xpose.msra.mxu0 %v489
  %493 = vmatprep.subr.bf16.mxu0 0
  %494 = vmatpush1.bf16.xpose.msra.mxu0 0
  %495 = vmatprep.subr.bf16.mxu0 0
  %496 = vmatpush1.bf16.xpose.msra.mxu0 0
  %497 = vmatprep.subr.bf16.mxu0 0
  %498 = vmatpush1.bf16.xpose.msra.mxu0 0
  %499 = vmatprep.subr.bf16.mxu0 0
  %500 = vmatpush1.bf16.xpose.msra.mxu0 0
  %501 = vmatprep.subr.bf16.mxu0 0
  %502 = vmatpush1.bf16.xpose.msra.mxu0 0
  %503 = vmatprep.subr.bf16.mxu0 0
  %504 = vmatpush1.bf16.xpose.msra.mxu0 0
  %505 = vmatprep.subr.bf16.mxu0 0
  %506 = vmatpush1.bf16.xpose.msra.mxu0 0
  %507 = vmatprep.subr.bf16.mxu0 0
  %508 = vmatpush1.bf16.xpose.msra.mxu0 0
  %509 = vmatprep.subr.bf16.mxu0 0
  %510 = vmatpush1.bf16.xpose.msra.mxu0 0
  %511 = vmatprep.subr.bf16.mxu0 0
  %512 = vmatpush1.bf16.xpose.msra.mxu0 0
  %513 = vmatprep.subr.bf16.mxu0 0
  %514 = vmatpush1.bf16.xpose.msra.mxu0 0
  %515 = vmatprep.subr.bf16.mxu0 0
  %516 = vmatpush1.bf16.xpose.msra.mxu0 0
  %517 = vmatprep.subr.bf16.mxu0 0
  %518 = vmatpush1.bf16.xpose.msra.mxu0 0
  %519 = vmatprep.subr.bf16.mxu0 0
  %520 = vmatpush1.bf16.xpose.msra.mxu0 0
  %521 = vmatprep.subr.bf16.mxu0 0
  %522 = vmatpush1.bf16.xpose.msra.mxu0 0
  %523 = vmatprep.mubr.bf16.mxu0 0
  %524 = vmatmul.mubr.bf16.gmra.mrb[0].mxu0 %v486
  %v525 = vpop.f32.mrb[0].mxu0
  %v526 = vadd.f32 %v191, %v525
  %v527 = vpop.f32.mrb[0].mxu0
  %v528 = vpop.f32.mrb[0].mxu0
  %v529 = vpop.f32.mrb[0].mxu0
  %530 = vdwg.mxu0
  %v531 = vsel %vm305, %v476, -inf
  %532 = vmax.xlane.f32.xlu0 %v531
  %v533 = vpop.xlane.xlu0 %532
  %v534 = vsel %vm305, %v526, -inf
  %535 = vmax.xlane.f32.xlu0 %v534
  %v536 = vpop.xlane.xlu0 %535
  %v537 = vsub.f32 %v476, %v533
  %v538 = vsub.f32 %v526, %v536
  %v539 = vmul.f32 %v537, 1.442695
  %v540 = vpow.pop %v539
  %v541 = vmul.f32 %v538, 1.442695
  %v542 = vpow.pop %v541
  %v543 = vsel %vm305, %v540, 0.0
  %544 = vadd.xlane.f32.xlu0 %v543
  %v545 = vpop.xlane.xlu0 %544
  %v546 = vsel %vm305, %v542, 0.0
  %547 = vadd.xlane.f32.xlu0 %v546
  %v548 = vpop.xlane.xlu0 %547
  %v549 = vrcp.pop %v545
  %v550 = vrcp.pop %v548
  %v551 = vmul.f32 %v540, %v549
  %v552 = vmul.f32 %v542, %v550
  %v553 = vpack.c.bf16 %v551, %v551
  %v554 = vpack.c.bf16 %v552, %v552
  %555 = vrot.lane.b32.xlu0 %v178, 112
  %v556 = vpop.permute.xlu0 %555
  %v557 = vrot.slane %v556, 2
  %v559 = vsel %vm331, %v553, 0
  %v562 = vsel %vm335, %v557, 0
  %564 = vmatprep.subr.bf16.mxu0 0
  %565 = vmatpush1.bf16.msra.mxu0 %v562
  %566 = vmatprep.subr.bf16.mxu0 0
  %567 = vmatpush1.bf16.msra.mxu0 0
  %568 = vmatprep.subr.bf16.mxu0 0
  %569 = vmatpush1.bf16.msra.mxu0 0
  %570 = vmatprep.subr.bf16.mxu0 0
  %571 = vmatpush1.bf16.msra.mxu0 0
  %572 = vmatprep.subr.bf16.mxu0 0
  %573 = vmatpush1.bf16.msra.mxu0 0
  %574 = vmatprep.subr.bf16.mxu0 0
  %575 = vmatpush1.bf16.msra.mxu0 0
  %576 = vmatprep.subr.bf16.mxu0 0
  %577 = vmatpush1.bf16.msra.mxu0 0
  %578 = vmatprep.subr.bf16.mxu0 0
  %579 = vmatpush1.bf16.msra.mxu0 0
  %580 = vmatprep.subr.bf16.mxu0 0
  %581 = vmatpush1.bf16.msra.mxu0 0
  %582 = vmatprep.subr.bf16.mxu0 0
  %583 = vmatpush1.bf16.msra.mxu0 0
  %584 = vmatprep.subr.bf16.mxu0 0
  %585 = vmatpush1.bf16.msra.mxu0 0
  %586 = vmatprep.subr.bf16.mxu0 0
  %587 = vmatpush1.bf16.msra.mxu0 0
  %588 = vmatprep.subr.bf16.mxu0 0
  %589 = vmatpush1.bf16.msra.mxu0 0
  %590 = vmatprep.subr.bf16.mxu0 0
  %591 = vmatpush1.bf16.msra.mxu0 0
  %592 = vmatprep.subr.bf16.mxu0 0
  %593 = vmatpush1.bf16.msra.mxu0 0
  %594 = vmatprep.subr.bf16.mxu0 0
  %595 = vmatpush1.bf16.msra.mxu0 0
  %596 = vmatprep.mubr.bf16.mxu0 0
  %597 = vmatmul.mubr.bf16.gmra.mrb[0].mxu0 %v559
  %v598 = vpop.f32.mrb[0].mxu0
  %v599 = vadd.f32 0.0, %v598
  %v600 = vpop.f32.mrb[0].mxu0
  %v601 = vpop.f32.mrb[0].mxu0
  %v602 = vpop.f32.mrb[0].mxu0
  %603 = vdwg.mxu0
  %604 = vrot.lane.b32.xlu0 %v179, 112
  %v605 = vpop.permute.xlu0 %604
  %v606 = vrot.slane %v605, 2
  %v608 = vsel %vm331, %v554, 0
  %v611 = vsel %vm335, %v606, 0
  %613 = vmatprep.subr.bf16.mxu0 0
  %614 = vmatpush1.bf16.msra.mxu0 %v611
  %615 = vmatprep.subr.bf16.mxu0 0
  %616 = vmatpush1.bf16.msra.mxu0 0
  %617 = vmatprep.subr.bf16.mxu0 0
  %618 = vmatpush1.bf16.msra.mxu0 0
  %619 = vmatprep.subr.bf16.mxu0 0
  %620 = vmatpush1.bf16.msra.mxu0 0
  %621 = vmatprep.subr.bf16.mxu0 0
  %622 = vmatpush1.bf16.msra.mxu0 0
  %623 = vmatprep.subr.bf16.mxu0 0
  %624 = vmatpush1.bf16.msra.mxu0 0
  %625 = vmatprep.subr.bf16.mxu0 0
  %626 = vmatpush1.bf16.msra.mxu0 0
  %627 = vmatprep.subr.bf16.mxu0 0
  %628 = vmatpush1.bf16.msra.mxu0 0
  %629 = vmatprep.subr.bf16.mxu0 0
  %630 = vmatpush1.bf16.msra.mxu0 0
  %631 = vmatprep.subr.bf16.mxu0 0
  %632 = vmatpush1.bf16.msra.mxu0 0
  %633 = vmatprep.subr.bf16.mxu0 0
  %634 = vmatpush1.bf16.msra.mxu0 0
  %635 = vmatprep.subr.bf16.mxu0 0
  %636 = vmatpush1.bf16.msra.mxu0 0
  %637 = vmatprep.subr.bf16.mxu0 0
  %638 = vmatpush1.bf16.msra.mxu0 0
  %639 = vmatprep.subr.bf16.mxu0 0
  %640 = vmatpush1.bf16.msra.mxu0 0
  %641 = vmatprep.subr.bf16.mxu0 0
  %642 = vmatpush1.bf16.msra.mxu0 0
  %643 = vmatprep.subr.bf16.mxu0 0
  %644 = vmatpush1.bf16.msra.mxu0 0
  %645 = vmatprep.mubr.bf16.mxu0 0
  %646 = vmatmul.mubr.bf16.gmra.mrb[0].mxu0 %v608
  %v647 = vpop.f32.mrb[0].mxu0
  %v648 = vadd.f32 0.0, %v647
  %v649 = vpop.f32.mrb[0].mxu0
  %v650 = vpop.f32.mrb[0].mxu0
  %v651 = vpop.f32.mrb[0].mxu0
  %652 = vdwg.mxu0
  %v653 = vpack.c.bf16 %v599, %v599
  %v654 = vpack.c.bf16 %v648, %v648
  %v658 = vunpack.c.l.s4 1983009808
  %v659 = vunpack.c.0.s8 %v658
  %v660 = vlaneseq
  %v661 = vshrl.u32 %v660, 7
  %v662 = vsub.s32 %v659, %v661
  %v663 = vrot.slane %v653, %v662
  %v665 = vunpack.c.l.s4 1983009808
  %v666 = vunpack.c.0.s8 %v665
  %v667 = vlaneseq
  %v668 = vshrl.u32 %v667, 7
  %v669 = vsub.s32 %v666, %v668
  %v670 = vrot.slane %v654, %v669
  %671 = vrot.lane.b32.xlu0 %v663, 16
  %v672 = vpop.permute.xlu0 %671
  %673 = vrot.lane.b32.xlu0 %v670, 16
  %v674 = vpop.permute.xlu0 %673
  %vm677 = vcmask 255104
  %678 = vst.msk [vmem:[#allocation2] sm:$0x3] %vm677, %v672
  %679 = vst.msk [vmem:[#allocation2 + $0x2] sm:$0x3] %vm677, %v674
  %680 = vrot.lane.b32.xlu0 %v200, 96
  %v681 = vpop.permute.xlu0 %680
  %682 = vrot.lane.b32.xlu0 %v200, 32
  %v683 = vpop.permute.xlu0 %682
  %v685 = vsel %vm203, %v681, 0
  %v688 = vsel %vm203, %v683, 0
  %690 = vmatprep.subr.bf16.mxu0 0
  %691 = vmatpush1.bf16.xpose.msra.mxu0 %v688
  %692 = vmatprep.subr.bf16.mxu0 0
  %693 = vmatpush1.bf16.xpose.msra.mxu0 0
  %694 = vmatprep.subr.bf16.mxu0 0
  %695 = vmatpush1.bf16.xpose.msra.mxu0 0
  %696 = vmatprep.subr.bf16.mxu0 0
  %697 = vmatpush1.bf16.xpose.msra.mxu0 0
  %698 = vmatprep.subr.bf16.mxu0 0
  %699 = vmatpush1.bf16.xpose.msra.mxu0 0
  %700 = vmatprep.subr.bf16.mxu0 0
  %701 = vmatpush1.bf16.xpose.msra.mxu0 0
  %702 = vmatprep.subr.bf16.mxu0 0
  %703 = vmatpush1.bf16.xpose.msra.mxu0 0
  %704 = vmatprep.subr.bf16.mxu0 0
  %705 = vmatpush1.bf16.xpose.msra.mxu0 0
  %706 = vmatprep.subr.bf16.mxu0 0
  %707 = vmatpush1.bf16.xpose.msra.mxu0 0
  %708 = vmatprep.subr.bf16.mxu0 0
  %709 = vmatpush1.bf16.xpose.msra.mxu0 0
  %710 = vmatprep.subr.bf16.mxu0 0
  %711 = vmatpush1.bf16.xpose.msra.mxu0 0
  %712 = vmatprep.subr.bf16.mxu0 0
  %713 = vmatpush1.bf16.xpose.msra.mxu0 0
  %714 = vmatprep.subr.bf16.mxu0 0
  %715 = vmatpush1.bf16.xpose.msra.mxu0 0
  %716 = vmatprep.subr.bf16.mxu0 0
  %717 = vmatpush1.bf16.xpose.msra.mxu0 0
  %718 = vmatprep.subr.bf16.mxu0 0
  %719 = vmatpush1.bf16.xpose.msra.mxu0 0
  %720 = vmatprep.subr.bf16.mxu0 0
  %721 = vmatpush1.bf16.xpose.msra.mxu0 0
  %722 = vmatprep.mubr.bf16.mxu0 0
  %723 = vmatmul.mubr.bf16.gmra.mrb[0].mxu0 %v685
  %v724 = vpop.f32.mrb[0].mxu0
  %v725 = vadd.f32 %v187, %v724
  %v726 = vpop.f32.mrb[0].mxu0
  %v727 = vpop.f32.mrb[0].mxu0
  %v728 = vpop.f32.mrb[0].mxu0
  %729 = vdwg.mxu0
  %730 = vrot.lane.b32.xlu0 %v256, 96
  %v731 = vpop.permute.xlu0 %730
  %732 = vrot.lane.b32.xlu0 %v256, 32
  %v733 = vpop.permute.xlu0 %732
  %v735 = vsel %vm203, %v731, 0
  %v738 = vsel %vm203, %v733, 0
  %740 = vmatprep.subr.bf16.mxu0 0
  %741 = vmatpush1.bf16.xpose.msra.mxu0 %v738
  %742 = vmatprep.subr.bf16.mxu0 0
  %743 = vmatpush1.bf16.xpose.msra.mxu0 0
  %744 = vmatprep.subr.bf16.mxu0 0
  %745 = vmatpush1.bf16.xpose.msra.mxu0 0
  %746 = vmatprep.subr.bf16.mxu0 0
  %747 = vmatpush1.bf16.xpose.msra.mxu0 0
  %748 = vmatprep.subr.bf16.mxu0 0
  %749 = vmatpush1.bf16.xpose.msra.mxu0 0
  %750 = vmatprep.subr.bf16.mxu0 0
  %751 = vmatpush1.bf16.xpose.msra.mxu0 0
  %752 = vmatprep.subr.bf16.mxu0 0
  %753 = vmatpush1.bf16.xpose.msra.mxu0 0
  %754 = vmatprep.subr.bf16.mxu0 0
  %755 = vmatpush1.bf16.xpose.msra.mxu0 0
  %756 = vmatprep.subr.bf16.mxu0 0
  %757 = vmatpush1.bf16.xpose.msra.mxu0 0
  %758 = vmatprep.subr.bf16.mxu0 0
  %759 = vmatpush1.bf16.xpose.msra.mxu0 0
  %760 = vmatprep.subr.bf16.mxu0 0
  %761 = vmatpush1.bf16.xpose.msra.mxu0 0
  %762 = vmatprep.subr.bf16.mxu0 0
  %763 = vmatpush1.bf16.xpose.msra.mxu0 0
  %764 = vmatprep.subr.bf16.mxu0 0
  %765 = vmatpush1.bf16.xpose.msra.mxu0 0
  %766 = vmatprep.subr.bf16.mxu0 0
  %767 = vmatpush1.bf16.xpose.msra.mxu0 0
  %768 = vmatprep.subr.bf16.mxu0 0
  %769 = vmatpush1.bf16.xpose.msra.mxu0 0
  %770 = vmatprep.subr.bf16.mxu0 0
  %771 = vmatpush1.bf16.xpose.msra.mxu0 0
  %772 = vmatprep.mubr.bf16.mxu0 0
  %773 = vmatmul.mubr.bf16.gmra.mrb[0].mxu0 %v735
  %v774 = vpop.f32.mrb[0].mxu0
  %v775 = vadd.f32 %v191, %v774
  %v776 = vpop.f32.mrb[0].mxu0
  %v777 = vpop.f32.mrb[0].mxu0
  %v778 = vpop.f32.mrb[0].mxu0
  %779 = vdwg.mxu0
  %v780 = vsel %vm305, %v725, -inf
  %781 = vmax.xlane.f32.xlu0 %v780
  %v782 = vpop.xlane.xlu0 %781
  %v783 = vsel %vm305, %v775, -inf
  %784 = vmax.xlane.f32.xlu0 %v783
  %v785 = vpop.xlane.xlu0 %784
  %v786 = vsub.f32 %v725, %v782
  %v787 = vsub.f32 %v775, %v785
  %v788 = vmul.f32 %v786, 1.442695
  %v789 = vpow.pop %v788
  %v790 = vmul.f32 %v787, 1.442695
  %v791 = vpow.pop %v790
  %v792 = vsel %vm305, %v789, 0.0
  %793 = vadd.xlane.f32.xlu0 %v792
  %v794 = vpop.xlane.xlu0 %793
  %v795 = vsel %vm305, %v791, 0.0
  %796 = vadd.xlane.f32.xlu0 %v795
  %v797 = vpop.xlane.xlu0 %796
  %v798 = vrcp.pop %v794
  %v799 = vrcp.pop %v797
  %v800 = vmul.f32 %v789, %v798
  %v801 = vmul.f32 %v791, %v799
  %v802 = vpack.c.bf16 %v800, %v800
  %v803 = vpack.c.bf16 %v801, %v801
  %804 = vrot.lane.b32.xlu0 %v178, 96
  %v805 = vpop.permute.xlu0 %804
  %v806 = vrot.slane %v805, 2
  %v808 = vsel %vm331, %v802, 0
  %v811 = vsel %vm335, %v806, 0
  %813 = vmatprep.subr.bf16.mxu0 0
  %814 = vmatpush1.bf16.msra.mxu0 %v811
  %815 = vmatprep.subr.bf16.mxu0 0
  %816 = vmatpush1.bf16.msra.mxu0 0
  %817 = vmatprep.subr.bf16.mxu0 0
  %818 = vmatpush1.bf16.msra.mxu0 0
  %819 = vmatprep.subr.bf16.mxu0 0
  %820 = vmatpush1.bf16.msra.mxu0 0
  %821 = vmatprep.subr.bf16.mxu0 0
  %822 = vmatpush1.bf16.msra.mxu0 0
  %823 = vmatprep.subr.bf16.mxu0 0
  %824 = vmatpush1.bf16.msra.mxu0 0
  %825 = vmatprep.subr.bf16.mxu0 0
  %826 = vmatpush1.bf16.msra.mxu0 0
  %827 = vmatprep.subr.bf16.mxu0 0
  %828 = vmatpush1.bf16.msra.mxu0 0
  %829 = vmatprep.subr.bf16.mxu0 0
  %830 = vmatpush1.bf16.msra.mxu0 0
  %831 = vmatprep.subr.bf16.mxu0 0
  %832 = vmatpush1.bf16.msra.mxu0 0
  %833 = vmatprep.subr.bf16.mxu0 0
  %834 = vmatpush1.bf16.msra.mxu0 0
  %835 = vmatprep.subr.bf16.mxu0 0
  %836 = vmatpush1.bf16.msra.mxu0 0
  %837 = vmatprep.subr.bf16.mxu0 0
  %838 = vmatpush1.bf16.msra.mxu0 0
  %839 = vmatprep.subr.bf16.mxu0 0
  %840 = vmatpush1.bf16.msra.mxu0 0
  %841 = vmatprep.subr.bf16.mxu0 0
  %842 = vmatpush1.bf16.msra.mxu0 0
  %843 = vmatprep.subr.bf16.mxu0 0
  %844 = vmatpush1.bf16.msra.mxu0 0
  %845 = vmatprep.mubr.bf16.mxu0 0
  %846 = vmatmul.mubr.bf16.gmra.mrb[0].mxu0 %v808
  %v847 = vpop.f32.mrb[0].mxu0
  %v848 = vadd.f32 0.0, %v847
  %v849 = vpop.f32.mrb[0].mxu0
  %v850 = vpop.f32.mrb[0].mxu0
  %v851 = vpop.f32.mrb[0].mxu0
  %852 = vdwg.mxu0
  %853 = vrot.lane.b32.xlu0 %v179, 96
  %v854 = vpop.permute.xlu0 %853
  %v855 = vrot.slane %v854, 2
  %v857 = vsel %vm331, %v803, 0
  %v860 = vsel %vm335, %v855, 0
  %862 = vmatprep.subr.bf16.mxu0 0
  %863 = vmatpush1.bf16.msra.mxu0 %v860
  %864 = vmatprep.subr.bf16.mxu0 0
  %865 = vmatpush1.bf16.msra.mxu0 0
  %866 = vmatprep.subr.bf16.mxu0 0
  %867 = vmatpush1.bf16.msra.mxu0 0
  %868 = vmatprep.subr.bf16.mxu0 0
  %869 = vmatpush1.bf16.msra.mxu0 0
  %870 = vmatprep.subr.bf16.mxu0 0
  %871 = vmatpush1.bf16.msra.mxu0 0
  %872 = vmatprep.subr.bf16.mxu0 0
  %873 = vmatpush1.bf16.msra.mxu0 0
  %874 = vmatprep.subr.bf16.mxu0 0
  %875 = vmatpush1.bf16.msra.mxu0 0
  %876 = vmatprep.subr.bf16.mxu0 0
  %877 = vmatpush1.bf16.msra.mxu0 0
  %878 = vmatprep.subr.bf16.mxu0 0
  %879 = vmatpush1.bf16.msra.mxu0 0
  %880 = vmatprep.subr.bf16.mxu0 0
  %881 = vmatpush1.bf16.msra.mxu0 0
  %882 = vmatprep.subr.bf16.mxu0 0
  %883 = vmatpush1.bf16.msra.mxu0 0
  %884 = vmatprep.subr.bf16.mxu0 0
  %885 = vmatpush1.bf16.msra.mxu0 0
  %886 = vmatprep.subr.bf16.mxu0 0
  %887 = vmatpush1.bf16.msra.mxu0 0
  %888 = vmatprep.subr.bf16.mxu0 0
  %889 = vmatpush1.bf16.msra.mxu0 0
  %890 = vmatprep.subr.bf16.mxu0 0
  %891 = vmatpush1.bf16.msra.mxu0 0
  %892 = vmatprep.subr.bf16.mxu0 0
  %893 = vmatpush1.bf16.msra.mxu0 0
  %894 = vmatprep.mubr.bf16.mxu0 0
  %895 = vmatmul.mubr.bf16.gmra.mrb[0].mxu0 %v857
  %v896 = vpop.f32.mrb[0].mxu0
  %v897 = vadd.f32 0.0, %v896
  %v898 = vpop.f32.mrb[0].mxu0
  %v899 = vpop.f32.mrb[0].mxu0
  %v900 = vpop.f32.mrb[0].mxu0
  %901 = vdwg.mxu0
  %v902 = vpack.c.bf16 %v848, %v848
  %v903 = vpack.c.bf16 %v897, %v897
  %v907 = vunpack.c.l.s4 1983009808
  %v908 = vunpack.c.0.s8 %v907
  %v909 = vlaneseq
  %v910 = vshrl.u32 %v909, 7
  %v911 = vsub.s32 %v908, %v910
  %v912 = vrot.slane %v902, %v911
  %v914 = vunpack.c.l.s4 1983009808
  %v915 = vunpack.c.0.s8 %v914
  %v916 = vlaneseq
  %v917 = vshrl.u32 %v916, 7
  %v918 = vsub.s32 %v915, %v917
  %v919 = vrot.slane %v903, %v918
  %920 = vrot.lane.b32.xlu0 %v912, 32
  %v921 = vpop.permute.xlu0 %920
  %922 = vrot.lane.b32.xlu0 %v919, 32
  %v923 = vpop.permute.xlu0 %922
  %vm926 = vcmask 386304
  %927 = vst.msk [vmem:[#allocation2] sm:$0x3] %vm926, %v921
  %928 = vst.msk [vmem:[#allocation2 + $0x2] sm:$0x3] %vm926, %v923
  %929 = vrot.lane.b32.xlu0 %v200, 80
  %v930 = vpop.permute.xlu0 %929
  %931 = vrot.lane.b32.xlu0 %v200, 16
  %v932 = vpop.permute.xlu0 %931
  %v934 = vsel %vm203, %v930, 0
  %v937 = vsel %vm203, %v932, 0
  %939 = vmatprep.subr.bf16.mxu0 0
  %940 = vmatpush1.bf16.xpose.msra.mxu0 %v937
  %941 = vmatprep.subr.bf16.mxu0 0
  %942 = vmatpush1.bf16.xpose.msra.mxu0 0
  %943 = vmatprep.subr.bf16.mxu0 0
  %944 = vmatpush1.bf16.xpose.msra.mxu0 0
  %945 = vmatprep.subr.bf16.mxu0 0
  %946 = vmatpush1.bf16.xpose.msra.mxu0 0
  %947 = vmatprep.subr.bf16.mxu0 0
  %948 = vmatpush1.bf16.xpose.msra.mxu0 0
  %949 = vmatprep.subr.bf16.mxu0 0
  %950 = vmatpush1.bf16.xpose.msra.mxu0 0
  %951 = vmatprep.subr.bf16.mxu0 0
  %952 = vmatpush1.bf16.xpose.msra.mxu0 0
  %953 = vmatprep.subr.bf16.mxu0 0
  %954 = vmatpush1.bf16.xpose.msra.mxu0 0
  %955 = vmatprep.subr.bf16.mxu0 0
  %956 = vmatpush1.bf16.xpose.msra.mxu0 0
  %957 = vmatprep.subr.bf16.mxu0 0
  %958 = vmatpush1.bf16.xpose.msra.mxu0 0
  %959 = vmatprep.subr.bf16.mxu0 0
  %960 = vmatpush1.bf16.xpose.msra.mxu0 0
  %961 = vmatprep.subr.bf16.mxu0 0
  %962 = vmatpush1.bf16.xpose.msra.mxu0 0
  %963 = vmatprep.subr.bf16.mxu0 0
  %964 = vmatpush1.bf16.xpose.msra.mxu0 0
  %965 = vmatprep.subr.bf16.mxu0 0
  %966 = vmatpush1.bf16.xpose.msra.mxu0 0
  %967 = vmatprep.subr.bf16.mxu0 0
  %968 = vmatpush1.bf16.xpose.msra.mxu0 0
  %969 = vmatprep.subr.bf16.mxu0 0
  %970 = vmatpush1.bf16.xpose.msra.mxu0 0
  %971 = vmatprep.mubr.bf16.mxu0 0
  %972 = vmatmul.mubr.bf16.gmra.mrb[0].mxu0 %v934
  %v973 = vpop.f32.mrb[0].mxu0
  %v974 = vadd.f32 %v187, %v973
  %v975 = vpop.f32.mrb[0].mxu0
  %v976 = vpop.f32.mrb[0].mxu0
  %v977 = vpop.f32.mrb[0].mxu0
  %978 = vdwg.mxu0
  %979 = vrot.lane.b32.xlu0 %v256, 80
  %v980 = vpop.permute.xlu0 %979
  %981 = vrot.lane.b32.xlu0 %v256, 16
  %v982 = vpop.permute.xlu0 %981
  %v984 = vsel %vm203, %v980, 0
  %v987 = vsel %vm203, %v982, 0
  %989 = vmatprep.subr.bf16.mxu0 0
  %990 = vmatpush1.bf16.xpose.msra.mxu0 %v987
  %991 = vmatprep.subr.bf16.mxu0 0
  %992 = vmatpush1.bf16.xpose.msra.mxu0 0
  %993 = vmatprep.subr.bf16.mxu0 0
  %994 = vmatpush1.bf16.xpose.msra.mxu0 0
  %995 = vmatprep.subr.bf16.mxu0 0
  %996 = vmatpush1.bf16.xpose.msra.mxu0 0
  %997 = vmatprep.subr.bf16.mxu0 0
  %998 = vmatpush1.bf16.xpose.msra.mxu0 0
  %999 = vmatprep.subr.bf16.mxu0 0
  %1000 = vmatpush1.bf16.xpose.msra.mxu0 0
  %1001 = vmatprep.subr.bf16.mxu0 0
  %1002 = vmatpush1.bf16.xpose.msra.mxu0 0
  %1003 = vmatprep.subr.bf16.mxu0 0
  %1004 = vmatpush1.bf16.xpose.msra.mxu0 0
  %1005 = vmatprep.subr.bf16.mxu0 0
  %1006 = vmatpush1.bf16.xpose.msra.mxu0 0
  %1007 = vmatprep.subr.bf16.mxu0 0
  %1008 = vmatpush1.bf16.xpose.msra.mxu0 0
  %1009 = vmatprep.subr.bf16.mxu0 0
  %1010 = vmatpush1.bf16.xpose.msra.mxu0 0
  %1011 = vmatprep.subr.bf16.mxu0 0
  %1012 = vmatpush1.bf16.xpose.msra.mxu0 0
  %1013 = vmatprep.subr.bf16.mxu0 0
  %1014 = vmatpush1.bf16.xpose.msra.mxu0 0
  %1015 = vmatprep.subr.bf16.mxu0 0
  %1016 = vmatpush1.bf16.xpose.msra.mxu0 0
  %1017 = vmatprep.subr.bf16.mxu0 0
  %1018 = vmatpush1.bf16.xpose.msra.mxu0 0
  %1019 = vmatprep.subr.bf16.mxu0 0
  %1020 = vmatpush1.bf16.xpose.msra.mxu0 0
  %1021 = vmatprep.mubr.bf16.mxu0 0
  %1022 = vmatmul.mubr.bf16.gmra.mrb[0].mxu0 %v984
  %v1023 = vpop.f32.mrb[0].mxu0
  %v1024 = vadd.f32 %v191, %v1023
  %v1025 = vpop.f32.mrb[0].mxu0
  %v1026 = vpop.f32.mrb[0].mxu0
  %v1027 = vpop.f32.mrb[0].mxu0
  %1028 = vdwg.mxu0
  %v1029 = vsel %vm305, %v974, -inf
  %1030 = vmax.xlane.f32.xlu0 %v1029
  %v1031 = vpop.xlane.xlu0 %1030
  %v1032 = vsel %vm305, %v1024, -inf
  %1033 = vmax.xlane.f32.xlu0 %v1032
  %v1034 = vpop.xlane.xlu0 %1033
  %v1035 = vsub.f32 %v974, %v1031
  %v1036 = vsub.f32 %v1024, %v1034
  %v1037 = vmul.f32 %v1035, 1.442695
  %v1038 = vpow.pop %v1037
  %v1039 = vmul.f32 %v1036, 1.442695
  %v1040 = vpow.pop %v1039
  %v1041 = vsel %vm305, %v1038, 0.0
  %1042 = vadd.xlane.f32.xlu0 %v1041
  %v1043 = vpop.xlane.xlu0 %1042
  %v1044 = vsel %vm305, %v1040, 0.0
  %1045 = vadd.xlane.f32.xlu0 %v1044
  %v1046 = vpop.xlane.xlu0 %1045
  %v1047 = vrcp.pop %v1043
  %v1048 = vrcp.pop %v1046
  %v1049 = vmul.f32 %v1038, %v1047
  %v1050 = vmul.f32 %v1040, %v1048
  %v1051 = vpack.c.bf16 %v1049, %v1049
  %v1052 = vpack.c.bf16 %v1050, %v1050
  %1053 = vrot.lane.b32.xlu0 %v178, 80
  %v1054 = vpop.permute.xlu0 %1053
  %v1055 = vrot.slane %v1054, 2
  %v1057 = vsel %vm331, %v1051, 0
  %v1060 = vsel %vm335, %v1055, 0
  %1062 = vmatprep.subr.bf16.mxu0 0
  %1063 = vmatpush1.bf16.msra.mxu0 %v1060
  %1064 = vmatprep.subr.bf16.mxu0 0
  %1065 = vmatpush1.bf16.msra.mxu0 0
  %1066 = vmatprep.subr.bf16.mxu0 0
  %1067 = vmatpush1.bf16.msra.mxu0 0
  %1068 = vmatprep.subr.bf16.mxu0 0
  %1069 = vmatpush1.bf16.msra.mxu0 0
  %1070 = vmatprep.subr.bf16.mxu0 0
  %1071 = vmatpush1.bf16.msra.mxu0 0
  %1072 = vmatprep.subr.bf16.mxu0 0
  %1073 = vmatpush1.bf16.msra.mxu0 0
  %1074 = vmatprep.subr.bf16.mxu0 0
  %1075 = vmatpush1.bf16.msra.mxu0 0
  %1076 = vmatprep.subr.bf16.mxu0 0
  %1077 = vmatpush1.bf16.msra.mxu0 0
  %1078 = vmatprep.subr.bf16.mxu0 0
  %1079 = vmatpush1.bf16.msra.mxu0 0
  %1080 = vmatprep.subr.bf16.mxu0 0
  %1081 = vmatpush1.bf16.msra.mxu0 0
  %1082 = vmatprep.subr.bf16.mxu0 0
  %1083 = vmatpush1.bf16.msra.mxu0 0
  %1084 = vmatprep.subr.bf16.mxu0 0
  %1085 = vmatpush1.bf16.msra.mxu0 0
  %1086 = vmatprep.subr.bf16.mxu0 0
  %1087 = vmatpush1.bf16.msra.mxu0 0
  %1088 = vmatprep.subr.bf16.mxu0 0
  %1089 = vmatpush1.bf16.msra.mxu0 0
  %1090 = vmatprep.subr.bf16.mxu0 0
  %1091 = vmatpush1.bf16.msra.mxu0 0
  %1092 = vmatprep.subr.bf16.mxu0 0
  %1093 = vmatpush1.bf16.msra.mxu0 0
  %1094 = vmatprep.mubr.bf16.mxu0 0
  %1095 = vmatmul.mubr.bf16.gmra.mrb[0].mxu0 %v1057
  %v1096 = vpop.f32.mrb[0].mxu0
  %v1097 = vadd.f32 0.0, %v1096
  %v1098 = vpop.f32.mrb[0].mxu0
  %v1099 = vpop.f32.mrb[0].mxu0
  %v1100 = vpop.f32.mrb[0].mxu0
  %1101 = vdwg.mxu0
  %1102 = vrot.lane.b32.xlu0 %v179, 80
  %v1103 = vpop.permute.xlu0 %1102
  %v1104 = vrot.slane %v1103, 2
  %v1106 = vsel %vm331, %v1052, 0
  %v1109 = vsel %vm335, %v1104, 0
  %1111 = vmatprep.subr.bf16.mxu0 0
  %1112 = vmatpush1.bf16.msra.mxu0 %v1109
  %1113 = vmatprep.subr.bf16.mxu0 0
  %1114 = vmatpush1.bf16.msra.mxu0 0
  %1115 = vmatprep.subr.bf16.mxu0 0
  %1116 = vmatpush1.bf16.msra.mxu0 0
  %1117 = vmatprep.subr.bf16.mxu0 0
  %1118 = vmatpush1.bf16.msra.mxu0 0
  %1119 = vmatprep.subr.bf16.mxu0 0
  %1120 = vmatpush1.bf16.msra.mxu0 0
  %1121 = vmatprep.subr.bf16.mxu0 0
  %1122 = vmatpush1.bf16.msra.mxu0 0
  %1123 = vmatprep.subr.bf16.mxu0 0
  %1124 = vmatpush1.bf16.msra.mxu0 0
  %1125 = vmatprep.subr.bf16.mxu0 0
  %1126 = vmatpush1.bf16.msra.mxu0 0
  %1127 = vmatprep.subr.bf16.mxu0 0
  %1128 = vmatpush1.bf16.msra.mxu0 0
  %1129 = vmatprep.subr.bf16.mxu0 0
  %1130 = vmatpush1.bf16.msra.mxu0 0
  %1131 = vmatprep.subr.bf16.mxu0 0
  %1132 = vmatpush1.bf16.msra.mxu0 0
  %1133 = vmatprep.subr.bf16.mxu0 0
  %1134 = vmatpush1.bf16.msra.mxu0 0
  %1135 = vmatprep.subr.bf16.mxu0 0
  %1136 = vmatpush1.bf16.msra.mxu0 0
  %1137 = vmatprep.subr.bf16.mxu0 0
  %1138 = vmatpush1.bf16.msra.mxu0 0
  %1139 = vmatprep.subr.bf16.mxu0 0
  %1140 = vmatpush1.bf16.msra.mxu0 0
  %1141 = vmatprep.subr.bf16.mxu0 0
  %1142 = vmatpush1.bf16.msra.mxu0 0
  %1143 = vmatprep.mubr.bf16.mxu0 0
  %1144 = vmatmul.mubr.bf16.gmra.mrb[0].mxu0 %v1106
  %v1145 = vpop.f32.mrb[0].mxu0
  %v1146 = vadd.f32 0.0, %v1145
  %v1147 = vpop.f32.mrb[0].mxu0
  %v1148 = vpop.f32.mrb[0].mxu0
  %v1149 = vpop.f32.mrb[0].mxu0
  %1150 = vdwg.mxu0
  %v1151 = vpack.c.bf16 %v1097, %v1097
  %v1152 = vpack.c.bf16 %v1146, %v1146
  %v1156 = vunpack.c.l.s4 1983009808
  %v1157 = vunpack.c.0.s8 %v1156
  %v1158 = vlaneseq
  %v1159 = vshrl.u32 %v1158, 7
  %v1160 = vsub.s32 %v1157, %v1159
  %v1161 = vrot.slane %v1151, %v1160
  %v1163 = vunpack.c.l.s4 1983009808
  %v1164 = vunpack.c.0.s8 %v1163
  %v1165 = vlaneseq
  %v1166 = vshrl.u32 %v1165, 7
  %v1167 = vsub.s32 %v1164, %v1166
  %v1168 = vrot.slane %v1152, %v1167
  %1169 = vrot.lane.b32.xlu0 %v1161, 48
  %v1170 = vpop.permute.xlu0 %1169
  %1171 = vrot.lane.b32.xlu0 %v1168, 48
  %v1172 = vpop.permute.xlu0 %1171
  %vm1175 = vcmask 517504
  %1176 = vst.msk [vmem:[#allocation2] sm:$0x3] %vm1175, %v1170
  %1177 = vst.msk [vmem:[#allocation2 + $0x2] sm:$0x3] %vm1175, %v1172
  %v1178 = vld [vmem:[#allocation2] sm:$0x3]
  %v1179 = vld [vmem:[#allocation2 + $0x2] sm:$0x3]
  %v1180 = vld [vmem:[%s4] sm:$0xf]
  %v1181 = vld [vmem:[%s4 + $0x4] sm:$0xf]
  %v1182 = vld [vmem:[%s4 + $0x8] sm:$0xf]
  %v1183 = vld [vmem:[%s4 + $0xc] sm:$0xf]
  %v1184 = vld [vmem:[%s4 + $0x10] sm:$0xf]
  %v1185 = vld [vmem:[%s4 + $0x14] sm:$0xf]
  %v1186 = vld [vmem:[%s4 + $0x18] sm:$0xf]
  %v1187 = vld [vmem:[%s4 + $0x1c] sm:$0xf]
  %v1188 = vld [vmem:[%s5] sm:$0x1]
  %v1190 = vlaneseq
  %v1191 = vshrl.u32 %v1190, 7
  %v1192 = vsub.s32 0, %v1191
  %v1193 = vrot.slane %v1188, %v1192
  %v1197 = vcombine.low %v1178, %v1179
  %v1199 = vunpack.c.l.s4 1983009808
  %v1200 = vunpack.c.0.s8 %v1199
  %v1201 = vlaneseq
  %v1202 = vshrl.u32 %v1201, 7
  %v1203 = vsub.s32 %v1200, %v1202
  %v1204 = vrot.slane %v1197, %v1203
  %v1213 = vunpack.c.l.b16 %v1180
  %v1214 = vunpack.c.l.b16 %v1181
  %v1215 = vunpack.c.l.b16 %v1182
  %v1216 = vunpack.c.l.b16 %v1183
  %v1217 = vunpack.c.l.b16 %v1184
  %v1218 = vunpack.c.l.b16 %v1185
  %v1219 = vunpack.c.l.b16 %v1186
  %v1220 = vunpack.c.l.b16 %v1187
  %v1221 = vpack.c.b16 %v1214, %v1213
  %v1222 = vpack.c.b16 %v1216, %v1215
  %v1223 = vpack.c.b16 %v1218, %v1217
  %v1224 = vpack.c.b16 %v1220, %v1219
  %v1230 = vsel %vm122, %v1204, 0
  %1232 = vmatprep.subr.bf16.mxu0 0
  %1233 = vmatpush1.bf16.msra.mxu0 %v1221
  %1234 = vmatprep.subr.bf16.mxu0 0
  %1235 = vmatpush1.bf16.msra.mxu0 %v1222
  %1236 = vmatprep.subr.bf16.mxu0 0
  %1237 = vmatpush1.bf16.msra.mxu0 %v1223
  %1238 = vmatprep.subr.bf16.mxu0 0
  %1239 = vmatpush1.bf16.msra.mxu0 %v1224
  %1240 = vmatprep.subr.bf16.mxu0 0
  %1241 = vmatpush1.bf16.msra.mxu0 0
  %1242 = vmatprep.subr.bf16.mxu0 0
  %1243 = vmatpush1.bf16.msra.mxu0 0
  %1244 = vmatprep.subr.bf16.mxu0 0
  %1245 = vmatpush1.bf16.msra.mxu0 0
  %1246 = vmatprep.subr.bf16.mxu0 0
  %1247 = vmatpush1.bf16.msra.mxu0 0
  %1248 = vmatprep.subr.bf16.mxu0 0
  %1249 = vmatpush1.bf16.msra.mxu0 0
  %1250 = vmatprep.subr.bf16.mxu0 0
  %1251 = vmatpush1.bf16.msra.mxu0 0
  %1252 = vmatprep.subr.bf16.mxu0 0
  %1253 = vmatpush1.bf16.msra.mxu0 0
  %1254 = vmatprep.subr.bf16.mxu0 0
  %1255 = vmatpush1.bf16.msra.mxu0 0
  %1256 = vmatprep.subr.bf16.mxu0 0
  %1257 = vmatpush1.bf16.msra.mxu0 0
  %1258 = vmatprep.subr.bf16.mxu0 0
  %1259 = vmatpush1.bf16.msra.mxu0 0
  %1260 = vmatprep.subr.bf16.mxu0 0
  %1261 = vmatpush1.bf16.msra.mxu0 0
  %1262 = vmatprep.subr.bf16.mxu0 0
  %1263 = vmatpush1.bf16.msra.mxu0 0
  %1264 = vmatprep.mubr.bf16.mxu0 0
  %1265 = vmatmul.mubr.bf16.gmra.mrb[0].mxu0 %v1230
  %v1266 = vpop.f32.mrb[0].mxu0
  %v1267 = vadd.f32 %v1193, %v1266
  %v1268 = vpop.f32.mrb[0].mxu0
  %v1269 = vpop.f32.mrb[0].mxu0
  %v1270 = vpop.f32.mrb[0].mxu0
  %1271 = vdwg.mxu0
  %v1274 = vcombine.low %v50, %v51
  %v1276 = vadd.f32 %v1267, %v1274
  %v1277 = vld [vmem:[%s6] sm:$0x1]
  %v1278 = vld [vmem:[%s7] sm:$0x1]
  %v1279 = vsel %vm122, %v1276, 0.0
  %1280 = vadd.xlane.f32.xlu0 %v1279
  %v1281 = vpop.xlane.xlu0 %1280
  %v1282 = vrcp.pop 64.0
  %v1283 = vmul.f32 %v1281, %v1282
  %v1284 = vsub.f32 %v1276, %v1283
  %v1285 = vmul.f32 %v1284, %v1284
  %v1286 = vsel %vm122, %v1285, 0.0
  %1287 = vadd.xlane.f32.xlu0 %v1286
  %v1288 = vpop.xlane.xlu0 %1287
  %v1289 = vmul.f32 %v1288, %v1282
  %v1290 = vadd.f32 %v1289, 1e-12
  %v1291 = vrsqrt.pop %v1290
  %v1292 = vmul.f32 %v1284, %v1291
  %v1294 = vlaneseq
  %v1295 = vshrl.u32 %v1294, 7
  %v1296 = vsub.s32 0, %v1295
  %v1297 = vrot.slane %v1277, %v1296
  %v1299 = vmul.f32 %v1292, %v1297
  %v1301 = vlaneseq
  %v1302 = vshrl.u32 %v1301, 7
  %v1303 = vsub.s32 0, %v1302
  %v1304 = vrot.slane %v1278, %v1303
  %v1306 = vadd.f32 %v1299, %v1304
  %v1307 = vpack.c.bf16 %v1306, %v1306
  %v1308 = vld [vmem:[%s8] sm:$0xf]
  %v1309 = vld [vmem:[%s8 + $0x4] sm:$0xf]
  %v1310 = vld [vmem:[%s8 + $0x8] sm:$0xf]
  %v1311 = vld [vmem:[%s8 + $0xc] sm:$0xf]
  %v1312 = vld [vmem:[%s8 + $0x10] sm:$0xf]
  %v1313 = vld [vmem:[%s8 + $0x14] sm:$0xf]
  %v1314 = vld [vmem:[%s8 + $0x18] sm:$0xf]
  %v1315 = vld [vmem:[%s8 + $0x1c] sm:$0xf]
  %v1316 = vld [vmem:[%s9] sm:$0x1]
  %v1318 = vlaneseq
  %v1319 = vshrl.u32 %v1318, 7
  %v1320 = vsub.s32 0, %v1319
  %v1321 = vrot.slane %v1316, %v1320
  %v1331 = vunpack.c.l.b16 %v1308
  %v1332 = vunpack.c.l.b16 %v1309
  %v1333 = vunpack.c.l.b16 %v1310
  %v1334 = vunpack.c.l.b16 %v1311
  %v1335 = vunpack.c.l.b16 %v1312
  %v1336 = vunpack.c.l.b16 %v1313
  %v1337 = vunpack.c.l.b16 %v1314
  %v1338 = vunpack.c.l.b16 %v1315
  %v1339 = vpack.c.b16 %v1332, %v1331
  %v1340 = vpack.c.b16 %v1334, %v1333
  %v1341 = vpack.c.b16 %v1336, %v1335
  %v1342 = vpack.c.b16 %v1338, %v1337
  %v1348 = vsel %vm122, %v1307, 0
  %1350 = vmatprep.subr.bf16.mxu0 0
  %1351 = vmatpush1.bf16.msra.mxu0 %v1339
  %1352 = vmatprep.subr.bf16.mxu0 0
  %1353 = vmatpush1.bf16.msra.mxu0 %v1340
  %1354 = vmatprep.subr.bf16.mxu0 0
  %1355 = vmatpush1.bf16.msra.mxu0 %v1341
  %1356 = vmatprep.subr.bf16.mxu0 0
  %1357 = vmatpush1.bf16.msra.mxu0 %v1342
  %1358 = vmatprep.subr.bf16.mxu0 0
  %1359 = vmatpush1.bf16.msra.mxu0 0
  %1360 = vmatprep.subr.bf16.mxu0 0
  %1361 = vmatpush1.bf16.msra.mxu0 0
  %1362 = vmatprep.subr.bf16.mxu0 0
  %1363 = vmatpush1.bf16.msra.mxu0 0
  %1364 = vmatprep.subr.bf16.mxu0 0
  %1365 = vmatpush1.bf16.msra.mxu0 0
  %1366 = vmatprep.subr.bf16.mxu0 0
  %1367 = vmatpush1.bf16.msra.mxu0 0
  %1368 = vmatprep.subr.bf16.mxu0 0
  %1369 = vmatpush1.bf16.msra.mxu0 0
  %1370 = vmatprep.subr.bf16.mxu0 0
  %1371 = vmatpush1.bf16.msra.mxu0 0
  %1372 = vmatprep.subr.bf16.mxu0 0
  %1373 = vmatpush1.bf16.msra.mxu0 0
  %1374 = vmatprep.subr.bf16.mxu0 0
  %1375 = vmatpush1.bf16.msra.mxu0 0
  %1376 = vmatprep.subr.bf16.mxu0 0
  %1377 = vmatpush1.bf16.msra.mxu0 0
  %1378 = vmatprep.subr.bf16.mxu0 0
  %1379 = vmatpush1.bf16.msra.mxu0 0
  %1380 = vmatprep.subr.bf16.mxu0 0
  %1381 = vmatpush1.bf16.msra.mxu0 0
  %1382 = vmatprep.mubr.bf16.mxu0 0
  %1383 = vmatmul.mubr.bf16.gmra.mrb[0].mxu0 %v1348
  %v1384 = vpop.f32.mrb[0].mxu0
  %v1385 = vadd.f32 %v1321, %v1384
  %v1386 = vpop.f32.mrb[0].mxu0
  %v1387 = vpop.f32.mrb[0].mxu0
  %v1388 = vpop.f32.mrb[0].mxu0
  %1389 = vdwg.mxu0
  %v1390 = vmul.f32 %v1385, %v1385
  %v1391 = vmul.f32 %v1385, %v1390
  %v1392 = vmul.f32 %v1391, 0.044715
  %v1393 = vadd.f32 %v1385, %v1392
  %v1394 = vmul.f32 %v1393, 0.7978846
  %v1395 = vtanh.pop %v1394
  %v1396 = vadd.f32 %v1395, 1.0
  %v1397 = vmul.f32 %v1396, 0.5
  %v1398 = vmul.f32 %v1385, %v1397
  %v1399 = vpack.c.bf16 %v1398, %v1398
  %v1400 = vld [vmem:[%s10] sm:$0xf]
  %v1401 = vld [vmem:[%s10 + $0x4] sm:$0xf]
  %v1402 = vld [vmem:[%s10 + $0x8] sm:$0xf]
  %v1403 = vld [vmem:[%s10 + $0xc] sm:$0xf]
  %v1404 = vld [vmem:[%s10 + $0x10] sm:$0xf]
  %v1405 = vld [vmem:[%s10 + $0x14] sm:$0xf]
  %v1406 = vld [vmem:[%s10 + $0x18] sm:$0xf]
  %v1407 = vld [vmem:[%s10 + $0x1c] sm:$0xf]
  %v1408 = vld [vmem:[%s10 + $0x20] sm:$0xf]
  %v1409 = vld [vmem:[%s10 + $0x24] sm:$0xf]
  %v1410 = vld [vmem:[%s10 + $0x28] sm:$0xf]
  %v1411 = vld [vmem:[%s10 + $0x2c] sm:$0xf]
  %v1412 = vld [vmem:[%s10 + $0x30] sm:$0xf]
  %v1413 = vld [vmem:[%s10 + $0x34] sm:$0xf]
  %v1414 = vld [vmem:[%s10 + $0x38] sm:$0xf]
  %v1415 = vld [vmem:[%s10 + $0x3c] sm:$0xf]
  %v1416 = vld [vmem:[%s11] sm:$0x1]
  %v1418 = vlaneseq
  %v1419 = vshrl.u32 %v1418, 7
  %v1420 = vsub.s32 0, %v1419
  %v1421 = vrot.slane %v1416, %v1420
  %v1439 = vunpack.c.l.b16 %v1400
  %v1440 = vunpack.c.l.b16 %v1401
  %v1441 = vunpack.c.l.b16 %v1402
  %v1442 = vunpack.c.l.b16 %v1403
  %v1443 = vunpack.c.l.b16 %v1404
  %v1444 = vunpack.c.l.b16 %v1405
  %v1445 = vunpack.c.l.b16 %v1406
  %v1446 = vunpack.c.l.b16 %v1407
  %v1447 = vunpack.c.l.b16 %v1408
  %v1448 = vunpack.c.l.b16 %v1409
  %v1449 = vunpack.c.l.b16 %v1410
  %v1450 = vunpack.c.l.b16 %v1411
  %v1451 = vunpack.c.l.b16 %v1412
  %v1452 = vunpack.c.l.b16 %v1413
  %v1453 = vunpack.c.l.b16 %v1414
  %v1454 = vunpack.c.l.b16 %v1415
  %v1455 = vpack.c.b16 %v1440, %v1439
  %v1456 = vpack.c.b16 %v1442, %v1441
  %v1457 = vpack.c.b16 %v1444, %v1443
  %v1458 = vpack.c.b16 %v1446, %v1445
  %v1459 = vpack.c.b16 %v1448, %v1447
  %v1460 = vpack.c.b16 %v1450, %v1449
  %v1461 = vpack.c.b16 %v1452, %v1451
  %v1462 = vpack.c.b16 %v1454, %v1453
  %1471 = vmatprep.subr.bf16.mxu0 0
  %1472 = vmatpush1.bf16.msra.mxu0 %v1455
  %1473 = vmatprep.subr.bf16.mxu0 0
  %1474 = vmatpush1.bf16.msra.mxu0 %v1456
  %1475 = vmatprep.subr.bf16.mxu0 0
  %1476 = vmatpush1.bf16.msra.mxu0 %v1457
  %1477 = vmatprep.subr.bf16.mxu0 0
  %1478 = vmatpush1.bf16.msra.mxu0 %v1458
  %1479 = vmatprep.subr.bf16.mxu0 0
  %1480 = vmatpush1.bf16.msra.mxu0 %v1459
  %1481 = vmatprep.subr.bf16.mxu0 0
  %1482 = vmatpush1.bf16.msra.mxu0 %v1460
  %1483 = vmatprep.subr.bf16.mxu0 0
  %1484 = vmatpush1.bf16.msra.mxu0 %v1461
  %1485 = vmatprep.subr.bf16.mxu0 0
  %1486 = vmatpush1.bf16.msra.mxu0 %v1462
  %1487 = vmatprep.subr.bf16.mxu0 0
  %1488 = vmatpush1.bf16.msra.mxu0 0
  %1489 = vmatprep.subr.bf16.mxu0 0
  %1490 = vmatpush1.bf16.msra.mxu0 0
  %1491 = vmatprep.subr.bf16.mxu0 0
  %1492 = vmatpush1.bf16.msra.mxu0 0
  %1493 = vmatprep.subr.bf16.mxu0 0
  %1494 = vmatpush1.bf16.msra.mxu0 0
  %1495 = vmatprep.subr.bf16.mxu0 0
  %1496 = vmatpush1.bf16.msra.mxu0 0
  %1497 = vmatprep.subr.bf16.mxu0 0
  %1498 = vmatpush1.bf16.msra.mxu0 0
  %1499 = vmatprep.subr.bf16.mxu0 0
  %1500 = vmatpush1.bf16.msra.mxu0 0
  %1501 = vmatprep.subr.bf16.mxu0 0
  %1502 = vmatpush1.bf16.msra.mxu0 0
  %1503 = vmatprep.mubr.bf16.mxu0 0
  %1504 = vmatmul.mubr.bf16.gmra.mrb[0].mxu0 %v1399
  %v1505 = vpop.f32.mrb[0].mxu0
  %v1506 = vadd.f32 %v1421, %v1505
  %v1507 = vpop.f32.mrb[0].mxu0
  %v1508 = vpop.f32.mrb[0].mxu0
  %v1509 = vpop.f32.mrb[0].mxu0
  %1510 = vdwg.mxu0
  %v1511 = vadd.f32 %v1506, %v1306
  %v1512 = vld [vmem:[%s12] sm:$0x1]
  %v1513 = vld [vmem:[%s13] sm:$0x1]
  %v1514 = vsel %vm122, %v1511, 0.0
  %1515 = vadd.xlane.f32.xlu0 %v1514
  %v1516 = vpop.xlane.xlu0 %1515
  %v1517 = vmul.f32 %v1516, %v1282
  %v1518 = vsub.f32 %v1511, %v1517
  %v1519 = vmul.f32 %v1518, %v1518
  %v1520 = vsel %vm122, %v1519, 0.0
  %1521 = vadd.xlane.f32.xlu0 %v1520
  %v1522 = vpop.xlane.xlu0 %1521
  %v1523 = vmul.f32 %v1522, %v1282
  %v1524 = vadd.f32 %v1523, 1e-12
  %v1525 = vrsqrt.pop %v1524
  %v1526 = vmul.f32 %v1518, %v1525
  %v1528 = vlaneseq
  %v1529 = vshrl.u32 %v1528, 7
  %v1530 = vsub.s32 0, %v1529
  %v1531 = vrot.slane %v1512, %v1530
  %v1533 = vmul.f32 %v1526, %v1531
  %v1535 = vlaneseq
  %v1536 = vshrl.u32 %v1535, 7
  %v1537 = vsub.s32 0, %v1536
  %v1538 = vrot.slane %v1513, %v1537
  %v1540 = vadd.f32 %v1533, %v1538
  %v1542 = vcombine.high %v1540, %v1540
  %v1544 = vpack.c.bf16 %v1540, %v1540
  %v1545 = vpack.c.bf16 %v1542, %v1542
  %vm1546 = vcmask 517120
  %1547 = vst.msk [vmem:[%s14] sm:$0x3] %vm1546, %v1544
  %1548 = vst.msk [vmem:[%s14 + $0x2] sm:$0x3] %vm1546, %v1545
  // Predicated region
  $region58: #{_lambda_.5} parent=0 // pred_check
    _
  $region59: #{_lambda_.5} parent=0 // pred_check_branch
    %1550 = sbr.rel (0) target = $region61
  $region60: #{_lambda_.5} parent=0 // pred_region
    _
  $region61: #{_lambda_.5} parent=0 // pred_fallthru
    _
  // Predicated region
  $region62: #{_lambda_.5} parent=0 // pred_check
    _
  $region63: #{_lambda_.5} parent=0 // pred_check_branch
    %1552 = sbr.rel (0) target = $region65
  $region64: #{_lambda_.5} parent=0 // pred_region
    _
  $region65: #{_lambda_.5} parent=0 // pred_fallthru
    _

// kernel: _lambda_.4
$region0: #{_lambda_.4}
  #allocation0 [shape = 'u32[]', space=smem, size = 0x4, offset = 0x4, fixed_abs, tag = 'smem constant byte address 0x4 - core index']
  #allocation1 [shape = 'u32[144,128]{1,0:T(1,128)}', space=vmem, size = 0x12000, scoped, tag = 'internal scratch']
  #allocation2 [shape = 'bf16[6,8,64]{2,1,0:T(8,128)(2,1)}', space=vmem, size = 0x3000, scoped, tag = 'scratch operand']
  %s0 = inlined_call_operand.vmem [shape: bf16[6,8,64], index: 0, kind: input, shape index: {}]
  %s1 = inlined_call_operand.vmem [shape: f32[6,1,8], index: 1, kind: input, shape index: {}]
  %s2 = inlined_call_operand.vmem [shape: bf16[64,192], index: 2, kind: input, shape index: {}]
  %s3 = inlined_call_operand.vmem [shape: f32[1,192], index: 3, kind: input, shape index: {}]
  %s4 = inlined_call_operand.vmem [shape: bf16[64,64], index: 4, kind: input, shape index: {}]
  %s5 = inlined_call_operand.vmem [shape: f32[1,64], index: 5, kind: input, shape index: {}]
  %s6 = inlined_call_operand.vmem [shape: f32[1,64], index: 6, kind: input, shape index: {}]
  %s7 = inlined_call_operand.vmem [shape: f32[1,64], index: 7, kind: input, shape index: {}]
  %s8 = inlined_call_operand.vmem [shape: bf16[64,128], index: 8, kind: input, shape index: {}]
  %s9 = inlined_call_operand.vmem [shape: f32[1,128], index: 9, kind: input, shape index: {}]
  %s10 = inlined_call_operand.vmem [shape: bf16[128,64], index: 10, kind: input, shape index: {}]
  %s11 = inlined_call_operand.vmem [shape: f32[1,64], index: 11, kind: input, shape index: {}]
  %s12 = inlined_call_operand.vmem [shape: f32[1,64], index: 12, kind: input, shape index: {}]
  %s13 = inlined_call_operand.vmem [shape: f32[1,64], index: 13, kind: input, shape index: {}]
  %s14 = inlined_call_operand.vmem [shape: bf16[6,8,64], index: 14, kind: output, shape index: {0}]
  %s15 = inlined_call_operand.vmem [shape: bf16[6,1,64], index: 15, kind: output, shape index: {1}]
  %16 = xla_tuple %s14, %s15
  %s17 = sld [smem:[#allocation0]]
  $region74: #{_lambda_.4} parent=0
    _
  %s19 = ssub.s32 1, %s17
  %s20 = scalar_select 0, %s19, %s17
  // Predicated region
  $region2: #{_lambda_.4} parent=0 // pred_check
    _
  $region3: #{_lambda_.4} parent=0 // pred_check_branch
    %22 = sbr.rel (0) target = $region5
  $region4: #{_lambda_.4} parent=0 // pred_region
    _
  $region5: #{_lambda_.4} parent=0 // pred_fallthru
    _
  // Predicated region
  $region6: #{_lambda_.4} parent=0 // pred_check
    _
  $region7: #{_lambda_.4} parent=0 // pred_check_branch
    %24 = sbr.rel (0) target = $region9
  $region8: #{_lambda_.4} parent=0 // pred_region
    _
  $region9: #{_lambda_.4} parent=0 // pred_fallthru
    _
  // Predicated region
  $region10: #{_lambda_.4} parent=0 // pred_check
    _
  $region11: #{_lambda_.4} parent=0 // pred_check_branch
    %26 = sbr.rel (0) target = $region13
  $region12: #{_lambda_.4} parent=0 // pred_region
    _
  $region13: #{_lambda_.4} parent=0 // pred_fallthru
    _
  // Predicated region
  $region14: #{_lambda_.4} parent=0 // pred_check
    _
  $region15: #{_lambda_.4} parent=0 // pred_check_branch
    %28 = sbr.rel (0) target = $region17
  $region16: #{_lambda_.4} parent=0 // pred_region
    _
  $region17: #{_lambda_.4} parent=0 // pred_fallthru
    _
  // Predicated region
  $region18: #{_lambda_.4} parent=0 // pred_check
    _
  $region19: #{_lambda_.4} parent=0 // pred_check_branch
    %30 = sbr.rel (0) target = $region21
  $region20: #{_lambda_.4} parent=0 // pred_region
    _
  $region21: #{_lambda_.4} parent=0 // pred_fallthru
    _
  // Predicated region
  $region22: #{_lambda_.4} parent=0 // pred_check
    _
  $region23: #{_lambda_.4} parent=0 // pred_check_branch
    %32 = sbr.rel (0) target = $region25
  $region24: #{_lambda_.4} parent=0 // pred_region
    _
  $region25: #{_lambda_.4} parent=0 // pred_fallthru
    _
  // Predicated region
  $region26: #{_lambda_.4} parent=0 // pred_check
    _
  $region27: #{_lambda_.4} parent=0 // pred_check_branch
    %34 = sbr.rel (0) target = $region29
  $region28: #{_lambda_.4} parent=0 // pred_region
    _
  $region29: #{_lambda_.4} parent=0 // pred_fallthru
    _
  // Predicated region
  $region30: #{_lambda_.4} parent=0 // pred_check
    _
  $region31: #{_lambda_.4} parent=0 // pred_check_branch
    %36 = sbr.rel (0) target = $region33
  $region32: #{_lambda_.4} parent=0 // pred_region
    _
  $region33: #{_lambda_.4} parent=0 // pred_fallthru
    _
  // Predicated region
  $region34: #{_lambda_.4} parent=0 // pred_check
    _
  $region35: #{_lambda_.4} parent=0 // pred_check_branch
    %38 = sbr.rel (0) target = $region37
  $region36: #{_lambda_.4} parent=0 // pred_region
    _
  $region37: #{_lambda_.4} parent=0 // pred_fallthru
    _
  // Predicated region
  $region38: #{_lambda_.4} parent=0 // pred_check
    _
  $region39: #{_lambda_.4} parent=0 // pred_check_branch
    %40 = sbr.rel (0) target = $region41
  $region40: #{_lambda_.4} parent=0 // pred_region
    _
  $region41: #{_lambda_.4} parent=0 // pred_fallthru
    _
  // Predicated region
  $region42: #{_lambda_.4} parent=0 // pred_check
    _
  $region43: #{_lambda_.4} parent=0 // pred_check_branch
    %42 = sbr.rel (0) target = $region45
  $region44: #{_lambda_.4} parent=0 // pred_region
    _
  $region45: #{_lambda_.4} parent=0 // pred_fallthru
    _
  // Predicated region
  $region46: #{_lambda_.4} parent=0 // pred_check
    _
  $region47: #{_lambda_.4} parent=0 // pred_check_branch
    %44 = sbr.rel (0) target = $region49
  $region48: #{_lambda_.4} parent=0 // pred_region
    _
  $region49: #{_lambda_.4} parent=0 // pred_fallthru
    _
  // Predicated region
  $region50: #{_lambda_.4} parent=0 // pred_check
    _
  $region51: #{_lambda_.4} parent=0 // pred_check_branch
    %46 = sbr.rel (0) target = $region53
  $region52: #{_lambda_.4} parent=0 // pred_region
    _
  $region53: #{_lambda_.4} parent=0 // pred_fallthru
    _
  // Predicated region
  $region54: #{_lambda_.4} parent=0 // pred_check
    _
  $region55: #{_lambda_.4} parent=0 // pred_check_branch
    %48 = sbr.rel (0) target = $region57
  $region56: #{_lambda_.4} parent=0 // pred_region
    _
  $region57: #{_lambda_.4} parent=0 // pred_fallthru
    _
  %v50 = vld [vmem:[%s0] sm:$0xf]
  %v51 = vld [vmem:[%s0 + $0x4] sm:$0xf]
  %v52 = vld [vmem:[%s0 + $0x8] sm:$0xf]
  %v53 = vld [vmem:[%s0 + $0xc] sm:$0xf]
  %v54 = vld [vmem:[%s0 + $0x10] sm:$0xf]
  %v55 = vld [vmem:[%s0 + $0x14] sm:$0xf]
  %v56 = vunpack.c.l.bf16 %v50
  %v57 = vunpack.c.l.bf16 %v51
  %v58 = vunpack.c.l.bf16 %v52
  %v59 = vunpack.c.l.bf16 %v53
  %v60 = vunpack.c.l.bf16 %v54
  %v61 = vunpack.c.l.bf16 %v55
  %v62 = vld [vmem:[%s2] sm:$0xff]
  %v63 = vld [vmem:[%s2 + $0x8] sm:$0xff]
  %v64 = vld [vmem:[%s2 + $0x10] sm:$0xff]
  %v65 = vld [vmem:[%s2 + $0x18] sm:$0xff]
  %v66 = vld [vmem:[%s2 + $0x20] sm:$0xff]
  %v67 = vld [vmem:[%s2 + $0x28] sm:$0xff]
  %v68 = vld [vmem:[%s2 + $0x30] sm:$0xff]
  %v69 = vld [vmem:[%s2 + $0x38] sm:$0xff]
  %v70 = vld [vmem:[%s3] sm:$0x3]
  %v72 = vlaneseq
  %v73 = vshrl.u32 %v72, 7
  %v74 = vsub.s32 0, %v73
  %v75 = vrot.slane %v70, %v74
  %v76 = vlaneseq
  %v77 = vshrl.u32 %v76, 7
  %v78 = vsub.s32 1, %v77
  %v79 = vrot.slane %v70, %v78
  %v88 = vunpack.c.l.b16 %v50
  %v89 = vunpack.c.l.b16 %v51
  %v90 = vunpack.c.l.b16 %v52
  %v91 = vunpack.c.l.b16 %v53
  %v92 = vunpack.c.l.b16 %v54
  %v93 = vunpack.c.l.b16 %v55
  %v94 = vpack.c.b16 %v89, %v88
  %v95 = vpack.c.b16 %v91, %v90
  %v96 = vpack.c.b16 %v93, %v92
  %v105 = vunpack.c.l.b16 %v62
  %v106 = vunpack.c.h.b16 %v62
  %v107 = vunpack.c.l.b16 %v63
  %v108 = vunpack.c.h.b16 %v63
  %v109 = vunpack.c.l.b16 %v64
  %v110 = vunpack.c.h.b16 %v64
  %v111 = vunpack.c.l.b16 %v65
  %v112 = vunpack.c.h.b16 %v65
  %v113 = vunpack.c.l.b16 %v66
  %v114 = vunpack.c.h.b16 %v66
  %v115 = vunpack.c.l.b16 %v67
  %v116 = vunpack.c.h.b16 %v67
  %v117 = vunpack.c.l.b16 %v68
  %v118 = vunpack.c.h.b16 %v68
  %v119 = vunpack.c.l.b16 %v69
  %v120 = vunpack.c.h.b16 %v69
  %v121 = vpack.c.b16 %v107, %v105
  %v122 = vpack.c.b16 %v108, %v106
  %v123 = vpack.c.b16 %v111, %v109
  %v124 = vpack.c.b16 %v112, %v110
  %v125 = vpack.c.b16 %v115, %v113
  %v126 = vpack.c.b16 %v116, %v114
  %v127 = vpack.c.b16 %v119, %v117
  %v128 = vpack.c.b16 %v120, %v118
  %vm137 = vcmask 523264
  %v139 = vsel %vm137, %v94, 0
  %v142 = vsel %vm137, %v95, 0
  %v145 = vsel %vm137, %v96, 0
  %147 = vmatprep.subr.bf16.mxu0 %v122
  %148 = vmatpush1.bf16.msra.mxu0 %v121
  %149 = vmatprep.subr.bf16.mxu0 %v124
  %150 = vmatpush1.bf16.msra.mxu0 %v123
  %151 = vmatprep.subr.bf16.mxu0 %v126
  %152 = vmatpush1.bf16.msra.mxu0 %v125
  %153 = vmatprep.subr.bf16.mxu0 %v128
  %154 = vmatpush1.bf16.msra.mxu0 %v127
  %155 = vmatprep.subr.bf16.mxu0 0
  %156 = vmatpush1.bf16.msra.mxu0 0
  %157 = vmatprep.subr.bf16.mxu0 0
  %158 = vmatpush1.bf16.msra.mxu0 0
  %159 = vmatprep.subr.bf16.mxu0 0
  %160 = vmatpush1.bf16.msra.mxu0 0
  %161 = vmatprep.subr.bf16.mxu0 0
  %162 = vmatpush1.bf16.msra.mxu0 0
  %163 = vmatprep.subr.bf16.mxu0 0
  %164 = vmatpush1.bf16.msra.mxu0 0
  %165 = vmatprep.subr.bf16.mxu0 0
  %166 = vmatpush1.bf16.msra.mxu0 0
  %167 = vmatprep.subr.bf16.mxu0 0
  %168 = vmatpush1.bf16.msra.mxu0 0
  %169 = vmatprep.subr.bf16.mxu0 0
  %170 = vmatpush1.bf16.msra.mxu0 0
  %171 = vmatprep.subr.bf16.mxu0 0
  %172 = vmatpush1.bf16.msra.mxu0 0
  %173 = vmatprep.subr.bf16.mxu0 0
  %174 = vmatpush1.bf16.msra.mxu0 0
  %175 = vmatprep.subr.bf16.mxu0 0
  %176 = vmatpush1.bf16.msra.mxu0 0
  %177 = vmatprep.subr.bf16.mxu0 0
  %178 = vmatpush1.bf16.msra.mxu0 0
  %179 = vmatprep.mubr.bf16.mxu0 0
  %180 = vmatmul.mubr.bf16.gmra.mrb[0].mxu0 %v139
  %v181 = vpop.f32.mrb[0].mxu0
  %v182 = vadd.f32 %v75, %v181
  %v183 = vpop.f32.mrb[0].mxu0
  %v184 = vadd.f32 %v79, %v183
  %v185 = vpop.f32.mrb[0].mxu0
  %v186 = vadd.f32 %v75, %v185
  %v187 = vpop.f32.mrb[0].mxu0
  %v188 = vadd.f32 %v79, %v187
  %189 = vmatprep.mubr.bf16.mxu0 0
  %190 = vmatmul.mubr.bf16.gmra.mrb[0].mxu0 %v142
  %v191 = vpop.f32.mrb[0].mxu0
  %v192 = vadd.f32 %v75, %v191
  %v193 = vpop.f32.mrb[0].mxu0
  %v194 = vadd.f32 %v79, %v193
  %v195 = vpop.f32.mrb[0].mxu0
  %v196 = vadd.f32 %v75, %v195
  %v197 = vpop.f32.mrb[0].mxu0
  %v198 = vadd.f32 %v79, %v197
  %199 = vmatprep.mubr.bf16.mxu0 0
  %200 = vmatmul.mubr.bf16.gmra.mrb[0].mxu0 %v145
  %v201 = vpop.f32.mrb[0].mxu0
  %v202 = vadd.f32 %v75, %v201
  %v203 = vpop.f32.mrb[0].mxu0
  %v204 = vadd.f32 %v79, %v203
  %v205 = vpop.f32.mrb[0].mxu0
  %v206 = vadd.f32 %v75, %v205
  %v207 = vpop.f32.mrb[0].mxu0
  %v208 = vadd.f32 %v79, %v207
  %209 = vdwg.mxu0
  %v210 = vpack.c.bf16 %v186, %v182
  %v211 = vpack.c.bf16 %v188, %v184
  %v212 = vpack.c.bf16 %v196, %v192
  %v213 = vpack.c.bf16 %v198, %v194
  %v214 = vpack.c.bf16 %v206, %v202
  %v215 = vpack.c.bf16 %v208, %v204
  %v222 = vunpack.c.l.b16 %v210
  %v223 = vunpack.c.l.b16 %v211
  %v224 = vunpack.c.h.b16 %v210
  %v225 = vunpack.c.h.b16 %v211
  %v226 = vunpack.c.l.b16 %v212
  %v227 = vunpack.c.l.b16 %v213
  %v228 = vunpack.c.h.b16 %v212
  %v229 = vunpack.c.h.b16 %v213
  %v230 = vunpack.c.l.b16 %v214
  %v231 = vunpack.c.l.b16 %v215
  %v232 = vunpack.c.h.b16 %v214
  %v233 = vunpack.c.h.b16 %v215
  %v234 = vpack.c.b16 %v223, %v222
  %v235 = vpack.c.b16 %v225, %v224
  %v236 = vpack.c.b16 %v227, %v226
  %v237 = vpack.c.b16 %v229, %v228
  %v238 = vpack.c.b16 %v231, %v230
  %v239 = vpack.c.b16 %v233, %v232
  %v240 = vld [vmem:[%s1] sm:$0x1]
  %v241 = vld [vmem:[%s1 + $0x1] sm:$0x1]
  %v242 = vld [vmem:[%s1 + $0x2] sm:$0x1]
  %v243 = vld [vmem:[%s1 + $0x3] sm:$0x1]
  %v244 = vld [vmem:[%s1 + $0x4] sm:$0x1]
  %v245 = vld [vmem:[%s1 + $0x5] sm:$0x1]
  %v252 = vlaneseq
  %v253 = vshrl.u32 %v252, 7
  %v254 = vsub.s32 0, %v253
  %v255 = vrot.slane %v240, %v254
  %v256 = vlaneseq
  %v257 = vshrl.u32 %v256, 7
  %v258 = vsub.s32 0, %v257
  %v259 = vrot.slane %v241, %v258
  %v260 = vlaneseq
  %v261 = vshrl.u32 %v260, 7
  %v262 = vsub.s32 0, %v261
  %v263 = vrot.slane %v242, %v262
  %v264 = vlaneseq
  %v265 = vshrl.u32 %v264, 7
  %v266 = vsub.s32 0, %v265
  %v267 = vrot.slane %v243, %v266
  %v268 = vlaneseq
  %v269 = vshrl.u32 %v268, 7
  %v270 = vsub.s32 0, %v269
  %v271 = vrot.slane %v244, %v270
  %v272 = vlaneseq
  %v273 = vshrl.u32 %v272, 7
  %v274 = vsub.s32 0, %v273
  %v275 = vrot.slane %v245, %v274
  %v282 = vpack.c.b16 %v222, %v222
  %283 = vrot.lane.b32.xlu0 %v282, 64
  %v284 = vpop.permute.xlu0 %283
  %vm285 = vcmask 130048
  %v287 = vsel %vm285, %v234, 0
  %v290 = vsel %vm285, %v284, 0
  %292 = vmatprep.subr.bf16.mxu0 0
  %293 = vmatpush1.bf16.xpose.msra.mxu0 %v290
  %294 = vmatprep.subr.bf16.mxu0 0
  %295 = vmatpush1.bf16.xpose.msra.mxu0 0
  %296 = vmatprep.subr.bf16.mxu0 0
  %297 = vmatpush1.bf16.xpose.msra.mxu0 0
  %298 = vmatprep.subr.bf16.mxu0 0
  %299 = vmatpush1.bf16.xpose.msra.mxu0 0
  %300 = vmatprep.subr.bf16.mxu0 0
  %301 = vmatpush1.bf16.xpose.msra.mxu0 0
  %302 = vmatprep.subr.bf16.mxu0 0
  %303 = vmatpush1.bf16.xpose.msra.mxu0 0
  %304 = vmatprep.subr.bf16.mxu0 0
  %305 = vmatpush1.bf16.xpose.msra.mxu0 0
  %306 = vmatprep.subr.bf16.mxu0 0
  %307 = vmatpush1.bf16.xpose.msra.mxu0 0
  %308 = vmatprep.subr.bf16.mxu0 0
  %309 = vmatpush1.bf16.xpose.msra.mxu0 0
  %310 = vmatprep.subr.bf16.mxu0 0
  %311 = vmatpush1.bf16.xpose.msra.mxu0 0
  %312 = vmatprep.subr.bf16.mxu0 0
  %313 = vmatpush1.bf16.xpose.msra.mxu0 0
  %314 = vmatprep.subr.bf16.mxu0 0
  %315 = vmatpush1.bf16.xpose.msra.mxu0 0
  %316 = vmatprep.subr.bf16.mxu0 0
  %317 = vmatpush1.bf16.xpose.msra.mxu0 0
  %318 = vmatprep.subr.bf16.mxu0 0
  %319 = vmatpush1.bf16.xpose.msra.mxu0 0
  %320 = vmatprep.subr.bf16.mxu0 0
  %321 = vmatpush1.bf16.xpose.msra.mxu0 0
  %322 = vmatprep.subr.bf16.mxu0 0
  %323 = vmatpush1.bf16.xpose.msra.mxu0 0
  %324 = vmatprep.mubr.bf16.mxu0 0
  %325 = vmatmul.mubr.bf16.gmra.mrb[0].mxu0 %v287
  %v326 = vpop.f32.mrb[0].mxu0
  %v327 = vadd.f32 %v255, %v326
  %v328 = vpop.f32.mrb[0].mxu0
  %v329 = vpop.f32.mrb[0].mxu0
  %v330 = vpop.f32.mrb[0].mxu0
  %331 = vdwg.mxu0
  %v332 = vpack.c.b16 %v224, %v224
  %333 = vrot.lane.b32.xlu0 %v332, 64
  %v334 = vpop.permute.xlu0 %333
  %v336 = vsel %vm285, %v235, 0
  %v339 = vsel %vm285, %v334, 0
  %341 = vmatprep.subr.bf16.mxu0 0
  %342 = vmatpush1.bf16.xpose.msra.mxu0 %v339
  %343 = vmatprep.subr.bf16.mxu0 0
  %344 = vmatpush1.bf16.xpose.msra.mxu0 0
  %345 = vmatprep.subr.bf16.mxu0 0
  %346 = vmatpush1.bf16.xpose.msra.mxu0 0
  %347 = vmatprep.subr.bf16.mxu0 0
  %348 = vmatpush1.bf16.xpose.msra.mxu0 0
  %349 = vmatprep.subr.bf16.mxu0 0
  %350 = vmatpush1.bf16.xpose.msra.mxu0 0
  %351 = vmatprep.subr.bf16.mxu0 0
  %352 = vmatpush1.bf16.xpose.msra.mxu0 0
  %353 = vmatprep.subr.bf16.mxu0 0
  %354 = vmatpush1.bf16.xpose.msra.mxu0 0
  %355 = vmatprep.subr.bf16.mxu0 0
  %356 = vmatpush1.bf16.xpose.msra.mxu0 0
  %357 = vmatprep.subr.bf16.mxu0 0
  %358 = vmatpush1.bf16.xpose.msra.mxu0 0
  %359 = vmatprep.subr.bf16.mxu0 0
  %360 = vmatpush1.bf16.xpose.msra.mxu0 0
  %361 = vmatprep.subr.bf16.mxu0 0
  %362 = vmatpush1.bf16.xpose.msra.mxu0 0
  %363 = vmatprep.subr.bf16.mxu0 0
  %364 = vmatpush1.bf16.xpose.msra.mxu0 0
  %365 = vmatprep.subr.bf16.mxu0 0
  %366 = vmatpush1.bf16.xpose.msra.mxu0 0
  %367 = vmatprep.subr.bf16.mxu0 0
  %368 = vmatpush1.bf16.xpose.msra.mxu0 0
  %369 = vmatprep.subr.bf16.mxu0 0
  %370 = vmatpush1.bf16.xpose.msra.mxu0 0
  %371 = vmatprep.subr.bf16.mxu0 0
  %372 = vmatpush1.bf16.xpose.msra.mxu0 0
  %373 = vmatprep.mubr.bf16.mxu0 0
  %374 = vmatmul.mubr.bf16.gmra.mrb[0].mxu0 %v336
  %v375 = vpop.f32.mrb[0].mxu0
  %v376 = vadd.f32 %v259, %v375
  %v377 = vpop.f32.mrb[0].mxu0
  %v378 = vpop.f32.mrb[0].mxu0
  %v379 = vpop.f32.mrb[0].mxu0
  %380 = vdwg.mxu0
  %v381 = vpack.c.b16 %v226, %v226
  %382 = vrot.lane.b32.xlu0 %v381, 64
  %v383 = vpop.permute.xlu0 %382
  %v385 = vsel %vm285, %v236, 0
  %v388 = vsel %vm285, %v383, 0
  %390 = vmatprep.subr.bf16.mxu0 0
  %391 = vmatpush1.bf16.xpose.msra.mxu0 %v388
  %392 = vmatprep.subr.bf16.mxu0 0
  %393 = vmatpush1.bf16.xpose.msra.mxu0 0
  %394 = vmatprep.subr.bf16.mxu0 0
  %395 = vmatpush1.bf16.xpose.msra.mxu0 0
  %396 = vmatprep.subr.bf16.mxu0 0
  %397 = vmatpush1.bf16.xpose.msra.mxu0 0
  %398 = vmatprep.subr.bf16.mxu0 0
  %399 = vmatpush1.bf16.xpose.msra.mxu0 0
  %400 = vmatprep.subr.bf16.mxu0 0
  %401 = vmatpush1.bf16.xpose.msra.mxu0 0
  %402 = vmatprep.subr.bf16.mxu0 0
  %403 = vmatpush1.bf16.xpose.msra.mxu0 0
  %404 = vmatprep.subr.bf16.mxu0 0
  %405 = vmatpush1.bf16.xpose.msra.mxu0 0
  %406 = vmatprep.subr.bf16.mxu0 0
  %407 = vmatpush1.bf16.xpose.msra.mxu0 0
  %408 = vmatprep.subr.bf16.mxu0 0
  %409 = vmatpush1.bf16.xpose.msra.mxu0 0
  %410 = vmatprep.subr.bf16.mxu0 0
  %411 = vmatpush1.bf16.xpose.msra.mxu0 0
  %412 = vmatprep.subr.bf16.mxu0 0
  %413 = vmatpush1.bf16.xpose.msra.mxu0 0
  %414 = vmatprep.subr.bf16.mxu0 0
  %415 = vmatpush1.bf16.xpose.msra.mxu0 0
  %416 = vmatprep.subr.bf16.mxu0 0
  %417 = vmatpush1.bf16.xpose.msra.mxu0 0
  %418 = vmatprep.subr.bf16.mxu0 0
  %419 = vmatpush1.bf16.xpose.msra.mxu0 0
  %420 = vmatprep.subr.bf16.mxu0 0
  %421 = vmatpush1.bf16.xpose.msra.mxu0 0
  %422 = vmatprep.mubr.bf16.mxu0 0
  %423 = vmatmul.mubr.bf16.gmra.mrb[0].mxu0 %v385
  %v424 = vpop.f32.mrb[0].mxu0
  %v425 = vadd.f32 %v263, %v424
  %v426 = vpop.f32.mrb[0].mxu0
  %v427 = vpop.f32.mrb[0].mxu0
  %v428 = vpop.f32.mrb[0].mxu0
  %429 = vdwg.mxu0
  %v430 = vpack.c.b16 %v228, %v228
  %431 = vrot.lane.b32.xlu0 %v430, 64
  %v432 = vpop.permute.xlu0 %431
  %v434 = vsel %vm285, %v237, 0
  %v437 = vsel %vm285, %v432, 0
  %439 = vmatprep.subr.bf16.mxu0 0
  %440 = vmatpush1.bf16.xpose.msra.mxu0 %v437
  %441 = vmatprep.subr.bf16.mxu0 0
  %442 = vmatpush1.bf16.xpose.msra.mxu0 0
  %443 = vmatprep.subr.bf16.mxu0 0
  %444 = vmatpush1.bf16.xpose.msra.mxu0 0
  %445 = vmatprep.subr.bf16.mxu0 0
  %446 = vmatpush1.bf16.xpose.msra.mxu0 0
  %447 = vmatprep.subr.bf16.mxu0 0
  %448 = vmatpush1.bf16.xpose.msra.mxu0 0
  %449 = vmatprep.subr.bf16.mxu0 0
  %450 = vmatpush1.bf16.xpose.msra.mxu0 0
  %451 = vmatprep.subr.bf16.mxu0 0
  %452 = vmatpush1.bf16.xpose.msra.mxu0 0
  %453 = vmatprep.subr.bf16.mxu0 0
  %454 = vmatpush1.bf16.xpose.msra.mxu0 0
  %455 = vmatprep.subr.bf16.mxu0 0
  %456 = vmatpush1.bf16.xpose.msra.mxu0 0
  %457 = vmatprep.subr.bf16.mxu0 0
  %458 = vmatpush1.bf16.xpose.msra.mxu0 0
  %459 = vmatprep.subr.bf16.mxu0 0
  %460 = vmatpush1.bf16.xpose.msra.mxu0 0
  %461 = vmatprep.subr.bf16.mxu0 0
  %462 = vmatpush1.bf16.xpose.msra.mxu0 0
  %463 = vmatprep.subr.bf16.mxu0 0
  %464 = vmatpush1.bf16.xpose.msra.mxu0 0
  %465 = vmatprep.subr.bf16.mxu0 0
  %466 = vmatpush1.bf16.xpose.msra.mxu0 0
  %467 = vmatprep.subr.bf16.mxu0 0
  %468 = vmatpush1.bf16.xpose.msra.mxu0 0
  %469 = vmatprep.subr.bf16.mxu0 0
  %470 = vmatpush1.bf16.xpose.msra.mxu0 0
  %471 = vmatprep.mubr.bf16.mxu0 0
  %472 = vmatmul.mubr.bf16.gmra.mrb[0].mxu0 %v434
  %v473 = vpop.f32.mrb[0].mxu0
  %v474 = vadd.f32 %v267, %v473
  %v475 = vpop.f32.mrb[0].mxu0
  %v476 = vpop.f32.mrb[0].mxu0
  %v477 = vpop.f32.mrb[0].mxu0
  %478 = vdwg.mxu0
  %v479 = vpack.c.b16 %v230, %v230
  %480 = vrot.lane.b32.xlu0 %v479, 64
  %v481 = vpop.permute.xlu0 %480
  %v483 = vsel %vm285, %v238, 0
  %v486 = vsel %vm285, %v481, 0
  %488 = vmatprep.subr.bf16.mxu0 0
  %489 = vmatpush1.bf16.xpose.msra.mxu0 %v486
  %490 = vmatprep.subr.bf16.mxu0 0
  %491 = vmatpush1.bf16.xpose.msra.mxu0 0
  %492 = vmatprep.subr.bf16.mxu0 0
  %493 = vmatpush1.bf16.xpose.msra.mxu0 0
  %494 = vmatprep.subr.bf16.mxu0 0
  %495 = vmatpush1.bf16.xpose.msra.mxu0 0
  %496 = vmatprep.subr.bf16.mxu0 0
  %497 = vmatpush1.bf16.xpose.msra.mxu0 0
  %498 = vmatprep.subr.bf16.mxu0 0
  %499 = vmatpush1.bf16.xpose.msra.mxu0 0
  %500 = vmatprep.subr.bf16.mxu0 0
  %501 = vmatpush1.bf16.xpose.msra.mxu0 0
  %502 = vmatprep.subr.bf16.mxu0 0
  %503 = vmatpush1.bf16.xpose.msra.mxu0 0
  %504 = vmatprep.subr.bf16.mxu0 0
  %505 = vmatpush1.bf16.xpose.msra.mxu0 0
  %506 = vmatprep.subr.bf16.mxu0 0
  %507 = vmatpush1.bf16.xpose.msra.mxu0 0
  %508 = vmatprep.subr.bf16.mxu0 0
  %509 = vmatpush1.bf16.xpose.msra.mxu0 0
  %510 = vmatprep.subr.bf16.mxu0 0
  %511 = vmatpush1.bf16.xpose.msra.mxu0 0
  %512 = vmatprep.subr.bf16.mxu0 0
  %513 = vmatpush1.bf16.xpose.msra.mxu0 0
  %514 = vmatprep.subr.bf16.mxu0 0
  %515 = vmatpush1.bf16.xpose.msra.mxu0 0
  %516 = vmatprep.subr.bf16.mxu0 0
  %517 = vmatpush1.bf16.xpose.msra.mxu0 0
  %518 = vmatprep.subr.bf16.mxu0 0
  %519 = vmatpush1.bf16.xpose.msra.mxu0 0
  %520 = vmatprep.mubr.bf16.mxu0 0
  %521 = vmatmul.mubr.bf16.gmra.mrb[0].mxu0 %v483
  %v522 = vpop.f32.mrb[0].mxu0
  %v523 = vadd.f32 %v271, %v522
  %v524 = vpop.f32.mrb[0].mxu0
  %v525 = vpop.f32.mrb[0].mxu0
  %v526 = vpop.f32.mrb[0].mxu0
  %527 = vdwg.mxu0
  %v528 = vpack.c.b16 %v232, %v232
  %529 = vrot.lane.b32.xlu0 %v528, 64
  %v530 = vpop.permute.xlu0 %529
  %v532 = vsel %vm285, %v239, 0
  %v535 = vsel %vm285, %v530, 0
  %537 = vmatprep.subr.bf16.mxu0 0
  %538 = vmatpush1.bf16.xpose.msra.mxu0 %v535
  %539 = vmatprep.subr.bf16.mxu0 0
  %540 = vmatpush1.bf16.xpose.msra.mxu0 0
  %541 = vmatprep.subr.bf16.mxu0 0
  %542 = vmatpush1.bf16.xpose.msra.mxu0 0
  %543 = vmatprep.subr.bf16.mxu0 0
  %544 = vmatpush1.bf16.xpose.msra.mxu0 0
  %545 = vmatprep.subr.bf16.mxu0 0
  %546 = vmatpush1.bf16.xpose.msra.mxu0 0
  %547 = vmatprep.subr.bf16.mxu0 0
  %548 = vmatpush1.bf16.xpose.msra.mxu0 0
  %549 = vmatprep.subr.bf16.mxu0 0
  %550 = vmatpush1.bf16.xpose.msra.mxu0 0
  %551 = vmatprep.subr.bf16.mxu0 0
  %552 = vmatpush1.bf16.xpose.msra.mxu0 0
  %553 = vmatprep.subr.bf16.mxu0 0
  %554 = vmatpush1.bf16.xpose.msra.mxu0 0
  %555 = vmatprep.subr.bf16.mxu0 0
  %556 = vmatpush1.bf16.xpose.msra.mxu0 0
  %557 = vmatprep.subr.bf16.mxu0 0
  %558 = vmatpush1.bf16.xpose.msra.mxu0 0
  %559 = vmatprep.subr.bf16.mxu0 0
  %560 = vmatpush1.bf16.xpose.msra.mxu0 0
  %561 = vmatprep.subr.bf16.mxu0 0
  %562 = vmatpush1.bf16.xpose.msra.mxu0 0
  %563 = vmatprep.subr.bf16.mxu0 0
  %564 = vmatpush1.bf16.xpose.msra.mxu0 0
  %565 = vmatprep.subr.bf16.mxu0 0
  %566 = vmatpush1.bf16.xpose.msra.mxu0 0
  %567 = vmatprep.subr.bf16.mxu0 0
  %568 = vmatpush1.bf16.xpose.msra.mxu0 0
  %569 = vmatprep.mubr.bf16.mxu0 0
  %570 = vmatmul.mubr.bf16.gmra.mrb[0].mxu0 %v532
  %v571 = vpop.f32.mrb[0].mxu0
  %v572 = vadd.f32 %v275, %v571
  %v573 = vpop.f32.mrb[0].mxu0
  %v574 = vpop.f32.mrb[0].mxu0
  %v575 = vpop.f32.mrb[0].mxu0
  %576 = vdwg.mxu0
  %vm577 = vcmask 64512
  %v578 = vsel %vm577, %v327, -inf
  %579 = vmax.xlane.f32.xlu0 %v578
  %v580 = vpop.xlane.xlu0 %579
  %v581 = vsel %vm577, %v376, -inf
  %582 = vmax.xlane.f32.xlu0 %v581
  %v583 = vpop.xlane.xlu0 %582
  %v584 = vsel %vm577, %v425, -inf
  %585 = vmax.xlane.f32.xlu0 %v584
  %v586 = vpop.xlane.xlu0 %585
  %v587 = vsel %vm577, %v474, -inf
  %588 = vmax.xlane.f32.xlu0 %v587
  %v589 = vpop.xlane.xlu0 %588
  %v590 = vsel %vm577, %v523, -inf
  %591 = vmax.xlane.f32.xlu0 %v590
  %v592 = vpop.xlane.xlu0 %591
  %v593 = vsel %vm577, %v572, -inf
  %594 = vmax.xlane.f32.xlu0 %v593
  %v595 = vpop.xlane.xlu0 %594
  %v596 = vsub.f32 %v327, %v580
  %v597 = vsub.f32 %v376, %v583
  %v598 = vsub.f32 %v425, %v586
  %v599 = vsub.f32 %v474, %v589
  %v600 = vsub.f32 %v523, %v592
  %v601 = vsub.f32 %v572, %v595
  %v602 = vmul.f32 %v596, 1.442695
  %v603 = vpow.pop %v602
  %v604 = vmul.f32 %v597, 1.442695
  %v605 = vpow.pop %v604
  %v606 = vmul.f32 %v598, 1.442695
  %v607 = vpow.pop %v606
  %v608 = vmul.f32 %v599, 1.442695
  %v609 = vpow.pop %v608
  %v610 = vmul.f32 %v600, 1.442695
  %v611 = vpow.pop %v610
  %v612 = vmul.f32 %v601, 1.442695
  %v613 = vpow.pop %v612
  %v614 = vsel %vm577, %v603, 0.0
  %615 = vadd.xlane.f32.xlu0 %v614
  %v616 = vpop.xlane.xlu0 %615
  %v617 = vsel %vm577, %v605, 0.0
  %618 = vadd.xlane.f32.xlu0 %v617
  %v619 = vpop.xlane.xlu0 %618
  %v620 = vsel %vm577, %v607, 0.0
  %621 = vadd.xlane.f32.xlu0 %v620
  %v622 = vpop.xlane.xlu0 %621
  %v623 = vsel %vm577, %v609, 0.0
  %624 = vadd.xlane.f32.xlu0 %v623
  %v625 = vpop.xlane.xlu0 %624
  %v626 = vsel %vm577, %v611, 0.0
  %627 = vadd.xlane.f32.xlu0 %v626
  %v628 = vpop.xlane.xlu0 %627
  %v629 = vsel %vm577, %v613, 0.0
  %630 = vadd.xlane.f32.xlu0 %v629
  %v631 = vpop.xlane.xlu0 %630
  %v632 = vrcp.pop %v616
  %v633 = vrcp.pop %v619
  %v634 = vrcp.pop %v622
  %v635 = vrcp.pop %v625
  %v636 = vrcp.pop %v628
  %v637 = vrcp.pop %v631
  %v638 = vmul.f32 %v603, %v632
  %v639 = vmul.f32 %v605, %v633
  %v640 = vmul.f32 %v607, %v634
  %v641 = vmul.f32 %v609, %v635
  %v642 = vmul.f32 %v611, %v636
  %v643 = vmul.f32 %v613, %v637
  %v644 = vpack.c.bf16 %v638, %v638
  %v645 = vpack.c.bf16 %v639, %v639
  %v646 = vpack.c.bf16 %v640, %v640
  %v647 = vpack.c.bf16 %v641, %v641
  %v648 = vpack.c.bf16 %v642, %v642
  %v649 = vpack.c.bf16 %v643, %v643
  %v650 = vrot.slane %v234, 4
  %v652 = vsel %vm577, %v644, 0
  %vm654 = vcmask 1043456
  %v656 = vsel %vm654, %v650, 0
  %658 = vmatprep.subr.bf16.mxu0 0
  %659 = vmatpush1.bf16.msra.mxu0 %v656
  %660 = vmatprep.subr.bf16.mxu0 0
  %661 = vmatpush1.bf16.msra.mxu0 0
  %662 = vmatprep.subr.bf16.mxu0 0
  %663 = vmatpush1.bf16.msra.mxu0 0
  %664 = vmatprep.subr.bf16.mxu0 0
  %665 = vmatpush1.bf16.msra.mxu0 0
  %666 = vmatprep.subr.bf16.mxu0 0
  %667 = vmatpush1.bf16.msra.mxu0 0
  %668 = vmatprep.subr.bf16.mxu0 0
  %669 = vmatpush1.bf16.msra.mxu0 0
  %670 = vmatprep.subr.bf16.mxu0 0
  %671 = vmatpush1.bf16.msra.mxu0 0
  %672 = vmatprep.subr.bf16.mxu0 0
  %673 = vmatpush1.bf16.msra.mxu0 0
  %674 = vmatprep.subr.bf16.mxu0 0
  %675 = vmatpush1.bf16.msra.mxu0 0
  %676 = vmatprep.subr.bf16.mxu0 0
  %677 = vmatpush1.bf16.msra.mxu0 0
  %678 = vmatprep.subr.bf16.mxu0 0
  %679 = vmatpush1.bf16.msra.mxu0 0
  %680 = vmatprep.subr.bf16.mxu0 0
  %681 = vmatpush1.bf16.msra.mxu0 0
  %682 = vmatprep.subr.bf16.mxu0 0
  %683 = vmatpush1.bf16.msra.mxu0 0
  %684 = vmatprep.subr.bf16.mxu0 0
  %685 = vmatpush1.bf16.msra.mxu0 0
  %686 = vmatprep.subr.bf16.mxu0 0
  %687 = vmatpush1.bf16.msra.mxu0 0
  %688 = vmatprep.subr.bf16.mxu0 0
  %689 = vmatpush1.bf16.msra.mxu0 0
  %690 = vmatprep.mubr.bf16.mxu0 0
  %691 = vmatmul.mubr.bf16.gmra.mrb[0].mxu0 %v652
  %v692 = vpop.f32.mrb[0].mxu0
  %v693 = vadd.f32 0.0, %v692
  %v694 = vpop.f32.mrb[0].mxu0
  %v695 = vpop.f32.mrb[0].mxu0
  %v696 = vpop.f32.mrb[0].mxu0
  %697 = vdwg.mxu0
  %v698 = vrot.slane %v235, 4
  %v700 = vsel %vm577, %v645, 0
  %v703 = vsel %vm654, %v698, 0
  %705 = vmatprep.subr.bf16.mxu0 0
  %706 = vmatpush1.bf16.msra.mxu0 %v703
  %707 = vmatprep.subr.bf16.mxu0 0
  %708 = vmatpush1.bf16.msra.mxu0 0
  %709 = vmatprep.subr.bf16.mxu0 0
  %710 = vmatpush1.bf16.msra.mxu0 0
  %711 = vmatprep.subr.bf16.mxu0 0
  %712 = vmatpush1.bf16.msra.mxu0 0
  %713 = vmatprep.subr.bf16.mxu0 0
  %714 = vmatpush1.bf16.msra.mxu0 0
  %715 = vmatprep.subr.bf16.mxu0 0
  %716 = vmatpush1.bf16.msra.mxu0 0
  %717 = vmatprep.subr.bf16.mxu0 0
  %718 = vmatpush1.bf16.msra.mxu0 0
  %719 = vmatprep.subr.bf16.mxu0 0
  %720 = vmatpush1.bf16.msra.mxu0 0
  %721 = vmatprep.subr.bf16.mxu0 0
  %722 = vmatpush1.bf16.msra.mxu0 0
  %723 = vmatprep.subr.bf16.mxu0 0
  %724 = vmatpush1.bf16.msra.mxu0 0
  %725 = vmatprep.subr.bf16.mxu0 0
  %726 = vmatpush1.bf16.msra.mxu0 0
  %727 = vmatprep.subr.bf16.mxu0 0
  %728 = vmatpush1.bf16.msra.mxu0 0
  %729 = vmatprep.subr.bf16.mxu0 0
  %730 = vmatpush1.bf16.msra.mxu0 0
  %731 = vmatprep.subr.bf16.mxu0 0
  %732 = vmatpush1.bf16.msra.mxu0 0
  %733 = vmatprep.subr.bf16.mxu0 0
  %734 = vmatpush1.bf16.msra.mxu0 0
  %735 = vmatprep.subr.bf16.mxu0 0
  %736 = vmatpush1.bf16.msra.mxu0 0
  %737 = vmatprep.mubr.bf16.mxu0 0
  %738 = vmatmul.mubr.bf16.gmra.mrb[0].mxu0 %v700
  %v739 = vpop.f32.mrb[0].mxu0
  %v740 = vadd.f32 0.0, %v739
  %v741 = vpop.f32.mrb[0].mxu0
  %v742 = vpop.f32.mrb[0].mxu0
  %v743 = vpop.f32.mrb[0].mxu0
  %744 = vdwg.mxu0
  %v745 = vrot.slane %v236, 4
  %v747 = vsel %vm577, %v646, 0
  %v750 = vsel %vm654, %v745, 0
  %752 = vmatprep.subr.bf16.mxu0 0
  %753 = vmatpush1.bf16.msra.mxu0 %v750
  %754 = vmatprep.subr.bf16.mxu0 0
  %755 = vmatpush1.bf16.msra.mxu0 0
  %756 = vmatprep.subr.bf16.mxu0 0
  %757 = vmatpush1.bf16.msra.mxu0 0
  %758 = vmatprep.subr.bf16.mxu0 0
  %759 = vmatpush1.bf16.msra.mxu0 0
  %760 = vmatprep.subr.bf16.mxu0 0
  %761 = vmatpush1.bf16.msra.mxu0 0
  %762 = vmatprep.subr.bf16.mxu0 0
  %763 = vmatpush1.bf16.msra.mxu0 0
  %764 = vmatprep.subr.bf16.mxu0 0
  %765 = vmatpush1.bf16.msra.mxu0 0
  %766 = vmatprep.subr.bf16.mxu0 0
  %767 = vmatpush1.bf16.msra.mxu0 0
  %768 = vmatprep.subr.bf16.mxu0 0
  %769 = vmatpush1.bf16.msra.mxu0 0
  %770 = vmatprep.subr.bf16.mxu0 0
  %771 = vmatpush1.bf16.msra.mxu0 0
  %772 = vmatprep.subr.bf16.mxu0 0
  %773 = vmatpush1.bf16.msra.mxu0 0
  %774 = vmatprep.subr.bf16.mxu0 0
  %775 = vmatpush1.bf16.msra.mxu0 0
  %776 = vmatprep.subr.bf16.mxu0 0
  %777 = vmatpush1.bf16.msra.mxu0 0
  %778 = vmatprep.subr.bf16.mxu0 0
  %779 = vmatpush1.bf16.msra.mxu0 0
  %780 = vmatprep.subr.bf16.mxu0 0
  %781 = vmatpush1.bf16.msra.mxu0 0
  %782 = vmatprep.subr.bf16.mxu0 0
  %783 = vmatpush1.bf16.msra.mxu0 0
  %784 = vmatprep.mubr.bf16.mxu0 0
  %785 = vmatmul.mubr.bf16.gmra.mrb[0].mxu0 %v747
  %v786 = vpop.f32.mrb[0].mxu0
  %v787 = vadd.f32 0.0, %v786
  %v788 = vpop.f32.mrb[0].mxu0
  %v789 = vpop.f32.mrb[0].mxu0
  %v790 = vpop.f32.mrb[0].mxu0
  %791 = vdwg.mxu0
  %v792 = vrot.slane %v237, 4
  %v794 = vsel %vm577, %v647, 0
  %v797 = vsel %vm654, %v792, 0
  %799 = vmatprep.subr.bf16.mxu0 0
  %800 = vmatpush1.bf16.msra.mxu0 %v797
  %801 = vmatprep.subr.bf16.mxu0 0
  %802 = vmatpush1.bf16.msra.mxu0 0
  %803 = vmatprep.subr.bf16.mxu0 0
  %804 = vmatpush1.bf16.msra.mxu0 0
  %805 = vmatprep.subr.bf16.mxu0 0
  %806 = vmatpush1.bf16.msra.mxu0 0
  %807 = vmatprep.subr.bf16.mxu0 0
  %808 = vmatpush1.bf16.msra.mxu0 0
  %809 = vmatprep.subr.bf16.mxu0 0
  %810 = vmatpush1.bf16.msra.mxu0 0
  %811 = vmatprep.subr.bf16.mxu0 0
  %812 = vmatpush1.bf16.msra.mxu0 0
  %813 = vmatprep.subr.bf16.mxu0 0
  %814 = vmatpush1.bf16.msra.mxu0 0
  %815 = vmatprep.subr.bf16.mxu0 0
  %816 = vmatpush1.bf16.msra.mxu0 0
  %817 = vmatprep.subr.bf16.mxu0 0
  %818 = vmatpush1.bf16.msra.mxu0 0
  %819 = vmatprep.subr.bf16.mxu0 0
  %820 = vmatpush1.bf16.msra.mxu0 0
  %821 = vmatprep.subr.bf16.mxu0 0
  %822 = vmatpush1.bf16.msra.mxu0 0
  %823 = vmatprep.subr.bf16.mxu0 0
  %824 = vmatpush1.bf16.msra.mxu0 0
  %825 = vmatprep.subr.bf16.mxu0 0
  %826 = vmatpush1.bf16.msra.mxu0 0
  %827 = vmatprep.subr.bf16.mxu0 0
  %828 = vmatpush1.bf16.msra.mxu0 0
  %829 = vmatprep.subr.bf16.mxu0 0
  %830 = vmatpush1.bf16.msra.mxu0 0
  %831 = vmatprep.mubr.bf16.mxu0 0
  %832 = vmatmul.mubr.bf16.gmra.mrb[0].mxu0 %v794
  %v833 = vpop.f32.mrb[0].mxu0
  %v834 = vadd.f32 0.0, %v833
  %v835 = vpop.f32.mrb[0].mxu0
  %v836 = vpop.f32.mrb[0].mxu0
  %v837 = vpop.f32.mrb[0].mxu0
  %838 = vdwg.mxu0
  %v839 = vrot.slane %v238, 4
  %v841 = vsel %vm577, %v648, 0
  %v844 = vsel %vm654, %v839, 0
  %846 = vmatprep.subr.bf16.mxu0 0
  %847 = vmatpush1.bf16.msra.mxu0 %v844
  %848 = vmatprep.subr.bf16.mxu0 0
  %849 = vmatpush1.bf16.msra.mxu0 0
  %850 = vmatprep.subr.bf16.mxu0 0
  %851 = vmatpush1.bf16.msra.mxu0 0
  %852 = vmatprep.subr.bf16.mxu0 0
  %853 = vmatpush1.bf16.msra.mxu0 0
  %854 = vmatprep.subr.bf16.mxu0 0
  %855 = vmatpush1.bf16.msra.mxu0 0
  %856 = vmatprep.subr.bf16.mxu0 0
  %857 = vmatpush1.bf16.msra.mxu0 0
  %858 = vmatprep.subr.bf16.mxu0 0
  %859 = vmatpush1.bf16.msra.mxu0 0
  %860 = vmatprep.subr.bf16.mxu0 0
  %861 = vmatpush1.bf16.msra.mxu0 0
  %862 = vmatprep.subr.bf16.mxu0 0
  %863 = vmatpush1.bf16.msra.mxu0 0
  %864 = vmatprep.subr.bf16.mxu0 0
  %865 = vmatpush1.bf16.msra.mxu0 0
  %866 = vmatprep.subr.bf16.mxu0 0
  %867 = vmatpush1.bf16.msra.mxu0 0
  %868 = vmatprep.subr.bf16.mxu0 0
  %869 = vmatpush1.bf16.msra.mxu0 0
  %870 = vmatprep.subr.bf16.mxu0 0
  %871 = vmatpush1.bf16.msra.mxu0 0
  %872 = vmatprep.subr.bf16.mxu0 0
  %873 = vmatpush1.bf16.msra.mxu0 0
  %874 = vmatprep.subr.bf16.mxu0 0
  %875 = vmatpush1.bf16.msra.mxu0 0
  %876 = vmatprep.subr.bf16.mxu0 0
  %877 = vmatpush1.bf16.msra.mxu0 0
  %878 = vmatprep.mubr.bf16.mxu0 0
  %879 = vmatmul.mubr.bf16.gmra.mrb[0].mxu0 %v841
  %v880 = vpop.f32.mrb[0].mxu0
  %v881 = vadd.f32 0.0, %v880
  %v882 = vpop.f32.mrb[0].mxu0
  %v883 = vpop.f32.mrb[0].mxu0
  %v884 = vpop.f32.mrb[0].mxu0
  %885 = vdwg.mxu0
  %v886 = vrot.slane %v239, 4
  %v888 = vsel %vm577, %v649, 0
  %v891 = vsel %vm654, %v886, 0
  %893 = vmatprep.subr.bf16.mxu0 0
  %894 = vmatpush1.bf16.msra.mxu0 %v891
  %895 = vmatprep.subr.bf16.mxu0 0
  %896 = vmatpush1.bf16.msra.mxu0 0
  %897 = vmatprep.subr.bf16.mxu0 0
  %898 = vmatpush1.bf16.msra.mxu0 0
  %899 = vmatprep.subr.bf16.mxu0 0
  %900 = vmatpush1.bf16.msra.mxu0 0
  %901 = vmatprep.subr.bf16.mxu0 0
  %902 = vmatpush1.bf16.msra.mxu0 0
  %903 = vmatprep.subr.bf16.mxu0 0
  %904 = vmatpush1.bf16.msra.mxu0 0
  %905 = vmatprep.subr.bf16.mxu0 0
  %906 = vmatpush1.bf16.msra.mxu0 0
  %907 = vmatprep.subr.bf16.mxu0 0
  %908 = vmatpush1.bf16.msra.mxu0 0
  %909 = vmatprep.subr.bf16.mxu0 0
  %910 = vmatpush1.bf16.msra.mxu0 0
  %911 = vmatprep.subr.bf16.mxu0 0
  %912 = vmatpush1.bf16.msra.mxu0 0
  %913 = vmatprep.subr.bf16.mxu0 0
  %914 = vmatpush1.bf16.msra.mxu0 0
  %915 = vmatprep.subr.bf16.mxu0 0
  %916 = vmatpush1.bf16.msra.mxu0 0
  %917 = vmatprep.subr.bf16.mxu0 0
  %918 = vmatpush1.bf16.msra.mxu0 0
  %919 = vmatprep.subr.bf16.mxu0 0
  %920 = vmatpush1.bf16.msra.mxu0 0
  %921 = vmatprep.subr.bf16.mxu0 0
  %922 = vmatpush1.bf16.msra.mxu0 0
  %923 = vmatprep.subr.bf16.mxu0 0
  %924 = vmatpush1.bf16.msra.mxu0 0
  %925 = vmatprep.mubr.bf16.mxu0 0
  %926 = vmatmul.mubr.bf16.gmra.mrb[0].mxu0 %v888
  %v927 = vpop.f32.mrb[0].mxu0
  %v928 = vadd.f32 0.0, %v927
  %v929 = vpop.f32.mrb[0].mxu0
  %v930 = vpop.f32.mrb[0].mxu0
  %v931 = vpop.f32.mrb[0].mxu0
  %932 = vdwg.mxu0
  %v933 = vpack.c.bf16 %v693, %v693
  %v934 = vpack.c.bf16 %v740, %v740
  %v935 = vpack.c.bf16 %v787, %v787
  %v936 = vpack.c.bf16 %v834, %v834
  %v937 = vpack.c.bf16 %v881, %v881
  %v938 = vpack.c.bf16 %v928, %v928
  %vm939 = vcmask 125952
  %940 = vst.msk [vmem:[#allocation2] sm:$0xf] %vm939, %v933
  %941 = vst.msk [vmem:[#allocation2 + $0x4] sm:$0xf] %vm939, %v934
  %942 = vst.msk [vmem:[#allocation2 + $0x8] sm:$0xf] %vm939, %v935
  %943 = vst.msk [vmem:[#allocation2 + $0xc] sm:$0xf] %vm939, %v936
  %944 = vst.msk [vmem:[#allocation2 + $0x10] sm:$0xf] %vm939, %v937
  %945 = vst.msk [vmem:[#allocation2 + $0x14] sm:$0xf] %vm939, %v938
  %946 = vrot.lane.b32.xlu0 %v282, 112
  %v947 = vpop.permute.xlu0 %946
  %948 = vrot.lane.b32.xlu0 %v282, 48
  %v949 = vpop.permute.xlu0 %948
  %v951 = vsel %vm285, %v947, 0
  %v954 = vsel %vm285, %v949, 0
  %956 = vmatprep.subr.bf16.mxu0 0
  %957 = vmatpush1.bf16.xpose.msra.mxu0 %v954
  %958 = vmatprep.subr.bf16.mxu0 0
  %959 = vmatpush1.bf16.xpose.msra.mxu0 0
  %960 = vmatprep.subr.bf16.mxu0 0
  %961 = vmatpush1.bf16.xpose.msra.mxu0 0
  %962 = vmatprep.subr.bf16.mxu0 0
  %963 = vmatpush1.bf16.xpose.msra.mxu0 0
  %964 = vmatprep.subr.bf16.mxu0 0
  %965 = vmatpush1.bf16.xpose.msra.mxu0 0
  %966 = vmatprep.subr.bf16.mxu0 0
  %967 = vmatpush1.bf16.xpose.msra.mxu0 0
  %968 = vmatprep.subr.bf16.mxu0 0
  %969 = vmatpush1.bf16.xpose.msra.mxu0 0
  %970 = vmatprep.subr.bf16.mxu0 0
  %971 = vmatpush1.bf16.xpose.msra.mxu0 0
  %972 = vmatprep.subr.bf16.mxu0 0
  %973 = vmatpush1.bf16.xpose.msra.mxu0 0
  %974 = vmatprep.subr.bf16.mxu0 0
  %975 = vmatpush1.bf16.xpose.msra.mxu0 0
  %976 = vmatprep.subr.bf16.mxu0 0
  %977 = vmatpush1.bf16.xpose.msra.mxu0 0
  %978 = vmatprep.subr.bf16.mxu0 0
  %979 = vmatpush1.bf16.xpose.msra.mxu0 0
  %980 = vmatprep.subr.bf16.mxu0 0
  %981 = vmatpush1.bf16.xpose.msra.mxu0 0
  %982 = vmatprep.subr.bf16.mxu0 0
  %983 = vmatpush1.bf16.xpose.msra.mxu0 0
  %984 = vmatprep.subr.bf16.mxu0 0
  %985 = vmatpush1.bf16.xpose.msra.mxu0 0
  %986 = vmatprep.subr.bf16.mxu0 0
  %987 = vmatpush1.bf16.xpose.msra.mxu0 0
  %988 = vmatprep.mubr.bf16.mxu0 0
  %989 = vmatmul.mubr.bf16.gmra.mrb[0].mxu0 %v951
  %v990 = vpop.f32.mrb[0].mxu0
  %v991 = vadd.f32 %v255, %v990
  %v992 = vpop.f32.mrb[0].mxu0
  %v993 = vpop.f32.mrb[0].mxu0
  %v994 = vpop.f32.mrb[0].mxu0
  %995 = vdwg.mxu0
  %996 = vrot.lane.b32.xlu0 %v332, 112
  %v997 = vpop.permute.xlu0 %996
  %998 = vrot.lane.b32.xlu0 %v332, 48
  %v999 = vpop.permute.xlu0 %998
  %v1001 = vsel %vm285, %v997, 0
  %v1004 = vsel %vm285, %v999, 0
  %1006 = vmatprep.subr.bf16.mxu0 0
  %1007 = vmatpush1.bf16.xpose.msra.mxu0 %v1004
  %1008 = vmatprep.subr.bf16.mxu0 0
  %1009 = vmatpush1.bf16.xpose.msra.mxu0 0
  %1010 = vmatprep.subr.bf16.mxu0 0
  %1011 = vmatpush1.bf16.xpose.msra.mxu0 0
  %1012 = vmatprep.subr.bf16.mxu0 0
  %1013 = vmatpush1.bf16.xpose.msra.mxu0 0
  %1014 = vmatprep.subr.bf16.mxu0 0
  %1015 = vmatpush1.bf16.xpose.msra.mxu0 0
  %1016 = vmatprep.subr.bf16.mxu0 0
  %1017 = vmatpush1.bf16.xpose.msra.mxu0 0
  %1018 = vmatprep.subr.bf16.mxu0 0
  %1019 = vmatpush1.bf16.xpose.msra.mxu0 0
  %1020 = vmatprep.subr.bf16.mxu0 0
  %1021 = vmatpush1.bf16.xpose.msra.mxu0 0
  %1022 = vmatprep.subr.bf16.mxu0 0
  %1023 = vmatpush1.bf16.xpose.msra.mxu0 0
  %1024 = vmatprep.subr.bf16.mxu0 0
  %1025 = vmatpush1.bf16.xpose.msra.mxu0 0
  %1026 = vmatprep.subr.bf16.mxu0 0
  %1027 = vmatpush1.bf16.xpose.msra.mxu0 0
  %1028 = vmatprep.subr.bf16.mxu0 0
  %1029 = vmatpush1.bf16.xpose.msra.mxu0 0
  %1030 = vmatprep.subr.bf16.mxu0 0
  %1031 = vmatpush1.bf16.xpose.msra.mxu0 0
  %1032 = vmatprep.subr.bf16.mxu0 0
  %1033 = vmatpush1.bf16.xpose.msra.mxu0 0
  %1034 = vmatprep.subr.bf16.mxu0 0
  %1035 = vmatpush1.bf16.xpose.msra.mxu0 0
  %1036 = vmatprep.subr.bf16.mxu0 0
  %1037 = vmatpush1.bf16.xpose.msra.mxu0 0
  %1038 = vmatprep.mubr.bf16.mxu0 0
  %1039 = vmatmul.mubr.bf16.gmra.mrb[0].mxu0 %v1001
  %v1040 = vpop.f32.mrb[0].mxu0
  %v1041 = vadd.f32 %v259, %v1040
  %v1042 = vpop.f32.mrb[0].mxu0
  %v1043 = vpop.f32.mrb[0].mxu0
  %v1044 = vpop.f32.mrb[0].mxu0
  %1045 = vdwg.mxu0
  %1046 = vrot.lane.b32.xlu0 %v381, 112
  %v1047 = vpop.permute.xlu0 %1046
  %1048 = vrot.lane.b32.xlu0 %v381, 48
  %v1049 = vpop.permute.xlu0 %1048
  %v1051 = vsel %vm285, %v1047, 0
  %v1054 = vsel %vm285, %v1049, 0
  %1056 = vmatprep.subr.bf16.mxu0 0
  %1057 = vmatpush1.bf16.xpose.msra.mxu0 %v1054
  %1058 = vmatprep.subr.bf16.mxu0 0
  %1059 = vmatpush1.bf16.xpose.msra.mxu0 0
  %1060 = vmatprep.subr.bf16.mxu0 0
  %1061 = vmatpush1.bf16.xpose.msra.mxu0 0
  %1062 = vmatprep.subr.bf16.mxu0 0
  %1063 = vmatpush1.bf16.xpose.msra.mxu0 0
  %1064 = vmatprep.subr.bf16.mxu0 0
  %1065 = vmatpush1.bf16.xpose.msra.mxu0 0
  %1066 = vmatprep.subr.bf16.mxu0 0
  %1067 = vmatpush1.bf16.xpose.msra.mxu0 0
  %1068 = vmatprep.subr.bf16.mxu0 0
  %1069 = vmatpush1.bf16.xpose.msra.mxu0 0
  %1070 = vmatprep.subr.bf16.mxu0 0
  %1071 = vmatpush1.bf16.xpose.msra.mxu0 0
  %1072 = vmatprep.subr.bf16.mxu0 0
  %1073 = vmatpush1.bf16.xpose.msra.mxu0 0
  %1074 = vmatprep.subr.bf16.mxu0 0
  %1075 = vmatpush1.bf16.xpose.msra.mxu0 0
  %1076 = vmatprep.subr.bf16.mxu0 0
  %1077 = vmatpush1.bf16.xpose.msra.mxu0 0
  %1078 = vmatprep.subr.bf16.mxu0 0
  %1079 = vmatpush1.bf16.xpose.msra.mxu0 0
  %1080 = vmatprep.subr.bf16.mxu0 0
  %1081 = vmatpush1.bf16.xpose.msra.mxu0 0
  %1082 = vmatprep.subr.bf16.mxu0 0
  %1083 = vmatpush1.bf16.xpose.msra.mxu0 0
  %1084 = vmatprep.subr.bf16.mxu0 0
  %1085 = vmatpush1.bf16.xpose.msra.mxu0 0
  %1086 = vmatprep.subr.bf16.mxu0 0
  %1087 = vmatpush1.bf16.xpose.msra.mxu0 0
  %1088 = vmatprep.mubr.bf16.mxu0 0
  %1089 = vmatmul.mubr.bf16.gmra.mrb[0].mxu0 %v1051
  %v1090 = vpop.f32.mrb[0].mxu0
  %v1091 = vadd.f32 %v263, %v1090
  %v1092 = vpop.f32.mrb[0].mxu0
  %v1093 = vpop.f32.mrb[0].mxu0
  %v1094 = vpop.f32.mrb[0].mxu0
  %1095 = vdwg.mxu0
  %1096 = vrot.lane.b32.xlu0 %v430, 112
  %v1097 = vpop.permute.xlu0 %1096
  %1098 = vrot.lane.b32.xlu0 %v430, 48
  %v1099 = vpop.permute.xlu0 %1098
  %v1101 = vsel %vm285, %v1097, 0
  %v1104 = vsel %vm285, %v1099, 0
  %1106 = vmatprep.subr.bf16.mxu0 0
  %1107 = vmatpush1.bf16.xpose.msra.mxu0 %v1104
  %1108 = vmatprep.subr.bf16.mxu0 0
  %1109 = vmatpush1.bf16.xpose.msra.mxu0 0
  %1110 = vmatprep.subr.bf16.mxu0 0
  %1111 = vmatpush1.bf16.xpose.msra.mxu0 0
  %1112 = vmatprep.subr.bf16.mxu0 0
  %1113 = vmatpush1.bf16.xpose.msra.mxu0 0
  %1114 = vmatprep.subr.bf16.mxu0 0
  %1115 = vmatpush1.bf16.xpose.msra.mxu0 0
  %1116 = vmatprep.subr.bf16.mxu0 0
  %1117 = vmatpush1.bf16.xpose.msra.mxu0 0
  %1118 = vmatprep.subr.bf16.mxu0 0
  %1119 = vmatpush1.bf16.xpose.msra.mxu0 0
  %1120 = vmatprep.subr.bf16.mxu0 0
  %1121 = vmatpush1.bf16.xpose.msra.mxu0 0
  %1122 = vmatprep.subr.bf16.mxu0 0
  %1123 = vmatpush1.bf16.xpose.msra.mxu0 0
  %1124 = vmatprep.subr.bf16.mxu0 0
  %1125 = vmatpush1.bf16.xpose.msra.mxu0 0
  %1126 = vmatprep.subr.bf16.mxu0 0
  %1127 = vmatpush1.bf16.xpose.msra.mxu0 0
  %1128 = vmatprep.subr.bf16.mxu0 0
  %1129 = vmatpush1.bf16.xpose.msra.mxu0 0
  %1130 = vmatprep.subr.bf16.mxu0 0
  %1131 = vmatpush1.bf16.xpose.msra.mxu0 0
  %1132 = vmatprep.subr.bf16.mxu0 0
  %1133 = vmatpush1.bf16.xpose.msra.mxu0 0
  %1134 = vmatprep.subr.bf16.mxu0 0
  %1135 = vmatpush1.bf16.xpose.msra.mxu0 0
  %1136 = vmatprep.subr.bf16.mxu0 0
  %1137 = vmatpush1.bf16.xpose.msra.mxu0 0
  %1138 = vmatprep.mubr.bf16.mxu0 0
  %1139 = vmatmul.mubr.bf16.gmra.mrb[0].mxu0 %v1101
  %v1140 = vpop.f32.mrb[0].mxu0
  %v1141 = vadd.f32 %v267, %v1140
  %v1142 = vpop.f32.mrb[0].mxu0
  %v1143 = vpop.f32.mrb[0].mxu0
  %v1144 = vpop.f32.mrb[0].mxu0
  %1145 = vdwg.mxu0
  %1146 = vrot.lane.b32.xlu0 %v479, 112
  %v1147 = vpop.permute.xlu0 %1146
  %1148 = vrot.lane.b32.xlu0 %v479, 48
  %v1149 = vpop.permute.xlu0 %1148
  %v1151 = vsel %vm285, %v1147, 0
  %v1154 = vsel %vm285, %v1149, 0
  %1156 = vmatprep.subr.bf16.mxu0 0
  %1157 = vmatpush1.bf16.xpose.msra.mxu0 %v1154
  %1158 = vmatprep.subr.bf16.mxu0 0
  %1159 = vmatpush1.bf16.xpose.msra.mxu0 0
  %1160 = vmatprep.subr.bf16.mxu0 0
  %1161 = vmatpush1.bf16.xpose.msra.mxu0 0
  %1162 = vmatprep.subr.bf16.mxu0 0
  %1163 = vmatpush1.bf16.xpose.msra.mxu0 0
  %1164 = vmatprep.subr.bf16.mxu0 0
  %1165 = vmatpush1.bf16.xpose.msra.mxu0 0
  %1166 = vmatprep.subr.bf16.mxu0 0
  %1167 = vmatpush1.bf16.xpose.msra.mxu0 0
  %1168 = vmatprep.subr.bf16.mxu0 0
  %1169 = vmatpush1.bf16.xpose.msra.mxu0 0
  %1170 = vmatprep.subr.bf16.mxu0 0
  %1171 = vmatpush1.bf16.xpose.msra.mxu0 0
  %1172 = vmatprep.subr.bf16.mxu0 0
  %1173 = vmatpush1.bf16.xpose.msra.mxu0 0
  %1174 = vmatprep.subr.bf16.mxu0 0
  %1175 = vmatpush1.bf16.xpose.msra.mxu0 0
  %1176 = vmatprep.subr.bf16.mxu0 0
  %1177 = vmatpush1.bf16.xpose.msra.mxu0 0
  %1178 = vmatprep.subr.bf16.mxu0 0
  %1179 = vmatpush1.bf16.xpose.msra.mxu0 0
  %1180 = vmatprep.subr.bf16.mxu0 0
  %1181 = vmatpush1.bf16.xpose.msra.mxu0 0
  %1182 = vmatprep.subr.bf16.mxu0 0
  %1183 = vmatpush1.bf16.xpose.msra.mxu0 0
  %1184 = vmatprep.subr.bf16.mxu0 0
  %1185 = vmatpush1.bf16.xpose.msra.mxu0 0
  %1186 = vmatprep.subr.bf16.mxu0 0
  %1187 = vmatpush1.bf16.xpose.msra.mxu0 0
  %1188 = vmatprep.mubr.bf16.mxu0 0
  %1189 = vmatmul.mubr.bf16.gmra.mrb[0].mxu0 %v1151
  %v1190 = vpop.f32.mrb[0].mxu0
  %v1191 = vadd.f32 %v271, %v1190
  %v1192 = vpop.f32.mrb[0].mxu0
  %v1193 = vpop.f32.mrb[0].mxu0
  %v1194 = vpop.f32.mrb[0].mxu0
  %1195 = vdwg.mxu0
  %1196 = vrot.lane.b32.xlu0 %v528, 112
  %v1197 = vpop.permute.xlu0 %1196
  %1198 = vrot.lane.b32.xlu0 %v528, 48
  %v1199 = vpop.permute.xlu0 %1198
  %v1201 = vsel %vm285, %v1197, 0
  %v1204 = vsel %vm285, %v1199, 0
  %1206 = vmatprep.subr.bf16.mxu0 0
  %1207 = vmatpush1.bf16.xpose.msra.mxu0 %v1204
  %1208 = vmatprep.subr.bf16.mxu0 0
  %1209 = vmatpush1.bf16.xpose.msra.mxu0 0
  %1210 = vmatprep.subr.bf16.mxu0 0
  %1211 = vmatpush1.bf16.xpose.msra.mxu0 0
  %1212 = vmatprep.subr.bf16.mxu0 0
  %1213 = vmatpush1.bf16.xpose.msra.mxu0 0
  %1214 = vmatprep.subr.bf16.mxu0 0
  %1215 = vmatpush1.bf16.xpose.msra.mxu0 0
  %1216 = vmatprep.subr.bf16.mxu0 0
  %1217 = vmatpush1.bf16.xpose.msra.mxu0 0
  %1218 = vmatprep.subr.bf16.mxu0 0
  %1219 = vmatpush1.bf16.xpose.msra.mxu0 0
  %1220 = vmatprep.subr.bf16.mxu0 0
  %1221 = vmatpush1.bf16.xpose.msra.mxu0 0
  %1222 = vmatprep.subr.bf16.mxu0 0
  %1223 = vmatpush1.bf16.xpose.msra.mxu0 0
  %1224 = vmatprep.subr.bf16.mxu0 0
  %1225 = vmatpush1.bf16.xpose.msra.mxu0 0
  %1226 = vmatprep.subr.bf16.mxu0 0
  %1227 = vmatpush1.bf16.xpose.msra.mxu0 0
  %1228 = vmatprep.subr.bf16.mxu0 0
  %1229 = vmatpush1.bf16.xpose.msra.mxu0 0
  %1230 = vmatprep.subr.bf16.mxu0 0
  %1231 = vmatpush1.bf16.xpose.msra.mxu0 0
  %1232 = vmatprep.subr.bf16.mxu0 0
  %1233 = vmatpush1.bf16.xpose.msra.mxu0 0
  %1234 = vmatprep.subr.bf16.mxu0 0
  %1235 = vmatpush1.bf16.xpose.msra.mxu0 0
  %1236 = vmatprep.subr.bf16.mxu0 0
  %1237 = vmatpush1.bf16.xpose.msra.mxu0 0
  %1238 = vmatprep.mubr.bf16.mxu0 0
  %1239 = vmatmul.mubr.bf16.gmra.mrb[0].mxu0 %v1201
  %v1240 = vpop.f32.mrb[0].mxu0
  %v1241 = vadd.f32 %v275, %v1240
  %v1242 = vpop.f32.mrb[0].mxu0
  %v1243 = vpop.f32.mrb[0].mxu0
  %v1244 = vpop.f32.mrb[0].mxu0
  %1245 = vdwg.mxu0
  %v1246 = vsel %vm577, %v991, -inf
  %1247 = vmax.xlane.f32.xlu0 %v1246
  %v1248 = vpop.xlane.xlu0 %1247
  %v1249 = vsel %vm577, %v1041, -inf
  %1250 = vmax.xlane.f32.xlu0 %v1249
  %v1251 = vpop.xlane.xlu0 %1250
  %v1252 = vsel %vm577, %v1091, -inf
  %1253 = vmax.xlane.f32.xlu0 %v1252
  %v1254 = vpop.xlane.xlu0 %1253
  %v1255 = vsel %vm577, %v1141, -inf
  %1256 = vmax.xlane.f32.xlu0 %v1255
  %v1257 = vpop.xlane.xlu0 %1256
  %v1258 = vsel %vm577, %v1191, -inf
  %1259 = vmax.xlane.f32.xlu0 %v1258
  %v1260 = vpop.xlane.xlu0 %1259
  %v1261 = vsel %vm577, %v1241, -inf
  %1262 = vmax.xlane.f32.xlu0 %v1261
  %v1263 = vpop.xlane.xlu0 %1262
  %v1264 = vsub.f32 %v991, %v1248
  %v1265 = vsub.f32 %v1041, %v1251
  %v1266 = vsub.f32 %v1091, %v1254
  %v1267 = vsub.f32 %v1141, %v1257
  %v1268 = vsub.f32 %v1191, %v1260
  %v1269 = vsub.f32 %v1241, %v1263
  %v1270 = vmul.f32 %v1264, 1.442695
  %v1271 = vpow.pop %v1270
  %v1272 = vmul.f32 %v1265, 1.442695
  %v1273 = vpow.pop %v1272
  %v1274 = vmul.f32 %v1266, 1.442695
  %v1275 = vpow.pop %v1274
  %v1276 = vmul.f32 %v1267, 1.442695
  %v1277 = vpow.pop %v1276
  %v1278 = vmul.f32 %v1268, 1.442695
  %v1279 = vpow.pop %v1278
  %v1280 = vmul.f32 %v1269, 1.442695
  %v1281 = vpow.pop %v1280
  %v1282 = vsel %vm577, %v1271, 0.0
  %1283 = vadd.xlane.f32.xlu0 %v1282
  %v1284 = vpop.xlane.xlu0 %1283
  %v1285 = vsel %vm577, %v1273, 0.0
  %1286 = vadd.xlane.f32.xlu0 %v1285
  %v1287 = vpop.xlane.xlu0 %1286
  %v1288 = vsel %vm577, %v1275, 0.0
  %1289 = vadd.xlane.f32.xlu0 %v1288
  %v1290 = vpop.xlane.xlu0 %1289
  %v1291 = vsel %vm577, %v1277, 0.0
  %1292 = vadd.xlane.f32.xlu0 %v1291
  %v1293 = vpop.xlane.xlu0 %1292
  %v1294 = vsel %vm577, %v1279, 0.0
  %1295 = vadd.xlane.f32.xlu0 %v1294
  %v1296 = vpop.xlane.xlu0 %1295
  %v1297 = vsel %vm577, %v1281, 0.0
  %1298 = vadd.xlane.f32.xlu0 %v1297
  %v1299 = vpop.xlane.xlu0 %1298
  %v1300 = vrcp.pop %v1284
  %v1301 = vrcp.pop %v1287
  %v1302 = vrcp.pop %v1290
  %v1303 = vrcp.pop %v1293
  %v1304 = vrcp.pop %v1296
  %v1305 = vrcp.pop %v1299
  %v1306 = vmul.f32 %v1271, %v1300
  %v1307 = vmul.f32 %v1273, %v1301
  %v1308 = vmul.f32 %v1275, %v1302
  %v1309 = vmul.f32 %v1277, %v1303
  %v1310 = vmul.f32 %v1279, %v1304
  %v1311 = vmul.f32 %v1281, %v1305
  %v1312 = vpack.c.bf16 %v1306, %v1306
  %v1313 = vpack.c.bf16 %v1307, %v1307
  %v1314 = vpack.c.bf16 %v1308, %v1308
  %v1315 = vpack.c.bf16 %v1309, %v1309
  %v1316 = vpack.c.bf16 %v1310, %v1310
  %v1317 = vpack.c.bf16 %v1311, %v1311
  %1318 = vrot.lane.b32.xlu0 %v234, 112
  %v1319 = vpop.permute.xlu0 %1318
  %v1320 = vrot.slane %v1319, 4
  %v1322 = vsel %vm577, %v1312, 0
  %v1325 = vsel %vm654, %v1320, 0
  %1327 = vmatprep.subr.bf16.mxu0 0
  %1328 = vmatpush1.bf16.msra.mxu0 %v1325
  %1329 = vmatprep.subr.bf16.mxu0 0
  %1330 = vmatpush1.bf16.msra.mxu0 0
  %1331 = vmatprep.subr.bf16.mxu0 0
  %1332 = vmatpush1.bf16.msra.mxu0 0
  %1333 = vmatprep.subr.bf16.mxu0 0
  %1334 = vmatpush1.bf16.msra.mxu0 0
  %1335 = vmatprep.subr.bf16.mxu0 0
  %1336 = vmatpush1.bf16.msra.mxu0 0
  %1337 = vmatprep.subr.bf16.mxu0 0
  %1338 = vmatpush1.bf16.msra.mxu0 0
  %1339 = vmatprep.subr.bf16.mxu0 0
  %1340 = vmatpush1.bf16.msra.mxu0 0
  %1341 = vmatprep.subr.bf16.mxu0 0
  %1342 = vmatpush1.bf16.msra.mxu0 0
  %1343 = vmatprep.subr.bf16.mxu0 0
  %1344 = vmatpush1.bf16.msra.mxu0 0
  %1345 = vmatprep.subr.bf16.mxu0 0
  %1346 = vmatpush1.bf16.msra.mxu0 0
  %1347 = vmatprep.subr.bf16.mxu0 0
  %1348 = vmatpush1.bf16.msra.mxu0 0
  %1349 = vmatprep.subr.bf16.mxu0 0
  %1350 = vmatpush1.bf16.msra.mxu0 0
  %1351 = vmatprep.subr.bf16.mxu0 0
  %1352 = vmatpush1.bf16.msra.mxu0 0
  %1353 = vmatprep.subr.bf16.mxu0 0
  %1354 = vmatpush1.bf16.msra.mxu0 0
  %1355 = vmatprep.subr.bf16.mxu0 0
  %1356 = vmatpush1.bf16.msra.mxu0 0
  %1357 = vmatprep.subr.bf16.mxu0 0
  %1358 = vmatpush1.bf16.msra.mxu0 0
  %1359 = vmatprep.mubr.bf16.mxu0 0
  %1360 = vmatmul.mubr.bf16.gmra.mrb[0].mxu0 %v1322
  %v1361 = vpop.f32.mrb[0].mxu0
  %v1362 = vadd.f32 0.0, %v1361
  %v1363 = vpop.f32.mrb[0].mxu0
  %v1364 = vpop.f32.mrb[0].mxu0
  %v1365 = vpop.f32.mrb[0].mxu0
  %1366 = vdwg.mxu0
  %1367 = vrot.lane.b32.xlu0 %v235, 112
  %v1368 = vpop.permute.xlu0 %1367
  %v1369 = vrot.slane %v1368, 4
  %v1371 = vsel %vm577, %v1313, 0
  %v1374 = vsel %vm654, %v1369, 0
  %1376 = vmatprep.subr.bf16.mxu0 0
  %1377 = vmatpush1.bf16.msra.mxu0 %v1374
  %1378 = vmatprep.subr.bf16.mxu0 0
  %1379 = vmatpush1.bf16.msra.mxu0 0
  %1380 = vmatprep.subr.bf16.mxu0 0
  %1381 = vmatpush1.bf16.msra.mxu0 0
  %1382 = vmatprep.subr.bf16.mxu0 0
  %1383 = vmatpush1.bf16.msra.mxu0 0
  %1384 = vmatprep.subr.bf16.mxu0 0
  %1385 = vmatpush1.bf16.msra.mxu0 0
  %1386 = vmatprep.subr.bf16.mxu0 0
  %1387 = vmatpush1.bf16.msra.mxu0 0
  %1388 = vmatprep.subr.bf16.mxu0 0
  %1389 = vmatpush1.bf16.msra.mxu0 0
  %1390 = vmatprep.subr.bf16.mxu0 0
  %1391 = vmatpush1.bf16.msra.mxu0 0
  %1392 = vmatprep.subr.bf16.mxu0 0
  %1393 = vmatpush1.bf16.msra.mxu0 0
  %1394 = vmatprep.subr.bf16.mxu0 0
  %1395 = vmatpush1.bf16.msra.mxu0 0
  %1396 = vmatprep.subr.bf16.mxu0 0
  %1397 = vmatpush1.bf16.msra.mxu0 0
  %1398 = vmatprep.subr.bf16.mxu0 0
  %1399 = vmatpush1.bf16.msra.mxu0 0
  %1400 = vmatprep.subr.bf16.mxu0 0
  %1401 = vmatpush1.bf16.msra.mxu0 0
  %1402 = vmatprep.subr.bf16.mxu0 0
  %1403 = vmatpush1.bf16.msra.mxu0 0
  %1404 = vmatprep.subr.bf16.mxu0 0
  %1405 = vmatpush1.bf16.msra.mxu0 0
  %1406 = vmatprep.subr.bf16.mxu0 0
  %1407 = vmatpush1.bf16.msra.mxu0 0
  %1408 = vmatprep.mubr.bf16.mxu0 0
  %1409 = vmatmul.mubr.bf16.gmra.mrb[0].mxu0 %v1371
  %v1410 = vpop.f32.mrb[0].mxu0
  %v1411 = vadd.f32 0.0, %v1410
  %v1412 = vpop.f32.mrb[0].mxu0
  %v1413 = vpop.f32.mrb[0].mxu0
  %v1414 = vpop.f32.mrb[0].mxu0
  %1415 = vdwg.mxu0
  %1416 = vrot.lane.b32.xlu0 %v236, 112
  %v1417 = vpop.permute.xlu0 %1416
  %v1418 = vrot.slane %v1417, 4
  %v1420 = vsel %vm577, %v1314, 0
  %v1423 = vsel %vm654, %v1418, 0
  %1425 = vmatprep.subr.bf16.mxu0 0
  %1426 = vmatpush1.bf16.msra.mxu0 %v1423
  %1427 = vmatprep.subr.bf16.mxu0 0
  %1428 = vmatpush1.bf16.msra.mxu0 0
  %1429 = vmatprep.subr.bf16.mxu0 0
  %1430 = vmatpush1.bf16.msra.mxu0 0
  %1431 = vmatprep.subr.bf16.mxu0 0
  %1432 = vmatpush1.bf16.msra.mxu0 0
  %1433 = vmatprep.subr.bf16.mxu0 0
  %1434 = vmatpush1.bf16.msra.mxu0 0
  %1435 = vmatprep.subr.bf16.mxu0 0
  %1436 = vmatpush1.bf16.msra.mxu0 0
  %1437 = vmatprep.subr.bf16.mxu0 0
  %1438 = vmatpush1.bf16.msra.mxu0 0
  %1439 = vmatprep.subr.bf16.mxu0 0
  %1440 = vmatpush1.bf16.msra.mxu0 0
  %1441 = vmatprep.subr.bf16.mxu0 0
  %1442 = vmatpush1.bf16.msra.mxu0 0
  %1443 = vmatprep.subr.bf16.mxu0 0
  %1444 = vmatpush1.bf16.msra.mxu0 0
  %1445 = vmatprep.subr.bf16.mxu0 0
  %1446 = vmatpush1.bf16.msra.mxu0 0
  %1447 = vmatprep.subr.bf16.mxu0 0
  %1448 = vmatpush1.bf16.msra.mxu0 0
  %1449 = vmatprep.subr.bf16.mxu0 0
  %1450 = vmatpush1.bf16.msra.mxu0 0
  %1451 = vmatprep.subr.bf16.mxu0 0
  %1452 = vmatpush1.bf16.msra.mxu0 0
  %1453 = vmatprep.subr.bf16.mxu0 0
  %1454 = vmatpush1.bf16.msra.mxu0 0
  %1455 = vmatprep.subr.bf16.mxu0 0
  %1456 = vmatpush1.bf16.msra.mxu0 0
  %1457 = vmatprep.mubr.bf16.mxu0 0
  %1458 = vmatmul.mubr.bf16.gmra.mrb[0].mxu0 %v1420
  %v1459 = vpop.f32.mrb[0].mxu0
  %v1460 = vadd.f32 0.0, %v1459
  %v1461 = vpop.f32.mrb[0].mxu0
  %v1462 = vpop.f32.mrb[0].mxu0
  %v1463 = vpop.f32.mrb[0].mxu0
  %1464 = vdwg.mxu0
  %1465 = vrot.lane.b32.xlu0 %v237, 112
  %v1466 = vpop.permute.xlu0 %1465
  %v1467 = vrot.slane %v1466, 4
  %v1469 = vsel %vm577, %v1315, 0
  %v1472 = vsel %vm654, %v1467, 0
  %1474 = vmatprep.subr.bf16.mxu0 0
  %1475 = vmatpush1.bf16.msra.mxu0 %v1472
  %1476 = vmatprep.subr.bf16.mxu0 0
  %1477 = vmatpush1.bf16.msra.mxu0 0
  %1478 = vmatprep.subr.bf16.mxu0 0
  %1479 = vmatpush1.bf16.msra.mxu0 0
  %1480 = vmatprep.subr.bf16.mxu0 0
  %1481 = vmatpush1.bf16.msra.mxu0 0
  %1482 = vmatprep.subr.bf16.mxu0 0
  %1483 = vmatpush1.bf16.msra.mxu0 0
  %1484 = vmatprep.subr.bf16.mxu0 0
  %1485 = vmatpush1.bf16.msra.mxu0 0
  %1486 = vmatprep.subr.bf16.mxu0 0
  %1487 = vmatpush1.bf16.msra.mxu0 0
  %1488 = vmatprep.subr.bf16.mxu0 0
  %1489 = vmatpush1.bf16.msra.mxu0 0
  %1490 = vmatprep.subr.bf16.mxu0 0
  %1491 = vmatpush1.bf16.msra.mxu0 0
  %1492 = vmatprep.subr.bf16.mxu0 0
  %1493 = vmatpush1.bf16.msra.mxu0 0
  %1494 = vmatprep.subr.bf16.mxu0 0
  %1495 = vmatpush1.bf16.msra.mxu0 0
  %1496 = vmatprep.subr.bf16.mxu0 0
  %1497 = vmatpush1.bf16.msra.mxu0 0
  %1498 = vmatprep.subr.bf16.mxu0 0
  %1499 = vmatpush1.bf16.msra.mxu0 0
  %1500 = vmatprep.subr.bf16.mxu0 0
  %1501 = vmatpush1.bf16.msra.mxu0 0
  %1502 = vmatprep.subr.bf16.mxu0 0
  %1503 = vmatpush1.bf16.msra.mxu0 0
  %1504 = vmatprep.subr.bf16.mxu0 0
  %1505 = vmatpush1.bf16.msra.mxu0 0
  %1506 = vmatprep.mubr.bf16.mxu0 0
  %1507 = vmatmul.mubr.bf16.gmra.mrb[0].mxu0 %v1469
  %v1508 = vpop.f32.mrb[0].mxu0
  %v1509 = vadd.f32 0.0, %v1508
  %v1510 = vpop.f32.mrb[0].mxu0
  %v1511 = vpop.f32.mrb[0].mxu0
  %v1512 = vpop.f32.mrb[0].mxu0
  %1513 = vdwg.mxu0
  %1514 = vrot.lane.b32.xlu0 %v238, 112
  %v1515 = vpop.permute.xlu0 %1514
  %v1516 = vrot.slane %v1515, 4
  %v1518 = vsel %vm577, %v1316, 0
  %v1521 = vsel %vm654, %v1516, 0
  %1523 = vmatprep.subr.bf16.mxu0 0
  %1524 = vmatpush1.bf16.msra.mxu0 %v1521
  %1525 = vmatprep.subr.bf16.mxu0 0
  %1526 = vmatpush1.bf16.msra.mxu0 0
  %1527 = vmatprep.subr.bf16.mxu0 0
  %1528 = vmatpush1.bf16.msra.mxu0 0
  %1529 = vmatprep.subr.bf16.mxu0 0
  %1530 = vmatpush1.bf16.msra.mxu0 0
  %1531 = vmatprep.subr.bf16.mxu0 0
  %1532 = vmatpush1.bf16.msra.mxu0 0
  %1533 = vmatprep.subr.bf16.mxu0 0
  %1534 = vmatpush1.bf16.msra.mxu0 0
  %1535 = vmatprep.subr.bf16.mxu0 0
  %1536 = vmatpush1.bf16.msra.mxu0 0
  %1537 = vmatprep.subr.bf16.mxu0 0
  %1538 = vmatpush1.bf16.msra.mxu0 0
  %1539 = vmatprep.subr.bf16.mxu0 0
  %1540 = vmatpush1.bf16.msra.mxu0 0
  %1541 = vmatprep.subr.bf16.mxu0 0
  %1542 = vmatpush1.bf16.msra.mxu0 0
  %1543 = vmatprep.subr.bf16.mxu0 0
  %1544 = vmatpush1.bf16.msra.mxu0 0
  %1545 = vmatprep.subr.bf16.mxu0 0
  %1546 = vmatpush1.bf16.msra.mxu0 0
  %1547 = vmatprep.subr.bf16.mxu0 0
  %1548 = vmatpush1.bf16.msra.mxu0 0
  %1549 = vmatprep.subr.bf16.mxu0 0
  %1550 = vmatpush1.bf16.msra.mxu0 0
  %1551 = vmatprep.subr.bf16.mxu0 0
  %1552 = vmatpush1.bf16.msra.mxu0 0
  %1553 = vmatprep.subr.bf16.mxu0 0
  %1554 = vmatpush1.bf16.msra.mxu0 0
  %1555 = vmatprep.mubr.bf16.mxu0 0
  %1556 = vmatmul.mubr.bf16.gmra.mrb[0].mxu0 %v1518
  %v1557 = vpop.f32.mrb[0].mxu0
  %v1558 = vadd.f32 0.0, %v1557
  %v1559 = vpop.f32.mrb[0].mxu0
  %v1560 = vpop.f32.mrb[0].mxu0
  %v1561 = vpop.f32.mrb[0].mxu0
  %1562 = vdwg.mxu0
  %1563 = vrot.lane.b32.xlu0 %v239, 112
  %v1564 = vpop.permute.xlu0 %1563
  %v1565 = vrot.slane %v1564, 4
  %v1567 = vsel %vm577, %v1317, 0
  %v1570 = vsel %vm654, %v1565, 0
  %1572 = vmatprep.subr.bf16.mxu0 0
  %1573 = vmatpush1.bf16.msra.mxu0 %v1570
  %1574 = vmatprep.subr.bf16.mxu0 0
  %1575 = vmatpush1.bf16.msra.mxu0 0
  %1576 = vmatprep.subr.bf16.mxu0 0
  %1577 = vmatpush1.bf16.msra.mxu0 0
  %1578 = vmatprep.subr.bf16.mxu0 0
  %1579 = vmatpush1.bf16.msra.mxu0 0
  %1580 = vmatprep.subr.bf16.mxu0 0
  %1581 = vmatpush1.bf16.msra.mxu0 0
  %1582 = vmatprep.subr.bf16.mxu0 0
  %1583 = vmatpush1.bf16.msra.mxu0 0
  %1584 = vmatprep.subr.bf16.mxu0 0
  %1585 = vmatpush1.bf16.msra.mxu0 0
  %1586 = vmatprep.subr.bf16.mxu0 0
  %1587 = vmatpush1.bf16.msra.mxu0 0
  %1588 = vmatprep.subr.bf16.mxu0 0
  %1589 = vmatpush1.bf16.msra.mxu0 0
  %1590 = vmatprep.subr.bf16.mxu0 0
  %1591 = vmatpush1.bf16.msra.mxu0 0
  %1592 = vmatprep.subr.bf16.mxu0 0
  %1593 = vmatpush1.bf16.msra.mxu0 0
  %1594 = vmatprep.subr.bf16.mxu0 0
  %1595 = vmatpush1.bf16.msra.mxu0 0
  %1596 = vmatprep.subr.bf16.mxu0 0
  %1597 = vmatpush1.bf16.msra.mxu0 0
  %1598 = vmatprep.subr.bf16.mxu0 0
  %1599 = vmatpush1.bf16.msra.mxu0 0
  %1600 = vmatprep.subr.bf16.mxu0 0
  %1601 = vmatpush1.bf16.msra.mxu0 0
  %1602 = vmatprep.subr.bf16.mxu0 0
  %1603 = vmatpush1.bf16.msra.mxu0 0
  %1604 = vmatprep.mubr.bf16.mxu0 0
  %1605 = vmatmul.mubr.bf16.gmra.mrb[0].mxu0 %v1567
  %v1606 = vpop.f32.mrb[0].mxu0
  %v1607 = vadd.f32 0.0, %v1606
  %v1608 = vpop.f32.mrb[0].mxu0
  %v1609 = vpop.f32.mrb[0].mxu0
  %v1610 = vpop.f32.mrb[0].mxu0
  %1611 = vdwg.mxu0
  %v1612 = vpack.c.bf16 %v1362, %v1362
  %v1613 = vpack.c.bf16 %v1411, %v1411
  %v1614 = vpack.c.bf16 %v1460, %v1460
  %v1615 = vpack.c.bf16 %v1509, %v1509
  %v1616 = vpack.c.bf16 %v1558, %v1558
  %v1617 = vpack.c.bf16 %v1607, %v1607
  %v1624 = vunpack.c.l.b16 %v1612
  %v1625 = vunpack.c.l.b16 %v1613
  %v1626 = vunpack.c.l.b16 %v1614
  %v1627 = vunpack.c.l.b16 %v1615
  %v1628 = vunpack.c.l.b16 %v1616
  %v1629 = vunpack.c.l.b16 %v1617
  %v1630 = vpack.c.b16 %v1624, %v1624
  %v1631 = vpack.c.b16 %v1625, %v1625
  %v1632 = vpack.c.b16 %v1626, %v1626
  %v1633 = vpack.c.b16 %v1627, %v1627
  %v1634 = vpack.c.b16 %v1628, %v1628
  %v1635 = vpack.c.b16 %v1629, %v1629
  %1636 = vrot.lane.b32.xlu0 %v1630, 16
  %v1637 = vpop.permute.xlu0 %1636
  %1638 = vrot.lane.b32.xlu0 %v1631, 16
  %v1639 = vpop.permute.xlu0 %1638
  %1640 = vrot.lane.b32.xlu0 %v1632, 16
  %v1641 = vpop.permute.xlu0 %1640
  %1642 = vrot.lane.b32.xlu0 %v1633, 16
  %v1643 = vpop.permute.xlu0 %1642
  %1644 = vrot.lane.b32.xlu0 %v1634, 16
  %v1645 = vpop.permute.xlu0 %1644
  %1646 = vrot.lane.b32.xlu0 %v1635, 16
  %v1647 = vpop.permute.xlu0 %1646
  %vm1654 = vcmask 257152
  %1655 = vst.msk [vmem:[#allocation2] sm:$0xf] %vm1654, %v1637
  %1656 = vst.msk [vmem:[#allocation2 + $0x4] sm:$0xf] %vm1654, %v1639
  %1657 = vst.msk [vmem:[#allocation2 + $0x8] sm:$0xf] %vm1654, %v1641
  %1658 = vst.msk [vmem:[#allocation2 + $0xc] sm:$0xf] %vm1654, %v1643
  %1659 = vst.msk [vmem:[#allocation2 + $0x10] sm:$0xf] %vm1654, %v1645
  %1660 = vst.msk [vmem:[#allocation2 + $0x14] sm:$0xf] %vm1654, %v1647
  %1661 = vrot.lane.b32.xlu0 %v282, 96
  %v1662 = vpop.permute.xlu0 %1661
  %1663 = vrot.lane.b32.xlu0 %v282, 32
  %v1664 = vpop.permute.xlu0 %1663
  %v1666 = vsel %vm285, %v1662, 0
  %v1669 = vsel %vm285, %v1664, 0
  %1671 = vmatprep.subr.bf16.mxu0 0
  %1672 = vmatpush1.bf16.xpose.msra.mxu0 %v1669
  %1673 = vmatprep.subr.bf16.mxu0 0
  %1674 = vmatpush1.bf16.xpose.msra.mxu0 0
  %1675 = vmatprep.subr.bf16.mxu0 0
  %1676 = vmatpush1.bf16.xpose.msra.mxu0 0
  %1677 = vmatprep.subr.bf16.mxu0 0
  %1678 = vmatpush1.bf16.xpose.msra.mxu0 0
  %1679 = vmatprep.subr.bf16.mxu0 0
  %1680 = vmatpush1.bf16.xpose.msra.mxu0 0
  %1681 = vmatprep.subr.bf16.mxu0 0
  %1682 = vmatpush1.bf16.xpose.msra.mxu0 0
  %1683 = vmatprep.subr.bf16.mxu0 0
  %1684 = vmatpush1.bf16.xpose.msra.mxu0 0
  %1685 = vmatprep.subr.bf16.mxu0 0
  %1686 = vmatpush1.bf16.xpose.msra.mxu0 0
  %1687 = vmatprep.subr.bf16.mxu0 0
  %1688 = vmatpush1.bf16.xpose.msra.mxu0 0
  %1689 = vmatprep.subr.bf16.mxu0 0
  %1690 = vmatpush1.bf16.xpose.msra.mxu0 0
  %1691 = vmatprep.subr.bf16.mxu0 0
  %1692 = vmatpush1.bf16.xpose.msra.mxu0 0
  %1693 = vmatprep.subr.bf16.mxu0 0
  %1694 = vmatpush1.bf16.xpose.msra.mxu0 0
  %1695 = vmatprep.subr.bf16.mxu0 0
  %1696 = vmatpush1.bf16.xpose.msra.mxu0 0
  %1697 = vmatprep.subr.bf16.mxu0 0
  %1698 = vmatpush1.bf16.xpose.msra.mxu0 0
  %1699 = vmatprep.subr.bf16.mxu0 0
  %1700 = vmatpush1.bf16.xpose.msra.mxu0 0
  %1701 = vmatprep.subr.bf16.mxu0 0
  %1702 = vmatpush1.bf16.xpose.msra.mxu0 0
  %1703 = vmatprep.mubr.bf16.mxu0 0
  %1704 = vmatmul.mubr.bf16.gmra.mrb[0].mxu0 %v1666
  %v1705 = vpop.f32.mrb[0].mxu0
  %v1706 = vadd.f32 %v255, %v1705
  %v1707 = vpop.f32.mrb[0].mxu0
  %v1708 = vpop.f32.mrb[0].mxu0
  %v1709 = vpop.f32.mrb[0].mxu0
  %1710 = vdwg.mxu0
  %1711 = vrot.lane.b32.xlu0 %v332, 96
  %v1712 = vpop.permute.xlu0 %1711
  %1713 = vrot.lane.b32.xlu0 %v332, 32
  %v1714 = vpop.permute.xlu0 %1713
  %v1716 = vsel %vm285, %v1712, 0
  %v1719 = vsel %vm285, %v1714, 0
  %1721 = vmatprep.subr.bf16.mxu0 0
  %1722 = vmatpush1.bf16.xpose.msra.mxu0 %v1719
  %1723 = vmatprep.subr.bf16.mxu0 0
  %1724 = vmatpush1.bf16.xpose.msra.mxu0 0
  %1725 = vmatprep.subr.bf16.mxu0 0
  %1726 = vmatpush1.bf16.xpose.msra.mxu0 0
  %1727 = vmatprep.subr.bf16.mxu0 0
  %1728 = vmatpush1.bf16.xpose.msra.mxu0 0
  %1729 = vmatprep.subr.bf16.mxu0 0
  %1730 = vmatpush1.bf16.xpose.msra.mxu0 0
  %1731 = vmatprep.subr.bf16.mxu0 0
  %1732 = vmatpush1.bf16.xpose.msra.mxu0 0
  %1733 = vmatprep.subr.bf16.mxu0 0
  %1734 = vmatpush1.bf16.xpose.msra.mxu0 0
  %1735 = vmatprep.subr.bf16.mxu0 0
  %1736 = vmatpush1.bf16.xpose.msra.mxu0 0
  %1737 = vmatprep.subr.bf16.mxu0 0
  %1738 = vmatpush1.bf16.xpose.msra.mxu0 0
  %1739 = vmatprep.subr.bf16.mxu0 0
  %1740 = vmatpush1.bf16.xpose.msra.mxu0 0
  %1741 = vmatprep.subr.bf16.mxu0 0
  %1742 = vmatpush1.bf16.xpose.msra.mxu0 0
  %1743 = vmatprep.subr.bf16.mxu0 0
  %1744 = vmatpush1.bf16.xpose.msra.mxu0 0
  %1745 = vmatprep.subr.bf16.mxu0 0
  %1746 = vmatpush1.bf16.xpose.msra.mxu0 0
  %1747 = vmatprep.subr.bf16.mxu0 0
  %1748 = vmatpush1.bf16.xpose.msra.mxu0 0
  %1749 = vmatprep.subr.bf16.mxu0 0
  %1750 = vmatpush1.bf16.xpose.msra.mxu0 0
  %1751 = vmatprep.subr.bf16.mxu0 0
  %1752 = vmatpush1.bf16.xpose.msra.mxu0 0
  %1753 = vmatprep.mubr.bf16.mxu0 0
  %1754 = vmatmul.mubr.bf16.gmra.mrb[0].mxu0 %v1716
  %v1755 = vpop.f32.mrb[0].mxu0
  %v1756 = vadd.f32 %v259, %v1755
  %v1757 = vpop.f32.mrb[0].mxu0
  %v1758 = vpop.f32.mrb[0].mxu0
  %v1759 = vpop.f32.mrb[0].mxu0
  %1760 = vdwg.mxu0
  %1761 = vrot.lane.b32.xlu0 %v381, 96
  %v1762 = vpop.permute.xlu0 %1761
  %1763 = vrot.lane.b32.xlu0 %v381, 32
  %v1764 = vpop.permute.xlu0 %1763
  %v1766 = vsel %vm285, %v1762, 0
  %v1769 = vsel %vm285, %v1764, 0
  %1771 = vmatprep.subr.bf16.mxu0 0
  %1772 = vmatpush1.bf16.xpose.msra.mxu0 %v1769
  %1773 = vmatprep.subr.bf16.mxu0 0
  %1774 = vmatpush1.bf16.xpose.msra.mxu0 0
  %1775 = vmatprep.subr.bf16.mxu0 0
  %1776 = vmatpush1.bf16.xpose.msra.mxu0 0
  %1777 = vmatprep.subr.bf16.mxu0 0
  %1778 = vmatpush1.bf16.xpose.msra.mxu0 0
  %1779 = vmatprep.subr.bf16.mxu0 0
  %1780 = vmatpush1.bf16.xpose.msra.mxu0 0
  %1781 = vmatprep.subr.bf16.mxu0 0
  %1782 = vmatpush1.bf16.xpose.msra.mxu0 0
  %1783 = vmatprep.subr.bf16.mxu0 0
  %1784 = vmatpush1.bf16.xpose.msra.mxu0 0
  %1785 = vmatprep.subr.bf16.mxu0 0
  %1786 = vmatpush1.bf16.xpose.msra.mxu0 0
  %1787 = vmatprep.subr.bf16.mxu0 0
  %1788 = vmatpush1.bf16.xpose.msra.mxu0 0
  %1789 = vmatprep.subr.bf16.mxu0 0
  %1790 = vmatpush1.bf16.xpose.msra.mxu0 0
  %1791 = vmatprep.subr.bf16.mxu0 0
  %1792 = vmatpush1.bf16.xpose.msra.mxu0 0
  %1793 = vmatprep.subr.bf16.mxu0 0
  %1794 = vmatpush1.bf16.xpose.msra.mxu0 0
  %1795 = vmatprep.subr.bf16.mxu0 0
  %1796 = vmatpush1.bf16.xpose.msra.mxu0 0
  %1797 = vmatprep.subr.bf16.mxu0 0
  %1798 = vmatpush1.bf16.xpose.msra.mxu0 0
  %1799 = vmatprep.subr.bf16.mxu0 0
  %1800 = vmatpush1.bf16.xpose.msra.mxu0 0
  %1801 = vmatprep.subr.bf16.mxu0 0
  %1802 = vmatpush1.bf16.xpose.msra.mxu0 0
  %1803 = vmatprep.mubr.bf16.mxu0 0
  %1804 = vmatmul.mubr.bf16.gmra.mrb[0].mxu0 %v1766
  %v1805 = vpop.f32.mrb[0].mxu0
  %v1806 = vadd.f32 %v263, %v1805
  %v1807 = vpop.f32.mrb[0].mxu0
  %v1808 = vpop.f32.mrb[0].mxu0
  %v1809 = vpop.f32.mrb[0].mxu0
  %1810 = vdwg.mxu0
  %1811 = vrot.lane.b32.xlu0 %v430, 96
  %v1812 = vpop.permute.xlu0 %1811
  %1813 = vrot.lane.b32.xlu0 %v430, 32
  %v1814 = vpop.permute.xlu0 %1813
  %v1816 = vsel %vm285, %v1812, 0
  %v1819 = vsel %vm285, %v1814, 0
  %1821 = vmatprep.subr.bf16.mxu0 0
  %1822 = vmatpush1.bf16.xpose.msra.mxu0 %v1819
  %1823 = vmatprep.subr.bf16.mxu0 0
  %1824 = vmatpush1.bf16.xpose.msra.mxu0 0
  %1825 = vmatprep.subr.bf16.mxu0 0
  %1826 = vmatpush1.bf16.xpose.msra.mxu0 0
  %1827 = vmatprep.subr.bf16.mxu0 0
  %1828 = vmatpush1.bf16.xpose.msra.mxu0 0
  %1829 = vmatprep.subr.bf16.mxu0 0
  %1830 = vmatpush1.bf16.xpose.msra.mxu0 0
  %1831 = vmatprep.subr.bf16.mxu0 0
  %1832 = vmatpush1.bf16.xpose.msra.mxu0 0
  %1833 = vmatprep.subr.bf16.mxu0 0
  %1834 = vmatpush1.bf16.xpose.msra.mxu0 0
  %1835 = vmatprep.subr.bf16.mxu0 0
  %1836 = vmatpush1.bf16.xpose.msra.mxu0 0
  %1837 = vmatprep.subr.bf16.mxu0 0
  %1838 = vmatpush1.bf16.xpose.msra.mxu0 0
  %1839 = vmatprep.subr.bf16.mxu0 0
  %1840 = vmatpush1.bf16.xpose.msra.mxu0 0
  %1841 = vmatprep.subr.bf16.mxu0 0
  %1842 = vmatpush1.bf16.xpose.msra.mxu0 0
  %1843 = vmatprep.subr.bf16.mxu0 0
  %1844 = vmatpush1.bf16.xpose.msra.mxu0 0
  %1845 = vmatprep.subr.bf16.mxu0 0
  %1846 = vmatpush1.bf16.xpose.msra.mxu0 0
  %1847 = vmatprep.subr.bf16.mxu0 0
  %1848 = vmatpush1.bf16.xpose.msra.mxu0 0
  %1849 = vmatprep.subr.bf16.mxu0 0
  %1850 = vmatpush1.bf16.xpose.msra.mxu0 0
  %1851 = vmatprep.subr.bf16.mxu0 0
  %1852 = vmatpush1.bf16.xpose.msra.mxu0 0
  %1853 = vmatprep.mubr.bf16.mxu0 0
  %1854 = vmatmul.mubr.bf16.gmra.mrb[0].mxu0 %v1816
  %v1855 = vpop.f32.mrb[0].mxu0
  %v1856 = vadd.f32 %v267, %v1855
  %v1857 = vpop.f32.mrb[0].mxu0
  %v1858 = vpop.f32.mrb[0].mxu0
  %v1859 = vpop.f32.mrb[0].mxu0
  %1860 = vdwg.mxu0
  %1861 = vrot.lane.b32.xlu0 %v479, 96
  %v1862 = vpop.permute.xlu0 %1861
  %1863 = vrot.lane.b32.xlu0 %v479, 32
  %v1864 = vpop.permute.xlu0 %1863
  %v1866 = vsel %vm285, %v1862, 0
  %v1869 = vsel %vm285, %v1864, 0
  %1871 = vmatprep.subr.bf16.mxu0 0
  %1872 = vmatpush1.bf16.xpose.msra.mxu0 %v1869
  %1873 = vmatprep.subr.bf16.mxu0 0
  %1874 = vmatpush1.bf16.xpose.msra.mxu0 0
  %1875 = vmatprep.subr.bf16.mxu0 0
  %1876 = vmatpush1.bf16.xpose.msra.mxu0 0
  %1877 = vmatprep.subr.bf16.mxu0 0
  %1878 = vmatpush1.bf16.xpose.msra.mxu0 0
  %1879 = vmatprep.subr.bf16.mxu0 0
  %1880 = vmatpush1.bf16.xpose.msra.mxu0 0
  %1881 = vmatprep.subr.bf16.mxu0 0
  %1882 = vmatpush1.bf16.xpose.msra.mxu0 0
  %1883 = vmatprep.subr.bf16.mxu0 0
  %1884 = vmatpush1.bf16.xpose.msra.mxu0 0
  %1885 = vmatprep.subr.bf16.mxu0 0
  %1886 = vmatpush1.bf16.xpose.msra.mxu0 0
  %1887 = vmatprep.subr.bf16.mxu0 0
  %1888 = vmatpush1.bf16.xpose.msra.mxu0 0
  %1889 = vmatprep.subr.bf16.mxu0 0
  %1890 = vmatpush1.bf16.xpose.msra.mxu0 0
  %1891 = vmatprep.subr.bf16.mxu0 0
  %1892 = vmatpush1.bf16.xpose.msra.mxu0 0
  %1893 = vmatprep.subr.bf16.mxu0 0
  %1894 = vmatpush1.bf16.xpose.msra.mxu0 0
  %1895 = vmatprep.subr.bf16.mxu0 0
  %1896 = vmatpush1.bf16.xpose.msra.mxu0 0
  %1897 = vmatprep.subr.bf16.mxu0 0
  %1898 = vmatpush1.bf16.xpose.msra.mxu0 0
  %1899 = vmatprep.subr.bf16.mxu0 0
  %1900 = vmatpush1.bf16.xpose.msra.mxu0 0
  %1901 = vmatprep.subr.bf16.mxu0 0
  %1902 = vmatpush1.bf16.xpose.msra.mxu0 0
  %1903 = vmatprep.mubr.bf16.mxu0 0
  %1904 = vmatmul.mubr.bf16.gmra.mrb[0].mxu0 %v1866
  %v1905 = vpop.f32.mrb[0].mxu0
  %v1906 = vadd.f32 %v271, %v1905
  %v1907 = vpop.f32.mrb[0].mxu0
  %v1908 = vpop.f32.mrb[0].mxu0
  %v1909 = vpop.f32.mrb[0].mxu0
  %1910 = vdwg.mxu0
  %1911 = vrot.lane.b32.xlu0 %v528, 96
  %v1912 = vpop.permute.xlu0 %1911
  %1913 = vrot.lane.b32.xlu0 %v528, 32
  %v1914 = vpop.permute.xlu0 %1913
  %v1916 = vsel %vm285, %v1912, 0
  %v1919 = vsel %vm285, %v1914, 0
  %1921 = vmatprep.subr.bf16.mxu0 0
  %1922 = vmatpush1.bf16.xpose.msra.mxu0 %v1919
  %1923 = vmatprep.subr.bf16.mxu0 0
  %1924 = vmatpush1.bf16.xpose.msra.mxu0 0
  %1925 = vmatprep.subr.bf16.mxu0 0
  %1926 = vmatpush1.bf16.xpose.msra.mxu0 0
  %1927 = vmatprep.subr.bf16.mxu0 0
  %1928 = vmatpush1.bf16.xpose.msra.mxu0 0
  %1929 = vmatprep.subr.bf16.mxu0 0
  %1930 = vmatpush1.bf16.xpose.msra.mxu0 0
  %1931 = vmatprep.subr.bf16.mxu0 0
  %1932 = vmatpush1.bf16.xpose.msra.mxu0 0
  %1933 = vmatprep.subr.bf16.mxu0 0
  %1934 = vmatpush1.bf16.xpose.msra.mxu0 0
  %1935 = vmatprep.subr.bf16.mxu0 0
  %1936 = vmatpush1.bf16.xpose.msra.mxu0 0
  %1937 = vmatprep.subr.bf16.mxu0 0
  %1938 = vmatpush1.bf16.xpose.msra.mxu0 0
  %1939 = vmatprep.subr.bf16.mxu0 0
  %1940 = vmatpush1.bf16.xpose.msra.mxu0 0
  %1941 = vmatprep.subr.bf16.mxu0 0
  %1942 = vmatpush1.bf16.xpose.msra.mxu0 0
  %1943 = vmatprep.subr.bf16.mxu0 0
  %1944 = vmatpush1.bf16.xpose.msra.mxu0 0
  %1945 = vmatprep.subr.bf16.mxu0 0
  %1946 = vmatpush1.bf16.xpose.msra.mxu0 0
  %1947 = vmatprep.subr.bf16.mxu0 0
  %1948 = vmatpush1.bf16.xpose.msra.mxu0 0
  %1949 = vmatprep.subr.bf16.mxu0 0
  %1950 = vmatpush1.bf16.xpose.msra.mxu0 0
  %1951 = vmatprep.subr.bf16.mxu0 0
  %1952 = vmatpush1.bf16.xpose.msra.mxu0 0
  %1953 = vmatprep.mubr.bf16.mxu0 0
  %1954 = vmatmul.mubr.bf16.gmra.mrb[0].mxu0 %v1916
  %v1955 = vpop.f32.mrb[0].mxu0
  %v1956 = vadd.f32 %v275, %v1955
  %v1957 = vpop.f32.mrb[0].mxu0
  %v1958 = vpop.f32.mrb[0].mxu0
  %v1959 = vpop.f32.mrb[0].mxu0
  %1960 = vdwg.mxu0
  %v1961 = vsel %vm577, %v1706, -inf
  %1962 = vmax.xlane.f32.xlu0 %v1961
  %v1963 = vpop.xlane.xlu0 %1962
  %v1964 = vsel %vm577, %v1756, -inf
  %1965 = vmax.xlane.f32.xlu0 %v1964
  %v1966 = vpop.xlane.xlu0 %1965
  %v1967 = vsel %vm577, %v1806, -inf
  %1968 = vmax.xlane.f32.xlu0 %v1967
  %v1969 = vpop.xlane.xlu0 %1968
  %v1970 = vsel %vm577, %v1856, -inf
  %1971 = vmax.xlane.f32.xlu0 %v1970
  %v1972 = vpop.xlane.xlu0 %1971
  %v1973 = vsel %vm577, %v1906, -inf
  %1974 = vmax.xlane.f32.xlu0 %v1973
  %v1975 = vpop.xlane.xlu0 %1974
  %v1976 = vsel %vm577, %v1956, -inf
  %1977 = vmax.xlane.f32.xlu0 %v1976
  %v1978 = vpop.xlane.xlu0 %1977
  %v1979 = vsub.f32 %v1706, %v1963
  %v1980 = vsub.f32 %v1756, %v1966
  %v1981 = vsub.f32 %v1806, %v1969
  %v1982 = vsub.f32 %v1856, %v1972
  %v1983 = vsub.f32 %v1906, %v1975
  %v1984 = vsub.f32 %v1956, %v1978
  %v1985 = vmul.f32 %v1979, 1.442695
  %v1986 = vpow.pop %v1985
  %v1987 = vmul.f32 %v1980, 1.442695
  %v1988 = vpow.pop %v1987
  %v1989 = vmul.f32 %v1981, 1.442695
  %v1990 = vpow.pop %v1989
  %v1991 = vmul.f32 %v1982, 1.442695
  %v1992 = vpow.pop %v1991
  %v1993 = vmul.f32 %v1983, 1.442695
  %v1994 = vpow.pop %v1993
  %v1995 = vmul.f32 %v1984, 1.442695
  %v1996 = vpow.pop %v1995
  %v1997 = vsel %vm577, %v1986, 0.0
  %1998 = vadd.xlane.f32.xlu0 %v1997
  %v1999 = vpop.xlane.xlu0 %1998
  %v2000 = vsel %vm577, %v1988, 0.0
  %2001 = vadd.xlane.f32.xlu0 %v2000
  %v2002 = vpop.xlane.xlu0 %2001
  %v2003 = vsel %vm577, %v1990, 0.0
  %2004 = vadd.xlane.f32.xlu0 %v2003
  %v2005 = vpop.xlane.xlu0 %2004
  %v2006 = vsel %vm577, %v1992, 0.0
  %2007 = vadd.xlane.f32.xlu0 %v2006
  %v2008 = vpop.xlane.xlu0 %2007
  %v2009 = vsel %vm577, %v1994, 0.0
  %2010 = vadd.xlane.f32.xlu0 %v2009
  %v2011 = vpop.xlane.xlu0 %2010
  %v2012 = vsel %vm577, %v1996, 0.0
  %2013 = vadd.xlane.f32.xlu0 %v2012
  %v2014 = vpop.xlane.xlu0 %2013
  %v2015 = vrcp.pop %v1999
  %v2016 = vrcp.pop %v2002
  %v2017 = vrcp.pop %v2005
  %v2018 = vrcp.pop %v2008
  %v2019 = vrcp.pop %v2011
  %v2020 = vrcp.pop %v2014
  %v2021 = vmul.f32 %v1986, %v2015
  %v2022 = vmul.f32 %v1988, %v2016
  %v2023 = vmul.f32 %v1990, %v2017
  %v2024 = vmul.f32 %v1992, %v2018
  %v2025 = vmul.f32 %v1994, %v2019
  %v2026 = vmul.f32 %v1996, %v2020
  %v2027 = vpack.c.bf16 %v2021, %v2021
  %v2028 = vpack.c.bf16 %v2022, %v2022
  %v2029 = vpack.c.bf16 %v2023, %v2023
  %v2030 = vpack.c.bf16 %v2024, %v2024
  %v2031 = vpack.c.bf16 %v2025, %v2025
  %v2032 = vpack.c.bf16 %v2026, %v2026
  %2033 = vrot.lane.b32.xlu0 %v234, 96
  %v2034 = vpop.permute.xlu0 %2033
  %v2035 = vrot.slane %v2034, 4
  %v2037 = vsel %vm577, %v2027, 0
  %v2040 = vsel %vm654, %v2035, 0
  %2042 = vmatprep.subr.bf16.mxu0 0
  %2043 = vmatpush1.bf16.msra.mxu0 %v2040
  %2044 = vmatprep.subr.bf16.mxu0 0
  %2045 = vmatpush1.bf16.msra.mxu0 0
  %2046 = vmatprep.subr.bf16.mxu0 0
  %2047 = vmatpush1.bf16.msra.mxu0 0
  %2048 = vmatprep.subr.bf16.mxu0 0
  %2049 = vmatpush1.bf16.msra.mxu0 0
  %2050 = vmatprep.subr.bf16.mxu0 0
  %2051 = vmatpush1.bf16.msra.mxu0 0
  %2052 = vmatprep.subr.bf16.mxu0 0
  %2053 = vmatpush1.bf16.msra.mxu0 0
  %2054 = vmatprep.subr.bf16.mxu0 0
  %2055 = vmatpush1.bf16.msra.mxu0 0
  %2056 = vmatprep.subr.bf16.mxu0 0
  %2057 = vmatpush1.bf16.msra.mxu0 0
  %2058 = vmatprep.subr.bf16.mxu0 0
  %2059 = vmatpush1.bf16.msra.mxu0 0
  %2060 = vmatprep.subr.bf16.mxu0 0
  %2061 = vmatpush1.bf16.msra.mxu0 0
  %2062 = vmatprep.subr.bf16.mxu0 0
  %2063 = vmatpush1.bf16.msra.mxu0 0
  %2064 = vmatprep.subr.bf16.mxu0 0
  %2065 = vmatpush1.bf16.msra.mxu0 0
  %2066 = vmatprep.subr.bf16.mxu0 0
  %2067 = vmatpush1.bf16.msra.mxu0 0
  %2068 = vmatprep.subr.bf16.mxu0 0
  %2069 = vmatpush1.bf16.msra.mxu0 0
  %2070 = vmatprep.subr.bf16.mxu0 0
  %2071 = vmatpush1.bf16.msra.mxu0 0
  %2072 = vmatprep.subr.bf16.mxu0 0
  %2073 = vmatpush1.bf16.msra.mxu0 0
  %2074 = vmatprep.mubr.bf16.mxu0 0
  %2075 = vmatmul.mubr.bf16.gmra.mrb[0].mxu0 %v2037
  %v2076 = vpop.f32.mrb[0].mxu0
  %v2077 = vadd.f32 0.0, %v2076
  %v2078 = vpop.f32.mrb[0].mxu0
  %v2079 = vpop.f32.mrb[0].mxu0
  %v2080 = vpop.f32.mrb[0].mxu0
  %2081 = vdwg.mxu0
  %2082 = vrot.lane.b32.xlu0 %v235, 96
  %v2083 = vpop.permute.xlu0 %2082
  %v2084 = vrot.slane %v2083, 4
  %v2086 = vsel %vm577, %v2028, 0
  %v2089 = vsel %vm654, %v2084, 0
  %2091 = vmatprep.subr.bf16.mxu0 0
  %2092 = vmatpush1.bf16.msra.mxu0 %v2089
  %2093 = vmatprep.subr.bf16.mxu0 0
  %2094 = vmatpush1.bf16.msra.mxu0 0
  %2095 = vmatprep.subr.bf16.mxu0 0
  %2096 = vmatpush1.bf16.msra.mxu0 0
  %2097 = vmatprep.subr.bf16.mxu0 0
  %2098 = vmatpush1.bf16.msra.mxu0 0
  %2099 = vmatprep.subr.bf16.mxu0 0
  %2100 = vmatpush1.bf16.msra.mxu0 0
  %2101 = vmatprep.subr.bf16.mxu0 0
  %2102 = vmatpush1.bf16.msra.mxu0 0
  %2103 = vmatprep.subr.bf16.mxu0 0
  %2104 = vmatpush1.bf16.msra.mxu0 0
  %2105 = vmatprep.subr.bf16.mxu0 0
  %2106 = vmatpush1.bf16.msra.mxu0 0
  %2107 = vmatprep.subr.bf16.mxu0 0
  %2108 = vmatpush1.bf16.msra.mxu0 0
  %2109 = vmatprep.subr.bf16.mxu0 0
  %2110 = vmatpush1.bf16.msra.mxu0 0
  %2111 = vmatprep.subr.bf16.mxu0 0
  %2112 = vmatpush1.bf16.msra.mxu0 0
  %2113 = vmatprep.subr.bf16.mxu0 0
  %2114 = vmatpush1.bf16.msra.mxu0 0
  %2115 = vmatprep.subr.bf16.mxu0 0
  %2116 = vmatpush1.bf16.msra.mxu0 0
  %2117 = vmatprep.subr.bf16.mxu0 0
  %2118 = vmatpush1.bf16.msra.mxu0 0
  %2119 = vmatprep.subr.bf16.mxu0 0
  %2120 = vmatpush1.bf16.msra.mxu0 0
  %2121 = vmatprep.subr.bf16.mxu0 0
  %2122 = vmatpush1.bf16.msra.mxu0 0
  %2123 = vmatprep.mubr.bf16.mxu0 0
  %2124 = vmatmul.mubr.bf16.gmra.mrb[0].mxu0 %v2086
  %v2125 = vpop.f32.mrb[0].mxu0
  %v2126 = vadd.f32 0.0, %v2125
  %v2127 = vpop.f32.mrb[0].mxu0
  %v2128 = vpop.f32.mrb[0].mxu0
  %v2129 = vpop.f32.mrb[0].mxu0
  %2130 = vdwg.mxu0
  %2131 = vrot.lane.b32.xlu0 %v236, 96
  %v2132 = vpop.permute.xlu0 %2131
  %v2133 = vrot.slane %v2132, 4
  %v2135 = vsel %vm577, %v2029, 0
  %v2138 = vsel %vm654, %v2133, 0
  %2140 = vmatprep.subr.bf16.mxu0 0
  %2141 = vmatpush1.bf16.msra.mxu0 %v2138
  %2142 = vmatprep.subr.bf16.mxu0 0
  %2143 = vmatpush1.bf16.msra.mxu0 0
  %2144 = vmatprep.subr.bf16.mxu0 0
  %2145 = vmatpush1.bf16.msra.mxu0 0
  %2146 = vmatprep.subr.bf16.mxu0 0
  %2147 = vmatpush1.bf16.msra.mxu0 0
  %2148 = vmatprep.subr.bf16.mxu0 0
  %2149 = vmatpush1.bf16.msra.mxu0 0
  %2150 = vmatprep.subr.bf16.mxu0 0
  %2151 = vmatpush1.bf16.msra.mxu0 0
  %2152 = vmatprep.subr.bf16.mxu0 0
  %2153 = vmatpush1.bf16.msra.mxu0 0
  %2154 = vmatprep.subr.bf16.mxu0 0
  %2155 = vmatpush1.bf16.msra.mxu0 0
  %2156 = vmatprep.subr.bf16.mxu0 0
  %2157 = vmatpush1.bf16.msra.mxu0 0
  %2158 = vmatprep.subr.bf16.mxu0 0
  %2159 = vmatpush1.bf16.msra.mxu0 0
  %2160 = vmatprep.subr.bf16.mxu0 0
  %2161 = vmatpush1.bf16.msra.mxu0 0
  %2162 = vmatprep.subr.bf16.mxu0 0
  %2163 = vmatpush1.bf16.msra.mxu0 0
  %2164 = vmatprep.subr.bf16.mxu0 0
  %2165 = vmatpush1.bf16.msra.mxu0 0
  %2166 = vmatprep.subr.bf16.mxu0 0
  %2167 = vmatpush1.bf16.msra.mxu0 0
  %2168 = vmatprep.subr.bf16.mxu0 0
  %2169 = vmatpush1.bf16.msra.mxu0 0
  %2170 = vmatprep.subr.bf16.mxu0 0
  %2171 = vmatpush1.bf16.msra.mxu0 0
  %2172 = vmatprep.mubr.bf16.mxu0 0
  %2173 = vmatmul.mubr.bf16.gmra.mrb[0].mxu0 %v2135
  %v2174 = vpop.f32.mrb[0].mxu0
  %v2175 = vadd.f32 0.0, %v2174
  %v2176 = vpop.f32.mrb[0].mxu0
  %v2177 = vpop.f32.mrb[0].mxu0
  %v2178 = vpop.f32.mrb[0].mxu0
  %2179 = vdwg.mxu0
  %2180 = vrot.lane.b32.xlu0 %v237, 96
  %v2181 = vpop.permute.xlu0 %2180
  %v2182 = vrot.slane %v2181, 4
  %v2184 = vsel %vm577, %v2030, 0
  %v2187 = vsel %vm654, %v2182, 0
  %2189 = vmatprep.subr.bf16.mxu0 0
  %2190 = vmatpush1.bf16.msra.mxu0 %v2187
  %2191 = vmatprep.subr.bf16.mxu0 0
  %2192 = vmatpush1.bf16.msra.mxu0 0
  %2193 = vmatprep.subr.bf16.mxu0 0
  %2194 = vmatpush1.bf16.msra.mxu0 0
  %2195 = vmatprep.subr.bf16.mxu0 0
  %2196 = vmatpush1.bf16.msra.mxu0 0
  %2197 = vmatprep.subr.bf16.mxu0 0
  %2198 = vmatpush1.bf16.msra.mxu0 0
  %2199 = vmatprep.subr.bf16.mxu0 0
  %2200 = vmatpush1.bf16.msra.mxu0 0
  %2201 = vmatprep.subr.bf16.mxu0 0
  %2202 = vmatpush1.bf16.msra.mxu0 0
  %2203 = vmatprep.subr.bf16.mxu0 0
  %2204 = vmatpush1.bf16.msra.mxu0 0
  %2205 = vmatprep.subr.bf16.mxu0 0
  %2206 = vmatpush1.bf16.msra.mxu0 0
  %2207 = vmatprep.subr.bf16.mxu0 0
  %2208 = vmatpush1.bf16.msra.mxu0 0
  %2209 = vmatprep.subr.bf16.mxu0 0
  %2210 = vmatpush1.bf16.msra.mxu0 0
  %2211 = vmatprep.subr.bf16.mxu0 0
  %2212 = vmatpush1.bf16.msra.mxu0 0
  %2213 = vmatprep.subr.bf16.mxu0 0
  %2214 = vmatpush1.bf16.msra.mxu0 0
  %2215 = vmatprep.subr.bf16.mxu0 0
  %2216 = vmatpush1.bf16.msra.mxu0 0
  %2217 = vmatprep.subr.bf16.mxu0 0
  %2218 = vmatpush1.bf16.msra.mxu0 0
  %2219 = vmatprep.subr.bf16.mxu0 0
  %2220 = vmatpush1.bf16.msra.mxu0 0
  %2221 = vmatprep.mubr.bf16.mxu0 0
  %2222 = vmatmul.mubr.bf16.gmra.mrb[0].mxu0 %v2184
  %v2223 = vpop.f32.mrb[0].mxu0
  %v2224 = vadd.f32 0.0, %v2223
  %v2225 = vpop.f32.mrb[0].mxu0
  %v2226 = vpop.f32.mrb[0].mxu0
  %v2227 = vpop.f32.mrb[0].mxu0
  %2228 = vdwg.mxu0
  %2229 = vrot.lane.b32.xlu0 %v238, 96
  %v2230 = vpop.permute.xlu0 %2229
  %v2231 = vrot.slane %v2230, 4
  %v2233 = vsel %vm577, %v2031, 0
  %v2236 = vsel %vm654, %v2231, 0
  %2238 = vmatprep.subr.bf16.mxu0 0
  %2239 = vmatpush1.bf16.msra.mxu0 %v2236
  %2240 = vmatprep.subr.bf16.mxu0 0
  %2241 = vmatpush1.bf16.msra.mxu0 0
  %2242 = vmatprep.subr.bf16.mxu0 0
  %2243 = vmatpush1.bf16.msra.mxu0 0
  %2244 = vmatprep.subr.bf16.mxu0 0
  %2245 = vmatpush1.bf16.msra.mxu0 0
  %2246 = vmatprep.subr.bf16.mxu0 0
  %2247 = vmatpush1.bf16.msra.mxu0 0
  %2248 = vmatprep.subr.bf16.mxu0 0
  %2249 = vmatpush1.bf16.msra.mxu0 0
  %2250 = vmatprep.subr.bf16.mxu0 0
  %2251 = vmatpush1.bf16.msra.mxu0 0
  %2252 = vmatprep.subr.bf16.mxu0 0
  %2253 = vmatpush1.bf16.msra.mxu0 0
  %2254 = vmatprep.subr.bf16.mxu0 0
  %2255 = vmatpush1.bf16.msra.mxu0 0
  %2256 = vmatprep.subr.bf16.mxu0 0
  %2257 = vmatpush1.bf16.msra.mxu0 0
  %2258 = vmatprep.subr.bf16.mxu0 0
  %2259 = vmatpush1.bf16.msra.mxu0 0
  %2260 = vmatprep.subr.bf16.mxu0 0
  %2261 = vmatpush1.bf16.msra.mxu0 0
  %2262 = vmatprep.subr.bf16.mxu0 0
  %2263 = vmatpush1.bf16.msra.mxu0 0
  %2264 = vmatprep.subr.bf16.mxu0 0
  %2265 = vmatpush1.bf16.msra.mxu0 0
  %2266 = vmatprep.subr.bf16.mxu0 0
  %2267 = vmatpush1.bf16.msra.mxu0 0
  %2268 = vmatprep.subr.bf16.mxu0 0
  %2269 = vmatpush1.bf16.msra.mxu0 0
  %2270 = vmatprep.mubr.bf16.mxu0 0
  %2271 = vmatmul.mubr.bf16.gmra.mrb[0].mxu0 %v2233
  %v2272 = vpop.f32.mrb[0].mxu0
  %v2273 = vadd.f32 0.0, %v2272
  %v2274 = vpop.f32.mrb[0].mxu0
  %v2275 = vpop.f32.mrb[0].mxu0
  %v2276 = vpop.f32.mrb[0].mxu0
  %2277 = vdwg.mxu0
  %2278 = vrot.lane.b32.xlu0 %v239, 96
  %v2279 = vpop.permute.xlu0 %2278
  %v2280 = vrot.slane %v2279, 4
  %v2282 = vsel %vm577, %v2032, 0
  %v2285 = vsel %vm654, %v2280, 0
  %2287 = vmatprep.subr.bf16.mxu0 0
  %2288 = vmatpush1.bf16.msra.mxu0 %v2285
  %2289 = vmatprep.subr.bf16.mxu0 0
  %2290 = vmatpush1.bf16.msra.mxu0 0
  %2291 = vmatprep.subr.bf16.mxu0 0
  %2292 = vmatpush1.bf16.msra.mxu0 0
  %2293 = vmatprep.subr.bf16.mxu0 0
  %2294 = vmatpush1.bf16.msra.mxu0 0
  %2295 = vmatprep.subr.bf16.mxu0 0
  %2296 = vmatpush1.bf16.msra.mxu0 0
  %2297 = vmatprep.subr.bf16.mxu0 0
  %2298 = vmatpush1.bf16.msra.mxu0 0
  %2299 = vmatprep.subr.bf16.mxu0 0
  %2300 = vmatpush1.bf16.msra.mxu0 0
  %2301 = vmatprep.subr.bf16.mxu0 0
  %2302 = vmatpush1.bf16.msra.mxu0 0
  %2303 = vmatprep.subr.bf16.mxu0 0
  %2304 = vmatpush1.bf16.msra.mxu0 0
  %2305 = vmatprep.subr.bf16.mxu0 0
  %2306 = vmatpush1.bf16.msra.mxu0 0
  %2307 = vmatprep.subr.bf16.mxu0 0
  %2308 = vmatpush1.bf16.msra.mxu0 0
  %2309 = vmatprep.subr.bf16.mxu0 0
  %2310 = vmatpush1.bf16.msra.mxu0 0
  %2311 = vmatprep.subr.bf16.mxu0 0
  %2312 = vmatpush1.bf16.msra.mxu0 0
  %2313 = vmatprep.subr.bf16.mxu0 0
  %2314 = vmatpush1.bf16.msra.mxu0 0
  %2315 = vmatprep.subr.bf16.mxu0 0
  %2316 = vmatpush1.bf16.msra.mxu0 0
  %2317 = vmatprep.subr.bf16.mxu0 0
  %2318 = vmatpush1.bf16.msra.mxu0 0
  %2319 = vmatprep.mubr.bf16.mxu0 0
  %2320 = vmatmul.mubr.bf16.gmra.mrb[0].mxu0 %v2282
  %v2321 = vpop.f32.mrb[0].mxu0
  %v2322 = vadd.f32 0.0, %v2321
  %v2323 = vpop.f32.mrb[0].mxu0
  %v2324 = vpop.f32.mrb[0].mxu0
  %v2325 = vpop.f32.mrb[0].mxu0
  %2326 = vdwg.mxu0
  %v2327 = vpack.c.bf16 %v2077, %v2077
  %v2328 = vpack.c.bf16 %v2126, %v2126
  %v2329 = vpack.c.bf16 %v2175, %v2175
  %v2330 = vpack.c.bf16 %v2224, %v2224
  %v2331 = vpack.c.bf16 %v2273, %v2273
  %v2332 = vpack.c.bf16 %v2322, %v2322
  %v2339 = vunpack.c.l.b16 %v2327
  %v2340 = vunpack.c.l.b16 %v2328
  %v2341 = vunpack.c.l.b16 %v2329
  %v2342 = vunpack.c.l.b16 %v2330
  %v2343 = vunpack.c.l.b16 %v2331
  %v2344 = vunpack.c.l.b16 %v2332
  %v2345 = vpack.c.b16 %v2339, %v2339
  %v2346 = vpack.c.b16 %v2340, %v2340
  %v2347 = vpack.c.b16 %v2341, %v2341
  %v2348 = vpack.c.b16 %v2342, %v2342
  %v2349 = vpack.c.b16 %v2343, %v2343
  %v2350 = vpack.c.b16 %v2344, %v2344
  %2351 = vrot.lane.b32.xlu0 %v2345, 32
  %v2352 = vpop.permute.xlu0 %2351
  %2353 = vrot.lane.b32.xlu0 %v2346, 32
  %v2354 = vpop.permute.xlu0 %2353
  %2355 = vrot.lane.b32.xlu0 %v2347, 32
  %v2356 = vpop.permute.xlu0 %2355
  %2357 = vrot.lane.b32.xlu0 %v2348, 32
  %v2358 = vpop.permute.xlu0 %2357
  %2359 = vrot.lane.b32.xlu0 %v2349, 32
  %v2360 = vpop.permute.xlu0 %2359
  %2361 = vrot.lane.b32.xlu0 %v2350, 32
  %v2362 = vpop.permute.xlu0 %2361
  %vm2369 = vcmask 388352
  %2370 = vst.msk [vmem:[#allocation2] sm:$0xf] %vm2369, %v2352
  %2371 = vst.msk [vmem:[#allocation2 + $0x4] sm:$0xf] %vm2369, %v2354
  %2372 = vst.msk [vmem:[#allocation2 + $0x8] sm:$0xf] %vm2369, %v2356
  %2373 = vst.msk [vmem:[#allocation2 + $0xc] sm:$0xf] %vm2369, %v2358
  %2374 = vst.msk [vmem:[#allocation2 + $0x10] sm:$0xf] %vm2369, %v2360
  %2375 = vst.msk [vmem:[#allocation2 + $0x14] sm:$0xf] %vm2369, %v2362
  %2376 = vrot.lane.b32.xlu0 %v282, 80
  %v2377 = vpop.permute.xlu0 %2376
  %2378 = vrot.lane.b32.xlu0 %v282, 16
  %v2379 = vpop.permute.xlu0 %2378
  %v2381 = vsel %vm285, %v2377, 0
  %v2384 = vsel %vm285, %v2379, 0
  %2386 = vmatprep.subr.bf16.mxu0 0
  %2387 = vmatpush1.bf16.xpose.msra.mxu0 %v2384
  %2388 = vmatprep.subr.bf16.mxu0 0
  %2389 = vmatpush1.bf16.xpose.msra.mxu0 0
  %2390 = vmatprep.subr.bf16.mxu0 0
  %2391 = vmatpush1.bf16.xpose.msra.mxu0 0
  %2392 = vmatprep.subr.bf16.mxu0 0
  %2393 = vmatpush1.bf16.xpose.msra.mxu0 0
  %2394 = vmatprep.subr.bf16.mxu0 0
  %2395 = vmatpush1.bf16.xpose.msra.mxu0 0
  %2396 = vmatprep.subr.bf16.mxu0 0
  %2397 = vmatpush1.bf16.xpose.msra.mxu0 0
  %2398 = vmatprep.subr.bf16.mxu0 0
  %2399 = vmatpush1.bf16.xpose.msra.mxu0 0
  %2400 = vmatprep.subr.bf16.mxu0 0
  %2401 = vmatpush1.bf16.xpose.msra.mxu0 0
  %2402 = vmatprep.subr.bf16.mxu0 0
  %2403 = vmatpush1.bf16.xpose.msra.mxu0 0
  %2404 = vmatprep.subr.bf16.mxu0 0
  %2405 = vmatpush1.bf16.xpose.msra.mxu0 0
  %2406 = vmatprep.subr.bf16.mxu0 0
  %2407 = vmatpush1.bf16.xpose.msra.mxu0 0
  %2408 = vmatprep.subr.bf16.mxu0 0
  %2409 = vmatpush1.bf16.xpose.msra.mxu0 0
  %2410 = vmatprep.subr.bf16.mxu0 0
  %2411 = vmatpush1.bf16.xpose.msra.mxu0 0
  %2412 = vmatprep.subr.bf16.mxu0 0
  %2413 = vmatpush1.bf16.xpose.msra.mxu0 0
  %2414 = vmatprep.subr.bf16.mxu0 0
  %2415 = vmatpush1.bf16.xpose.msra.mxu0 0
  %2416 = vmatprep.subr.bf16.mxu0 0
  %2417 = vmatpush1.bf16.xpose.msra.mxu0 0
  %2418 = vmatprep.mubr.bf16.mxu0 0
  %2419 = vmatmul.mubr.bf16.gmra.mrb[0].mxu0 %v2381
  %v2420 = vpop.f32.mrb[0].mxu0
  %v2421 = vadd.f32 %v255, %v2420
  %v2422 = vpop.f32.mrb[0].mxu0
  %v2423 = vpop.f32.mrb[0].mxu0
  %v2424 = vpop.f32.mrb[0].mxu0
  %2425 = vdwg.mxu0
  %2426 = vrot.lane.b32.xlu0 %v332, 80
  %v2427 = vpop.permute.xlu0 %2426
  %2428 = vrot.lane.b32.xlu0 %v332, 16
  %v2429 = vpop.permute.xlu0 %2428
  %v2431 = vsel %vm285, %v2427, 0
  %v2434 = vsel %vm285, %v2429, 0
  %2436 = vmatprep.subr.bf16.mxu0 0
  %2437 = vmatpush1.bf16.xpose.msra.mxu0 %v2434
  %2438 = vmatprep.subr.bf16.mxu0 0
  %2439 = vmatpush1.bf16.xpose.msra.mxu0 0
  %2440 = vmatprep.subr.bf16.mxu0 0
  %2441 = vmatpush1.bf16.xpose.msra.mxu0 0
  %2442 = vmatprep.subr.bf16.mxu0 0
  %2443 = vmatpush1.bf16.xpose.msra.mxu0 0
  %2444 = vmatprep.subr.bf16.mxu0 0
  %2445 = vmatpush1.bf16.xpose.msra.mxu0 0
  %2446 = vmatprep.subr.bf16.mxu0 0
  %2447 = vmatpush1.bf16.xpose.msra.mxu0 0
  %2448 = vmatprep.subr.bf16.mxu0 0
  %2449 = vmatpush1.bf16.xpose.msra.mxu0 0
  %2450 = vmatprep.subr.bf16.mxu0 0
  %2451 = vmatpush1.bf16.xpose.msra.mxu0 0
  %2452 = vmatprep.subr.bf16.mxu0 0
  %2453 = vmatpush1.bf16.xpose.msra.mxu0 0
  %2454 = vmatprep.subr.bf16.mxu0 0
  %2455 = vmatpush1.bf16.xpose.msra.mxu0 0
  %2456 = vmatprep.subr.bf16.mxu0 0
  %2457 = vmatpush1.bf16.xpose.msra.mxu0 0
  %2458 = vmatprep.subr.bf16.mxu0 0
  %2459 = vmatpush1.bf16.xpose.msra.mxu0 0
  %2460 = vmatprep.subr.bf16.mxu0 0
  %2461 = vmatpush1.bf16.xpose.msra.mxu0 0
  %2462 = vmatprep.subr.bf16.mxu0 0
  %2463 = vmatpush1.bf16.xpose.msra.mxu0 0
  %2464 = vmatprep.subr.bf16.mxu0 0
  %2465 = vmatpush1.bf16.xpose.msra.mxu0 0
  %2466 = vmatprep.subr.bf16.mxu0 0
  %2467 = vmatpush1.bf16.xpose.msra.mxu0 0
  %2468 = vmatprep.mubr.bf16.mxu0 0
  %2469 = vmatmul.mubr.bf16.gmra.mrb[0].mxu0 %v2431
  %v2470 = vpop.f32.mrb[0].mxu0
  %v2471 = vadd.f32 %v259, %v2470
  %v2472 = vpop.f32.mrb[0].mxu0
  %v2473 = vpop.f32.mrb[0].mxu0
  %v2474 = vpop.f32.mrb[0].mxu0
  %2475 = vdwg.mxu0
  %2476 = vrot.lane.b32.xlu0 %v381, 80
  %v2477 = vpop.permute.xlu0 %2476
  %2478 = vrot.lane.b32.xlu0 %v381, 16
  %v2479 = vpop.permute.xlu0 %2478
  %v2481 = vsel %vm285, %v2477, 0
  %v2484 = vsel %vm285, %v2479, 0
  %2486 = vmatprep.subr.bf16.mxu0 0
  %2487 = vmatpush1.bf16.xpose.msra.mxu0 %v2484
  %2488 = vmatprep.subr.bf16.mxu0 0
  %2489 = vmatpush1.bf16.xpose.msra.mxu0 0
  %2490 = vmatprep.subr.bf16.mxu0 0
  %2491 = vmatpush1.bf16.xpose.msra.mxu0 0
  %2492 = vmatprep.subr.bf16.mxu0 0
  %2493 = vmatpush1.bf16.xpose.msra.mxu0 0
  %2494 = vmatprep.subr.bf16.mxu0 0
  %2495 = vmatpush1.bf16.xpose.msra.mxu0 0
  %2496 = vmatprep.subr.bf16.mxu0 0
  %2497 = vmatpush1.bf16.xpose.msra.mxu0 0
  %2498 = vmatprep.subr.bf16.mxu0 0
  %2499 = vmatpush1.bf16.xpose.msra.mxu0 0
  %2500 = vmatprep.subr.bf16.mxu0 0
  %2501 = vmatpush1.bf16.xpose.msra.mxu0 0
  %2502 = vmatprep.subr.bf16.mxu0 0
  %2503 = vmatpush1.bf16.xpose.msra.mxu0 0
  %2504 = vmatprep.subr.bf16.mxu0 0
  %2505 = vmatpush1.bf16.xpose.msra.mxu0 0
  %2506 = vmatprep.subr.bf16.mxu0 0
  %2507 = vmatpush1.bf16.xpose.msra.mxu0 0
  %2508 = vmatprep.subr.bf16.mxu0 0
  %2509 = vmatpush1.bf16.xpose.msra.mxu0 0
  %2510 = vmatprep.subr.bf16.mxu0 0
  %2511 = vmatpush1.bf16.xpose.msra.mxu0 0
  %2512 = vmatprep.subr.bf16.mxu0 0
  %2513 = vmatpush1.bf16.xpose.msra.mxu0 0
  %2514 = vmatprep.subr.bf16.mxu0 0
  %2515 = vmatpush1.bf16.xpose.msra.mxu0 0
  %2516 = vmatprep.subr.bf16.mxu0 0
  %2517 = vmatpush1.bf16.xpose.msra.mxu0 0
  %2518 = vmatprep.mubr.bf16.mxu0 0
  %2519 = vmatmul.mubr.bf16.gmra.mrb[0].mxu0 %v2481
  %v2520 = vpop.f32.mrb[0].mxu0
  %v2521 = vadd.f32 %v263, %v2520
  %v2522 = vpop.f32.mrb[0].mxu0
  %v2523 = vpop.f32.mrb[0].mxu0
  %v2524 = vpop.f32.mrb[0].mxu0
  %2525 = vdwg.mxu0
  %2526 = vrot.lane.b32.xlu0 %v430, 80
  %v2527 = vpop.permute.xlu0 %2526
  %2528 = vrot.lane.b32.xlu0 %v430, 16
  %v2529 = vpop.permute.xlu0 %2528
  %v2531 = vsel %vm285, %v2527, 0
  %v2534 = vsel %vm285, %v2529, 0
  %2536 = vmatprep.subr.bf16.mxu0 0
  %2537 = vmatpush1.bf16.xpose.msra.mxu0 %v2534
  %2538 = vmatprep.subr.bf16.mxu0 0
  %2539 = vmatpush1.bf16.xpose.msra.mxu0 0
  %2540 = vmatprep.subr.bf16.mxu0 0
  %2541 = vmatpush1.bf16.xpose.msra.mxu0 0
  %2542 = vmatprep.subr.bf16.mxu0 0
  %2543 = vmatpush1.bf16.xpose.msra.mxu0 0
  %2544 = vmatprep.subr.bf16.mxu0 0
  %2545 = vmatpush1.bf16.xpose.msra.mxu0 0
  %2546 = vmatprep.subr.bf16.mxu0 0
  %2547 = vmatpush1.bf16.xpose.msra.mxu0 0
  %2548 = vmatprep.subr.bf16.mxu0 0
  %2549 = vmatpush1.bf16.xpose.msra.mxu0 0
  %2550 = vmatprep.subr.bf16.mxu0 0
  %2551 = vmatpush1.bf16.xpose.msra.mxu0 0
  %2552 = vmatprep.subr.bf16.mxu0 0
  %2553 = vmatpush1.bf16.xpose.msra.mxu0 0
  %2554 = vmatprep.subr.bf16.mxu0 0
  %2555 = vmatpush1.bf16.xpose.msra.mxu0 0
  %2556 = vmatprep.subr.bf16.mxu0 0
  %2557 = vmatpush1.bf16.xpose.msra.mxu0 0
  %2558 = vmatprep.subr.bf16.mxu0 0
  %2559 = vmatpush1.bf16.xpose.msra.mxu0 0
  %2560 = vmatprep.subr.bf16.mxu0 0
  %2561 = vmatpush1.bf16.xpose.msra.mxu0 0
  %2562 = vmatprep.subr.bf16.mxu0 0
  %2563 = vmatpush1.bf16.xpose.msra.mxu0 0
  %2564 = vmatprep.subr.bf16.mxu0 0
  %2565 = vmatpush1.bf16.xpose.msra.mxu0 0
  %2566 = vmatprep.subr.bf16.mxu0 0
  %2567 = vmatpush1.bf16.xpose.msra.mxu0 0
  %2568 = vmatprep.mubr.bf16.mxu0 0
  %2569 = vmatmul.mubr.bf16.gmra.mrb[0].mxu0 %v2531
  %v2570 = vpop.f32.mrb[0].mxu0
  %v2571 = vadd.f32 %v267, %v2570
  %v2572 = vpop.f32.mrb[0].mxu0
  %v2573 = vpop.f32.mrb[0].mxu0
  %v2574 = vpop.f32.mrb[0].mxu0
  %2575 = vdwg.mxu0
  %2576 = vrot.lane.b32.xlu0 %v479, 80
  %v2577 = vpop.permute.xlu0 %2576
  %2578 = vrot.lane.b32.xlu0 %v479, 16
  %v2579 = vpop.permute.xlu0 %2578
  %v2581 = vsel %vm285, %v2577, 0
  %v2584 = vsel %vm285, %v2579, 0
  %2586 = vmatprep.subr.bf16.mxu0 0
  %2587 = vmatpush1.bf16.xpose.msra.mxu0 %v2584
  %2588 = vmatprep.subr.bf16.mxu0 0
  %2589 = vmatpush1.bf16.xpose.msra.mxu0 0
  %2590 = vmatprep.subr.bf16.mxu0 0
  %2591 = vmatpush1.bf16.xpose.msra.mxu0 0
  %2592 = vmatprep.subr.bf16.mxu0 0
  %2593 = vmatpush1.bf16.xpose.msra.mxu0 0
  %2594 = vmatprep.subr.bf16.mxu0 0
  %2595 = vmatpush1.bf16.xpose.msra.mxu0 0
  %2596 = vmatprep.subr.bf16.mxu0 0
  %2597 = vmatpush1.bf16.xpose.msra.mxu0 0
  %2598 = vmatprep.subr.bf16.mxu0 0
  %2599 = vmatpush1.bf16.xpose.msra.mxu0 0
  %2600 = vmatprep.subr.bf16.mxu0 0
  %2601 = vmatpush1.bf16.xpose.msra.mxu0 0
  %2602 = vmatprep.subr.bf16.mxu0 0
  %2603 = vmatpush1.bf16.xpose.msra.mxu0 0
  %2604 = vmatprep.subr.bf16.mxu0 0
  %2605 = vmatpush1.bf16.xpose.msra.mxu0 0
  %2606 = vmatprep.subr.bf16.mxu0 0
  %2607 = vmatpush1.bf16.xpose.msra.mxu0 0
  %2608 = vmatprep.subr.bf16.mxu0 0
  %2609 = vmatpush1.bf16.xpose.msra.mxu0 0
  %2610 = vmatprep.subr.bf16.mxu0 0
  %2611 = vmatpush1.bf16.xpose.msra.mxu0 0
  %2612 = vmatprep.subr.bf16.mxu0 0
  %2613 = vmatpush1.bf16.xpose.msra.mxu0 0
  %2614 = vmatprep.subr.bf16.mxu0 0
  %2615 = vmatpush1.bf16.xpose.msra.mxu0 0
  %2616 = vmatprep.subr.bf16.mxu0 0
  %2617 = vmatpush1.bf16.xpose.msra.mxu0 0
  %2618 = vmatprep.mubr.bf16.mxu0 0
  %2619 = vmatmul.mubr.bf16.gmra.mrb[0].mxu0 %v2581
  %v2620 = vpop.f32.mrb[0].mxu0
  %v2621 = vadd.f32 %v271, %v2620
  %v2622 = vpop.f32.mrb[0].mxu0
  %v2623 = vpop.f32.mrb[0].mxu0
  %v2624 = vpop.f32.mrb[0].mxu0
  %2625 = vdwg.mxu0
  %2626 = vrot.lane.b32.xlu0 %v528, 80
  %v2627 = vpop.permute.xlu0 %2626
  %2628 = vrot.lane.b32.xlu0 %v528, 16
  %v2629 = vpop.permute.xlu0 %2628
  %v2631 = vsel %vm285, %v2627, 0
  %v2634 = vsel %vm285, %v2629, 0
  %2636 = vmatprep.subr.bf16.mxu0 0
  %2637 = vmatpush1.bf16.xpose.msra.mxu0 %v2634
  %2638 = vmatprep.subr.bf16.mxu0 0
  %2639 = vmatpush1.bf16.xpose.msra.mxu0 0
  %2640 = vmatprep.subr.bf16.mxu0 0
  %2641 = vmatpush1.bf16.xpose.msra.mxu0 0
  %2642 = vmatprep.subr.bf16.mxu0 0
  %2643 = vmatpush1.bf16.xpose.msra.mxu0 0
  %2644 = vmatprep.subr.bf16.mxu0 0
  %2645 = vmatpush1.bf16.xpose.msra.mxu0 0
  %2646 = vmatprep.subr.bf16.mxu0 0
  %2647 = vmatpush1.bf16.xpose.msra.mxu0 0
  %2648 = vmatprep.subr.bf16.mxu0 0
  %2649 = vmatpush1.bf16.xpose.msra.mxu0 0
  %2650 = vmatprep.subr.bf16.mxu0 0
  %2651 = vmatpush1.bf16.xpose.msra.mxu0 0
  %2652 = vmatprep.subr.bf16.mxu0 0
  %2653 = vmatpush1.bf16.xpose.msra.mxu0 0
  %2654 = vmatprep.subr.bf16.mxu0 0
  %2655 = vmatpush1.bf16.xpose.msra.mxu0 0
  %2656 = vmatprep.subr.bf16.mxu0 0
  %2657 = vmatpush1.bf16.xpose.msra.mxu0 0
  %2658 = vmatprep.subr.bf16.mxu0 0
  %2659 = vmatpush1.bf16.xpose.msra.mxu0 0
  %2660 = vmatprep.subr.bf16.mxu0 0
  %2661 = vmatpush1.bf16.xpose.msra.mxu0 0
  %2662 = vmatprep.subr.bf16.mxu0 0
  %2663 = vmatpush1.bf16.xpose.msra.mxu0 0
  %2664 = vmatprep.subr.bf16.mxu0 0
  %2665 = vmatpush1.bf16.xpose.msra.mxu0 0
  %2666 = vmatprep.subr.bf16.mxu0 0
  %2667 = vmatpush1.bf16.xpose.msra.mxu0 0
  %2668 = vmatprep.mubr.bf16.mxu0 0
  %2669 = vmatmul.mubr.bf16.gmra.mrb[0].mxu0 %v2631
  %v2670 = vpop.f32.mrb[0].mxu0
  %v2671 = vadd.f32 %v275, %v2670
  %v2672 = vpop.f32.mrb[0].mxu0
  %v2673 = vpop.f32.mrb[0].mxu0
  %v2674 = vpop.f32.mrb[0].mxu0
  %2675 = vdwg.mxu0
  %v2676 = vsel %vm577, %v2421, -inf
  %2677 = vmax.xlane.f32.xlu0 %v2676
  %v2678 = vpop.xlane.xlu0 %2677
  %v2679 = vsel %vm577, %v2471, -inf
  %2680 = vmax.xlane.f32.xlu0 %v2679
  %v2681 = vpop.xlane.xlu0 %2680
  %v2682 = vsel %vm577, %v2521, -inf
  %2683 = vmax.xlane.f32.xlu0 %v2682
  %v2684 = vpop.xlane.xlu0 %2683
  %v2685 = vsel %vm577, %v2571, -inf
  %2686 = vmax.xlane.f32.xlu0 %v2685
  %v2687 = vpop.xlane.xlu0 %2686
  %v2688 = vsel %vm577, %v2621, -inf
  %2689 = vmax.xlane.f32.xlu0 %v2688
  %v2690 = vpop.xlane.xlu0 %2689
  %v2691 = vsel %vm577, %v2671, -inf
  %2692 = vmax.xlane.f32.xlu0 %v2691
  %v2693 = vpop.xlane.xlu0 %2692
  %v2694 = vsub.f32 %v2421, %v2678
  %v2695 = vsub.f32 %v2471, %v2681
  %v2696 = vsub.f32 %v2521, %v2684
  %v2697 = vsub.f32 %v2571, %v2687
  %v2698 = vsub.f32 %v2621, %v2690
  %v2699 = vsub.f32 %v2671, %v2693
  %v2700 = vmul.f32 %v2694, 1.442695
  %v2701 = vpow.pop %v2700
  %v2702 = vmul.f32 %v2695, 1.442695
  %v2703 = vpow.pop %v2702
  %v2704 = vmul.f32 %v2696, 1.442695
  %v2705 = vpow.pop %v2704
  %v2706 = vmul.f32 %v2697, 1.442695
  %v2707 = vpow.pop %v2706
  %v2708 = vmul.f32 %v2698, 1.442695
  %v2709 = vpow.pop %v2708
  %v2710 = vmul.f32 %v2699, 1.442695
  %v2711 = vpow.pop %v2710
  %v2712 = vsel %vm577, %v2701, 0.0
  %2713 = vadd.xlane.f32.xlu0 %v2712
  %v2714 = vpop.xlane.xlu0 %2713
  %v2715 = vsel %vm577, %v2703, 0.0
  %2716 = vadd.xlane.f32.xlu0 %v2715
  %v2717 = vpop.xlane.xlu0 %2716
  %v2718 = vsel %vm577, %v2705, 0.0
  %2719 = vadd.xlane.f32.xlu0 %v2718
  %v2720 = vpop.xlane.xlu0 %2719
  %v2721 = vsel %vm577, %v2707, 0.0
  %2722 = vadd.xlane.f32.xlu0 %v2721
  %v2723 = vpop.xlane.xlu0 %2722
  %v2724 = vsel %vm577, %v2709, 0.0
  %2725 = vadd.xlane.f32.xlu0 %v2724
  %v2726 = vpop.xlane.xlu0 %2725
  %v2727 = vsel %vm577, %v2711, 0.0
  %2728 = vadd.xlane.f32.xlu0 %v2727
  %v2729 = vpop.xlane.xlu0 %2728
  %v2730 = vrcp.pop %v2714
  %v2731 = vrcp.pop %v2717
  %v2732 = vrcp.pop %v2720
  %v2733 = vrcp.pop %v2723
  %v2734 = vrcp.pop %v2726
  %v2735 = vrcp.pop %v2729
  %v2736 = vmul.f32 %v2701, %v2730
  %v2737 = vmul.f32 %v2703, %v2731
  %v2738 = vmul.f32 %v2705, %v2732
  %v2739 = vmul.f32 %v2707, %v2733
  %v2740 = vmul.f32 %v2709, %v2734
  %v2741 = vmul.f32 %v2711, %v2735
  %v2742 = vpack.c.bf16 %v2736, %v2736
  %v2743 = vpack.c.bf16 %v2737, %v2737
  %v2744 = vpack.c.bf16 %v2738, %v2738
  %v2745 = vpack.c.bf16 %v2739, %v2739
  %v2746 = vpack.c.bf16 %v2740, %v2740
  %v2747 = vpack.c.bf16 %v2741, %v2741
  %2748 = vrot.lane.b32.xlu0 %v234, 80
  %v2749 = vpop.permute.xlu0 %2748
  %v2750 = vrot.slane %v2749, 4
  %v2752 = vsel %vm577, %v2742, 0
  %v2755 = vsel %vm654, %v2750, 0
  %2757 = vmatprep.subr.bf16.mxu0 0
  %2758 = vmatpush1.bf16.msra.mxu0 %v2755
  %2759 = vmatprep.subr.bf16.mxu0 0
  %2760 = vmatpush1.bf16.msra.mxu0 0
  %2761 = vmatprep.subr.bf16.mxu0 0
  %2762 = vmatpush1.bf16.msra.mxu0 0
  %2763 = vmatprep.subr.bf16.mxu0 0
  %2764 = vmatpush1.bf16.msra.mxu0 0
  %2765 = vmatprep.subr.bf16.mxu0 0
  %2766 = vmatpush1.bf16.msra.mxu0 0
  %2767 = vmatprep.subr.bf16.mxu0 0
  %2768 = vmatpush1.bf16.msra.mxu0 0
  %2769 = vmatprep.subr.bf16.mxu0 0
  %2770 = vmatpush1.bf16.msra.mxu0 0
  %2771 = vmatprep.subr.bf16.mxu0 0
  %2772 = vmatpush1.bf16.msra.mxu0 0
  %2773 = vmatprep.subr.bf16.mxu0 0
  %2774 = vmatpush1.bf16.msra.mxu0 0
  %2775 = vmatprep.subr.bf16.mxu0 0
  %2776 = vmatpush1.bf16.msra.mxu0 0
  %2777 = vmatprep.subr.bf16.mxu0 0
  %2778 = vmatpush1.bf16.msra.mxu0 0
  %2779 = vmatprep.subr.bf16.mxu0 0
  %2780 = vmatpush1.bf16.msra.mxu0 0
  %2781 = vmatprep.subr.bf16.mxu0 0
  %2782 = vmatpush1.bf16.msra.mxu0 0
  %2783 = vmatprep.subr.bf16.mxu0 0
  %2784 = vmatpush1.bf16.msra.mxu0 0
  %2785 = vmatprep.subr.bf16.mxu0 0
  %2786 = vmatpush1.bf16.msra.mxu0 0
  %2787 = vmatprep.subr.bf16.mxu0 0
  %2788 = vmatpush1.bf16.msra.mxu0 0
  %2789 = vmatprep.mubr.bf16.mxu0 0
  %2790 = vmatmul.mubr.bf16.gmra.mrb[0].mxu0 %v2752
  %v2791 = vpop.f32.mrb[0].mxu0
  %v2792 = vadd.f32 0.0, %v2791
  %v2793 = vpop.f32.mrb[0].mxu0
  %v2794 = vpop.f32.mrb[0].mxu0
  %v2795 = vpop.f32.mrb[0].mxu0
  %2796 = vdwg.mxu0
  %2797 = vrot.lane.b32.xlu0 %v235, 80
  %v2798 = vpop.permute.xlu0 %2797
  %v2799 = vrot.slane %v2798, 4
  %v2801 = vsel %vm577, %v2743, 0
  %v2804 = vsel %vm654, %v2799, 0
  %2806 = vmatprep.subr.bf16.mxu0 0
  %2807 = vmatpush1.bf16.msra.mxu0 %v2804
  %2808 = vmatprep.subr.bf16.mxu0 0
  %2809 = vmatpush1.bf16.msra.mxu0 0
  %2810 = vmatprep.subr.bf16.mxu0 0
  %2811 = vmatpush1.bf16.msra.mxu0 0
  %2812 = vmatprep.subr.bf16.mxu0 0
  %2813 = vmatpush1.bf16.msra.mxu0 0
  %2814 = vmatprep.subr.bf16.mxu0 0
  %2815 = vmatpush1.bf16.msra.mxu0 0
  %2816 = vmatprep.subr.bf16.mxu0 0
  %2817 = vmatpush1.bf16.msra.mxu0 0
  %2818 = vmatprep.subr.bf16.mxu0 0
  %2819 = vmatpush1.bf16.msra.mxu0 0
  %2820 = vmatprep.subr.bf16.mxu0 0
  %2821 = vmatpush1.bf16.msra.mxu0 0
  %2822 = vmatprep.subr.bf16.mxu0 0
  %2823 = vmatpush1.bf16.msra.mxu0 0
  %2824 = vmatprep.subr.bf16.mxu0 0
  %2825 = vmatpush1.bf16.msra.mxu0 0
  %2826 = vmatprep.subr.bf16.mxu0 0
  %2827 = vmatpush1.bf16.msra.mxu0 0
  %2828 = vmatprep.subr.bf16.mxu0 0
  %2829 = vmatpush1.bf16.msra.mxu0 0
  %2830 = vmatprep.subr.bf16.mxu0 0
  %2831 = vmatpush1.bf16.msra.mxu0 0
  %2832 = vmatprep.subr.bf16.mxu0 0
  %2833 = vmatpush1.bf16.msra.mxu0 0
  %2834 = vmatprep.subr.bf16.mxu0 0
  %2835 = vmatpush1.bf16.msra.mxu0 0
  %2836 = vmatprep.subr.bf16.mxu0 0
  %2837 = vmatpush1.bf16.msra.mxu0 0
  %2838 = vmatprep.mubr.bf16.mxu0 0
  %2839 = vmatmul.mubr.bf16.gmra.mrb[0].mxu0 %v2801
  %v2840 = vpop.f32.mrb[0].mxu0
  %v2841 = vadd.f32 0.0, %v2840
  %v2842 = vpop.f32.mrb[0].mxu0
  %v2843 = vpop.f32.mrb[0].mxu0
  %v2844 = vpop.f32.mrb[0].mxu0
  %2845 = vdwg.mxu0
  %2846 = vrot.lane.b32.xlu0 %v236, 80
  %v2847 = vpop.permute.xlu0 %2846
  %v2848 = vrot.slane %v2847, 4
  %v2850 = vsel %vm577, %v2744, 0
  %v2853 = vsel %vm654, %v2848, 0
  %2855 = vmatprep.subr.bf16.mxu0 0
  %2856 = vmatpush1.bf16.msra.mxu0 %v2853
  %2857 = vmatprep.subr.bf16.mxu0 0
  %2858 = vmatpush1.bf16.msra.mxu0 0
  %2859 = vmatprep.subr.bf16.mxu0 0
  %2860 = vmatpush1.bf16.msra.mxu0 0
  %2861 = vmatprep.subr.bf16.mxu0 0
  %2862 = vmatpush1.bf16.msra.mxu0 0
  %2863 = vmatprep.subr.bf16.mxu0 0
  %2864 = vmatpush1.bf16.msra.mxu0 0
  %2865 = vmatprep.subr.bf16.mxu0 0
  %2866 = vmatpush1.bf16.msra.mxu0 0
  %2867 = vmatprep.subr.bf16.mxu0 0
  %2868 = vmatpush1.bf16.msra.mxu0 0
  %2869 = vmatprep.subr.bf16.mxu0 0
  %2870 = vmatpush1.bf16.msra.mxu0 0
  %2871 = vmatprep.subr.bf16.mxu0 0
  %2872 = vmatpush1.bf16.msra.mxu0 0
  %2873 = vmatprep.subr.bf16.mxu0 0
  %2874 = vmatpush1.bf16.msra.mxu0 0
  %2875 = vmatprep.subr.bf16.mxu0 0
  %2876 = vmatpush1.bf16.msra.mxu0 0
  %2877 = vmatprep.subr.bf16.mxu0 0
  %2878 = vmatpush1.bf16.msra.mxu0 0
  %2879 = vmatprep.subr.bf16.mxu0 0
  %2880 = vmatpush1.bf16.msra.mxu0 0
  %2881 = vmatprep.subr.bf16.mxu0 0
  %2882 = vmatpush1.bf16.msra.mxu0 0
  %2883 = vmatprep.subr.bf16.mxu0 0
  %2884 = vmatpush1.bf16.msra.mxu0 0
  %2885 = vmatprep.subr.bf16.mxu0 0
  %2886 = vmatpush1.bf16.msra.mxu0 0
  %2887 = vmatprep.mubr.bf16.mxu0 0
  %2888 = vmatmul.mubr.bf16.gmra.mrb[0].mxu0 %v2850
  %v2889 = vpop.f32.mrb[0].mxu0
  %v2890 = vadd.f32 0.0, %v2889
  %v2891 = vpop.f32.mrb[0].mxu0
  %v2892 = vpop.f32.mrb[0].mxu0
  %v2893 = vpop.f32.mrb[0].mxu0
  %2894 = vdwg.mxu0
  %2895 = vrot.lane.b32.xlu0 %v237, 80
  %v2896 = vpop.permute.xlu0 %2895
  %v2897 = vrot.slane %v2896, 4
  %v2899 = vsel %vm577, %v2745, 0
  %v2902 = vsel %vm654, %v2897, 0
  %2904 = vmatprep.subr.bf16.mxu0 0
  %2905 = vmatpush1.bf16.msra.mxu0 %v2902
  %2906 = vmatprep.subr.bf16.mxu0 0
  %2907 = vmatpush1.bf16.msra.mxu0 0
  %2908 = vmatprep.subr.bf16.mxu0 0
  %2909 = vmatpush1.bf16.msra.mxu0 0
  %2910 = vmatprep.subr.bf16.mxu0 0
  %2911 = vmatpush1.bf16.msra.mxu0 0
  %2912 = vmatprep.subr.bf16.mxu0 0
  %2913 = vmatpush1.bf16.msra.mxu0 0
  %2914 = vmatprep.subr.bf16.mxu0 0
  %2915 = vmatpush1.bf16.msra.mxu0 0
  %2916 = vmatprep.subr.bf16.mxu0 0
  %2917 = vmatpush1.bf16.msra.mxu0 0
  %2918 = vmatprep.subr.bf16.mxu0 0
  %2919 = vmatpush1.bf16.msra.mxu0 0
  %2920 = vmatprep.subr.bf16.mxu0 0
  %2921 = vmatpush1.bf16.msra.mxu0 0
  %2922 = vmatprep.subr.bf16.mxu0 0
  %2923 = vmatpush1.bf16.msra.mxu0 0
  %2924 = vmatprep.subr.bf16.mxu0 0
  %2925 = vmatpush1.bf16.msra.mxu0 0
  %2926 = vmatprep.subr.bf16.mxu0 0
  %2927 = vmatpush1.bf16.msra.mxu0 0
  %2928 = vmatprep.subr.bf16.mxu0 0
  %2929 = vmatpush1.bf16.msra.mxu0 0
  %2930 = vmatprep.subr.bf16.mxu0 0
  %2931 = vmatpush1.bf16.msra.mxu0 0
  %2932 = vmatprep.subr.bf16.mxu0 0
  %2933 = vmatpush1.bf16.msra.mxu0 0
  %2934 = vmatprep.subr.bf16.mxu0 0
  %2935 = vmatpush1.bf16.msra.mxu0 0
  %2936 = vmatprep.mubr.bf16.mxu0 0
  %2937 = vmatmul.mubr.bf16.gmra.mrb[0].mxu0 %v2899
  %v2938 = vpop.f32.mrb[0].mxu0
  %v2939 = vadd.f32 0.0, %v2938
  %v2940 = vpop.f32.mrb[0].mxu0
  %v2941 = vpop.f32.mrb[0].mxu0
  %v2942 = vpop.f32.mrb[0].mxu0
  %2943 = vdwg.mxu0
  %2944 = vrot.lane.b32.xlu0 %v238, 80
  %v2945 = vpop.permute.xlu0 %2944
  %v2946 = vrot.slane %v2945, 4
  %v2948 = vsel %vm577, %v2746, 0
  %v2951 = vsel %vm654, %v2946, 0
  %2953 = vmatprep.subr.bf16.mxu0 0
  %2954 = vmatpush1.bf16.msra.mxu0 %v2951
  %2955 = vmatprep.subr.bf16.mxu0 0
  %2956 = vmatpush1.bf16.msra.mxu0 0
  %2957 = vmatprep.subr.bf16.mxu0 0
  %2958 = vmatpush1.bf16.msra.mxu0 0
  %2959 = vmatprep.subr.bf16.mxu0 0
  %2960 = vmatpush1.bf16.msra.mxu0 0
  %2961 = vmatprep.subr.bf16.mxu0 0
  %2962 = vmatpush1.bf16.msra.mxu0 0
  %2963 = vmatprep.subr.bf16.mxu0 0
  %2964 = vmatpush1.bf16.msra.mxu0 0
  %2965 = vmatprep.subr.bf16.mxu0 0
  %2966 = vmatpush1.bf16.msra.mxu0 0
  %2967 = vmatprep.subr.bf16.mxu0 0
  %2968 = vmatpush1.bf16.msra.mxu0 0
  %2969 = vmatprep.subr.bf16.mxu0 0
  %2970 = vmatpush1.bf16.msra.mxu0 0
  %2971 = vmatprep.subr.bf16.mxu0 0
  %2972 = vmatpush1.bf16.msra.mxu0 0
  %2973 = vmatprep.subr.bf16.mxu0 0
  %2974 = vmatpush1.bf16.msra.mxu0 0
  %2975 = vmatprep.subr.bf16.mxu0 0
  %2976 = vmatpush1.bf16.msra.mxu0 0
  %2977 = vmatprep.subr.bf16.mxu0 0
  %2978 = vmatpush1.bf16.msra.mxu0 0
  %2979 = vmatprep.subr.bf16.mxu0 0
  %2980 = vmatpush1.bf16.msra.mxu0 0
  %2981 = vmatprep.subr.bf16.mxu0 0
  %2982 = vmatpush1.bf16.msra.mxu0 0
  %2983 = vmatprep.subr.bf16.mxu0 0
  %2984 = vmatpush1.bf16.msra.mxu0 0
  %2985 = vmatprep.mubr.bf16.mxu0 0
  %2986 = vmatmul.mubr.bf16.gmra.mrb[0].mxu0 %v2948
  %v2987 = vpop.f32.mrb[0].mxu0
  %v2988 = vadd.f32 0.0, %v2987
  %v2989 = vpop.f32.mrb[0].mxu0
  %v2990 = vpop.f32.mrb[0].mxu0
  %v2991 = vpop.f32.mrb[0].mxu0
  %2992 = vdwg.mxu0
  %2993 = vrot.lane.b32.xlu0 %v239, 80
  %v2994 = vpop.permute.xlu0 %2993
  %v2995 = vrot.slane %v2994, 4
  %v2997 = vsel %vm577, %v2747, 0
  %v3000 = vsel %vm654, %v2995, 0
  %3002 = vmatprep.subr.bf16.mxu0 0
  %3003 = vmatpush1.bf16.msra.mxu0 %v3000
  %3004 = vmatprep.subr.bf16.mxu0 0
  %3005 = vmatpush1.bf16.msra.mxu0 0
  %3006 = vmatprep.subr.bf16.mxu0 0
  %3007 = vmatpush1.bf16.msra.mxu0 0
  %3008 = vmatprep.subr.bf16.mxu0 0
  %3009 = vmatpush1.bf16.msra.mxu0 0
  %3010 = vmatprep.subr.bf16.mxu0 0
  %3011 = vmatpush1.bf16.msra.mxu0 0
  %3012 = vmatprep.subr.bf16.mxu0 0
  %3013 = vmatpush1.bf16.msra.mxu0 0
  %3014 = vmatprep.subr.bf16.mxu0 0
  %3015 = vmatpush1.bf16.msra.mxu0 0
  %3016 = vmatprep.subr.bf16.mxu0 0
  %3017 = vmatpush1.bf16.msra.mxu0 0
  %3018 = vmatprep.subr.bf16.mxu0 0
  %3019 = vmatpush1.bf16.msra.mxu0 0
  %3020 = vmatprep.subr.bf16.mxu0 0
  %3021 = vmatpush1.bf16.msra.mxu0 0
  %3022 = vmatprep.subr.bf16.mxu0 0
  %3023 = vmatpush1.bf16.msra.mxu0 0
  %3024 = vmatprep.subr.bf16.mxu0 0
  %3025 = vmatpush1.bf16.msra.mxu0 0
  %3026 = vmatprep.subr.bf16.mxu0 0
  %3027 = vmatpush1.bf16.msra.mxu0 0
  %3028 = vmatprep.subr.bf16.mxu0 0
  %3029 = vmatpush1.bf16.msra.mxu0 0
  %3030 = vmatprep.subr.bf16.mxu0 0
  %3031 = vmatpush1.bf16.msra.mxu0 0
  %3032 = vmatprep.subr.bf16.mxu0 0
  %3033 = vmatpush1.bf16.msra.mxu0 0
  %3034 = vmatprep.mubr.bf16.mxu0 0
  %3035 = vmatmul.mubr.bf16.gmra.mrb[0].mxu0 %v2997
  %v3036 = vpop.f32.mrb[0].mxu0
  %v3037 = vadd.f32 0.0, %v3036
  %v3038 = vpop.f32.mrb[0].mxu0
  %v3039 = vpop.f32.mrb[0].mxu0
  %v3040 = vpop.f32.mrb[0].mxu0
  %3041 = vdwg.mxu0
  %v3042 = vpack.c.bf16 %v2792, %v2792
  %v3043 = vpack.c.bf16 %v2841, %v2841
  %v3044 = vpack.c.bf16 %v2890, %v2890
  %v3045 = vpack.c.bf16 %v2939, %v2939
  %v3046 = vpack.c.bf16 %v2988, %v2988
  %v3047 = vpack.c.bf16 %v3037, %v3037
  %v3054 = vunpack.c.l.b16 %v3042
  %v3055 = vunpack.c.l.b16 %v3043
  %v3056 = vunpack.c.l.b16 %v3044
  %v3057 = vunpack.c.l.b16 %v3045
  %v3058 = vunpack.c.l.b16 %v3046
  %v3059 = vunpack.c.l.b16 %v3047
  %v3060 = vpack.c.b16 %v3054, %v3054
  %v3061 = vpack.c.b16 %v3055, %v3055
  %v3062 = vpack.c.b16 %v3056, %v3056
  %v3063 = vpack.c.b16 %v3057, %v3057
  %v3064 = vpack.c.b16 %v3058, %v3058
  %v3065 = vpack.c.b16 %v3059, %v3059
  %3066 = vrot.lane.b32.xlu0 %v3060, 48
  %v3067 = vpop.permute.xlu0 %3066
  %3068 = vrot.lane.b32.xlu0 %v3061, 48
  %v3069 = vpop.permute.xlu0 %3068
  %3070 = vrot.lane.b32.xlu0 %v3062, 48
  %v3071 = vpop.permute.xlu0 %3070
  %3072 = vrot.lane.b32.xlu0 %v3063, 48
  %v3073 = vpop.permute.xlu0 %3072
  %3074 = vrot.lane.b32.xlu0 %v3064, 48
  %v3075 = vpop.permute.xlu0 %3074
  %3076 = vrot.lane.b32.xlu0 %v3065, 48
  %v3077 = vpop.permute.xlu0 %3076
  %vm3084 = vcmask 519552
  %3085 = vst.msk [vmem:[#allocation2] sm:$0xf] %vm3084, %v3067
  %3086 = vst.msk [vmem:[#allocation2 + $0x4] sm:$0xf] %vm3084, %v3069
  %3087 = vst.msk [vmem:[#allocation2 + $0x8] sm:$0xf] %vm3084, %v3071
  %3088 = vst.msk [vmem:[#allocation2 + $0xc] sm:$0xf] %vm3084, %v3073
  %3089 = vst.msk [vmem:[#allocation2 + $0x10] sm:$0xf] %vm3084, %v3075
  %3090 = vst.msk [vmem:[#allocation2 + $0x14] sm:$0xf] %vm3084, %v3077
  %v3091 = vld [vmem:[#allocation2] sm:$0xf]
  %v3092 = vld [vmem:[#allocation2 + $0x4] sm:$0xf]
  %v3093 = vld [vmem:[#allocation2 + $0x8] sm:$0xf]
  %v3094 = vld [vmem:[#allocation2 + $0xc] sm:$0xf]
  %v3095 = vld [vmem:[#allocation2 + $0x10] sm:$0xf]
  %v3096 = vld [vmem:[#allocation2 + $0x14] sm:$0xf]
  %v3097 = vld [vmem:[%s4] sm:$0xf]
  %v3098 = vld [vmem:[%s4 + $0x4] sm:$0xf]
  %v3099 = vld [vmem:[%s4 + $0x8] sm:$0xf]
  %v3100 = vld [vmem:[%s4 + $0xc] sm:$0xf]
  %v3101 = vld [vmem:[%s4 + $0x10] sm:$0xf]
  %v3102 = vld [vmem:[%s4 + $0x14] sm:$0xf]
  %v3103 = vld [vmem:[%s4 + $0x18] sm:$0xf]
  %v3104 = vld [vmem:[%s4 + $0x1c] sm:$0xf]
  %v3105 = vld [vmem:[%s5] sm:$0x1]
  %v3107 = vlaneseq
  %v3108 = vshrl.u32 %v3107, 7
  %v3109 = vsub.s32 0, %v3108
  %v3110 = vrot.slane %v3105, %v3109
  %v3118 = vunpack.c.l.b16 %v3091
  %v3119 = vunpack.c.l.b16 %v3092
  %v3120 = vunpack.c.l.b16 %v3093
  %v3121 = vunpack.c.l.b16 %v3094
  %v3122 = vunpack.c.l.b16 %v3095
  %v3123 = vunpack.c.l.b16 %v3096
  %v3124 = vpack.c.b16 %v3119, %v3118
  %v3125 = vpack.c.b16 %v3121, %v3120
  %v3126 = vpack.c.b16 %v3123, %v3122
  %v3135 = vunpack.c.l.b16 %v3097
  %v3136 = vunpack.c.l.b16 %v3098
  %v3137 = vunpack.c.l.b16 %v3099
  %v3138 = vunpack.c.l.b16 %v3100
  %v3139 = vunpack.c.l.b16 %v3101
  %v3140 = vunpack.c.l.b16 %v3102
  %v3141 = vunpack.c.l.b16 %v3103
  %v3142 = vunpack.c.l.b16 %v3104
  %v3143 = vpack.c.b16 %v3136, %v3135
  %v3144 = vpack.c.b16 %v3138, %v3137
  %v3145 = vpack.c.b16 %v3140, %v3139
  %v3146 = vpack.c.b16 %v3142, %v3141
  %v3152 = vsel %vm137, %v3124, 0
  %v3155 = vsel %vm137, %v3125, 0
  %v3158 = vsel %vm137, %v3126, 0
  %3160 = vmatprep.subr.bf16.mxu0 0
  %3161 = vmatpush1.bf16.msra.mxu0 %v3143
  %3162 = vmatprep.subr.bf16.mxu0 0
  %3163 = vmatpush1.bf16.msra.mxu0 %v3144
  %3164 = vmatprep.subr.bf16.mxu0 0
  %3165 = vmatpush1.bf16.msra.mxu0 %v3145
  %3166 = vmatprep.subr.bf16.mxu0 0
  %3167 = vmatpush1.bf16.msra.mxu0 %v3146
  %3168 = vmatprep.subr.bf16.mxu0 0
  %3169 = vmatpush1.bf16.msra.mxu0 0
  %3170 = vmatprep.subr.bf16.mxu0 0
  %3171 = vmatpush1.bf16.msra.mxu0 0
  %3172 = vmatprep.subr.bf16.mxu0 0
  %3173 = vmatpush1.bf16.msra.mxu0 0
  %3174 = vmatprep.subr.bf16.mxu0 0
  %3175 = vmatpush1.bf16.msra.mxu0 0
  %3176 = vmatprep.subr.bf16.mxu0 0
  %3177 = vmatpush1.bf16.msra.mxu0 0
  %3178 = vmatprep.subr.bf16.mxu0 0
  %3179 = vmatpush1.bf16.msra.mxu0 0
  %3180 = vmatprep.subr.bf16.mxu0 0
  %3181 = vmatpush1.bf16.msra.mxu0 0
  %3182 = vmatprep.subr.bf16.mxu0 0
  %3183 = vmatpush1.bf16.msra.mxu0 0
  %3184 = vmatprep.subr.bf16.mxu0 0
  %3185 = vmatpush1.bf16.msra.mxu0 0
  %3186 = vmatprep.subr.bf16.mxu0 0
  %3187 = vmatpush1.bf16.msra.mxu0 0
  %3188 = vmatprep.subr.bf16.mxu0 0
  %3189 = vmatpush1.bf16.msra.mxu0 0
  %3190 = vmatprep.subr.bf16.mxu0 0
  %3191 = vmatpush1.bf16.msra.mxu0 0
  %3192 = vmatprep.mubr.bf16.mxu0 0
  %3193 = vmatmul.mubr.bf16.gmra.mrb[0].mxu0 %v3152
  %v3194 = vpop.f32.mrb[0].mxu0
  %v3195 = vadd.f32 %v3110, %v3194
  %v3196 = vpop.f32.mrb[0].mxu0
  %v3197 = vpop.f32.mrb[0].mxu0
  %v3198 = vadd.f32 %v3110, %v3197
  %v3199 = vpop.f32.mrb[0].mxu0
  %3200 = vmatprep.mubr.bf16.mxu0 0
  %3201 = vmatmul.mubr.bf16.gmra.mrb[0].mxu0 %v3155
  %v3202 = vpop.f32.mrb[0].mxu0
  %v3203 = vadd.f32 %v3110, %v3202
  %v3204 = vpop.f32.mrb[0].mxu0
  %v3205 = vpop.f32.mrb[0].mxu0
  %v3206 = vadd.f32 %v3110, %v3205
  %v3207 = vpop.f32.mrb[0].mxu0
  %3208 = vmatprep.mubr.bf16.mxu0 0
  %3209 = vmatmul.mubr.bf16.gmra.mrb[0].mxu0 %v3158
  %v3210 = vpop.f32.mrb[0].mxu0
  %v3211 = vadd.f32 %v3110, %v3210
  %v3212 = vpop.f32.mrb[0].mxu0
  %v3213 = vpop.f32.mrb[0].mxu0
  %v3214 = vadd.f32 %v3110, %v3213
  %v3215 = vpop.f32.mrb[0].mxu0
  %3216 = vdwg.mxu0
  %v3217 = vadd.f32 %v3195, %v56
  %v3218 = vadd.f32 %v3198, %v57
  %v3219 = vadd.f32 %v3203, %v58
  %v3220 = vadd.f32 %v3206, %v59
  %v3221 = vadd.f32 %v3211, %v60
  %v3222 = vadd.f32 %v3214, %v61
  %v3223 = vld [vmem:[%s6] sm:$0x1]
  %v3224 = vld [vmem:[%s7] sm:$0x1]
  %v3225 = vsel %vm137, %v3217, 0.0
  %3226 = vadd.xlane.f32.xlu0 %v3225
  %v3227 = vpop.xlane.xlu0 %3226
  %v3228 = vsel %vm137, %v3218, 0.0
  %3229 = vadd.xlane.f32.xlu0 %v3228
  %v3230 = vpop.xlane.xlu0 %3229
  %v3231 = vsel %vm137, %v3219, 0.0
  %3232 = vadd.xlane.f32.xlu0 %v3231
  %v3233 = vpop.xlane.xlu0 %3232
  %v3234 = vsel %vm137, %v3220, 0.0
  %3235 = vadd.xlane.f32.xlu0 %v3234
  %v3236 = vpop.xlane.xlu0 %3235
  %v3237 = vsel %vm137, %v3221, 0.0
  %3238 = vadd.xlane.f32.xlu0 %v3237
  %v3239 = vpop.xlane.xlu0 %3238
  %v3240 = vsel %vm137, %v3222, 0.0
  %3241 = vadd.xlane.f32.xlu0 %v3240
  %v3242 = vpop.xlane.xlu0 %3241
  %v3243 = vrcp.pop 64.0
  %v3244 = vmul.f32 %v3227, %v3243
  %v3245 = vmul.f32 %v3230, %v3243
  %v3246 = vmul.f32 %v3233, %v3243
  %v3247 = vmul.f32 %v3236, %v3243
  %v3248 = vmul.f32 %v3239, %v3243
  %v3249 = vmul.f32 %v3242, %v3243
  %v3250 = vsub.f32 %v3217, %v3244
  %v3251 = vsub.f32 %v3218, %v3245
  %v3252 = vsub.f32 %v3219, %v3246
  %v3253 = vsub.f32 %v3220, %v3247
  %v3254 = vsub.f32 %v3221, %v3248
  %v3255 = vsub.f32 %v3222, %v3249
  %v3256 = vmul.f32 %v3250, %v3250
  %v3257 = vmul.f32 %v3251, %v3251
  %v3258 = vmul.f32 %v3252, %v3252
  %v3259 = vmul.f32 %v3253, %v3253
  %v3260 = vmul.f32 %v3254, %v3254
  %v3261 = vmul.f32 %v3255, %v3255
  %v3262 = vsel %vm137, %v3256, 0.0
  %3263 = vadd.xlane.f32.xlu0 %v3262
  %v3264 = vpop.xlane.xlu0 %3263
  %v3265 = vsel %vm137, %v3257, 0.0
  %3266 = vadd.xlane.f32.xlu0 %v3265
  %v3267 = vpop.xlane.xlu0 %3266
  %v3268 = vsel %vm137, %v3258, 0.0
  %3269 = vadd.xlane.f32.xlu0 %v3268
  %v3270 = vpop.xlane.xlu0 %3269
  %v3271 = vsel %vm137, %v3259, 0.0
  %3272 = vadd.xlane.f32.xlu0 %v3271
  %v3273 = vpop.xlane.xlu0 %3272
  %v3274 = vsel %vm137, %v3260, 0.0
  %3275 = vadd.xlane.f32.xlu0 %v3274
  %v3276 = vpop.xlane.xlu0 %3275
  %v3277 = vsel %vm137, %v3261, 0.0
  %3278 = vadd.xlane.f32.xlu0 %v3277
  %v3279 = vpop.xlane.xlu0 %3278
  %v3280 = vmul.f32 %v3264, %v3243
  %v3281 = vmul.f32 %v3267, %v3243
  %v3282 = vmul.f32 %v3270, %v3243
  %v3283 = vmul.f32 %v3273, %v3243
  %v3284 = vmul.f32 %v3276, %v3243
  %v3285 = vmul.f32 %v3279, %v3243
  %v3286 = vadd.f32 %v3280, 1e-12
  %v3287 = vadd.f32 %v3281, 1e-12
  %v3288 = vadd.f32 %v3282, 1e-12
  %v3289 = vadd.f32 %v3283, 1e-12
  %v3290 = vadd.f32 %v3284, 1e-12
  %v3291 = vadd.f32 %v3285, 1e-12
  %v3292 = vrsqrt.pop %v3286
  %v3293 = vrsqrt.pop %v3287
  %v3294 = vrsqrt.pop %v3288
  %v3295 = vrsqrt.pop %v3289
  %v3296 = vrsqrt.pop %v3290
  %v3297 = vrsqrt.pop %v3291
  %v3298 = vmul.f32 %v3250, %v3292
  %v3299 = vmul.f32 %v3251, %v3293
  %v3300 = vmul.f32 %v3252, %v3294
  %v3301 = vmul.f32 %v3253, %v3295
  %v3302 = vmul.f32 %v3254, %v3296
  %v3303 = vmul.f32 %v3255, %v3297
  %v3305 = vlaneseq
  %v3306 = vshrl.u32 %v3305, 7
  %v3307 = vsub.s32 0, %v3306
  %v3308 = vrot.slane %v3223, %v3307
  %v3310 = vmul.f32 %v3298, %v3308
  %v3311 = vmul.f32 %v3299, %v3308
  %v3312 = vmul.f32 %v3300, %v3308
  %v3313 = vmul.f32 %v3301, %v3308
  %v3314 = vmul.f32 %v3302, %v3308
  %v3315 = vmul.f32 %v3303, %v3308
  %v3317 = vlaneseq
  %v3318 = vshrl.u32 %v3317, 7
  %v3319 = vsub.s32 0, %v3318
  %v3320 = vrot.slane %v3224, %v3319
  %v3322 = vadd.f32 %v3310, %v3320
  %v3323 = vadd.f32 %v3311, %v3320
  %v3324 = vadd.f32 %v3312, %v3320
  %v3325 = vadd.f32 %v3313, %v3320
  %v3326 = vadd.f32 %v3314, %v3320
  %v3327 = vadd.f32 %v3315, %v3320
  %v3328 = vpack.c.bf16 %v3323, %v3322
  %v3329 = vpack.c.bf16 %v3325, %v3324
  %v3330 = vpack.c.bf16 %v3327, %v3326
  %v3331 = vld [vmem:[%s8] sm:$0xf]
  %v3332 = vld [vmem:[%s8 + $0x4] sm:$0xf]
  %v3333 = vld [vmem:[%s8 + $0x8] sm:$0xf]
  %v3334 = vld [vmem:[%s8 + $0xc] sm:$0xf]
  %v3335 = vld [vmem:[%s8 + $0x10] sm:$0xf]
  %v3336 = vld [vmem:[%s8 + $0x14] sm:$0xf]
  %v3337 = vld [vmem:[%s8 + $0x18] sm:$0xf]
  %v3338 = vld [vmem:[%s8 + $0x1c] sm:$0xf]
  %v3339 = vld [vmem:[%s9] sm:$0x1]
  %v3341 = vlaneseq
  %v3342 = vshrl.u32 %v3341, 7
  %v3343 = vsub.s32 0, %v3342
  %v3344 = vrot.slane %v3339, %v3343
  %v3354 = vunpack.c.l.b16 %v3331
  %v3355 = vunpack.c.l.b16 %v3332
  %v3356 = vunpack.c.l.b16 %v3333
  %v3357 = vunpack.c.l.b16 %v3334
  %v3358 = vunpack.c.l.b16 %v3335
  %v3359 = vunpack.c.l.b16 %v3336
  %v3360 = vunpack.c.l.b16 %v3337
  %v3361 = vunpack.c.l.b16 %v3338
  %v3362 = vpack.c.b16 %v3355, %v3354
  %v3363 = vpack.c.b16 %v3357, %v3356
  %v3364 = vpack.c.b16 %v3359, %v3358
  %v3365 = vpack.c.b16 %v3361, %v3360
  %v3371 = vsel %vm137, %v3328, 0
  %v3374 = vsel %vm137, %v3329, 0
  %v3377 = vsel %vm137, %v3330, 0
  %3379 = vmatprep.subr.bf16.mxu0 0
  %3380 = vmatpush1.bf16.msra.mxu0 %v3362
  %3381 = vmatprep.subr.bf16.mxu0 0
  %3382 = vmatpush1.bf16.msra.mxu0 %v3363
  %3383 = vmatprep.subr.bf16.mxu0 0
  %3384 = vmatpush1.bf16.msra.mxu0 %v3364
  %3385 = vmatprep.subr.bf16.mxu0 0
  %3386 = vmatpush1.bf16.msra.mxu0 %v3365
  %3387 = vmatprep.subr.bf16.mxu0 0
  %3388 = vmatpush1.bf16.msra.mxu0 0
  %3389 = vmatprep.subr.bf16.mxu0 0
  %3390 = vmatpush1.bf16.msra.mxu0 0
  %3391 = vmatprep.subr.bf16.mxu0 0
  %3392 = vmatpush1.bf16.msra.mxu0 0
  %3393 = vmatprep.subr.bf16.mxu0 0
  %3394 = vmatpush1.bf16.msra.mxu0 0
  %3395 = vmatprep.subr.bf16.mxu0 0
  %3396 = vmatpush1.bf16.msra.mxu0 0
  %3397 = vmatprep.subr.bf16.mxu0 0
  %3398 = vmatpush1.bf16.msra.mxu0 0
  %3399 = vmatprep.subr.bf16.mxu0 0
  %3400 = vmatpush1.bf16.msra.mxu0 0
  %3401 = vmatprep.subr.bf16.mxu0 0
  %3402 = vmatpush1.bf16.msra.mxu0 0
  %3403 = vmatprep.subr.bf16.mxu0 0
  %3404 = vmatpush1.bf16.msra.mxu0 0
  %3405 = vmatprep.subr.bf16.mxu0 0
  %3406 = vmatpush1.bf16.msra.mxu0 0
  %3407 = vmatprep.subr.bf16.mxu0 0
  %3408 = vmatpush1.bf16.msra.mxu0 0
  %3409 = vmatprep.subr.bf16.mxu0 0
  %3410 = vmatpush1.bf16.msra.mxu0 0
  %3411 = vmatprep.mubr.bf16.mxu0 0
  %3412 = vmatmul.mubr.bf16.gmra.mrb[0].mxu0 %v3371
  %v3413 = vpop.f32.mrb[0].mxu0
  %v3414 = vadd.f32 %v3344, %v3413
  %v3415 = vpop.f32.mrb[0].mxu0
  %v3416 = vpop.f32.mrb[0].mxu0
  %v3417 = vadd.f32 %v3344, %v3416
  %v3418 = vpop.f32.mrb[0].mxu0
  %3419 = vmatprep.mubr.bf16.mxu0 0
  %3420 = vmatmul.mubr.bf16.gmra.mrb[0].mxu0 %v3374
  %v3421 = vpop.f32.mrb[0].mxu0
  %v3422 = vadd.f32 %v3344, %v3421
  %v3423 = vpop.f32.mrb[0].mxu0
  %v3424 = vpop.f32.mrb[0].mxu0
  %v3425 = vadd.f32 %v3344, %v3424
  %v3426 = vpop.f32.mrb[0].mxu0
  %3427 = vmatprep.mubr.bf16.mxu0 0
  %3428 = vmatmul.mubr.bf16.gmra.mrb[0].mxu0 %v3377
  %v3429 = vpop.f32.mrb[0].mxu0
  %v3430 = vadd.f32 %v3344, %v3429
  %v3431 = vpop.f32.mrb[0].mxu0
  %v3432 = vpop.f32.mrb[0].mxu0
  %v3433 = vadd.f32 %v3344, %v3432
  %v3434 = vpop.f32.mrb[0].mxu0
  %3435 = vdwg.mxu0
  %v3436 = vmul.f32 %v3414, %v3414
  %v3437 = vmul.f32 %v3417, %v3417
  %v3438 = vmul.f32 %v3422, %v3422
  %v3439 = vmul.f32 %v3425, %v3425
  %v3440 = vmul.f32 %v3430, %v3430
  %v3441 = vmul.f32 %v3433, %v3433
  %v3442 = vmul.f32 %v3414, %v3436
  %v3443 = vmul.f32 %v3417, %v3437
  %v3444 = vmul.f32 %v3422, %v3438
  %v3445 = vmul.f32 %v3425, %v3439
  %v3446 = vmul.f32 %v3430, %v3440
  %v3447 = vmul.f32 %v3433, %v3441
  %v3448 = vmul.f32 %v3442, 0.044715
  %v3449 = vmul.f32 %v3443, 0.044715
  %v3450 = vmul.f32 %v3444, 0.044715
  %v3451 = vmul.f32 %v3445, 0.044715
  %v3452 = vmul.f32 %v3446, 0.044715
  %v3453 = vmul.f32 %v3447, 0.044715
  %v3454 = vadd.f32 %v3414, %v3448
  %v3455 = vadd.f32 %v3417, %v3449
  %v3456 = vadd.f32 %v3422, %v3450
  %v3457 = vadd.f32 %v3425, %v3451
  %v3458 = vadd.f32 %v3430, %v3452
  %v3459 = vadd.f32 %v3433, %v3453
  %v3460 = vmul.f32 %v3454, 0.7978846
  %v3461 = vmul.f32 %v3455, 0.7978846
  %v3462 = vmul.f32 %v3456, 0.7978846
  %v3463 = vmul.f32 %v3457, 0.7978846
  %v3464 = vmul.f32 %v3458, 0.7978846
  %v3465 = vmul.f32 %v3459, 0.7978846
  %v3466 = vtanh.pop %v3460
  %v3467 = vtanh.pop %v3461
  %v3468 = vtanh.pop %v3462
  %v3469 = vtanh.pop %v3463
  %v3470 = vtanh.pop %v3464
  %v3471 = vtanh.pop %v3465
  %v3472 = vadd.f32 %v3466, 1.0
  %v3473 = vadd.f32 %v3467, 1.0
  %v3474 = vadd.f32 %v3468, 1.0
  %v3475 = vadd.f32 %v3469, 1.0
  %v3476 = vadd.f32 %v3470, 1.0
  %v3477 = vadd.f32 %v3471, 1.0
  %v3478 = vmul.f32 %v3472, 0.5
  %v3479 = vmul.f32 %v3473, 0.5
  %v3480 = vmul.f32 %v3474, 0.5
  %v3481 = vmul.f32 %v3475, 0.5
  %v3482 = vmul.f32 %v3476, 0.5
  %v3483 = vmul.f32 %v3477, 0.5
  %v3484 = vmul.f32 %v3414, %v3478
  %v3485 = vmul.f32 %v3417, %v3479
  %v3486 = vmul.f32 %v3422, %v3480
  %v3487 = vmul.f32 %v3425, %v3481
  %v3488 = vmul.f32 %v3430, %v3482
  %v3489 = vmul.f32 %v3433, %v3483
  %v3490 = vpack.c.bf16 %v3485, %v3484
  %v3491 = vpack.c.bf16 %v3487, %v3486
  %v3492 = vpack.c.bf16 %v3489, %v3488
  %v3493 = vld [vmem:[%s10] sm:$0xf]
  %v3494 = vld [vmem:[%s10 + $0x4] sm:$0xf]
  %v3495 = vld [vmem:[%s10 + $0x8] sm:$0xf]
  %v3496 = vld [vmem:[%s10 + $0xc] sm:$0xf]
  %v3497 = vld [vmem:[%s10 + $0x10] sm:$0xf]
  %v3498 = vld [vmem:[%s10 + $0x14] sm:$0xf]
  %v3499 = vld [vmem:[%s10 + $0x18] sm:$0xf]
  %v3500 = vld [vmem:[%s10 + $0x1c] sm:$0xf]
  %v3501 = vld [vmem:[%s10 + $0x20] sm:$0xf]
  %v3502 = vld [vmem:[%s10 + $0x24] sm:$0xf]
  %v3503 = vld [vmem:[%s10 + $0x28] sm:$0xf]
  %v3504 = vld [vmem:[%s10 + $0x2c] sm:$0xf]
  %v3505 = vld [vmem:[%s10 + $0x30] sm:$0xf]
  %v3506 = vld [vmem:[%s10 + $0x34] sm:$0xf]
  %v3507 = vld [vmem:[%s10 + $0x38] sm:$0xf]
  %v3508 = vld [vmem:[%s10 + $0x3c] sm:$0xf]
  %v3509 = vld [vmem:[%s11] sm:$0x1]
  %v3511 = vlaneseq
  %v3512 = vshrl.u32 %v3511, 7
  %v3513 = vsub.s32 0, %v3512
  %v3514 = vrot.slane %v3509, %v3513
  %v3532 = vunpack.c.l.b16 %v3493
  %v3533 = vunpack.c.l.b16 %v3494
  %v3534 = vunpack.c.l.b16 %v3495
  %v3535 = vunpack.c.l.b16 %v3496
  %v3536 = vunpack.c.l.b16 %v3497
  %v3537 = vunpack.c.l.b16 %v3498
  %v3538 = vunpack.c.l.b16 %v3499
  %v3539 = vunpack.c.l.b16 %v3500
  %v3540 = vunpack.c.l.b16 %v3501
  %v3541 = vunpack.c.l.b16 %v3502
  %v3542 = vunpack.c.l.b16 %v3503
  %v3543 = vunpack.c.l.b16 %v3504
  %v3544 = vunpack.c.l.b16 %v3505
  %v3545 = vunpack.c.l.b16 %v3506
  %v3546 = vunpack.c.l.b16 %v3507
  %v3547 = vunpack.c.l.b16 %v3508
  %v3548 = vpack.c.b16 %v3533, %v3532
  %v3549 = vpack.c.b16 %v3535, %v3534
  %v3550 = vpack.c.b16 %v3537, %v3536
  %v3551 = vpack.c.b16 %v3539, %v3538
  %v3552 = vpack.c.b16 %v3541, %v3540
  %v3553 = vpack.c.b16 %v3543, %v3542
  %v3554 = vpack.c.b16 %v3545, %v3544
  %v3555 = vpack.c.b16 %v3547, %v3546
  %3564 = vmatprep.subr.bf16.mxu0 0
  %3565 = vmatpush1.bf16.msra.mxu0 %v3548
  %3566 = vmatprep.subr.bf16.mxu0 0
  %3567 = vmatpush1.bf16.msra.mxu0 %v3549
  %3568 = vmatprep.subr.bf16.mxu0 0
  %3569 = vmatpush1.bf16.msra.mxu0 %v3550
  %3570 = vmatprep.subr.bf16.mxu0 0
  %3571 = vmatpush1.bf16.msra.mxu0 %v3551
  %3572 = vmatprep.subr.bf16.mxu0 0
  %3573 = vmatpush1.bf16.msra.mxu0 %v3552
  %3574 = vmatprep.subr.bf16.mxu0 0
  %3575 = vmatpush1.bf16.msra.mxu0 %v3553
  %3576 = vmatprep.subr.bf16.mxu0 0
  %3577 = vmatpush1.bf16.msra.mxu0 %v3554
  %3578 = vmatprep.subr.bf16.mxu0 0
  %3579 = vmatpush1.bf16.msra.mxu0 %v3555
  %3580 = vmatprep.subr.bf16.mxu0 0
  %3581 = vmatpush1.bf16.msra.mxu0 0
  %3582 = vmatprep.subr.bf16.mxu0 0
  %3583 = vmatpush1.bf16.msra.mxu0 0
  %3584 = vmatprep.subr.bf16.mxu0 0
  %3585 = vmatpush1.bf16.msra.mxu0 0
  %3586 = vmatprep.subr.bf16.mxu0 0
  %3587 = vmatpush1.bf16.msra.mxu0 0
  %3588 = vmatprep.subr.bf16.mxu0 0
  %3589 = vmatpush1.bf16.msra.mxu0 0
  %3590 = vmatprep.subr.bf16.mxu0 0
  %3591 = vmatpush1.bf16.msra.mxu0 0
  %3592 = vmatprep.subr.bf16.mxu0 0
  %3593 = vmatpush1.bf16.msra.mxu0 0
  %3594 = vmatprep.subr.bf16.mxu0 0
  %3595 = vmatpush1.bf16.msra.mxu0 0
  %3596 = vmatprep.mubr.bf16.mxu0 0
  %3597 = vmatmul.mubr.bf16.gmra.mrb[0].mxu0 %v3490
  %v3598 = vpop.f32.mrb[0].mxu0
  %v3599 = vadd.f32 %v3514, %v3598
  %v3600 = vpop.f32.mrb[0].mxu0
  %v3601 = vpop.f32.mrb[0].mxu0
  %v3602 = vadd.f32 %v3514, %v3601
  %v3603 = vpop.f32.mrb[0].mxu0
  %3604 = vmatprep.mubr.bf16.mxu0 0
  %3605 = vmatmul.mubr.bf16.gmra.mrb[0].mxu0 %v3491
  %v3606 = vpop.f32.mrb[0].mxu0
  %v3607 = vadd.f32 %v3514, %v3606
  %v3608 = vpop.f32.mrb[0].mxu0
  %v3609 = vpop.f32.mrb[0].mxu0
  %v3610 = vadd.f32 %v3514, %v3609
  %v3611 = vpop.f32.mrb[0].mxu0
  %3612 = vmatprep.mubr.bf16.mxu0 0
  %3613 = vmatmul.mubr.bf16.gmra.mrb[0].mxu0 %v3492
  %v3614 = vpop.f32.mrb[0].mxu0
  %v3615 = vadd.f32 %v3514, %v3614
  %v3616 = vpop.f32.mrb[0].mxu0
  %v3617 = vpop.f32.mrb[0].mxu0
  %v3618 = vadd.f32 %v3514, %v3617
  %v3619 = vpop.f32.mrb[0].mxu0
  %3620 = vdwg.mxu0
  %v3621 = vadd.f32 %v3599, %v3322
  %v3622 = vadd.f32 %v3602, %v3323
  %v3623 = vadd.f32 %v3607, %v3324
  %v3624 = vadd.f32 %v3610, %v3325
  %v3625 = vadd.f32 %v3615, %v3326
  %v3626 = vadd.f32 %v3618, %v3327
  %v3627 = vld [vmem:[%s12] sm:$0x1]
  %v3628 = vld [vmem:[%s13] sm:$0x1]
  %v3629 = vsel %vm137, %v3621, 0.0
  %3630 = vadd.xlane.f32.xlu0 %v3629
  %v3631 = vpop.xlane.xlu0 %3630
  %v3632 = vsel %vm137, %v3622, 0.0
  %3633 = vadd.xlane.f32.xlu0 %v3632
  %v3634 = vpop.xlane.xlu0 %3633
  %v3635 = vsel %vm137, %v3623, 0.0
  %3636 = vadd.xlane.f32.xlu0 %v3635
  %v3637 = vpop.xlane.xlu0 %3636
  %v3638 = vsel %vm137, %v3624, 0.0
  %3639 = vadd.xlane.f32.xlu0 %v3638
  %v3640 = vpop.xlane.xlu0 %3639
  %v3641 = vsel %vm137, %v3625, 0.0
  %3642 = vadd.xlane.f32.xlu0 %v3641
  %v3643 = vpop.xlane.xlu0 %3642
  %v3644 = vsel %vm137, %v3626, 0.0
  %3645 = vadd.xlane.f32.xlu0 %v3644
  %v3646 = vpop.xlane.xlu0 %3645
  %v3647 = vmul.f32 %v3631, %v3243
  %v3648 = vmul.f32 %v3634, %v3243
  %v3649 = vmul.f32 %v3637, %v3243
  %v3650 = vmul.f32 %v3640, %v3243
  %v3651 = vmul.f32 %v3643, %v3243
  %v3652 = vmul.f32 %v3646, %v3243
  %v3653 = vsub.f32 %v3621, %v3647
  %v3654 = vsub.f32 %v3622, %v3648
  %v3655 = vsub.f32 %v3623, %v3649
  %v3656 = vsub.f32 %v3624, %v3650
  %v3657 = vsub.f32 %v3625, %v3651
  %v3658 = vsub.f32 %v3626, %v3652
  %v3659 = vmul.f32 %v3653, %v3653
  %v3660 = vmul.f32 %v3654, %v3654
  %v3661 = vmul.f32 %v3655, %v3655
  %v3662 = vmul.f32 %v3656, %v3656
  %v3663 = vmul.f32 %v3657, %v3657
  %v3664 = vmul.f32 %v3658, %v3658
  %v3665 = vsel %vm137, %v3659, 0.0
  %3666 = vadd.xlane.f32.xlu0 %v3665
  %v3667 = vpop.xlane.xlu0 %3666
  %v3668 = vsel %vm137, %v3660, 0.0
  %3669 = vadd.xlane.f32.xlu0 %v3668
  %v3670 = vpop.xlane.xlu0 %3669
  %v3671 = vsel %vm137, %v3661, 0.0
  %3672 = vadd.xlane.f32.xlu0 %v3671
  %v3673 = vpop.xlane.xlu0 %3672
  %v3674 = vsel %vm137, %v3662, 0.0
  %3675 = vadd.xlane.f32.xlu0 %v3674
  %v3676 = vpop.xlane.xlu0 %3675
  %v3677 = vsel %vm137, %v3663, 0.0
  %3678 = vadd.xlane.f32.xlu0 %v3677
  %v3679 = vpop.xlane.xlu0 %3678
  %v3680 = vsel %vm137, %v3664, 0.0
  %3681 = vadd.xlane.f32.xlu0 %v3680
  %v3682 = vpop.xlane.xlu0 %3681
  %v3683 = vmul.f32 %v3667, %v3243
  %v3684 = vmul.f32 %v3670, %v3243
  %v3685 = vmul.f32 %v3673, %v3243
  %v3686 = vmul.f32 %v3676, %v3243
  %v3687 = vmul.f32 %v3679, %v3243
  %v3688 = vmul.f32 %v3682, %v3243
  %v3689 = vadd.f32 %v3683, 1e-12
  %v3690 = vadd.f32 %v3684, 1e-12
  %v3691 = vadd.f32 %v3685, 1e-12
  %v3692 = vadd.f32 %v3686, 1e-12
  %v3693 = vadd.f32 %v3687, 1e-12
  %v3694 = vadd.f32 %v3688, 1e-12
  %v3695 = vrsqrt.pop %v3689
  %v3696 = vrsqrt.pop %v3690
  %v3697 = vrsqrt.pop %v3691
  %v3698 = vrsqrt.pop %v3692
  %v3699 = vrsqrt.pop %v3693
  %v3700 = vrsqrt.pop %v3694
  %v3701 = vmul.f32 %v3653, %v3695
  %v3702 = vmul.f32 %v3654, %v3696
  %v3703 = vmul.f32 %v3655, %v3697
  %v3704 = vmul.f32 %v3656, %v3698
  %v3705 = vmul.f32 %v3657, %v3699
  %v3706 = vmul.f32 %v3658, %v3700
  %v3708 = vlaneseq
  %v3709 = vshrl.u32 %v3708, 7
  %v3710 = vsub.s32 0, %v3709
  %v3711 = vrot.slane %v3627, %v3710
  %v3713 = vmul.f32 %v3701, %v3711
  %v3714 = vmul.f32 %v3702, %v3711
  %v3715 = vmul.f32 %v3703, %v3711
  %v3716 = vmul.f32 %v3704, %v3711
  %v3717 = vmul.f32 %v3705, %v3711
  %v3718 = vmul.f32 %v3706, %v3711
  %v3720 = vlaneseq
  %v3721 = vshrl.u32 %v3720, 7
  %v3722 = vsub.s32 0, %v3721
  %v3723 = vrot.slane %v3628, %v3722
  %v3725 = vadd.f32 %v3713, %v3723
  %v3726 = vadd.f32 %v3714, %v3723
  %v3727 = vadd.f32 %v3715, %v3723
  %v3728 = vadd.f32 %v3716, %v3723
  %v3729 = vadd.f32 %v3717, %v3723
  %v3730 = vadd.f32 %v3718, %v3723
  %v3731 = vpack.c.bf16 %v3725, %v3725
  %v3732 = vpack.c.bf16 %v3726, %v3726
  %v3733 = vpack.c.bf16 %v3727, %v3727
  %v3734 = vpack.c.bf16 %v3728, %v3728
  %v3735 = vpack.c.bf16 %v3729, %v3729
  %v3736 = vpack.c.bf16 %v3730, %v3730
  %vm3737 = vcmask 519168
  %3738 = vst.msk [vmem:[%s14] sm:$0xf] %vm3737, %v3731
  %3739 = vst.msk [vmem:[%s14 + $0x4] sm:$0xf] %vm3737, %v3732
  %3740 = vst.msk [vmem:[%s14 + $0x8] sm:$0xf] %vm3737, %v3733
  %3741 = vst.msk [vmem:[%s14 + $0xc] sm:$0xf] %vm3737, %v3734
  %3742 = vst.msk [vmem:[%s14 + $0x10] sm:$0xf] %vm3737, %v3735
  %3743 = vst.msk [vmem:[%s14 + $0x14] sm:$0xf] %vm3737, %v3736
  %v3751 = vunpack.c.l.s4 1966171168
  %v3752 = vunpack.c.0.s8 %v3751
  %v3753 = vlaneseq
  %v3754 = vshrl.u32 %v3753, 7
  %v3755 = vsub.s32 %v3752, %v3754
  %v3756 = vrot.slane %v3731, %v3755
  %v3758 = vunpack.c.l.s4 1966171168
  %v3759 = vunpack.c.0.s8 %v3758
  %v3760 = vlaneseq
  %v3761 = vshrl.u32 %v3760, 7
  %v3762 = vsub.s32 %v3759, %v3761
  %v3763 = vrot.slane %v3756, %v3762
  %v3765 = vunpack.c.l.s4 1966171168
  %v3766 = vunpack.c.0.s8 %v3765
  %v3767 = vlaneseq
  %v3768 = vshrl.u32 %v3767, 7
  %v3769 = vsub.s32 %v3766, %v3768
  %v3770 = vrot.slane %v3732, %v3769
  %v3772 = vunpack.c.l.s4 1966171168
  %v3773 = vunpack.c.0.s8 %v3772
  %v3774 = vlaneseq
  %v3775 = vshrl.u32 %v3774, 7
  %v3776 = vsub.s32 %v3773, %v3775
  %v3777 = vrot.slane %v3770, %v3776
  %v3779 = vunpack.c.l.s4 1966171168
  %v3780 = vunpack.c.0.s8 %v3779
  %v3781 = vlaneseq
  %v3782 = vshrl.u32 %v3781, 7
  %v3783 = vsub.s32 %v3780, %v3782
  %v3784 = vrot.slane %v3733, %v3783
  %v3786 = vunpack.c.l.s4 1966171168
  %v3787 = vunpack.c.0.s8 %v3786
  %v3788 = vlaneseq
  %v3789 = vshrl.u32 %v3788, 7
  %v3790 = vsub.s32 %v3787, %v3789
  %v3791 = vrot.slane %v3784, %v3790
  %v3793 = vunpack.c.l.s4 1966171168
  %v3794 = vunpack.c.0.s8 %v3793
  %v3795 = vlaneseq
  %v3796 = vshrl.u32 %v3795, 7
  %v3797 = vsub.s32 %v3794, %v3796
  %v3798 = vrot.slane %v3734, %v3797
  %v3800 = vunpack.c.l.s4 1966171168
  %v3801 = vunpack.c.0.s8 %v3800
  %v3802 = vlaneseq
  %v3803 = vshrl.u32 %v3802, 7
  %v3804 = vsub.s32 %v3801, %v3803
  %v3805 = vrot.slane %v3798, %v3804
  %v3807 = vunpack.c.l.s4 1966171168
  %v3808 = vunpack.c.0.s8 %v3807
  %v3809 = vlaneseq
  %v3810 = vshrl.u32 %v3809, 7
  %v3811 = vsub.s32 %v3808, %v3810
  %v3812 = vrot.slane %v3735, %v3811
  %v3814 = vunpack.c.l.s4 1966171168
  %v3815 = vunpack.c.0.s8 %v3814
  %v3816 = vlaneseq
  %v3817 = vshrl.u32 %v3816, 7
  %v3818 = vsub.s32 %v3815, %v3817
  %v3819 = vrot.slane %v3812, %v3818
  %v3821 = vunpack.c.l.s4 1966171168
  %v3822 = vunpack.c.0.s8 %v3821
  %v3823 = vlaneseq
  %v3824 = vshrl.u32 %v3823, 7
  %v3825 = vsub.s32 %v3822, %v3824
  %v3826 = vrot.slane %v3736, %v3825
  %v3828 = vunpack.c.l.s4 1966171168
  %v3829 = vunpack.c.0.s8 %v3828
  %v3830 = vlaneseq
  %v3831 = vshrl.u32 %v3830, 7
  %v3832 = vsub.s32 %v3829, %v3831
  %v3833 = vrot.slane %v3826, %v3832
  %v3835 = vshrl.u32 %v3763, 16
  %v3837 = vrot.slane %v3835, 7
  %v3838 = vrot.slane %v3837, 1
  %v3840 = vshrl.u32 %v3777, 16
  %v3842 = vrot.slane %v3840, 7
  %v3843 = vrot.slane %v3842, 1
  %v3845 = vshrl.u32 %v3791, 16
  %v3847 = vrot.slane %v3845, 7
  %v3848 = vrot.slane %v3847, 1
  %v3850 = vshrl.u32 %v3805, 16
  %v3852 = vrot.slane %v3850, 7
  %v3853 = vrot.slane %v3852, 1
  %v3855 = vshrl.u32 %v3819, 16
  %v3857 = vrot.slane %v3855, 7
  %v3858 = vrot.slane %v3857, 1
  %v3860 = vshrl.u32 %v3833, 16
  %v3862 = vrot.slane %v3860, 7
  %v3863 = vrot.slane %v3862, 1
  %vm3870 = vcmask 516096
  %vm3871 = vsmask.f32 256
  %vm3872 = vmand %vm3870, %vm3871
  %v3873 = vld [vmem:[%s15] sm:$0x1]
  %v3874 = vsel %vm3872, %v3838, %v3873
  %3875 = vst [vmem:[%s15] sm:$0x1] %v3874
  %v3876 = vld [vmem:[%s15 + $0x1] sm:$0x1]
  %v3877 = vsel %vm3872, %v3843, %v3876
  %3878 = vst [vmem:[%s15 + $0x1] sm:$0x1] %v3877
  %v3879 = vld [vmem:[%s15 + $0x2] sm:$0x1]
  %v3880 = vsel %vm3872, %v3848, %v3879
  %3881 = vst [vmem:[%s15 + $0x2] sm:$0x1] %v3880
  %v3882 = vld [vmem:[%s15 + $0x3] sm:$0x1]
  %v3883 = vsel %vm3872, %v3853, %v3882
  %3884 = vst [vmem:[%s15 + $0x3] sm:$0x1] %v3883
  %v3885 = vld [vmem:[%s15 + $0x4] sm:$0x1]
  %v3886 = vsel %vm3872, %v3858, %v3885
  %3887 = vst [vmem:[%s15 + $0x4] sm:$0x1] %v3886
  %v3888 = vld [vmem:[%s15 + $0x5] sm:$0x1]
  %v3889 = vsel %vm3872, %v3863, %v3888
  %3890 = vst [vmem:[%s15 + $0x5] sm:$0x1] %v3889
  // Predicated region
  $region58: #{_lambda_.4} parent=0 // pred_check
    _
  $region59: #{_lambda_.4} parent=0 // pred_check_branch
    %3892 = sbr.rel (0) target = $region61
  $region60: #{_lambda_.4} parent=0 // pred_region
    _
  $region61: #{_lambda_.4} parent=0 // pred_fallthru
    _
  // Predicated region
  $region62: #{_lambda_.4} parent=0 // pred_check
    _
  $region63: #{_lambda_.4} parent=0 // pred_check_branch
    %3894 = sbr.rel (0) target = $region65
  $region64: #{_lambda_.4} parent=0 // pred_region
    _
  $region65: #{_lambda_.4} parent=0 // pred_fallthru
    _
  // Predicated region
  $region66: #{_lambda_.4} parent=0 // pred_check
    _
  $region67: #{_lambda_.4} parent=0 // pred_check_branch
    %3896 = sbr.rel (0) target = $region69
  $region68: #{_lambda_.4} parent=0 // pred_region
    _
  $region69: #{_lambda_.4} parent=0 // pred_fallthru
    _
  // Predicated region
  $region70: #{_lambda_.4} parent=0 // pred_check
    _
  $region71: #{_lambda_.4} parent=0 // pred_check_branch
    %3898 = sbr.rel (0) target = $region73
  $region72: #{_lambda_.4} parent=0 // pred_region
    _
  $region73: #{_lambda_.4} parent=0 // pred_fallthru
    _

// kernel: _lambda_.6
$region0: #{_lambda_.6}
  #allocation0 [shape = 'u32[]', space=smem, size = 0x4, offset = 0x4, fixed_abs, tag = 'smem constant byte address 0x4 - core index']
  #allocation1 [shape = 'u32[144,128]{1,0:T(1,128)}', space=vmem, size = 0x12000, scoped, tag = 'internal scratch']
  #allocation2 [shape = 'bf16[6,8,64]{2,1,0:T(8,128)(2,1)}', space=vmem, size = 0x3000, scoped, tag = 'scratch operand']
  %s0 = inlined_call_operand.vmem [shape: bf16[6,8,64], index: 0, kind: input, shape index: {}]
  %s1 = inlined_call_operand.vmem [shape: f32[6,1,8], index: 1, kind: input, shape index: {}]
  %s2 = inlined_call_operand.vmem [shape: bf16[6,1,64], index: 2, kind: input, shape index: {}]
  %s3 = inlined_call_operand.vmem [shape: bf16[64,192], index: 3, kind: input, shape index: {}]
  %s4 = inlined_call_operand.vmem [shape: f32[1,192], index: 4, kind: input, shape index: {}]
  %s5 = inlined_call_operand.vmem [shape: bf16[64,64], index: 5, kind: input, shape index: {}]
  %s6 = inlined_call_operand.vmem [shape: f32[1,64], index: 6, kind: input, shape index: {}]
  %s7 = inlined_call_operand.vmem [shape: f32[1,64], index: 7, kind: input, shape index: {}]
  %s8 = inlined_call_operand.vmem [shape: f32[1,64], index: 8, kind: input, shape index: {}]
  %s9 = inlined_call_operand.vmem [shape: bf16[64,128], index: 9, kind: input, shape index: {}]
  %s10 = inlined_call_operand.vmem [shape: f32[1,128], index: 10, kind: input, shape index: {}]
  %s11 = inlined_call_operand.vmem [shape: bf16[128,64], index: 11, kind: input, shape index: {}]
  %s12 = inlined_call_operand.vmem [shape: f32[1,64], index: 12, kind: input, shape index: {}]
  %s13 = inlined_call_operand.vmem [shape: f32[1,64], index: 13, kind: input, shape index: {}]
  %s14 = inlined_call_operand.vmem [shape: f32[1,64], index: 14, kind: input, shape index: {}]
  %s15 = inlined_call_operand.vmem [shape: bf16[6,8,64], index: 15, kind: output, shape index: {0}]
  %s16 = inlined_call_operand.vmem [shape: bf16[6,1,64], index: 16, kind: output, shape index: {1}]
  %17 = xla_tuple %s15, %s16
  %s18 = sld [smem:[#allocation0]]
  $region78: #{_lambda_.6} parent=0
    _
  %s20 = ssub.s32 1, %s18
  %s21 = scalar_select 0, %s20, %s18
  // Predicated region
  $region2: #{_lambda_.6} parent=0 // pred_check
    _
  $region3: #{_lambda_.6} parent=0 // pred_check_branch
    %23 = sbr.rel (0) target = $region5
  $region4: #{_lambda_.6} parent=0 // pred_region
    _
  $region5: #{_lambda_.6} parent=0 // pred_fallthru
    _
  // Predicated region
  $region6: #{_lambda_.6} parent=0 // pred_check
    _
  $region7: #{_lambda_.6} parent=0 // pred_check_branch
    %25 = sbr.rel (0) target = $region9
  $region8: #{_lambda_.6} parent=0 // pred_region
    _
  $region9: #{_lambda_.6} parent=0 // pred_fallthru
    _
  // Predicated region
  $region10: #{_lambda_.6} parent=0 // pred_check
    _
  $region11: #{_lambda_.6} parent=0 // pred_check_branch
    %27 = sbr.rel (0) target = $region13
  $region12: #{_lambda_.6} parent=0 // pred_region
    _
  $region13: #{_lambda_.6} parent=0 // pred_fallthru
    _
  // Predicated region
  $region14: #{_lambda_.6} parent=0 // pred_check
    _
  $region15: #{_lambda_.6} parent=0 // pred_check_branch
    %29 = sbr.rel (0) target = $region17
  $region16: #{_lambda_.6} parent=0 // pred_region
    _
  $region17: #{_lambda_.6} parent=0 // pred_fallthru
    _
  // Predicated region
  $region18: #{_lambda_.6} parent=0 // pred_check
    _
  $region19: #{_lambda_.6} parent=0 // pred_check_branch
    %31 = sbr.rel (0) target = $region21
  $region20: #{_lambda_.6} parent=0 // pred_region
    _
  $region21: #{_lambda_.6} parent=0 // pred_fallthru
    _
  // Predicated region
  $region22: #{_lambda_.6} parent=0 // pred_check
    _
  $region23: #{_lambda_.6} parent=0 // pred_check_branch
    %33 = sbr.rel (0) target = $region25
  $region24: #{_lambda_.6} parent=0 // pred_region
    _
  $region25: #{_lambda_.6} parent=0 // pred_fallthru
    _
  // Predicated region
  $region26: #{_lambda_.6} parent=0 // pred_check
    _
  $region27: #{_lambda_.6} parent=0 // pred_check_branch
    %35 = sbr.rel (0) target = $region29
  $region28: #{_lambda_.6} parent=0 // pred_region
    _
  $region29: #{_lambda_.6} parent=0 // pred_fallthru
    _
  // Predicated region
  $region30: #{_lambda_.6} parent=0 // pred_check
    _
  $region31: #{_lambda_.6} parent=0 // pred_check_branch
    %37 = sbr.rel (0) target = $region33
  $region32: #{_lambda_.6} parent=0 // pred_region
    _
  $region33: #{_lambda_.6} parent=0 // pred_fallthru
    _
  // Predicated region
  $region34: #{_lambda_.6} parent=0 // pred_check
    _
  $region35: #{_lambda_.6} parent=0 // pred_check_branch
    %39 = sbr.rel (0) target = $region37
  $region36: #{_lambda_.6} parent=0 // pred_region
    _
  $region37: #{_lambda_.6} parent=0 // pred_fallthru
    _
  // Predicated region
  $region38: #{_lambda_.6} parent=0 // pred_check
    _
  $region39: #{_lambda_.6} parent=0 // pred_check_branch
    %41 = sbr.rel (0) target = $region41
  $region40: #{_lambda_.6} parent=0 // pred_region
    _
  $region41: #{_lambda_.6} parent=0 // pred_fallthru
    _
  // Predicated region
  $region42: #{_lambda_.6} parent=0 // pred_check
    _
  $region43: #{_lambda_.6} parent=0 // pred_check_branch
    %43 = sbr.rel (0) target = $region45
  $region44: #{_lambda_.6} parent=0 // pred_region
    _
  $region45: #{_lambda_.6} parent=0 // pred_fallthru
    _
  // Predicated region
  $region46: #{_lambda_.6} parent=0 // pred_check
    _
  $region47: #{_lambda_.6} parent=0 // pred_check_branch
    %45 = sbr.rel (0) target = $region49
  $region48: #{_lambda_.6} parent=0 // pred_region
    _
  $region49: #{_lambda_.6} parent=0 // pred_fallthru
    _
  // Predicated region
  $region50: #{_lambda_.6} parent=0 // pred_check
    _
  $region51: #{_lambda_.6} parent=0 // pred_check_branch
    %47 = sbr.rel (0) target = $region53
  $region52: #{_lambda_.6} parent=0 // pred_region
    _
  $region53: #{_lambda_.6} parent=0 // pred_fallthru
    _
  // Predicated region
  $region54: #{_lambda_.6} parent=0 // pred_check
    _
  $region55: #{_lambda_.6} parent=0 // pred_check_branch
    %49 = sbr.rel (0) target = $region57
  $region56: #{_lambda_.6} parent=0 // pred_region
    _
  $region57: #{_lambda_.6} parent=0 // pred_fallthru
    _
  // Predicated region
  $region58: #{_lambda_.6} parent=0 // pred_check
    _
  $region59: #{_lambda_.6} parent=0 // pred_check_branch
    %51 = sbr.rel (0) target = $region61
  $region60: #{_lambda_.6} parent=0 // pred_region
    _
  $region61: #{_lambda_.6} parent=0 // pred_fallthru
    _
  %v53 = vld [vmem:[%s0] sm:$0xf]
  %v54 = vld [vmem:[%s0 + $0x4] sm:$0xf]
  %v55 = vld [vmem:[%s0 + $0x8] sm:$0xf]
  %v56 = vld [vmem:[%s0 + $0xc] sm:$0xf]
  %v57 = vld [vmem:[%s0 + $0x10] sm:$0xf]
  %v58 = vld [vmem:[%s0 + $0x14] sm:$0xf]
  %v59 = vlaneseq
  %v60 = vshrl.u32 %v59, 7
  %vm61 = vcmp.eq.s32.totalorder %v60, 0
  %v62 = vld [vmem:[%s2] sm:$0x1]
  %v63 = vld [vmem:[%s2 + $0x1] sm:$0x1]
  %v64 = vld [vmem:[%s2 + $0x2] sm:$0x1]
  %v65 = vld [vmem:[%s2 + $0x3] sm:$0x1]
  %v66 = vld [vmem:[%s2 + $0x4] sm:$0x1]
  %v67 = vld [vmem:[%s2 + $0x5] sm:$0x1]
  %v68 = vsel %vm61, 1, 0
  %vm69 = vcmp.eq.s32.totalorder %v68, 1
  %v71 = vpack.i.b16 %v62, %v62
  %v73 = vlaneseq
  %v74 = vshrl.u32 %v73, 7
  %v75 = vsub.s32 0, %v74
  %v76 = vrot.slane %v71, %v75
  %v78 = vpack.i.b16 %v63, %v63
  %v80 = vlaneseq
  %v81 = vshrl.u32 %v80, 7
  %v82 = vsub.s32 0, %v81
  %v83 = vrot.slane %v78, %v82
  %v85 = vpack.i.b16 %v64, %v64
  %v87 = vlaneseq
  %v88 = vshrl.u32 %v87, 7
  %v89 = vsub.s32 0, %v88
  %v90 = vrot.slane %v85, %v89
  %v92 = vpack.i.b16 %v65, %v65
  %v94 = vlaneseq
  %v95 = vshrl.u32 %v94, 7
  %v96 = vsub.s32 0, %v95
  %v97 = vrot.slane %v92, %v96
  %v99 = vpack.i.b16 %v66, %v66
  %v101 = vlaneseq
  %v102 = vshrl.u32 %v101, 7
  %v103 = vsub.s32 0, %v102
  %v104 = vrot.slane %v99, %v103
  %v106 = vpack.i.b16 %v67, %v67
  %v108 = vlaneseq
  %v109 = vshrl.u32 %v108, 7
  %v110 = vsub.s32 0, %v109
  %v111 = vrot.slane %v106, %v110
  %vm112 = vmpackc.low %vm69, %vm69
  %v113 = vsel %vm112, %v76, %v53
  %v114 = vsel %vm112, %v83, %v54
  %v115 = vsel %vm112, %v90, %v55
  %v116 = vsel %vm112, %v97, %v56
  %v117 = vsel %vm112, %v104, %v57
  %v118 = vsel %vm112, %v111, %v58
  %v119 = vunpack.c.l.bf16 %v113
  %v120 = vunpack.c.l.bf16 %v114
  %v121 = vunpack.c.l.bf16 %v115
  %v122 = vunpack.c.l.bf16 %v116
  %v123 = vunpack.c.l.bf16 %v117
  %v124 = vunpack.c.l.bf16 %v118
  %v125 = vld [vmem:[%s3] sm:$0xff]
  %v126 = vld [vmem:[%s3 + $0x8] sm:$0xff]
  %v127 = vld [vmem:[%s3 + $0x10] sm:$0xff]
  %v128 = vld [vmem:[%s3 + $0x18] sm:$0xff]
  %v129 = vld [vmem:[%s3 + $0x20] sm:$0xff]
  %v130 = vld [vmem:[%s3 + $0x28] sm:$0xff]
  %v131 = vld [vmem:[%s3 + $0x30] sm:$0xff]
  %v132 = vld [vmem:[%s3 + $0x38] sm:$0xff]
  %v133 = vld [vmem:[%s4] sm:$0x3]
  %v135 = vlaneseq
  %v136 = vshrl.u32 %v135, 7
  %v137 = vsub.s32 0, %v136
  %v138 = vrot.slane %v133, %v137
  %v139 = vlaneseq
  %v140 = vshrl.u32 %v139, 7
  %v141 = vsub.s32 1, %v140
  %v142 = vrot.slane %v133, %v141
  %v151 = vunpack.c.l.b16 %v113
  %v152 = vunpack.c.l.b16 %v114
  %v153 = vunpack.c.l.b16 %v115
  %v154 = vunpack.c.l.b16 %v116
  %v155 = vunpack.c.l.b16 %v117
  %v156 = vunpack.c.l.b16 %v118
  %v157 = vpack.c.b16 %v152, %v151
  %v158 = vpack.c.b16 %v154, %v153
  %v159 = vpack.c.b16 %v156, %v155
  %v168 = vunpack.c.l.b16 %v125
  %v169 = vunpack.c.h.b16 %v125
  %v170 = vunpack.c.l.b16 %v126
  %v171 = vunpack.c.h.b16 %v126
  %v172 = vunpack.c.l.b16 %v127
  %v173 = vunpack.c.h.b16 %v127
  %v174 = vunpack.c.l.b16 %v128
  %v175 = vunpack.c.h.b16 %v128
  %v176 = vunpack.c.l.b16 %v129
  %v177 = vunpack.c.h.b16 %v129
  %v178 = vunpack.c.l.b16 %v130
  %v179 = vunpack.c.h.b16 %v130
  %v180 = vunpack.c.l.b16 %v131
  %v181 = vunpack.c.h.b16 %v131
  %v182 = vunpack.c.l.b16 %v132
  %v183 = vunpack.c.h.b16 %v132
  %v184 = vpack.c.b16 %v170, %v168
  %v185 = vpack.c.b16 %v171, %v169
  %v186 = vpack.c.b16 %v174, %v172
  %v187 = vpack.c.b16 %v175, %v173
  %v188 = vpack.c.b16 %v178, %v176
  %v189 = vpack.c.b16 %v179, %v177
  %v190 = vpack.c.b16 %v182, %v180
  %v191 = vpack.c.b16 %v183, %v181
  %vm200 = vcmask 523264
  %v202 = vsel %vm200, %v157, 0
  %v205 = vsel %vm200, %v158, 0
  %v208 = vsel %vm200, %v159, 0
  %210 = vmatprep.subr.bf16.mxu0 %v185
  %211 = vmatpush1.bf16.msra.mxu0 %v184
  %212 = vmatprep.subr.bf16.mxu0 %v187
  %213 = vmatpush1.bf16.msra.mxu0 %v186
  %214 = vmatprep.subr.bf16.mxu0 %v189
  %215 = vmatpush1.bf16.msra.mxu0 %v188
  %216 = vmatprep.subr.bf16.mxu0 %v191
  %217 = vmatpush1.bf16.msra.mxu0 %v190
  %218 = vmatprep.subr.bf16.mxu0 0
  %219 = vmatpush1.bf16.msra.mxu0 0
  %220 = vmatprep.subr.bf16.mxu0 0
  %221 = vmatpush1.bf16.msra.mxu0 0
  %222 = vmatprep.subr.bf16.mxu0 0
  %223 = vmatpush1.bf16.msra.mxu0 0
  %224 = vmatprep.subr.bf16.mxu0 0
  %225 = vmatpush1.bf16.msra.mxu0 0
  %226 = vmatprep.subr.bf16.mxu0 0
  %227 = vmatpush1.bf16.msra.mxu0 0
  %228 = vmatprep.subr.bf16.mxu0 0
  %229 = vmatpush1.bf16.msra.mxu0 0
  %230 = vmatprep.subr.bf16.mxu0 0
  %231 = vmatpush1.bf16.msra.mxu0 0
  %232 = vmatprep.subr.bf16.mxu0 0
  %233 = vmatpush1.bf16.msra.mxu0 0
  %234 = vmatprep.subr.bf16.mxu0 0
  %235 = vmatpush1.bf16.msra.mxu0 0
  %236 = vmatprep.subr.bf16.mxu0 0
  %237 = vmatpush1.bf16.msra.mxu0 0
  %238 = vmatprep.subr.bf16.mxu0 0
  %239 = vmatpush1.bf16.msra.mxu0 0
  %240 = vmatprep.subr.bf16.mxu0 0
  %241 = vmatpush1.bf16.msra.mxu0 0
  %242 = vmatprep.mubr.bf16.mxu0 0
  %243 = vmatmul.mubr.bf16.gmra.mrb[0].mxu0 %v202
  %v244 = vpop.f32.mrb[0].mxu0
  %v245 = vadd.f32 %v138, %v244
  %v246 = vpop.f32.mrb[0].mxu0
  %v247 = vadd.f32 %v142, %v246
  %v248 = vpop.f32.mrb[0].mxu0
  %v249 = vadd.f32 %v138, %v248
  %v250 = vpop.f32.mrb[0].mxu0
  %v251 = vadd.f32 %v142, %v250
  %252 = vmatprep.mubr.bf16.mxu0 0
  %253 = vmatmul.mubr.bf16.gmra.mrb[0].mxu0 %v205
  %v254 = vpop.f32.mrb[0].mxu0
  %v255 = vadd.f32 %v138, %v254
  %v256 = vpop.f32.mrb[0].mxu0
  %v257 = vadd.f32 %v142, %v256
  %v258 = vpop.f32.mrb[0].mxu0
  %v259 = vadd.f32 %v138, %v258
  %v260 = vpop.f32.mrb[0].mxu0
  %v261 = vadd.f32 %v142, %v260
  %262 = vmatprep.mubr.bf16.mxu0 0
  %263 = vmatmul.mubr.bf16.gmra.mrb[0].mxu0 %v208
  %v264 = vpop.f32.mrb[0].mxu0
  %v265 = vadd.f32 %v138, %v264
  %v266 = vpop.f32.mrb[0].mxu0
  %v267 = vadd.f32 %v142, %v266
  %v268 = vpop.f32.mrb[0].mxu0
  %v269 = vadd.f32 %v138, %v268
  %v270 = vpop.f32.mrb[0].mxu0
  %v271 = vadd.f32 %v142, %v270
  %272 = vdwg.mxu0
  %v273 = vpack.c.bf16 %v249, %v245
  %v274 = vpack.c.bf16 %v251, %v247
  %v275 = vpack.c.bf16 %v259, %v255
  %v276 = vpack.c.bf16 %v261, %v257
  %v277 = vpack.c.bf16 %v269, %v265
  %v278 = vpack.c.bf16 %v271, %v267
  %v285 = vunpack.c.l.b16 %v273
  %v286 = vunpack.c.l.b16 %v274
  %v287 = vunpack.c.h.b16 %v273
  %v288 = vunpack.c.h.b16 %v274
  %v289 = vunpack.c.l.b16 %v275
  %v290 = vunpack.c.l.b16 %v276
  %v291 = vunpack.c.h.b16 %v275
  %v292 = vunpack.c.h.b16 %v276
  %v293 = vunpack.c.l.b16 %v277
  %v294 = vunpack.c.l.b16 %v278
  %v295 = vunpack.c.h.b16 %v277
  %v296 = vunpack.c.h.b16 %v278
  %v297 = vpack.c.b16 %v286, %v285
  %v298 = vpack.c.b16 %v288, %v287
  %v299 = vpack.c.b16 %v290, %v289
  %v300 = vpack.c.b16 %v292, %v291
  %v301 = vpack.c.b16 %v294, %v293
  %v302 = vpack.c.b16 %v296, %v295
  %v303 = vld [vmem:[%s1] sm:$0x1]
  %v304 = vld [vmem:[%s1 + $0x1] sm:$0x1]
  %v305 = vld [vmem:[%s1 + $0x2] sm:$0x1]
  %v306 = vld [vmem:[%s1 + $0x3] sm:$0x1]
  %v307 = vld [vmem:[%s1 + $0x4] sm:$0x1]
  %v308 = vld [vmem:[%s1 + $0x5] sm:$0x1]
  %v315 = vlaneseq
  %v316 = vshrl.u32 %v315, 7
  %v317 = vsub.s32 0, %v316
  %v318 = vrot.slane %v303, %v317
  %v319 = vlaneseq
  %v320 = vshrl.u32 %v319, 7
  %v321 = vsub.s32 0, %v320
  %v322 = vrot.slane %v304, %v321
  %v323 = vlaneseq
  %v324 = vshrl.u32 %v323, 7
  %v325 = vsub.s32 0, %v324
  %v326 = vrot.slane %v305, %v325
  %v327 = vlaneseq
  %v328 = vshrl.u32 %v327, 7
  %v329 = vsub.s32 0, %v328
  %v330 = vrot.slane %v306, %v329
  %v331 = vlaneseq
  %v332 = vshrl.u32 %v331, 7
  %v333 = vsub.s32 0, %v332
  %v334 = vrot.slane %v307, %v333
  %v335 = vlaneseq
  %v336 = vshrl.u32 %v335, 7
  %v337 = vsub.s32 0, %v336
  %v338 = vrot.slane %v308, %v337
  %v345 = vpack.c.b16 %v285, %v285
  %346 = vrot.lane.b32.xlu0 %v345, 64
  %v347 = vpop.permute.xlu0 %346
  %vm348 = vcmask 130048
  %v350 = vsel %vm348, %v297, 0
  %v353 = vsel %vm348, %v347, 0
  %355 = vmatprep.subr.bf16.mxu0 0
  %356 = vmatpush1.bf16.xpose.msra.mxu0 %v353
  %357 = vmatprep.subr.bf16.mxu0 0
  %358 = vmatpush1.bf16.xpose.msra.mxu0 0
  %359 = vmatprep.subr.bf16.mxu0 0
  %360 = vmatpush1.bf16.xpose.msra.mxu0 0
  %361 = vmatprep.subr.bf16.mxu0 0
  %362 = vmatpush1.bf16.xpose.msra.mxu0 0
  %363 = vmatprep.subr.bf16.mxu0 0
  %364 = vmatpush1.bf16.xpose.msra.mxu0 0
  %365 = vmatprep.subr.bf16.mxu0 0
  %366 = vmatpush1.bf16.xpose.msra.mxu0 0
  %367 = vmatprep.subr.bf16.mxu0 0
  %368 = vmatpush1.bf16.xpose.msra.mxu0 0
  %369 = vmatprep.subr.bf16.mxu0 0
  %370 = vmatpush1.bf16.xpose.msra.mxu0 0
  %371 = vmatprep.subr.bf16.mxu0 0
  %372 = vmatpush1.bf16.xpose.msra.mxu0 0
  %373 = vmatprep.subr.bf16.mxu0 0
  %374 = vmatpush1.bf16.xpose.msra.mxu0 0
  %375 = vmatprep.subr.bf16.mxu0 0
  %376 = vmatpush1.bf16.xpose.msra.mxu0 0
  %377 = vmatprep.subr.bf16.mxu0 0
  %378 = vmatpush1.bf16.xpose.msra.mxu0 0
  %379 = vmatprep.subr.bf16.mxu0 0
  %380 = vmatpush1.bf16.xpose.msra.mxu0 0
  %381 = vmatprep.subr.bf16.mxu0 0
  %382 = vmatpush1.bf16.xpose.msra.mxu0 0
  %383 = vmatprep.subr.bf16.mxu0 0
  %384 = vmatpush1.bf16.xpose.msra.mxu0 0
  %385 = vmatprep.subr.bf16.mxu0 0
  %386 = vmatpush1.bf16.xpose.msra.mxu0 0
  %387 = vmatprep.mubr.bf16.mxu0 0
  %388 = vmatmul.mubr.bf16.gmra.mrb[0].mxu0 %v350
  %v389 = vpop.f32.mrb[0].mxu0
  %v390 = vadd.f32 %v318, %v389
  %v391 = vpop.f32.mrb[0].mxu0
  %v392 = vpop.f32.mrb[0].mxu0
  %v393 = vpop.f32.mrb[0].mxu0
  %394 = vdwg.mxu0
  %v395 = vpack.c.b16 %v287, %v287
  %396 = vrot.lane.b32.xlu0 %v395, 64
  %v397 = vpop.permute.xlu0 %396
  %v399 = vsel %vm348, %v298, 0
  %v402 = vsel %vm348, %v397, 0
  %404 = vmatprep.subr.bf16.mxu0 0
  %405 = vmatpush1.bf16.xpose.msra.mxu0 %v402
  %406 = vmatprep.subr.bf16.mxu0 0
  %407 = vmatpush1.bf16.xpose.msra.mxu0 0
  %408 = vmatprep.subr.bf16.mxu0 0
  %409 = vmatpush1.bf16.xpose.msra.mxu0 0
  %410 = vmatprep.subr.bf16.mxu0 0
  %411 = vmatpush1.bf16.xpose.msra.mxu0 0
  %412 = vmatprep.subr.bf16.mxu0 0
  %413 = vmatpush1.bf16.xpose.msra.mxu0 0
  %414 = vmatprep.subr.bf16.mxu0 0
  %415 = vmatpush1.bf16.xpose.msra.mxu0 0
  %416 = vmatprep.subr.bf16.mxu0 0
  %417 = vmatpush1.bf16.xpose.msra.mxu0 0
  %418 = vmatprep.subr.bf16.mxu0 0
  %419 = vmatpush1.bf16.xpose.msra.mxu0 0
  %420 = vmatprep.subr.bf16.mxu0 0
  %421 = vmatpush1.bf16.xpose.msra.mxu0 0
  %422 = vmatprep.subr.bf16.mxu0 0
  %423 = vmatpush1.bf16.xpose.msra.mxu0 0
  %424 = vmatprep.subr.bf16.mxu0 0
  %425 = vmatpush1.bf16.xpose.msra.mxu0 0
  %426 = vmatprep.subr.bf16.mxu0 0
  %427 = vmatpush1.bf16.xpose.msra.mxu0 0
  %428 = vmatprep.subr.bf16.mxu0 0
  %429 = vmatpush1.bf16.xpose.msra.mxu0 0
  %430 = vmatprep.subr.bf16.mxu0 0
  %431 = vmatpush1.bf16.xpose.msra.mxu0 0
  %432 = vmatprep.subr.bf16.mxu0 0
  %433 = vmatpush1.bf16.xpose.msra.mxu0 0
  %434 = vmatprep.subr.bf16.mxu0 0
  %435 = vmatpush1.bf16.xpose.msra.mxu0 0
  %436 = vmatprep.mubr.bf16.mxu0 0
  %437 = vmatmul.mubr.bf16.gmra.mrb[0].mxu0 %v399
  %v438 = vpop.f32.mrb[0].mxu0
  %v439 = vadd.f32 %v322, %v438
  %v440 = vpop.f32.mrb[0].mxu0
  %v441 = vpop.f32.mrb[0].mxu0
  %v442 = vpop.f32.mrb[0].mxu0
  %443 = vdwg.mxu0
  %v444 = vpack.c.b16 %v289, %v289
  %445 = vrot.lane.b32.xlu0 %v444, 64
  %v446 = vpop.permute.xlu0 %445
  %v448 = vsel %vm348, %v299, 0
  %v451 = vsel %vm348, %v446, 0
  %453 = vmatprep.subr.bf16.mxu0 0
  %454 = vmatpush1.bf16.xpose.msra.mxu0 %v451
  %455 = vmatprep.subr.bf16.mxu0 0
  %456 = vmatpush1.bf16.xpose.msra.mxu0 0
  %457 = vmatprep.subr.bf16.mxu0 0
  %458 = vmatpush1.bf16.xpose.msra.mxu0 0
  %459 = vmatprep.subr.bf16.mxu0 0
  %460 = vmatpush1.bf16.xpose.msra.mxu0 0
  %461 = vmatprep.subr.bf16.mxu0 0
  %462 = vmatpush1.bf16.xpose.msra.mxu0 0
  %463 = vmatprep.subr.bf16.mxu0 0
  %464 = vmatpush1.bf16.xpose.msra.mxu0 0
  %465 = vmatprep.subr.bf16.mxu0 0
  %466 = vmatpush1.bf16.xpose.msra.mxu0 0
  %467 = vmatprep.subr.bf16.mxu0 0
  %468 = vmatpush1.bf16.xpose.msra.mxu0 0
  %469 = vmatprep.subr.bf16.mxu0 0
  %470 = vmatpush1.bf16.xpose.msra.mxu0 0
  %471 = vmatprep.subr.bf16.mxu0 0
  %472 = vmatpush1.bf16.xpose.msra.mxu0 0
  %473 = vmatprep.subr.bf16.mxu0 0
  %474 = vmatpush1.bf16.xpose.msra.mxu0 0
  %475 = vmatprep.subr.bf16.mxu0 0
  %476 = vmatpush1.bf16.xpose.msra.mxu0 0
  %477 = vmatprep.subr.bf16.mxu0 0
  %478 = vmatpush1.bf16.xpose.msra.mxu0 0
  %479 = vmatprep.subr.bf16.mxu0 0
  %480 = vmatpush1.bf16.xpose.msra.mxu0 0
  %481 = vmatprep.subr.bf16.mxu0 0
  %482 = vmatpush1.bf16.xpose.msra.mxu0 0
  %483 = vmatprep.subr.bf16.mxu0 0
  %484 = vmatpush1.bf16.xpose.msra.mxu0 0
  %485 = vmatprep.mubr.bf16.mxu0 0
  %486 = vmatmul.mubr.bf16.gmra.mrb[0].mxu0 %v448
  %v487 = vpop.f32.mrb[0].mxu0
  %v488 = vadd.f32 %v326, %v487
  %v489 = vpop.f32.mrb[0].mxu0
  %v490 = vpop.f32.mrb[0].mxu0
  %v491 = vpop.f32.mrb[0].mxu0
  %492 = vdwg.mxu0
  %v493 = vpack.c.b16 %v291, %v291
  %494 = vrot.lane.b32.xlu0 %v493, 64
  %v495 = vpop.permute.xlu0 %494
  %v497 = vsel %vm348, %v300, 0
  %v500 = vsel %vm348, %v495, 0
  %502 = vmatprep.subr.bf16.mxu0 0
  %503 = vmatpush1.bf16.xpose.msra.mxu0 %v500
  %504 = vmatprep.subr.bf16.mxu0 0
  %505 = vmatpush1.bf16.xpose.msra.mxu0 0
  %506 = vmatprep.subr.bf16.mxu0 0
  %507 = vmatpush1.bf16.xpose.msra.mxu0 0
  %508 = vmatprep.subr.bf16.mxu0 0
  %509 = vmatpush1.bf16.xpose.msra.mxu0 0
  %510 = vmatprep.subr.bf16.mxu0 0
  %511 = vmatpush1.bf16.xpose.msra.mxu0 0
  %512 = vmatprep.subr.bf16.mxu0 0
  %513 = vmatpush1.bf16.xpose.msra.mxu0 0
  %514 = vmatprep.subr.bf16.mxu0 0
  %515 = vmatpush1.bf16.xpose.msra.mxu0 0
  %516 = vmatprep.subr.bf16.mxu0 0
  %517 = vmatpush1.bf16.xpose.msra.mxu0 0
  %518 = vmatprep.subr.bf16.mxu0 0
  %519 = vmatpush1.bf16.xpose.msra.mxu0 0
  %520 = vmatprep.subr.bf16.mxu0 0
  %521 = vmatpush1.bf16.xpose.msra.mxu0 0
  %522 = vmatprep.subr.bf16.mxu0 0
  %523 = vmatpush1.bf16.xpose.msra.mxu0 0
  %524 = vmatprep.subr.bf16.mxu0 0
  %525 = vmatpush1.bf16.xpose.msra.mxu0 0
  %526 = vmatprep.subr.bf16.mxu0 0
  %527 = vmatpush1.bf16.xpose.msra.mxu0 0
  %528 = vmatprep.subr.bf16.mxu0 0
  %529 = vmatpush1.bf16.xpose.msra.mxu0 0
  %530 = vmatprep.subr.bf16.mxu0 0
  %531 = vmatpush1.bf16.xpose.msra.mxu0 0
  %532 = vmatprep.subr.bf16.mxu0 0
  %533 = vmatpush1.bf16.xpose.msra.mxu0 0
  %534 = vmatprep.mubr.bf16.mxu0 0
  %535 = vmatmul.mubr.bf16.gmra.mrb[0].mxu0 %v497
  %v536 = vpop.f32.mrb[0].mxu0
  %v537 = vadd.f32 %v330, %v536
  %v538 = vpop.f32.mrb[0].mxu0
  %v539 = vpop.f32.mrb[0].mxu0
  %v540 = vpop.f32.mrb[0].mxu0
  %541 = vdwg.mxu0
  %v542 = vpack.c.b16 %v293, %v293
  %543 = vrot.lane.b32.xlu0 %v542, 64
  %v544 = vpop.permute.xlu0 %543
  %v546 = vsel %vm348, %v301, 0
  %v549 = vsel %vm348, %v544, 0
  %551 = vmatprep.subr.bf16.mxu0 0
  %552 = vmatpush1.bf16.xpose.msra.mxu0 %v549
  %553 = vmatprep.subr.bf16.mxu0 0
  %554 = vmatpush1.bf16.xpose.msra.mxu0 0
  %555 = vmatprep.subr.bf16.mxu0 0
  %556 = vmatpush1.bf16.xpose.msra.mxu0 0
  %557 = vmatprep.subr.bf16.mxu0 0
  %558 = vmatpush1.bf16.xpose.msra.mxu0 0
  %559 = vmatprep.subr.bf16.mxu0 0
  %560 = vmatpush1.bf16.xpose.msra.mxu0 0
  %561 = vmatprep.subr.bf16.mxu0 0
  %562 = vmatpush1.bf16.xpose.msra.mxu0 0
  %563 = vmatprep.subr.bf16.mxu0 0
  %564 = vmatpush1.bf16.xpose.msra.mxu0 0
  %565 = vmatprep.subr.bf16.mxu0 0
  %566 = vmatpush1.bf16.xpose.msra.mxu0 0
  %567 = vmatprep.subr.bf16.mxu0 0
  %568 = vmatpush1.bf16.xpose.msra.mxu0 0
  %569 = vmatprep.subr.bf16.mxu0 0
  %570 = vmatpush1.bf16.xpose.msra.mxu0 0
  %571 = vmatprep.subr.bf16.mxu0 0
  %572 = vmatpush1.bf16.xpose.msra.mxu0 0
  %573 = vmatprep.subr.bf16.mxu0 0
  %574 = vmatpush1.bf16.xpose.msra.mxu0 0
  %575 = vmatprep.subr.bf16.mxu0 0
  %576 = vmatpush1.bf16.xpose.msra.mxu0 0
  %577 = vmatprep.subr.bf16.mxu0 0
  %578 = vmatpush1.bf16.xpose.msra.mxu0 0
  %579 = vmatprep.subr.bf16.mxu0 0
  %580 = vmatpush1.bf16.xpose.msra.mxu0 0
  %581 = vmatprep.subr.bf16.mxu0 0
  %582 = vmatpush1.bf16.xpose.msra.mxu0 0
  %583 = vmatprep.mubr.bf16.mxu0 0
  %584 = vmatmul.mubr.bf16.gmra.mrb[0].mxu0 %v546
  %v585 = vpop.f32.mrb[0].mxu0
  %v586 = vadd.f32 %v334, %v585
  %v587 = vpop.f32.mrb[0].mxu0
  %v588 = vpop.f32.mrb[0].mxu0
  %v589 = vpop.f32.mrb[0].mxu0
  %590 = vdwg.mxu0
  %v591 = vpack.c.b16 %v295, %v295
  %592 = vrot.lane.b32.xlu0 %v591, 64
  %v593 = vpop.permute.xlu0 %592
  %v595 = vsel %vm348, %v302, 0
  %v598 = vsel %vm348, %v593, 0
  %600 = vmatprep.subr.bf16.mxu0 0
  %601 = vmatpush1.bf16.xpose.msra.mxu0 %v598
  %602 = vmatprep.subr.bf16.mxu0 0
  %603 = vmatpush1.bf16.xpose.msra.mxu0 0
  %604 = vmatprep.subr.bf16.mxu0 0
  %605 = vmatpush1.bf16.xpose.msra.mxu0 0
  %606 = vmatprep.subr.bf16.mxu0 0
  %607 = vmatpush1.bf16.xpose.msra.mxu0 0
  %608 = vmatprep.subr.bf16.mxu0 0
  %609 = vmatpush1.bf16.xpose.msra.mxu0 0
  %610 = vmatprep.subr.bf16.mxu0 0
  %611 = vmatpush1.bf16.xpose.msra.mxu0 0
  %612 = vmatprep.subr.bf16.mxu0 0
  %613 = vmatpush1.bf16.xpose.msra.mxu0 0
  %614 = vmatprep.subr.bf16.mxu0 0
  %615 = vmatpush1.bf16.xpose.msra.mxu0 0
  %616 = vmatprep.subr.bf16.mxu0 0
  %617 = vmatpush1.bf16.xpose.msra.mxu0 0
  %618 = vmatprep.subr.bf16.mxu0 0
  %619 = vmatpush1.bf16.xpose.msra.mxu0 0
  %620 = vmatprep.subr.bf16.mxu0 0
  %621 = vmatpush1.bf16.xpose.msra.mxu0 0
  %622 = vmatprep.subr.bf16.mxu0 0
  %623 = vmatpush1.bf16.xpose.msra.mxu0 0
  %624 = vmatprep.subr.bf16.mxu0 0
  %625 = vmatpush1.bf16.xpose.msra.mxu0 0
  %626 = vmatprep.subr.bf16.mxu0 0
  %627 = vmatpush1.bf16.xpose.msra.mxu0 0
  %628 = vmatprep.subr.bf16.mxu0 0
  %629 = vmatpush1.bf16.xpose.msra.mxu0 0
  %630 = vmatprep.subr.bf16.mxu0 0
  %631 = vmatpush1.bf16.xpose.msra.mxu0 0
  %632 = vmatprep.mubr.bf16.mxu0 0
  %633 = vmatmul.mubr.bf16.gmra.mrb[0].mxu0 %v595
  %v634 = vpop.f32.mrb[0].mxu0
  %v635 = vadd.f32 %v338, %v634
  %v636 = vpop.f32.mrb[0].mxu0
  %v637 = vpop.f32.mrb[0].mxu0
  %v638 = vpop.f32.mrb[0].mxu0
  %639 = vdwg.mxu0
  %vm640 = vcmask 64512
  %v641 = vsel %vm640, %v390, -inf
  %642 = vmax.xlane.f32.xlu0 %v641
  %v643 = vpop.xlane.xlu0 %642
  %v644 = vsel %vm640, %v439, -inf
  %645 = vmax.xlane.f32.xlu0 %v644
  %v646 = vpop.xlane.xlu0 %645
  %v647 = vsel %vm640, %v488, -inf
  %648 = vmax.xlane.f32.xlu0 %v647
  %v649 = vpop.xlane.xlu0 %648
  %v650 = vsel %vm640, %v537, -inf
  %651 = vmax.xlane.f32.xlu0 %v650
  %v652 = vpop.xlane.xlu0 %651
  %v653 = vsel %vm640, %v586, -inf
  %654 = vmax.xlane.f32.xlu0 %v653
  %v655 = vpop.xlane.xlu0 %654
  %v656 = vsel %vm640, %v635, -inf
  %657 = vmax.xlane.f32.xlu0 %v656
  %v658 = vpop.xlane.xlu0 %657
  %v659 = vsub.f32 %v390, %v643
  %v660 = vsub.f32 %v439, %v646
  %v661 = vsub.f32 %v488, %v649
  %v662 = vsub.f32 %v537, %v652
  %v663 = vsub.f32 %v586, %v655
  %v664 = vsub.f32 %v635, %v658
  %v665 = vmul.f32 %v659, 1.442695
  %v666 = vpow.pop %v665
  %v667 = vmul.f32 %v660, 1.442695
  %v668 = vpow.pop %v667
  %v669 = vmul.f32 %v661, 1.442695
  %v670 = vpow.pop %v669
  %v671 = vmul.f32 %v662, 1.442695
  %v672 = vpow.pop %v671
  %v673 = vmul.f32 %v663, 1.442695
  %v674 = vpow.pop %v673
  %v675 = vmul.f32 %v664, 1.442695
  %v676 = vpow.pop %v675
  %v677 = vsel %vm640, %v666, 0.0
  %678 = vadd.xlane.f32.xlu0 %v677
  %v679 = vpop.xlane.xlu0 %678
  %v680 = vsel %vm640, %v668, 0.0
  %681 = vadd.xlane.f32.xlu0 %v680
  %v682 = vpop.xlane.xlu0 %681
  %v683 = vsel %vm640, %v670, 0.0
  %684 = vadd.xlane.f32.xlu0 %v683
  %v685 = vpop.xlane.xlu0 %684
  %v686 = vsel %vm640, %v672, 0.0
  %687 = vadd.xlane.f32.xlu0 %v686
  %v688 = vpop.xlane.xlu0 %687
  %v689 = vsel %vm640, %v674, 0.0
  %690 = vadd.xlane.f32.xlu0 %v689
  %v691 = vpop.xlane.xlu0 %690
  %v692 = vsel %vm640, %v676, 0.0
  %693 = vadd.xlane.f32.xlu0 %v692
  %v694 = vpop.xlane.xlu0 %693
  %v695 = vrcp.pop %v679
  %v696 = vrcp.pop %v682
  %v697 = vrcp.pop %v685
  %v698 = vrcp.pop %v688
  %v699 = vrcp.pop %v691
  %v700 = vrcp.pop %v694
  %v701 = vmul.f32 %v666, %v695
  %v702 = vmul.f32 %v668, %v696
  %v703 = vmul.f32 %v670, %v697
  %v704 = vmul.f32 %v672, %v698
  %v705 = vmul.f32 %v674, %v699
  %v706 = vmul.f32 %v676, %v700
  %v707 = vpack.c.bf16 %v701, %v701
  %v708 = vpack.c.bf16 %v702, %v702
  %v709 = vpack.c.bf16 %v703, %v703
  %v710 = vpack.c.bf16 %v704, %v704
  %v711 = vpack.c.bf16 %v705, %v705
  %v712 = vpack.c.bf16 %v706, %v706
  %v713 = vrot.slane %v297, 4
  %v715 = vsel %vm640, %v707, 0
  %vm717 = vcmask 1043456
  %v719 = vsel %vm717, %v713, 0
  %721 = vmatprep.subr.bf16.mxu0 0
  %722 = vmatpush1.bf16.msra.mxu0 %v719
  %723 = vmatprep.subr.bf16.mxu0 0
  %724 = vmatpush1.bf16.msra.mxu0 0
  %725 = vmatprep.subr.bf16.mxu0 0
  %726 = vmatpush1.bf16.msra.mxu0 0
  %727 = vmatprep.subr.bf16.mxu0 0
  %728 = vmatpush1.bf16.msra.mxu0 0
  %729 = vmatprep.subr.bf16.mxu0 0
  %730 = vmatpush1.bf16.msra.mxu0 0
  %731 = vmatprep.subr.bf16.mxu0 0
  %732 = vmatpush1.bf16.msra.mxu0 0
  %733 = vmatprep.subr.bf16.mxu0 0
  %734 = vmatpush1.bf16.msra.mxu0 0
  %735 = vmatprep.subr.bf16.mxu0 0
  %736 = vmatpush1.bf16.msra.mxu0 0
  %737 = vmatprep.subr.bf16.mxu0 0
  %738 = vmatpush1.bf16.msra.mxu0 0
  %739 = vmatprep.subr.bf16.mxu0 0
  %740 = vmatpush1.bf16.msra.mxu0 0
  %741 = vmatprep.subr.bf16.mxu0 0
  %742 = vmatpush1.bf16.msra.mxu0 0
  %743 = vmatprep.subr.bf16.mxu0 0
  %744 = vmatpush1.bf16.msra.mxu0 0
  %745 = vmatprep.subr.bf16.mxu0 0
  %746 = vmatpush1.bf16.msra.mxu0 0
  %747 = vmatprep.subr.bf16.mxu0 0
  %748 = vmatpush1.bf16.msra.mxu0 0
  %749 = vmatprep.subr.bf16.mxu0 0
  %750 = vmatpush1.bf16.msra.mxu0 0
  %751 = vmatprep.subr.bf16.mxu0 0
  %752 = vmatpush1.bf16.msra.mxu0 0
  %753 = vmatprep.mubr.bf16.mxu0 0
  %754 = vmatmul.mubr.bf16.gmra.mrb[0].mxu0 %v715
  %v755 = vpop.f32.mrb[0].mxu0
  %v756 = vadd.f32 0.0, %v755
  %v757 = vpop.f32.mrb[0].mxu0
  %v758 = vpop.f32.mrb[0].mxu0
  %v759 = vpop.f32.mrb[0].mxu0
  %760 = vdwg.mxu0
  %v761 = vrot.slane %v298, 4
  %v763 = vsel %vm640, %v708, 0
  %v766 = vsel %vm717, %v761, 0
  %768 = vmatprep.subr.bf16.mxu0 0
  %769 = vmatpush1.bf16.msra.mxu0 %v766
  %770 = vmatprep.subr.bf16.mxu0 0
  %771 = vmatpush1.bf16.msra.mxu0 0
  %772 = vmatprep.subr.bf16.mxu0 0
  %773 = vmatpush1.bf16.msra.mxu0 0
  %774 = vmatprep.subr.bf16.mxu0 0
  %775 = vmatpush1.bf16.msra.mxu0 0
  %776 = vmatprep.subr.bf16.mxu0 0
  %777 = vmatpush1.bf16.msra.mxu0 0
  %778 = vmatprep.subr.bf16.mxu0 0
  %779 = vmatpush1.bf16.msra.mxu0 0
  %780 = vmatprep.subr.bf16.mxu0 0
  %781 = vmatpush1.bf16.msra.mxu0 0
  %782 = vmatprep.subr.bf16.mxu0 0
  %783 = vmatpush1.bf16.msra.mxu0 0
  %784 = vmatprep.subr.bf16.mxu0 0
  %785 = vmatpush1.bf16.msra.mxu0 0
  %786 = vmatprep.subr.bf16.mxu0 0
  %787 = vmatpush1.bf16.msra.mxu0 0
  %788 = vmatprep.subr.bf16.mxu0 0
  %789 = vmatpush1.bf16.msra.mxu0 0
  %790 = vmatprep.subr.bf16.mxu0 0
  %791 = vmatpush1.bf16.msra.mxu0 0
  %792 = vmatprep.subr.bf16.mxu0 0
  %793 = vmatpush1.bf16.msra.mxu0 0
  %794 = vmatprep.subr.bf16.mxu0 0
  %795 = vmatpush1.bf16.msra.mxu0 0
  %796 = vmatprep.subr.bf16.mxu0 0
  %797 = vmatpush1.bf16.msra.mxu0 0
  %798 = vmatprep.subr.bf16.mxu0 0
  %799 = vmatpush1.bf16.msra.mxu0 0
  %800 = vmatprep.mubr.bf16.mxu0 0
  %801 = vmatmul.mubr.bf16.gmra.mrb[0].mxu0 %v763
  %v802 = vpop.f32.mrb[0].mxu0
  %v803 = vadd.f32 0.0, %v802
  %v804 = vpop.f32.mrb[0].mxu0
  %v805 = vpop.f32.mrb[0].mxu0
  %v806 = vpop.f32.mrb[0].mxu0
  %807 = vdwg.mxu0
  %v808 = vrot.slane %v299, 4
  %v810 = vsel %vm640, %v709, 0
  %v813 = vsel %vm717, %v808, 0
  %815 = vmatprep.subr.bf16.mxu0 0
  %816 = vmatpush1.bf16.msra.mxu0 %v813
  %817 = vmatprep.subr.bf16.mxu0 0
  %818 = vmatpush1.bf16.msra.mxu0 0
  %819 = vmatprep.subr.bf16.mxu0 0
  %820 = vmatpush1.bf16.msra.mxu0 0
  %821 = vmatprep.subr.bf16.mxu0 0
  %822 = vmatpush1.bf16.msra.mxu0 0
  %823 = vmatprep.subr.bf16.mxu0 0
  %824 = vmatpush1.bf16.msra.mxu0 0
  %825 = vmatprep.subr.bf16.mxu0 0
  %826 = vmatpush1.bf16.msra.mxu0 0
  %827 = vmatprep.subr.bf16.mxu0 0
  %828 = vmatpush1.bf16.msra.mxu0 0
  %829 = vmatprep.subr.bf16.mxu0 0
  %830 = vmatpush1.bf16.msra.mxu0 0
  %831 = vmatprep.subr.bf16.mxu0 0
  %832 = vmatpush1.bf16.msra.mxu0 0
  %833 = vmatprep.subr.bf16.mxu0 0
  %834 = vmatpush1.bf16.msra.mxu0 0
  %835 = vmatprep.subr.bf16.mxu0 0
  %836 = vmatpush1.bf16.msra.mxu0 0
  %837 = vmatprep.subr.bf16.mxu0 0
  %838 = vmatpush1.bf16.msra.mxu0 0
  %839 = vmatprep.subr.bf16.mxu0 0
  %840 = vmatpush1.bf16.msra.mxu0 0
  %841 = vmatprep.subr.bf16.mxu0 0
  %842 = vmatpush1.bf16.msra.mxu0 0
  %843 = vmatprep.subr.bf16.mxu0 0
  %844 = vmatpush1.bf16.msra.mxu0 0
  %845 = vmatprep.subr.bf16.mxu0 0
  %846 = vmatpush1.bf16.msra.mxu0 0
  %847 = vmatprep.mubr.bf16.mxu0 0
  %848 = vmatmul.mubr.bf16.gmra.mrb[0].mxu0 %v810
  %v849 = vpop.f32.mrb[0].mxu0
  %v850 = vadd.f32 0.0, %v849
  %v851 = vpop.f32.mrb[0].mxu0
  %v852 = vpop.f32.mrb[0].mxu0
  %v853 = vpop.f32.mrb[0].mxu0
  %854 = vdwg.mxu0
  %v855 = vrot.slane %v300, 4
  %v857 = vsel %vm640, %v710, 0
  %v860 = vsel %vm717, %v855, 0
  %862 = vmatprep.subr.bf16.mxu0 0
  %863 = vmatpush1.bf16.msra.mxu0 %v860
  %864 = vmatprep.subr.bf16.mxu0 0
  %865 = vmatpush1.bf16.msra.mxu0 0
  %866 = vmatprep.subr.bf16.mxu0 0
  %867 = vmatpush1.bf16.msra.mxu0 0
  %868 = vmatprep.subr.bf16.mxu0 0
  %869 = vmatpush1.bf16.msra.mxu0 0
  %870 = vmatprep.subr.bf16.mxu0 0
  %871 = vmatpush1.bf16.msra.mxu0 0
  %872 = vmatprep.subr.bf16.mxu0 0
  %873 = vmatpush1.bf16.msra.mxu0 0
  %874 = vmatprep.subr.bf16.mxu0 0
  %875 = vmatpush1.bf16.msra.mxu0 0
  %876 = vmatprep.subr.bf16.mxu0 0
  %877 = vmatpush1.bf16.msra.mxu0 0
  %878 = vmatprep.subr.bf16.mxu0 0
  %879 = vmatpush1.bf16.msra.mxu0 0
  %880 = vmatprep.subr.bf16.mxu0 0
  %881 = vmatpush1.bf16.msra.mxu0 0
  %882 = vmatprep.subr.bf16.mxu0 0
  %883 = vmatpush1.bf16.msra.mxu0 0
  %884 = vmatprep.subr.bf16.mxu0 0
  %885 = vmatpush1.bf16.msra.mxu0 0
  %886 = vmatprep.subr.bf16.mxu0 0
  %887 = vmatpush1.bf16.msra.mxu0 0
  %888 = vmatprep.subr.bf16.mxu0 0
  %889 = vmatpush1.bf16.msra.mxu0 0
  %890 = vmatprep.subr.bf16.mxu0 0
  %891 = vmatpush1.bf16.msra.mxu0 0
  %892 = vmatprep.subr.bf16.mxu0 0
  %893 = vmatpush1.bf16.msra.mxu0 0
  %894 = vmatprep.mubr.bf16.mxu0 0
  %895 = vmatmul.mubr.bf16.gmra.mrb[0].mxu0 %v857
  %v896 = vpop.f32.mrb[0].mxu0
  %v897 = vadd.f32 0.0, %v896
  %v898 = vpop.f32.mrb[0].mxu0
  %v899 = vpop.f32.mrb[0].mxu0
  %v900 = vpop.f32.mrb[0].mxu0
  %901 = vdwg.mxu0
  %v902 = vrot.slane %v301, 4
  %v904 = vsel %vm640, %v711, 0
  %v907 = vsel %vm717, %v902, 0
  %909 = vmatprep.subr.bf16.mxu0 0
  %910 = vmatpush1.bf16.msra.mxu0 %v907
  %911 = vmatprep.subr.bf16.mxu0 0
  %912 = vmatpush1.bf16.msra.mxu0 0
  %913 = vmatprep.subr.bf16.mxu0 0
  %914 = vmatpush1.bf16.msra.mxu0 0
  %915 = vmatprep.subr.bf16.mxu0 0
  %916 = vmatpush1.bf16.msra.mxu0 0
  %917 = vmatprep.subr.bf16.mxu0 0
  %918 = vmatpush1.bf16.msra.mxu0 0
  %919 = vmatprep.subr.bf16.mxu0 0
  %920 = vmatpush1.bf16.msra.mxu0 0
  %921 = vmatprep.subr.bf16.mxu0 0
  %922 = vmatpush1.bf16.msra.mxu0 0
  %923 = vmatprep.subr.bf16.mxu0 0
  %924 = vmatpush1.bf16.msra.mxu0 0
  %925 = vmatprep.subr.bf16.mxu0 0
  %926 = vmatpush1.bf16.msra.mxu0 0
  %927 = vmatprep.subr.bf16.mxu0 0
  %928 = vmatpush1.bf16.msra.mxu0 0
  %929 = vmatprep.subr.bf16.mxu0 0
  %930 = vmatpush1.bf16.msra.mxu0 0
  %931 = vmatprep.subr.bf16.mxu0 0
  %932 = vmatpush1.bf16.msra.mxu0 0
  %933 = vmatprep.subr.bf16.mxu0 0
  %934 = vmatpush1.bf16.msra.mxu0 0
  %935 = vmatprep.subr.bf16.mxu0 0
  %936 = vmatpush1.bf16.msra.mxu0 0
  %937 = vmatprep.subr.bf16.mxu0 0
  %938 = vmatpush1.bf16.msra.mxu0 0
  %939 = vmatprep.subr.bf16.mxu0 0
  %940 = vmatpush1.bf16.msra.mxu0 0
  %941 = vmatprep.mubr.bf16.mxu0 0
  %942 = vmatmul.mubr.bf16.gmra.mrb[0].mxu0 %v904
  %v943 = vpop.f32.mrb[0].mxu0
  %v944 = vadd.f32 0.0, %v943
  %v945 = vpop.f32.mrb[0].mxu0
  %v946 = vpop.f32.mrb[0].mxu0
  %v947 = vpop.f32.mrb[0].mxu0
  %948 = vdwg.mxu0
  %v949 = vrot.slane %v302, 4
  %v951 = vsel %vm640, %v712, 0
  %v954 = vsel %vm717, %v949, 0
  %956 = vmatprep.subr.bf16.mxu0 0
  %957 = vmatpush1.bf16.msra.mxu0 %v954
  %958 = vmatprep.subr.bf16.mxu0 0
  %959 = vmatpush1.bf16.msra.mxu0 0
  %960 = vmatprep.subr.bf16.mxu0 0
  %961 = vmatpush1.bf16.msra.mxu0 0
  %962 = vmatprep.subr.bf16.mxu0 0
  %963 = vmatpush1.bf16.msra.mxu0 0
  %964 = vmatprep.subr.bf16.mxu0 0
  %965 = vmatpush1.bf16.msra.mxu0 0
  %966 = vmatprep.subr.bf16.mxu0 0
  %967 = vmatpush1.bf16.msra.mxu0 0
  %968 = vmatprep.subr.bf16.mxu0 0
  %969 = vmatpush1.bf16.msra.mxu0 0
  %970 = vmatprep.subr.bf16.mxu0 0
  %971 = vmatpush1.bf16.msra.mxu0 0
  %972 = vmatprep.subr.bf16.mxu0 0
  %973 = vmatpush1.bf16.msra.mxu0 0
  %974 = vmatprep.subr.bf16.mxu0 0
  %975 = vmatpush1.bf16.msra.mxu0 0
  %976 = vmatprep.subr.bf16.mxu0 0
  %977 = vmatpush1.bf16.msra.mxu0 0
  %978 = vmatprep.subr.bf16.mxu0 0
  %979 = vmatpush1.bf16.msra.mxu0 0
  %980 = vmatprep.subr.bf16.mxu0 0
  %981 = vmatpush1.bf16.msra.mxu0 0
  %982 = vmatprep.subr.bf16.mxu0 0
  %983 = vmatpush1.bf16.msra.mxu0 0
  %984 = vmatprep.subr.bf16.mxu0 0
  %985 = vmatpush1.bf16.msra.mxu0 0
  %986 = vmatprep.subr.bf16.mxu0 0
  %987 = vmatpush1.bf16.msra.mxu0 0
  %988 = vmatprep.mubr.bf16.mxu0 0
  %989 = vmatmul.mubr.bf16.gmra.mrb[0].mxu0 %v951
  %v990 = vpop.f32.mrb[0].mxu0
  %v991 = vadd.f32 0.0, %v990
  %v992 = vpop.f32.mrb[0].mxu0
  %v993 = vpop.f32.mrb[0].mxu0
  %v994 = vpop.f32.mrb[0].mxu0
  %995 = vdwg.mxu0
  %v996 = vpack.c.bf16 %v756, %v756
  %v997 = vpack.c.bf16 %v803, %v803
  %v998 = vpack.c.bf16 %v850, %v850
  %v999 = vpack.c.bf16 %v897, %v897
  %v1000 = vpack.c.bf16 %v944, %v944
  %v1001 = vpack.c.bf16 %v991, %v991
  %vm1002 = vcmask 125952
  %1003 = vst.msk [vmem:[#allocation2] sm:$0xf] %vm1002, %v996
  %1004 = vst.msk [vmem:[#allocation2 + $0x4] sm:$0xf] %vm1002, %v997
  %1005 = vst.msk [vmem:[#allocation2 + $0x8] sm:$0xf] %vm1002, %v998
  %1006 = vst.msk [vmem:[#allocation2 + $0xc] sm:$0xf] %vm1002, %v999
  %1007 = vst.msk [vmem:[#allocation2 + $0x10] sm:$0xf] %vm1002, %v1000
  %1008 = vst.msk [vmem:[#allocation2 + $0x14] sm:$0xf] %vm1002, %v1001
  %1009 = vrot.lane.b32.xlu0 %v345, 112
  %v1010 = vpop.permute.xlu0 %1009
  %1011 = vrot.lane.b32.xlu0 %v345, 48
  %v1012 = vpop.permute.xlu0 %1011
  %v1014 = vsel %vm348, %v1010, 0
  %v1017 = vsel %vm348, %v1012, 0
  %1019 = vmatprep.subr.bf16.mxu0 0
  %1020 = vmatpush1.bf16.xpose.msra.mxu0 %v1017
  %1021 = vmatprep.subr.bf16.mxu0 0
  %1022 = vmatpush1.bf16.xpose.msra.mxu0 0
  %1023 = vmatprep.subr.bf16.mxu0 0
  %1024 = vmatpush1.bf16.xpose.msra.mxu0 0
  %1025 = vmatprep.subr.bf16.mxu0 0
  %1026 = vmatpush1.bf16.xpose.msra.mxu0 0
  %1027 = vmatprep.subr.bf16.mxu0 0
  %1028 = vmatpush1.bf16.xpose.msra.mxu0 0
  %1029 = vmatprep.subr.bf16.mxu0 0
  %1030 = vmatpush1.bf16.xpose.msra.mxu0 0
  %1031 = vmatprep.subr.bf16.mxu0 0
  %1032 = vmatpush1.bf16.xpose.msra.mxu0 0
  %1033 = vmatprep.subr.bf16.mxu0 0
  %1034 = vmatpush1.bf16.xpose.msra.mxu0 0
  %1035 = vmatprep.subr.bf16.mxu0 0
  %1036 = vmatpush1.bf16.xpose.msra.mxu0 0
  %1037 = vmatprep.subr.bf16.mxu0 0
  %1038 = vmatpush1.bf16.xpose.msra.mxu0 0
  %1039 = vmatprep.subr.bf16.mxu0 0
  %1040 = vmatpush1.bf16.xpose.msra.mxu0 0
  %1041 = vmatprep.subr.bf16.mxu0 0
  %1042 = vmatpush1.bf16.xpose.msra.mxu0 0
  %1043 = vmatprep.subr.bf16.mxu0 0
  %1044 = vmatpush1.bf16.xpose.msra.mxu0 0
  %1045 = vmatprep.subr.bf16.mxu0 0
  %1046 = vmatpush1.bf16.xpose.msra.mxu0 0
  %1047 = vmatprep.subr.bf16.mxu0 0
  %1048 = vmatpush1.bf16.xpose.msra.mxu0 0
  %1049 = vmatprep.subr.bf16.mxu0 0
  %1050 = vmatpush1.bf16.xpose.msra.mxu0 0
  %1051 = vmatprep.mubr.bf16.mxu0 0
  %1052 = vmatmul.mubr.bf16.gmra.mrb[0].mxu0 %v1014
  %v1053 = vpop.f32.mrb[0].mxu0
  %v1054 = vadd.f32 %v318, %v1053
  %v1055 = vpop.f32.mrb[0].mxu0
  %v1056 = vpop.f32.mrb[0].mxu0
  %v1057 = vpop.f32.mrb[0].mxu0
  %1058 = vdwg.mxu0
  %1059 = vrot.lane.b32.xlu0 %v395, 112
  %v1060 = vpop.permute.xlu0 %1059
  %1061 = vrot.lane.b32.xlu0 %v395, 48
  %v1062 = vpop.permute.xlu0 %1061
  %v1064 = vsel %vm348, %v1060, 0
  %v1067 = vsel %vm348, %v1062, 0
  %1069 = vmatprep.subr.bf16.mxu0 0
  %1070 = vmatpush1.bf16.xpose.msra.mxu0 %v1067
  %1071 = vmatprep.subr.bf16.mxu0 0
  %1072 = vmatpush1.bf16.xpose.msra.mxu0 0
  %1073 = vmatprep.subr.bf16.mxu0 0
  %1074 = vmatpush1.bf16.xpose.msra.mxu0 0
  %1075 = vmatprep.subr.bf16.mxu0 0
  %1076 = vmatpush1.bf16.xpose.msra.mxu0 0
  %1077 = vmatprep.subr.bf16.mxu0 0
  %1078 = vmatpush1.bf16.xpose.msra.mxu0 0
  %1079 = vmatprep.subr.bf16.mxu0 0
  %1080 = vmatpush1.bf16.xpose.msra.mxu0 0
  %1081 = vmatprep.subr.bf16.mxu0 0
  %1082 = vmatpush1.bf16.xpose.msra.mxu0 0
  %1083 = vmatprep.subr.bf16.mxu0 0
  %1084 = vmatpush1.bf16.xpose.msra.mxu0 0
  %1085 = vmatprep.subr.bf16.mxu0 0
  %1086 = vmatpush1.bf16.xpose.msra.mxu0 0
  %1087 = vmatprep.subr.bf16.mxu0 0
  %1088 = vmatpush1.bf16.xpose.msra.mxu0 0
  %1089 = vmatprep.subr.bf16.mxu0 0
  %1090 = vmatpush1.bf16.xpose.msra.mxu0 0
  %1091 = vmatprep.subr.bf16.mxu0 0
  %1092 = vmatpush1.bf16.xpose.msra.mxu0 0
  %1093 = vmatprep.subr.bf16.mxu0 0
  %1094 = vmatpush1.bf16.xpose.msra.mxu0 0
  %1095 = vmatprep.subr.bf16.mxu0 0
  %1096 = vmatpush1.bf16.xpose.msra.mxu0 0
  %1097 = vmatprep.subr.bf16.mxu0 0
  %1098 = vmatpush1.bf16.xpose.msra.mxu0 0
  %1099 = vmatprep.subr.bf16.mxu0 0
  %1100 = vmatpush1.bf16.xpose.msra.mxu0 0
  %1101 = vmatprep.mubr.bf16.mxu0 0
  %1102 = vmatmul.mubr.bf16.gmra.mrb[0].mxu0 %v1064
  %v1103 = vpop.f32.mrb[0].mxu0
  %v1104 = vadd.f32 %v322, %v1103
  %v1105 = vpop.f32.mrb[0].mxu0
  %v1106 = vpop.f32.mrb[0].mxu0
  %v1107 = vpop.f32.mrb[0].mxu0
  %1108 = vdwg.mxu0
  %1109 = vrot.lane.b32.xlu0 %v444, 112
  %v1110 = vpop.permute.xlu0 %1109
  %1111 = vrot.lane.b32.xlu0 %v444, 48
  %v1112 = vpop.permute.xlu0 %1111
  %v1114 = vsel %vm348, %v1110, 0
  %v1117 = vsel %vm348, %v1112, 0
  %1119 = vmatprep.subr.bf16.mxu0 0
  %1120 = vmatpush1.bf16.xpose.msra.mxu0 %v1117
  %1121 = vmatprep.subr.bf16.mxu0 0
  %1122 = vmatpush1.bf16.xpose.msra.mxu0 0
  %1123 = vmatprep.subr.bf16.mxu0 0
  %1124 = vmatpush1.bf16.xpose.msra.mxu0 0
  %1125 = vmatprep.subr.bf16.mxu0 0
  %1126 = vmatpush1.bf16.xpose.msra.mxu0 0
  %1127 = vmatprep.subr.bf16.mxu0 0
  %1128 = vmatpush1.bf16.xpose.msra.mxu0 0
  %1129 = vmatprep.subr.bf16.mxu0 0
  %1130 = vmatpush1.bf16.xpose.msra.mxu0 0
  %1131 = vmatprep.subr.bf16.mxu0 0
  %1132 = vmatpush1.bf16.xpose.msra.mxu0 0
  %1133 = vmatprep.subr.bf16.mxu0 0
  %1134 = vmatpush1.bf16.xpose.msra.mxu0 0
  %1135 = vmatprep.subr.bf16.mxu0 0
  %1136 = vmatpush1.bf16.xpose.msra.mxu0 0
  %1137 = vmatprep.subr.bf16.mxu0 0
  %1138 = vmatpush1.bf16.xpose.msra.mxu0 0
  %1139 = vmatprep.subr.bf16.mxu0 0
  %1140 = vmatpush1.bf16.xpose.msra.mxu0 0
  %1141 = vmatprep.subr.bf16.mxu0 0
  %1142 = vmatpush1.bf16.xpose.msra.mxu0 0
  %1143 = vmatprep.subr.bf16.mxu0 0
  %1144 = vmatpush1.bf16.xpose.msra.mxu0 0
  %1145 = vmatprep.subr.bf16.mxu0 0
  %1146 = vmatpush1.bf16.xpose.msra.mxu0 0
  %1147 = vmatprep.subr.bf16.mxu0 0
  %1148 = vmatpush1.bf16.xpose.msra.mxu0 0
  %1149 = vmatprep.subr.bf16.mxu0 0
  %1150 = vmatpush1.bf16.xpose.msra.mxu0 0
  %1151 = vmatprep.mubr.bf16.mxu0 0
  %1152 = vmatmul.mubr.bf16.gmra.mrb[0].mxu0 %v1114
  %v1153 = vpop.f32.mrb[0].mxu0
  %v1154 = vadd.f32 %v326, %v1153
  %v1155 = vpop.f32.mrb[0].mxu0
  %v1156 = vpop.f32.mrb[0].mxu0
  %v1157 = vpop.f32.mrb[0].mxu0
  %1158 = vdwg.mxu0
  %1159 = vrot.lane.b32.xlu0 %v493, 112
  %v1160 = vpop.permute.xlu0 %1159
  %1161 = vrot.lane.b32.xlu0 %v493, 48
  %v1162 = vpop.permute.xlu0 %1161
  %v1164 = vsel %vm348, %v1160, 0
  %v1167 = vsel %vm348, %v1162, 0
  %1169 = vmatprep.subr.bf16.mxu0 0
  %1170 = vmatpush1.bf16.xpose.msra.mxu0 %v1167
  %1171 = vmatprep.subr.bf16.mxu0 0
  %1172 = vmatpush1.bf16.xpose.msra.mxu0 0
  %1173 = vmatprep.subr.bf16.mxu0 0
  %1174 = vmatpush1.bf16.xpose.msra.mxu0 0
  %1175 = vmatprep.subr.bf16.mxu0 0
  %1176 = vmatpush1.bf16.xpose.msra.mxu0 0
  %1177 = vmatprep.subr.bf16.mxu0 0
  %1178 = vmatpush1.bf16.xpose.msra.mxu0 0
  %1179 = vmatprep.subr.bf16.mxu0 0
  %1180 = vmatpush1.bf16.xpose.msra.mxu0 0
  %1181 = vmatprep.subr.bf16.mxu0 0
  %1182 = vmatpush1.bf16.xpose.msra.mxu0 0
  %1183 = vmatprep.subr.bf16.mxu0 0
  %1184 = vmatpush1.bf16.xpose.msra.mxu0 0
  %1185 = vmatprep.subr.bf16.mxu0 0
  %1186 = vmatpush1.bf16.xpose.msra.mxu0 0
  %1187 = vmatprep.subr.bf16.mxu0 0
  %1188 = vmatpush1.bf16.xpose.msra.mxu0 0
  %1189 = vmatprep.subr.bf16.mxu0 0
  %1190 = vmatpush1.bf16.xpose.msra.mxu0 0
  %1191 = vmatprep.subr.bf16.mxu0 0
  %1192 = vmatpush1.bf16.xpose.msra.mxu0 0
  %1193 = vmatprep.subr.bf16.mxu0 0
  %1194 = vmatpush1.bf16.xpose.msra.mxu0 0
  %1195 = vmatprep.subr.bf16.mxu0 0
  %1196 = vmatpush1.bf16.xpose.msra.mxu0 0
  %1197 = vmatprep.subr.bf16.mxu0 0
  %1198 = vmatpush1.bf16.xpose.msra.mxu0 0
  %1199 = vmatprep.subr.bf16.mxu0 0
  %1200 = vmatpush1.bf16.xpose.msra.mxu0 0
  %1201 = vmatprep.mubr.bf16.mxu0 0
  %1202 = vmatmul.mubr.bf16.gmra.mrb[0].mxu0 %v1164
  %v1203 = vpop.f32.mrb[0].mxu0
  %v1204 = vadd.f32 %v330, %v1203
  %v1205 = vpop.f32.mrb[0].mxu0
  %v1206 = vpop.f32.mrb[0].mxu0
  %v1207 = vpop.f32.mrb[0].mxu0
  %1208 = vdwg.mxu0
  %1209 = vrot.lane.b32.xlu0 %v542, 112
  %v1210 = vpop.permute.xlu0 %1209
  %1211 = vrot.lane.b32.xlu0 %v542, 48
  %v1212 = vpop.permute.xlu0 %1211
  %v1214 = vsel %vm348, %v1210, 0
  %v1217 = vsel %vm348, %v1212, 0
  %1219 = vmatprep.subr.bf16.mxu0 0
  %1220 = vmatpush1.bf16.xpose.msra.mxu0 %v1217
  %1221 = vmatprep.subr.bf16.mxu0 0
  %1222 = vmatpush1.bf16.xpose.msra.mxu0 0
  %1223 = vmatprep.subr.bf16.mxu0 0
  %1224 = vmatpush1.bf16.xpose.msra.mxu0 0
  %1225 = vmatprep.subr.bf16.mxu0 0
  %1226 = vmatpush1.bf16.xpose.msra.mxu0 0
  %1227 = vmatprep.subr.bf16.mxu0 0
  %1228 = vmatpush1.bf16.xpose.msra.mxu0 0
  %1229 = vmatprep.subr.bf16.mxu0 0
  %1230 = vmatpush1.bf16.xpose.msra.mxu0 0
  %1231 = vmatprep.subr.bf16.mxu0 0
  %1232 = vmatpush1.bf16.xpose.msra.mxu0 0
  %1233 = vmatprep.subr.bf16.mxu0 0
  %1234 = vmatpush1.bf16.xpose.msra.mxu0 0
  %1235 = vmatprep.subr.bf16.mxu0 0
  %1236 = vmatpush1.bf16.xpose.msra.mxu0 0
  %1237 = vmatprep.subr.bf16.mxu0 0
  %1238 = vmatpush1.bf16.xpose.msra.mxu0 0
  %1239 = vmatprep.subr.bf16.mxu0 0
  %1240 = vmatpush1.bf16.xpose.msra.mxu0 0
  %1241 = vmatprep.subr.bf16.mxu0 0
  %1242 = vmatpush1.bf16.xpose.msra.mxu0 0
  %1243 = vmatprep.subr.bf16.mxu0 0
  %1244 = vmatpush1.bf16.xpose.msra.mxu0 0
  %1245 = vmatprep.subr.bf16.mxu0 0
  %1246 = vmatpush1.bf16.xpose.msra.mxu0 0
  %1247 = vmatprep.subr.bf16.mxu0 0
  %1248 = vmatpush1.bf16.xpose.msra.mxu0 0
  %1249 = vmatprep.subr.bf16.mxu0 0
  %1250 = vmatpush1.bf16.xpose.msra.mxu0 0
  %1251 = vmatprep.mubr.bf16.mxu0 0
  %1252 = vmatmul.mubr.bf16.gmra.mrb[0].mxu0 %v1214
  %v1253 = vpop.f32.mrb[0].mxu0
  %v1254 = vadd.f32 %v334, %v1253
  %v1255 = vpop.f32.mrb[0].mxu0
  %v1256 = vpop.f32.mrb[0].mxu0
  %v1257 = vpop.f32.mrb[0].mxu0
  %1258 = vdwg.mxu0
  %1259 = vrot.lane.b32.xlu0 %v591, 112
  %v1260 = vpop.permute.xlu0 %1259
  %1261 = vrot.lane.b32.xlu0 %v591, 48
  %v1262 = vpop.permute.xlu0 %1261
  %v1264 = vsel %vm348, %v1260, 0
  %v1267 = vsel %vm348, %v1262, 0
  %1269 = vmatprep.subr.bf16.mxu0 0
  %1270 = vmatpush1.bf16.xpose.msra.mxu0 %v1267
  %1271 = vmatprep.subr.bf16.mxu0 0
  %1272 = vmatpush1.bf16.xpose.msra.mxu0 0
  %1273 = vmatprep.subr.bf16.mxu0 0
  %1274 = vmatpush1.bf16.xpose.msra.mxu0 0
  %1275 = vmatprep.subr.bf16.mxu0 0
  %1276 = vmatpush1.bf16.xpose.msra.mxu0 0
  %1277 = vmatprep.subr.bf16.mxu0 0
  %1278 = vmatpush1.bf16.xpose.msra.mxu0 0
  %1279 = vmatprep.subr.bf16.mxu0 0
  %1280 = vmatpush1.bf16.xpose.msra.mxu0 0
  %1281 = vmatprep.subr.bf16.mxu0 0
  %1282 = vmatpush1.bf16.xpose.msra.mxu0 0
  %1283 = vmatprep.subr.bf16.mxu0 0
  %1284 = vmatpush1.bf16.xpose.msra.mxu0 0
  %1285 = vmatprep.subr.bf16.mxu0 0
  %1286 = vmatpush1.bf16.xpose.msra.mxu0 0
  %1287 = vmatprep.subr.bf16.mxu0 0
  %1288 = vmatpush1.bf16.xpose.msra.mxu0 0
  %1289 = vmatprep.subr.bf16.mxu0 0
  %1290 = vmatpush1.bf16.xpose.msra.mxu0 0
  %1291 = vmatprep.subr.bf16.mxu0 0
  %1292 = vmatpush1.bf16.xpose.msra.mxu0 0
  %1293 = vmatprep.subr.bf16.mxu0 0
  %1294 = vmatpush1.bf16.xpose.msra.mxu0 0
  %1295 = vmatprep.subr.bf16.mxu0 0
  %1296 = vmatpush1.bf16.xpose.msra.mxu0 0
  %1297 = vmatprep.subr.bf16.mxu0 0
  %1298 = vmatpush1.bf16.xpose.msra.mxu0 0
  %1299 = vmatprep.subr.bf16.mxu0 0
  %1300 = vmatpush1.bf16.xpose.msra.mxu0 0
  %1301 = vmatprep.mubr.bf16.mxu0 0
  %1302 = vmatmul.mubr.bf16.gmra.mrb[0].mxu0 %v1264
  %v1303 = vpop.f32.mrb[0].mxu0
  %v1304 = vadd.f32 %v338, %v1303
  %v1305 = vpop.f32.mrb[0].mxu0
  %v1306 = vpop.f32.mrb[0].mxu0
  %v1307 = vpop.f32.mrb[0].mxu0
  %1308 = vdwg.mxu0
  %v1309 = vsel %vm640, %v1054, -inf
  %1310 = vmax.xlane.f32.xlu0 %v1309
  %v1311 = vpop.xlane.xlu0 %1310
  %v1312 = vsel %vm640, %v1104, -inf
  %1313 = vmax.xlane.f32.xlu0 %v1312
  %v1314 = vpop.xlane.xlu0 %1313
  %v1315 = vsel %vm640, %v1154, -inf
  %1316 = vmax.xlane.f32.xlu0 %v1315
  %v1317 = vpop.xlane.xlu0 %1316
  %v1318 = vsel %vm640, %v1204, -inf
  %1319 = vmax.xlane.f32.xlu0 %v1318
  %v1320 = vpop.xlane.xlu0 %1319
  %v1321 = vsel %vm640, %v1254, -inf
  %1322 = vmax.xlane.f32.xlu0 %v1321
  %v1323 = vpop.xlane.xlu0 %1322
  %v1324 = vsel %vm640, %v1304, -inf
  %1325 = vmax.xlane.f32.xlu0 %v1324
  %v1326 = vpop.xlane.xlu0 %1325
  %v1327 = vsub.f32 %v1054, %v1311
  %v1328 = vsub.f32 %v1104, %v1314
  %v1329 = vsub.f32 %v1154, %v1317
  %v1330 = vsub.f32 %v1204, %v1320
  %v1331 = vsub.f32 %v1254, %v1323
  %v1332 = vsub.f32 %v1304, %v1326
  %v1333 = vmul.f32 %v1327, 1.442695
  %v1334 = vpow.pop %v1333
  %v1335 = vmul.f32 %v1328, 1.442695
  %v1336 = vpow.pop %v1335
  %v1337 = vmul.f32 %v1329, 1.442695
  %v1338 = vpow.pop %v1337
  %v1339 = vmul.f32 %v1330, 1.442695
  %v1340 = vpow.pop %v1339
  %v1341 = vmul.f32 %v1331, 1.442695
  %v1342 = vpow.pop %v1341
  %v1343 = vmul.f32 %v1332, 1.442695
  %v1344 = vpow.pop %v1343
  %v1345 = vsel %vm640, %v1334, 0.0
  %1346 = vadd.xlane.f32.xlu0 %v1345
  %v1347 = vpop.xlane.xlu0 %1346
  %v1348 = vsel %vm640, %v1336, 0.0
  %1349 = vadd.xlane.f32.xlu0 %v1348
  %v1350 = vpop.xlane.xlu0 %1349
  %v1351 = vsel %vm640, %v1338, 0.0
  %1352 = vadd.xlane.f32.xlu0 %v1351
  %v1353 = vpop.xlane.xlu0 %1352
  %v1354 = vsel %vm640, %v1340, 0.0
  %1355 = vadd.xlane.f32.xlu0 %v1354
  %v1356 = vpop.xlane.xlu0 %1355
  %v1357 = vsel %vm640, %v1342, 0.0
  %1358 = vadd.xlane.f32.xlu0 %v1357
  %v1359 = vpop.xlane.xlu0 %1358
  %v1360 = vsel %vm640, %v1344, 0.0
  %1361 = vadd.xlane.f32.xlu0 %v1360
  %v1362 = vpop.xlane.xlu0 %1361
  %v1363 = vrcp.pop %v1347
  %v1364 = vrcp.pop %v1350
  %v1365 = vrcp.pop %v1353
  %v1366 = vrcp.pop %v1356
  %v1367 = vrcp.pop %v1359
  %v1368 = vrcp.pop %v1362
  %v1369 = vmul.f32 %v1334, %v1363
  %v1370 = vmul.f32 %v1336, %v1364
  %v1371 = vmul.f32 %v1338, %v1365
  %v1372 = vmul.f32 %v1340, %v1366
  %v1373 = vmul.f32 %v1342, %v1367
  %v1374 = vmul.f32 %v1344, %v1368
  %v1375 = vpack.c.bf16 %v1369, %v1369
  %v1376 = vpack.c.bf16 %v1370, %v1370
  %v1377 = vpack.c.bf16 %v1371, %v1371
  %v1378 = vpack.c.bf16 %v1372, %v1372
  %v1379 = vpack.c.bf16 %v1373, %v1373
  %v1380 = vpack.c.bf16 %v1374, %v1374
  %1381 = vrot.lane.b32.xlu0 %v297, 112
  %v1382 = vpop.permute.xlu0 %1381
  %v1383 = vrot.slane %v1382, 4
  %v1385 = vsel %vm640, %v1375, 0
  %v1388 = vsel %vm717, %v1383, 0
  %1390 = vmatprep.subr.bf16.mxu0 0
  %1391 = vmatpush1.bf16.msra.mxu0 %v1388
  %1392 = vmatprep.subr.bf16.mxu0 0
  %1393 = vmatpush1.bf16.msra.mxu0 0
  %1394 = vmatprep.subr.bf16.mxu0 0
  %1395 = vmatpush1.bf16.msra.mxu0 0
  %1396 = vmatprep.subr.bf16.mxu0 0
  %1397 = vmatpush1.bf16.msra.mxu0 0
  %1398 = vmatprep.subr.bf16.mxu0 0
  %1399 = vmatpush1.bf16.msra.mxu0 0
  %1400 = vmatprep.subr.bf16.mxu0 0
  %1401 = vmatpush1.bf16.msra.mxu0 0
  %1402 = vmatprep.subr.bf16.mxu0 0
  %1403 = vmatpush1.bf16.msra.mxu0 0
  %1404 = vmatprep.subr.bf16.mxu0 0
  %1405 = vmatpush1.bf16.msra.mxu0 0
  %1406 = vmatprep.subr.bf16.mxu0 0
  %1407 = vmatpush1.bf16.msra.mxu0 0
  %1408 = vmatprep.subr.bf16.mxu0 0
  %1409 = vmatpush1.bf16.msra.mxu0 0
  %1410 = vmatprep.subr.bf16.mxu0 0
  %1411 = vmatpush1.bf16.msra.mxu0 0
  %1412 = vmatprep.subr.bf16.mxu0 0
  %1413 = vmatpush1.bf16.msra.mxu0 0
  %1414 = vmatprep.subr.bf16.mxu0 0
  %1415 = vmatpush1.bf16.msra.mxu0 0
  %1416 = vmatprep.subr.bf16.mxu0 0
  %1417 = vmatpush1.bf16.msra.mxu0 0
  %1418 = vmatprep.subr.bf16.mxu0 0
  %1419 = vmatpush1.bf16.msra.mxu0 0
  %1420 = vmatprep.subr.bf16.mxu0 0
  %1421 = vmatpush1.bf16.msra.mxu0 0
  %1422 = vmatprep.mubr.bf16.mxu0 0
  %1423 = vmatmul.mubr.bf16.gmra.mrb[0].mxu0 %v1385
  %v1424 = vpop.f32.mrb[0].mxu0
  %v1425 = vadd.f32 0.0, %v1424
  %v1426 = vpop.f32.mrb[0].mxu0
  %v1427 = vpop.f32.mrb[0].mxu0
  %v1428 = vpop.f32.mrb[0].mxu0
  %1429 = vdwg.mxu0
  %1430 = vrot.lane.b32.xlu0 %v298, 112
  %v1431 = vpop.permute.xlu0 %1430
  %v1432 = vrot.slane %v1431, 4
  %v1434 = vsel %vm640, %v1376, 0
  %v1437 = vsel %vm717, %v1432, 0
  %1439 = vmatprep.subr.bf16.mxu0 0
  %1440 = vmatpush1.bf16.msra.mxu0 %v1437
  %1441 = vmatprep.subr.bf16.mxu0 0
  %1442 = vmatpush1.bf16.msra.mxu0 0
  %1443 = vmatprep.subr.bf16.mxu0 0
  %1444 = vmatpush1.bf16.msra.mxu0 0
  %1445 = vmatprep.subr.bf16.mxu0 0
  %1446 = vmatpush1.bf16.msra.mxu0 0
  %1447 = vmatprep.subr.bf16.mxu0 0
  %1448 = vmatpush1.bf16.msra.mxu0 0
  %1449 = vmatprep.subr.bf16.mxu0 0
  %1450 = vmatpush1.bf16.msra.mxu0 0
  %1451 = vmatprep.subr.bf16.mxu0 0
  %1452 = vmatpush1.bf16.msra.mxu0 0
  %1453 = vmatprep.subr.bf16.mxu0 0
  %1454 = vmatpush1.bf16.msra.mxu0 0
  %1455 = vmatprep.subr.bf16.mxu0 0
  %1456 = vmatpush1.bf16.msra.mxu0 0
  %1457 = vmatprep.subr.bf16.mxu0 0
  %1458 = vmatpush1.bf16.msra.mxu0 0
  %1459 = vmatprep.subr.bf16.mxu0 0
  %1460 = vmatpush1.bf16.msra.mxu0 0
  %1461 = vmatprep.subr.bf16.mxu0 0
  %1462 = vmatpush1.bf16.msra.mxu0 0
  %1463 = vmatprep.subr.bf16.mxu0 0
  %1464 = vmatpush1.bf16.msra.mxu0 0
  %1465 = vmatprep.subr.bf16.mxu0 0
  %1466 = vmatpush1.bf16.msra.mxu0 0
  %1467 = vmatprep.subr.bf16.mxu0 0
  %1468 = vmatpush1.bf16.msra.mxu0 0
  %1469 = vmatprep.subr.bf16.mxu0 0
  %1470 = vmatpush1.bf16.msra.mxu0 0
  %1471 = vmatprep.mubr.bf16.mxu0 0
  %1472 = vmatmul.mubr.bf16.gmra.mrb[0].mxu0 %v1434
  %v1473 = vpop.f32.mrb[0].mxu0
  %v1474 = vadd.f32 0.0, %v1473
  %v1475 = vpop.f32.mrb[0].mxu0
  %v1476 = vpop.f32.mrb[0].mxu0
  %v1477 = vpop.f32.mrb[0].mxu0
  %1478 = vdwg.mxu0
  %1479 = vrot.lane.b32.xlu0 %v299, 112
  %v1480 = vpop.permute.xlu0 %1479
  %v1481 = vrot.slane %v1480, 4
  %v1483 = vsel %vm640, %v1377, 0
  %v1486 = vsel %vm717, %v1481, 0
  %1488 = vmatprep.subr.bf16.mxu0 0
  %1489 = vmatpush1.bf16.msra.mxu0 %v1486
  %1490 = vmatprep.subr.bf16.mxu0 0
  %1491 = vmatpush1.bf16.msra.mxu0 0
  %1492 = vmatprep.subr.bf16.mxu0 0
  %1493 = vmatpush1.bf16.msra.mxu0 0
  %1494 = vmatprep.subr.bf16.mxu0 0
  %1495 = vmatpush1.bf16.msra.mxu0 0
  %1496 = vmatprep.subr.bf16.mxu0 0
  %1497 = vmatpush1.bf16.msra.mxu0 0
  %1498 = vmatprep.subr.bf16.mxu0 0
  %1499 = vmatpush1.bf16.msra.mxu0 0
  %1500 = vmatprep.subr.bf16.mxu0 0
  %1501 = vmatpush1.bf16.msra.mxu0 0
  %1502 = vmatprep.subr.bf16.mxu0 0
  %1503 = vmatpush1.bf16.msra.mxu0 0
  %1504 = vmatprep.subr.bf16.mxu0 0
  %1505 = vmatpush1.bf16.msra.mxu0 0
  %1506 = vmatprep.subr.bf16.mxu0 0
  %1507 = vmatpush1.bf16.msra.mxu0 0
  %1508 = vmatprep.subr.bf16.mxu0 0
  %1509 = vmatpush1.bf16.msra.mxu0 0
  %1510 = vmatprep.subr.bf16.mxu0 0
  %1511 = vmatpush1.bf16.msra.mxu0 0
  %1512 = vmatprep.subr.bf16.mxu0 0
  %1513 = vmatpush1.bf16.msra.mxu0 0
  %1514 = vmatprep.subr.bf16.mxu0 0
  %1515 = vmatpush1.bf16.msra.mxu0 0
  %1516 = vmatprep.subr.bf16.mxu0 0
  %1517 = vmatpush1.bf16.msra.mxu0 0
  %1518 = vmatprep.subr.bf16.mxu0 0
  %1519 = vmatpush1.bf16.msra.mxu0 0
  %1520 = vmatprep.mubr.bf16.mxu0 0
  %1521 = vmatmul.mubr.bf16.gmra.mrb[0].mxu0 %v1483
  %v1522 = vpop.f32.mrb[0].mxu0
  %v1523 = vadd.f32 0.0, %v1522
  %v1524 = vpop.f32.mrb[0].mxu0
  %v1525 = vpop.f32.mrb[0].mxu0
  %v1526 = vpop.f32.mrb[0].mxu0
  %1527 = vdwg.mxu0
  %1528 = vrot.lane.b32.xlu0 %v300, 112
  %v1529 = vpop.permute.xlu0 %1528
  %v1530 = vrot.slane %v1529, 4
  %v1532 = vsel %vm640, %v1378, 0
  %v1535 = vsel %vm717, %v1530, 0
  %1537 = vmatprep.subr.bf16.mxu0 0
  %1538 = vmatpush1.bf16.msra.mxu0 %v1535
  %1539 = vmatprep.subr.bf16.mxu0 0
  %1540 = vmatpush1.bf16.msra.mxu0 0
  %1541 = vmatprep.subr.bf16.mxu0 0
  %1542 = vmatpush1.bf16.msra.mxu0 0
  %1543 = vmatprep.subr.bf16.mxu0 0
  %1544 = vmatpush1.bf16.msra.mxu0 0
  %1545 = vmatprep.subr.bf16.mxu0 0
  %1546 = vmatpush1.bf16.msra.mxu0 0
  %1547 = vmatprep.subr.bf16.mxu0 0
  %1548 = vmatpush1.bf16.msra.mxu0 0
  %1549 = vmatprep.subr.bf16.mxu0 0
  %1550 = vmatpush1.bf16.msra.mxu0 0
  %1551 = vmatprep.subr.bf16.mxu0 0
  %1552 = vmatpush1.bf16.msra.mxu0 0
  %1553 = vmatprep.subr.bf16.mxu0 0
  %1554 = vmatpush1.bf16.msra.mxu0 0
  %1555 = vmatprep.subr.bf16.mxu0 0
  %1556 = vmatpush1.bf16.msra.mxu0 0
  %1557 = vmatprep.subr.bf16.mxu0 0
  %1558 = vmatpush1.bf16.msra.mxu0 0
  %1559 = vmatprep.subr.bf16.mxu0 0
  %1560 = vmatpush1.bf16.msra.mxu0 0
  %1561 = vmatprep.subr.bf16.mxu0 0
  %1562 = vmatpush1.bf16.msra.mxu0 0
  %1563 = vmatprep.subr.bf16.mxu0 0
  %1564 = vmatpush1.bf16.msra.mxu0 0
  %1565 = vmatprep.subr.bf16.mxu0 0
  %1566 = vmatpush1.bf16.msra.mxu0 0
  %1567 = vmatprep.subr.bf16.mxu0 0
  %1568 = vmatpush1.bf16.msra.mxu0 0
  %1569 = vmatprep.mubr.bf16.mxu0 0
  %1570 = vmatmul.mubr.bf16.gmra.mrb[0].mxu0 %v1532
  %v1571 = vpop.f32.mrb[0].mxu0
  %v1572 = vadd.f32 0.0, %v1571
  %v1573 = vpop.f32.mrb[0].mxu0
  %v1574 = vpop.f32.mrb[0].mxu0
  %v1575 = vpop.f32.mrb[0].mxu0
  %1576 = vdwg.mxu0
  %1577 = vrot.lane.b32.xlu0 %v301, 112
  %v1578 = vpop.permute.xlu0 %1577
  %v1579 = vrot.slane %v1578, 4
  %v1581 = vsel %vm640, %v1379, 0
  %v1584 = vsel %vm717, %v1579, 0
  %1586 = vmatprep.subr.bf16.mxu0 0
  %1587 = vmatpush1.bf16.msra.mxu0 %v1584
  %1588 = vmatprep.subr.bf16.mxu0 0
  %1589 = vmatpush1.bf16.msra.mxu0 0
  %1590 = vmatprep.subr.bf16.mxu0 0
  %1591 = vmatpush1.bf16.msra.mxu0 0
  %1592 = vmatprep.subr.bf16.mxu0 0
  %1593 = vmatpush1.bf16.msra.mxu0 0
  %1594 = vmatprep.subr.bf16.mxu0 0
  %1595 = vmatpush1.bf16.msra.mxu0 0
  %1596 = vmatprep.subr.bf16.mxu0 0
  %1597 = vmatpush1.bf16.msra.mxu0 0
  %1598 = vmatprep.subr.bf16.mxu0 0
  %1599 = vmatpush1.bf16.msra.mxu0 0
  %1600 = vmatprep.subr.bf16.mxu0 0
  %1601 = vmatpush1.bf16.msra.mxu0 0
  %1602 = vmatprep.subr.bf16.mxu0 0
  %1603 = vmatpush1.bf16.msra.mxu0 0
  %1604 = vmatprep.subr.bf16.mxu0 0
  %1605 = vmatpush1.bf16.msra.mxu0 0
  %1606 = vmatprep.subr.bf16.mxu0 0
  %1607 = vmatpush1.bf16.msra.mxu0 0
  %1608 = vmatprep.subr.bf16.mxu0 0
  %1609 = vmatpush1.bf16.msra.mxu0 0
  %1610 = vmatprep.subr.bf16.mxu0 0
  %1611 = vmatpush1.bf16.msra.mxu0 0
  %1612 = vmatprep.subr.bf16.mxu0 0
  %1613 = vmatpush1.bf16.msra.mxu0 0
  %1614 = vmatprep.subr.bf16.mxu0 0
  %1615 = vmatpush1.bf16.msra.mxu0 0
  %1616 = vmatprep.subr.bf16.mxu0 0
  %1617 = vmatpush1.bf16.msra.mxu0 0
  %1618 = vmatprep.mubr.bf16.mxu0 0
  %1619 = vmatmul.mubr.bf16.gmra.mrb[0].mxu0 %v1581
  %v1620 = vpop.f32.mrb[0].mxu0
  %v1621 = vadd.f32 0.0, %v1620
  %v1622 = vpop.f32.mrb[0].mxu0
  %v1623 = vpop.f32.mrb[0].mxu0
  %v1624 = vpop.f32.mrb[0].mxu0
  %1625 = vdwg.mxu0
  %1626 = vrot.lane.b32.xlu0 %v302, 112
  %v1627 = vpop.permute.xlu0 %1626
  %v1628 = vrot.slane %v1627, 4
  %v1630 = vsel %vm640, %v1380, 0
  %v1633 = vsel %vm717, %v1628, 0
  %1635 = vmatprep.subr.bf16.mxu0 0
  %1636 = vmatpush1.bf16.msra.mxu0 %v1633
  %1637 = vmatprep.subr.bf16.mxu0 0
  %1638 = vmatpush1.bf16.msra.mxu0 0
  %1639 = vmatprep.subr.bf16.mxu0 0
  %1640 = vmatpush1.bf16.msra.mxu0 0
  %1641 = vmatprep.subr.bf16.mxu0 0
  %1642 = vmatpush1.bf16.msra.mxu0 0
  %1643 = vmatprep.subr.bf16.mxu0 0
  %1644 = vmatpush1.bf16.msra.mxu0 0
  %1645 = vmatprep.subr.bf16.mxu0 0
  %1646 = vmatpush1.bf16.msra.mxu0 0
  %1647 = vmatprep.subr.bf16.mxu0 0
  %1648 = vmatpush1.bf16.msra.mxu0 0
  %1649 = vmatprep.subr.bf16.mxu0 0
  %1650 = vmatpush1.bf16.msra.mxu0 0
  %1651 = vmatprep.subr.bf16.mxu0 0
  %1652 = vmatpush1.bf16.msra.mxu0 0
  %1653 = vmatprep.subr.bf16.mxu0 0
  %1654 = vmatpush1.bf16.msra.mxu0 0
  %1655 = vmatprep.subr.bf16.mxu0 0
  %1656 = vmatpush1.bf16.msra.mxu0 0
  %1657 = vmatprep.subr.bf16.mxu0 0
  %1658 = vmatpush1.bf16.msra.mxu0 0
  %1659 = vmatprep.subr.bf16.mxu0 0
  %1660 = vmatpush1.bf16.msra.mxu0 0
  %1661 = vmatprep.subr.bf16.mxu0 0
  %1662 = vmatpush1.bf16.msra.mxu0 0
  %1663 = vmatprep.subr.bf16.mxu0 0
  %1664 = vmatpush1.bf16.msra.mxu0 0
  %1665 = vmatprep.subr.bf16.mxu0 0
  %1666 = vmatpush1.bf16.msra.mxu0 0
  %1667 = vmatprep.mubr.bf16.mxu0 0
  %1668 = vmatmul.mubr.bf16.gmra.mrb[0].mxu0 %v1630
  %v1669 = vpop.f32.mrb[0].mxu0
  %v1670 = vadd.f32 0.0, %v1669
  %v1671 = vpop.f32.mrb[0].mxu0
  %v1672 = vpop.f32.mrb[0].mxu0
  %v1673 = vpop.f32.mrb[0].mxu0
  %1674 = vdwg.mxu0
  %v1675 = vpack.c.bf16 %v1425, %v1425
  %v1676 = vpack.c.bf16 %v1474, %v1474
  %v1677 = vpack.c.bf16 %v1523, %v1523
  %v1678 = vpack.c.bf16 %v1572, %v1572
  %v1679 = vpack.c.bf16 %v1621, %v1621
  %v1680 = vpack.c.bf16 %v1670, %v1670
  %v1687 = vunpack.c.l.b16 %v1675
  %v1688 = vunpack.c.l.b16 %v1676
  %v1689 = vunpack.c.l.b16 %v1677
  %v1690 = vunpack.c.l.b16 %v1678
  %v1691 = vunpack.c.l.b16 %v1679
  %v1692 = vunpack.c.l.b16 %v1680
  %v1693 = vpack.c.b16 %v1687, %v1687
  %v1694 = vpack.c.b16 %v1688, %v1688
  %v1695 = vpack.c.b16 %v1689, %v1689
  %v1696 = vpack.c.b16 %v1690, %v1690
  %v1697 = vpack.c.b16 %v1691, %v1691
  %v1698 = vpack.c.b16 %v1692, %v1692
  %1699 = vrot.lane.b32.xlu0 %v1693, 16
  %v1700 = vpop.permute.xlu0 %1699
  %1701 = vrot.lane.b32.xlu0 %v1694, 16
  %v1702 = vpop.permute.xlu0 %1701
  %1703 = vrot.lane.b32.xlu0 %v1695, 16
  %v1704 = vpop.permute.xlu0 %1703
  %1705 = vrot.lane.b32.xlu0 %v1696, 16
  %v1706 = vpop.permute.xlu0 %1705
  %1707 = vrot.lane.b32.xlu0 %v1697, 16
  %v1708 = vpop.permute.xlu0 %1707
  %1709 = vrot.lane.b32.xlu0 %v1698, 16
  %v1710 = vpop.permute.xlu0 %1709
  %vm1717 = vcmask 257152
  %1718 = vst.msk [vmem:[#allocation2] sm:$0xf] %vm1717, %v1700
  %1719 = vst.msk [vmem:[#allocation2 + $0x4] sm:$0xf] %vm1717, %v1702
  %1720 = vst.msk [vmem:[#allocation2 + $0x8] sm:$0xf] %vm1717, %v1704
  %1721 = vst.msk [vmem:[#allocation2 + $0xc] sm:$0xf] %vm1717, %v1706
  %1722 = vst.msk [vmem:[#allocation2 + $0x10] sm:$0xf] %vm1717, %v1708
  %1723 = vst.msk [vmem:[#allocation2 + $0x14] sm:$0xf] %vm1717, %v1710
  %1724 = vrot.lane.b32.xlu0 %v345, 96
  %v1725 = vpop.permute.xlu0 %1724
  %1726 = vrot.lane.b32.xlu0 %v345, 32
  %v1727 = vpop.permute.xlu0 %1726
  %v1729 = vsel %vm348, %v1725, 0
  %v1732 = vsel %vm348, %v1727, 0
  %1734 = vmatprep.subr.bf16.mxu0 0
  %1735 = vmatpush1.bf16.xpose.msra.mxu0 %v1732
  %1736 = vmatprep.subr.bf16.mxu0 0
  %1737 = vmatpush1.bf16.xpose.msra.mxu0 0
  %1738 = vmatprep.subr.bf16.mxu0 0
  %1739 = vmatpush1.bf16.xpose.msra.mxu0 0
  %1740 = vmatprep.subr.bf16.mxu0 0
  %1741 = vmatpush1.bf16.xpose.msra.mxu0 0
  %1742 = vmatprep.subr.bf16.mxu0 0
  %1743 = vmatpush1.bf16.xpose.msra.mxu0 0
  %1744 = vmatprep.subr.bf16.mxu0 0
  %1745 = vmatpush1.bf16.xpose.msra.mxu0 0
  %1746 = vmatprep.subr.bf16.mxu0 0
  %1747 = vmatpush1.bf16.xpose.msra.mxu0 0
  %1748 = vmatprep.subr.bf16.mxu0 0
  %1749 = vmatpush1.bf16.xpose.msra.mxu0 0
  %1750 = vmatprep.subr.bf16.mxu0 0
  %1751 = vmatpush1.bf16.xpose.msra.mxu0 0
  %1752 = vmatprep.subr.bf16.mxu0 0
  %1753 = vmatpush1.bf16.xpose.msra.mxu0 0
  %1754 = vmatprep.subr.bf16.mxu0 0
  %1755 = vmatpush1.bf16.xpose.msra.mxu0 0
  %1756 = vmatprep.subr.bf16.mxu0 0
  %1757 = vmatpush1.bf16.xpose.msra.mxu0 0
  %1758 = vmatprep.subr.bf16.mxu0 0
  %1759 = vmatpush1.bf16.xpose.msra.mxu0 0
  %1760 = vmatprep.subr.bf16.mxu0 0
  %1761 = vmatpush1.bf16.xpose.msra.mxu0 0
  %1762 = vmatprep.subr.bf16.mxu0 0
  %1763 = vmatpush1.bf16.xpose.msra.mxu0 0
  %1764 = vmatprep.subr.bf16.mxu0 0
  %1765 = vmatpush1.bf16.xpose.msra.mxu0 0
  %1766 = vmatprep.mubr.bf16.mxu0 0
  %1767 = vmatmul.mubr.bf16.gmra.mrb[0].mxu0 %v1729
  %v1768 = vpop.f32.mrb[0].mxu0
  %v1769 = vadd.f32 %v318, %v1768
  %v1770 = vpop.f32.mrb[0].mxu0
  %v1771 = vpop.f32.mrb[0].mxu0
  %v1772 = vpop.f32.mrb[0].mxu0
  %1773 = vdwg.mxu0
  %1774 = vrot.lane.b32.xlu0 %v395, 96
  %v1775 = vpop.permute.xlu0 %1774
  %1776 = vrot.lane.b32.xlu0 %v395, 32
  %v1777 = vpop.permute.xlu0 %1776
  %v1779 = vsel %vm348, %v1775, 0
  %v1782 = vsel %vm348, %v1777, 0
  %1784 = vmatprep.subr.bf16.mxu0 0
  %1785 = vmatpush1.bf16.xpose.msra.mxu0 %v1782
  %1786 = vmatprep.subr.bf16.mxu0 0
  %1787 = vmatpush1.bf16.xpose.msra.mxu0 0
  %1788 = vmatprep.subr.bf16.mxu0 0
  %1789 = vmatpush1.bf16.xpose.msra.mxu0 0
  %1790 = vmatprep.subr.bf16.mxu0 0
  %1791 = vmatpush1.bf16.xpose.msra.mxu0 0
  %1792 = vmatprep.subr.bf16.mxu0 0
  %1793 = vmatpush1.bf16.xpose.msra.mxu0 0
  %1794 = vmatprep.subr.bf16.mxu0 0
  %1795 = vmatpush1.bf16.xpose.msra.mxu0 0
  %1796 = vmatprep.subr.bf16.mxu0 0
  %1797 = vmatpush1.bf16.xpose.msra.mxu0 0
  %1798 = vmatprep.subr.bf16.mxu0 0
  %1799 = vmatpush1.bf16.xpose.msra.mxu0 0
  %1800 = vmatprep.subr.bf16.mxu0 0
  %1801 = vmatpush1.bf16.xpose.msra.mxu0 0
  %1802 = vmatprep.subr.bf16.mxu0 0
  %1803 = vmatpush1.bf16.xpose.msra.mxu0 0
  %1804 = vmatprep.subr.bf16.mxu0 0
  %1805 = vmatpush1.bf16.xpose.msra.mxu0 0
  %1806 = vmatprep.subr.bf16.mxu0 0
  %1807 = vmatpush1.bf16.xpose.msra.mxu0 0
  %1808 = vmatprep.subr.bf16.mxu0 0
  %1809 = vmatpush1.bf16.xpose.msra.mxu0 0
  %1810 = vmatprep.subr.bf16.mxu0 0
  %1811 = vmatpush1.bf16.xpose.msra.mxu0 0
  %1812 = vmatprep.subr.bf16.mxu0 0
  %1813 = vmatpush1.bf16.xpose.msra.mxu0 0
  %1814 = vmatprep.subr.bf16.mxu0 0
  %1815 = vmatpush1.bf16.xpose.msra.mxu0 0
  %1816 = vmatprep.mubr.bf16.mxu0 0
  %1817 = vmatmul.mubr.bf16.gmra.mrb[0].mxu0 %v1779
  %v1818 = vpop.f32.mrb[0].mxu0
  %v1819 = vadd.f32 %v322, %v1818
  %v1820 = vpop.f32.mrb[0].mxu0
  %v1821 = vpop.f32.mrb[0].mxu0
  %v1822 = vpop.f32.mrb[0].mxu0
  %1823 = vdwg.mxu0
  %1824 = vrot.lane.b32.xlu0 %v444, 96
  %v1825 = vpop.permute.xlu0 %1824
  %1826 = vrot.lane.b32.xlu0 %v444, 32
  %v1827 = vpop.permute.xlu0 %1826
  %v1829 = vsel %vm348, %v1825, 0
  %v1832 = vsel %vm348, %v1827, 0
  %1834 = vmatprep.subr.bf16.mxu0 0
  %1835 = vmatpush1.bf16.xpose.msra.mxu0 %v1832
  %1836 = vmatprep.subr.bf16.mxu0 0
  %1837 = vmatpush1.bf16.xpose.msra.mxu0 0
  %1838 = vmatprep.subr.bf16.mxu0 0
  %1839 = vmatpush1.bf16.xpose.msra.mxu0 0
  %1840 = vmatprep.subr.bf16.mxu0 0
  %1841 = vmatpush1.bf16.xpose.msra.mxu0 0
  %1842 = vmatprep.subr.bf16.mxu0 0
  %1843 = vmatpush1.bf16.xpose.msra.mxu0 0
  %1844 = vmatprep.subr.bf16.mxu0 0
  %1845 = vmatpush1.bf16.xpose.msra.mxu0 0
  %1846 = vmatprep.subr.bf16.mxu0 0
  %1847 = vmatpush1.bf16.xpose.msra.mxu0 0
  %1848 = vmatprep.subr.bf16.mxu0 0
  %1849 = vmatpush1.bf16.xpose.msra.mxu0 0
  %1850 = vmatprep.subr.bf16.mxu0 0
  %1851 = vmatpush1.bf16.xpose.msra.mxu0 0
  %1852 = vmatprep.subr.bf16.mxu0 0
  %1853 = vmatpush1.bf16.xpose.msra.mxu0 0
  %1854 = vmatprep.subr.bf16.mxu0 0
  %1855 = vmatpush1.bf16.xpose.msra.mxu0 0
  %1856 = vmatprep.subr.bf16.mxu0 0
  %1857 = vmatpush1.bf16.xpose.msra.mxu0 0
  %1858 = vmatprep.subr.bf16.mxu0 0
  %1859 = vmatpush1.bf16.xpose.msra.mxu0 0
  %1860 = vmatprep.subr.bf16.mxu0 0
  %1861 = vmatpush1.bf16.xpose.msra.mxu0 0
  %1862 = vmatprep.subr.bf16.mxu0 0
  %1863 = vmatpush1.bf16.xpose.msra.mxu0 0
  %1864 = vmatprep.subr.bf16.mxu0 0
  %1865 = vmatpush1.bf16.xpose.msra.mxu0 0
  %1866 = vmatprep.mubr.bf16.mxu0 0
  %1867 = vmatmul.mubr.bf16.gmra.mrb[0].mxu0 %v1829
  %v1868 = vpop.f32.mrb[0].mxu0
  %v1869 = vadd.f32 %v326, %v1868
  %v1870 = vpop.f32.mrb[0].mxu0
  %v1871 = vpop.f32.mrb[0].mxu0
  %v1872 = vpop.f32.mrb[0].mxu0
  %1873 = vdwg.mxu0
  %1874 = vrot.lane.b32.xlu0 %v493, 96
  %v1875 = vpop.permute.xlu0 %1874
  %1876 = vrot.lane.b32.xlu0 %v493, 32
  %v1877 = vpop.permute.xlu0 %1876
  %v1879 = vsel %vm348, %v1875, 0
  %v1882 = vsel %vm348, %v1877, 0
  %1884 = vmatprep.subr.bf16.mxu0 0
  %1885 = vmatpush1.bf16.xpose.msra.mxu0 %v1882
  %1886 = vmatprep.subr.bf16.mxu0 0
  %1887 = vmatpush1.bf16.xpose.msra.mxu0 0
  %1888 = vmatprep.subr.bf16.mxu0 0
  %1889 = vmatpush1.bf16.xpose.msra.mxu0 0
  %1890 = vmatprep.subr.bf16.mxu0 0
  %1891 = vmatpush1.bf16.xpose.msra.mxu0 0
  %1892 = vmatprep.subr.bf16.mxu0 0
  %1893 = vmatpush1.bf16.xpose.msra.mxu0 0
  %1894 = vmatprep.subr.bf16.mxu0 0
  %1895 = vmatpush1.bf16.xpose.msra.mxu0 0
  %1896 = vmatprep.subr.bf16.mxu0 0
  %1897 = vmatpush1.bf16.xpose.msra.mxu0 0
  %1898 = vmatprep.subr.bf16.mxu0 0
  %1899 = vmatpush1.bf16.xpose.msra.mxu0 0
  %1900 = vmatprep.subr.bf16.mxu0 0
  %1901 = vmatpush1.bf16.xpose.msra.mxu0 0
  %1902 = vmatprep.subr.bf16.mxu0 0
  %1903 = vmatpush1.bf16.xpose.msra.mxu0 0
  %1904 = vmatprep.subr.bf16.mxu0 0
  %1905 = vmatpush1.bf16.xpose.msra.mxu0 0
  %1906 = vmatprep.subr.bf16.mxu0 0
  %1907 = vmatpush1.bf16.xpose.msra.mxu0 0
  %1908 = vmatprep.subr.bf16.mxu0 0
  %1909 = vmatpush1.bf16.xpose.msra.mxu0 0
  %1910 = vmatprep.subr.bf16.mxu0 0
  %1911 = vmatpush1.bf16.xpose.msra.mxu0 0
  %1912 = vmatprep.subr.bf16.mxu0 0
  %1913 = vmatpush1.bf16.xpose.msra.mxu0 0
  %1914 = vmatprep.subr.bf16.mxu0 0
  %1915 = vmatpush1.bf16.xpose.msra.mxu0 0
  %1916 = vmatprep.mubr.bf16.mxu0 0
  %1917 = vmatmul.mubr.bf16.gmra.mrb[0].mxu0 %v1879
  %v1918 = vpop.f32.mrb[0].mxu0
  %v1919 = vadd.f32 %v330, %v1918
  %v1920 = vpop.f32.mrb[0].mxu0
  %v1921 = vpop.f32.mrb[0].mxu0
  %v1922 = vpop.f32.mrb[0].mxu0
  %1923 = vdwg.mxu0
  %1924 = vrot.lane.b32.xlu0 %v542, 96
  %v1925 = vpop.permute.xlu0 %1924
  %1926 = vrot.lane.b32.xlu0 %v542, 32
  %v1927 = vpop.permute.xlu0 %1926
  %v1929 = vsel %vm348, %v1925, 0
  %v1932 = vsel %vm348, %v1927, 0
  %1934 = vmatprep.subr.bf16.mxu0 0
  %1935 = vmatpush1.bf16.xpose.msra.mxu0 %v1932
  %1936 = vmatprep.subr.bf16.mxu0 0
  %1937 = vmatpush1.bf16.xpose.msra.mxu0 0
  %1938 = vmatprep.subr.bf16.mxu0 0
  %1939 = vmatpush1.bf16.xpose.msra.mxu0 0
  %1940 = vmatprep.subr.bf16.mxu0 0
  %1941 = vmatpush1.bf16.xpose.msra.mxu0 0
  %1942 = vmatprep.subr.bf16.mxu0 0
  %1943 = vmatpush1.bf16.xpose.msra.mxu0 0
  %1944 = vmatprep.subr.bf16.mxu0 0
  %1945 = vmatpush1.bf16.xpose.msra.mxu0 0
  %1946 = vmatprep.subr.bf16.mxu0 0
  %1947 = vmatpush1.bf16.xpose.msra.mxu0 0
  %1948 = vmatprep.subr.bf16.mxu0 0
  %1949 = vmatpush1.bf16.xpose.msra.mxu0 0
  %1950 = vmatprep.subr.bf16.mxu0 0
  %1951 = vmatpush1.bf16.xpose.msra.mxu0 0
  %1952 = vmatprep.subr.bf16.mxu0 0
  %1953 = vmatpush1.bf16.xpose.msra.mxu0 0
  %1954 = vmatprep.subr.bf16.mxu0 0
  %1955 = vmatpush1.bf16.xpose.msra.mxu0 0
  %1956 = vmatprep.subr.bf16.mxu0 0
  %1957 = vmatpush1.bf16.xpose.msra.mxu0 0
  %1958 = vmatprep.subr.bf16.mxu0 0
  %1959 = vmatpush1.bf16.xpose.msra.mxu0 0
  %1960 = vmatprep.subr.bf16.mxu0 0
  %1961 = vmatpush1.bf16.xpose.msra.mxu0 0
  %1962 = vmatprep.subr.bf16.mxu0 0
  %1963 = vmatpush1.bf16.xpose.msra.mxu0 0
  %1964 = vmatprep.subr.bf16.mxu0 0
  %1965 = vmatpush1.bf16.xpose.msra.mxu0 0
  %1966 = vmatprep.mubr.bf16.mxu0 0
  %1967 = vmatmul.mubr.bf16.gmra.mrb[0].mxu0 %v1929
  %v1968 = vpop.f32.mrb[0].mxu0
  %v1969 = vadd.f32 %v334, %v1968
  %v1970 = vpop.f32.mrb[0].mxu0
  %v1971 = vpop.f32.mrb[0].mxu0
  %v1972 = vpop.f32.mrb[0].mxu0
  %1973 = vdwg.mxu0
  %1974 = vrot.lane.b32.xlu0 %v591, 96
  %v1975 = vpop.permute.xlu0 %1974
  %1976 = vrot.lane.b32.xlu0 %v591, 32
  %v1977 = vpop.permute.xlu0 %1976
  %v1979 = vsel %vm348, %v1975, 0
  %v1982 = vsel %vm348, %v1977, 0
  %1984 = vmatprep.subr.bf16.mxu0 0
  %1985 = vmatpush1.bf16.xpose.msra.mxu0 %v1982
  %1986 = vmatprep.subr.bf16.mxu0 0
  %1987 = vmatpush1.bf16.xpose.msra.mxu0 0
  %1988 = vmatprep.subr.bf16.mxu0 0
  %1989 = vmatpush1.bf16.xpose.msra.mxu0 0
  %1990 = vmatprep.subr.bf16.mxu0 0
  %1991 = vmatpush1.bf16.xpose.msra.mxu0 0
  %1992 = vmatprep.subr.bf16.mxu0 0
  %1993 = vmatpush1.bf16.xpose.msra.mxu0 0
  %1994 = vmatprep.subr.bf16.mxu0 0
  %1995 = vmatpush1.bf16.xpose.msra.mxu0 0
  %1996 = vmatprep.subr.bf16.mxu0 0
  %1997 = vmatpush1.bf16.xpose.msra.mxu0 0
  %1998 = vmatprep.subr.bf16.mxu0 0
  %1999 = vmatpush1.bf16.xpose.msra.mxu0 0
  %2000 = vmatprep.subr.bf16.mxu0 0
  %2001 = vmatpush1.bf16.xpose.msra.mxu0 0
  %2002 = vmatprep.subr.bf16.mxu0 0
  %2003 = vmatpush1.bf16.xpose.msra.mxu0 0
  %2004 = vmatprep.subr.bf16.mxu0 0
  %2005 = vmatpush1.bf16.xpose.msra.mxu0 0
  %2006 = vmatprep.subr.bf16.mxu0 0
  %2007 = vmatpush1.bf16.xpose.msra.mxu0 0
  %2008 = vmatprep.subr.bf16.mxu0 0
  %2009 = vmatpush1.bf16.xpose.msra.mxu0 0
  %2010 = vmatprep.subr.bf16.mxu0 0
  %2011 = vmatpush1.bf16.xpose.msra.mxu0 0
  %2012 = vmatprep.subr.bf16.mxu0 0
  %2013 = vmatpush1.bf16.xpose.msra.mxu0 0
  %2014 = vmatprep.subr.bf16.mxu0 0
  %2015 = vmatpush1.bf16.xpose.msra.mxu0 0
  %2016 = vmatprep.mubr.bf16.mxu0 0
  %2017 = vmatmul.mubr.bf16.gmra.mrb[0].mxu0 %v1979
  %v2018 = vpop.f32.mrb[0].mxu0
  %v2019 = vadd.f32 %v338, %v2018
  %v2020 = vpop.f32.mrb[0].mxu0
  %v2021 = vpop.f32.mrb[0].mxu0
  %v2022 = vpop.f32.mrb[0].mxu0
  %2023 = vdwg.mxu0
  %v2024 = vsel %vm640, %v1769, -inf
  %2025 = vmax.xlane.f32.xlu0 %v2024
  %v2026 = vpop.xlane.xlu0 %2025
  %v2027 = vsel %vm640, %v1819, -inf
  %2028 = vmax.xlane.f32.xlu0 %v2027
  %v2029 = vpop.xlane.xlu0 %2028
  %v2030 = vsel %vm640, %v1869, -inf
  %2031 = vmax.xlane.f32.xlu0 %v2030
  %v2032 = vpop.xlane.xlu0 %2031
  %v2033 = vsel %vm640, %v1919, -inf
  %2034 = vmax.xlane.f32.xlu0 %v2033
  %v2035 = vpop.xlane.xlu0 %2034
  %v2036 = vsel %vm640, %v1969, -inf
  %2037 = vmax.xlane.f32.xlu0 %v2036
  %v2038 = vpop.xlane.xlu0 %2037
  %v2039 = vsel %vm640, %v2019, -inf
  %2040 = vmax.xlane.f32.xlu0 %v2039
  %v2041 = vpop.xlane.xlu0 %2040
  %v2042 = vsub.f32 %v1769, %v2026
  %v2043 = vsub.f32 %v1819, %v2029
  %v2044 = vsub.f32 %v1869, %v2032
  %v2045 = vsub.f32 %v1919, %v2035
  %v2046 = vsub.f32 %v1969, %v2038
  %v2047 = vsub.f32 %v2019, %v2041
  %v2048 = vmul.f32 %v2042, 1.442695
  %v2049 = vpow.pop %v2048
  %v2050 = vmul.f32 %v2043, 1.442695
  %v2051 = vpow.pop %v2050
  %v2052 = vmul.f32 %v2044, 1.442695
  %v2053 = vpow.pop %v2052
  %v2054 = vmul.f32 %v2045, 1.442695
  %v2055 = vpow.pop %v2054
  %v2056 = vmul.f32 %v2046, 1.442695
  %v2057 = vpow.pop %v2056
  %v2058 = vmul.f32 %v2047, 1.442695
  %v2059 = vpow.pop %v2058
  %v2060 = vsel %vm640, %v2049, 0.0
  %2061 = vadd.xlane.f32.xlu0 %v2060
  %v2062 = vpop.xlane.xlu0 %2061
  %v2063 = vsel %vm640, %v2051, 0.0
  %2064 = vadd.xlane.f32.xlu0 %v2063
  %v2065 = vpop.xlane.xlu0 %2064
  %v2066 = vsel %vm640, %v2053, 0.0
  %2067 = vadd.xlane.f32.xlu0 %v2066
  %v2068 = vpop.xlane.xlu0 %2067
  %v2069 = vsel %vm640, %v2055, 0.0
  %2070 = vadd.xlane.f32.xlu0 %v2069
  %v2071 = vpop.xlane.xlu0 %2070
  %v2072 = vsel %vm640, %v2057, 0.0
  %2073 = vadd.xlane.f32.xlu0 %v2072
  %v2074 = vpop.xlane.xlu0 %2073
  %v2075 = vsel %vm640, %v2059, 0.0
  %2076 = vadd.xlane.f32.xlu0 %v2075
  %v2077 = vpop.xlane.xlu0 %2076
  %v2078 = vrcp.pop %v2062
  %v2079 = vrcp.pop %v2065
  %v2080 = vrcp.pop %v2068
  %v2081 = vrcp.pop %v2071
  %v2082 = vrcp.pop %v2074
  %v2083 = vrcp.pop %v2077
  %v2084 = vmul.f32 %v2049, %v2078
  %v2085 = vmul.f32 %v2051, %v2079
  %v2086 = vmul.f32 %v2053, %v2080
  %v2087 = vmul.f32 %v2055, %v2081
  %v2088 = vmul.f32 %v2057, %v2082
  %v2089 = vmul.f32 %v2059, %v2083
  %v2090 = vpack.c.bf16 %v2084, %v2084
  %v2091 = vpack.c.bf16 %v2085, %v2085
  %v2092 = vpack.c.bf16 %v2086, %v2086
  %v2093 = vpack.c.bf16 %v2087, %v2087
  %v2094 = vpack.c.bf16 %v2088, %v2088
  %v2095 = vpack.c.bf16 %v2089, %v2089
  %2096 = vrot.lane.b32.xlu0 %v297, 96
  %v2097 = vpop.permute.xlu0 %2096
  %v2098 = vrot.slane %v2097, 4
  %v2100 = vsel %vm640, %v2090, 0
  %v2103 = vsel %vm717, %v2098, 0
  %2105 = vmatprep.subr.bf16.mxu0 0
  %2106 = vmatpush1.bf16.msra.mxu0 %v2103
  %2107 = vmatprep.subr.bf16.mxu0 0
  %2108 = vmatpush1.bf16.msra.mxu0 0
  %2109 = vmatprep.subr.bf16.mxu0 0
  %2110 = vmatpush1.bf16.msra.mxu0 0
  %2111 = vmatprep.subr.bf16.mxu0 0
  %2112 = vmatpush1.bf16.msra.mxu0 0
  %2113 = vmatprep.subr.bf16.mxu0 0
  %2114 = vmatpush1.bf16.msra.mxu0 0
  %2115 = vmatprep.subr.bf16.mxu0 0
  %2116 = vmatpush1.bf16.msra.mxu0 0
  %2117 = vmatprep.subr.bf16.mxu0 0
  %2118 = vmatpush1.bf16.msra.mxu0 0
  %2119 = vmatprep.subr.bf16.mxu0 0
  %2120 = vmatpush1.bf16.msra.mxu0 0
  %2121 = vmatprep.subr.bf16.mxu0 0
  %2122 = vmatpush1.bf16.msra.mxu0 0
  %2123 = vmatprep.subr.bf16.mxu0 0
  %2124 = vmatpush1.bf16.msra.mxu0 0
  %2125 = vmatprep.subr.bf16.mxu0 0
  %2126 = vmatpush1.bf16.msra.mxu0 0
  %2127 = vmatprep.subr.bf16.mxu0 0
  %2128 = vmatpush1.bf16.msra.mxu0 0
  %2129 = vmatprep.subr.bf16.mxu0 0
  %2130 = vmatpush1.bf16.msra.mxu0 0
  %2131 = vmatprep.subr.bf16.mxu0 0
  %2132 = vmatpush1.bf16.msra.mxu0 0
  %2133 = vmatprep.subr.bf16.mxu0 0
  %2134 = vmatpush1.bf16.msra.mxu0 0
  %2135 = vmatprep.subr.bf16.mxu0 0
  %2136 = vmatpush1.bf16.msra.mxu0 0
  %2137 = vmatprep.mubr.bf16.mxu0 0
  %2138 = vmatmul.mubr.bf16.gmra.mrb[0].mxu0 %v2100
  %v2139 = vpop.f32.mrb[0].mxu0
  %v2140 = vadd.f32 0.0, %v2139
  %v2141 = vpop.f32.mrb[0].mxu0
  %v2142 = vpop.f32.mrb[0].mxu0
  %v2143 = vpop.f32.mrb[0].mxu0
  %2144 = vdwg.mxu0
  %2145 = vrot.lane.b32.xlu0 %v298, 96
  %v2146 = vpop.permute.xlu0 %2145
  %v2147 = vrot.slane %v2146, 4
  %v2149 = vsel %vm640, %v2091, 0
  %v2152 = vsel %vm717, %v2147, 0
  %2154 = vmatprep.subr.bf16.mxu0 0
  %2155 = vmatpush1.bf16.msra.mxu0 %v2152
  %2156 = vmatprep.subr.bf16.mxu0 0
  %2157 = vmatpush1.bf16.msra.mxu0 0
  %2158 = vmatprep.subr.bf16.mxu0 0
  %2159 = vmatpush1.bf16.msra.mxu0 0
  %2160 = vmatprep.subr.bf16.mxu0 0
  %2161 = vmatpush1.bf16.msra.mxu0 0
  %2162 = vmatprep.subr.bf16.mxu0 0
  %2163 = vmatpush1.bf16.msra.mxu0 0
  %2164 = vmatprep.subr.bf16.mxu0 0
  %2165 = vmatpush1.bf16.msra.mxu0 0
  %2166 = vmatprep.subr.bf16.mxu0 0
  %2167 = vmatpush1.bf16.msra.mxu0 0
  %2168 = vmatprep.subr.bf16.mxu0 0
  %2169 = vmatpush1.bf16.msra.mxu0 0
  %2170 = vmatprep.subr.bf16.mxu0 0
  %2171 = vmatpush1.bf16.msra.mxu0 0
  %2172 = vmatprep.subr.bf16.mxu0 0
  %2173 = vmatpush1.bf16.msra.mxu0 0
  %2174 = vmatprep.subr.bf16.mxu0 0
  %2175 = vmatpush1.bf16.msra.mxu0 0
  %2176 = vmatprep.subr.bf16.mxu0 0
  %2177 = vmatpush1.bf16.msra.mxu0 0
  %2178 = vmatprep.subr.bf16.mxu0 0
  %2179 = vmatpush1.bf16.msra.mxu0 0
  %2180 = vmatprep.subr.bf16.mxu0 0
  %2181 = vmatpush1.bf16.msra.mxu0 0
  %2182 = vmatprep.subr.bf16.mxu0 0
  %2183 = vmatpush1.bf16.msra.mxu0 0
  %2184 = vmatprep.subr.bf16.mxu0 0
  %2185 = vmatpush1.bf16.msra.mxu0 0
  %2186 = vmatprep.mubr.bf16.mxu0 0
  %2187 = vmatmul.mubr.bf16.gmra.mrb[0].mxu0 %v2149
  %v2188 = vpop.f32.mrb[0].mxu0
  %v2189 = vadd.f32 0.0, %v2188
  %v2190 = vpop.f32.mrb[0].mxu0
  %v2191 = vpop.f32.mrb[0].mxu0
  %v2192 = vpop.f32.mrb[0].mxu0
  %2193 = vdwg.mxu0
  %2194 = vrot.lane.b32.xlu0 %v299, 96
  %v2195 = vpop.permute.xlu0 %2194
  %v2196 = vrot.slane %v2195, 4
  %v2198 = vsel %vm640, %v2092, 0
  %v2201 = vsel %vm717, %v2196, 0
  %2203 = vmatprep.subr.bf16.mxu0 0
  %2204 = vmatpush1.bf16.msra.mxu0 %v2201
  %2205 = vmatprep.subr.bf16.mxu0 0
  %2206 = vmatpush1.bf16.msra.mxu0 0
  %2207 = vmatprep.subr.bf16.mxu0 0
  %2208 = vmatpush1.bf16.msra.mxu0 0
  %2209 = vmatprep.subr.bf16.mxu0 0
  %2210 = vmatpush1.bf16.msra.mxu0 0
  %2211 = vmatprep.subr.bf16.mxu0 0
  %2212 = vmatpush1.bf16.msra.mxu0 0
  %2213 = vmatprep.subr.bf16.mxu0 0
  %2214 = vmatpush1.bf16.msra.mxu0 0
  %2215 = vmatprep.subr.bf16.mxu0 0
  %2216 = vmatpush1.bf16.msra.mxu0 0
  %2217 = vmatprep.subr.bf16.mxu0 0
  %2218 = vmatpush1.bf16.msra.mxu0 0
  %2219 = vmatprep.subr.bf16.mxu0 0
  %2220 = vmatpush1.bf16.msra.mxu0 0
  %2221 = vmatprep.subr.bf16.mxu0 0
  %2222 = vmatpush1.bf16.msra.mxu0 0
  %2223 = vmatprep.subr.bf16.mxu0 0
  %2224 = vmatpush1.bf16.msra.mxu0 0
  %2225 = vmatprep.subr.bf16.mxu0 0
  %2226 = vmatpush1.bf16.msra.mxu0 0
  %2227 = vmatprep.subr.bf16.mxu0 0
  %2228 = vmatpush1.bf16.msra.mxu0 0
  %2229 = vmatprep.subr.bf16.mxu0 0
  %2230 = vmatpush1.bf16.msra.mxu0 0
  %2231 = vmatprep.subr.bf16.mxu0 0
  %2232 = vmatpush1.bf16.msra.mxu0 0
  %2233 = vmatprep.subr.bf16.mxu0 0
  %2234 = vmatpush1.bf16.msra.mxu0 0
  %2235 = vmatprep.mubr.bf16.mxu0 0
  %2236 = vmatmul.mubr.bf16.gmra.mrb[0].mxu0 %v2198
  %v2237 = vpop.f32.mrb[0].mxu0
  %v2238 = vadd.f32 0.0, %v2237
  %v2239 = vpop.f32.mrb[0].mxu0
  %v2240 = vpop.f32.mrb[0].mxu0
  %v2241 = vpop.f32.mrb[0].mxu0
  %2242 = vdwg.mxu0
  %2243 = vrot.lane.b32.xlu0 %v300, 96
  %v2244 = vpop.permute.xlu0 %2243
  %v2245 = vrot.slane %v2244, 4
  %v2247 = vsel %vm640, %v2093, 0
  %v2250 = vsel %vm717, %v2245, 0
  %2252 = vmatprep.subr.bf16.mxu0 0
  %2253 = vmatpush1.bf16.msra.mxu0 %v2250
  %2254 = vmatprep.subr.bf16.mxu0 0
  %2255 = vmatpush1.bf16.msra.mxu0 0
  %2256 = vmatprep.subr.bf16.mxu0 0
  %2257 = vmatpush1.bf16.msra.mxu0 0
  %2258 = vmatprep.subr.bf16.mxu0 0
  %2259 = vmatpush1.bf16.msra.mxu0 0
  %2260 = vmatprep.subr.bf16.mxu0 0
  %2261 = vmatpush1.bf16.msra.mxu0 0
  %2262 = vmatprep.subr.bf16.mxu0 0
  %2263 = vmatpush1.bf16.msra.mxu0 0
  %2264 = vmatprep.subr.bf16.mxu0 0
  %2265 = vmatpush1.bf16.msra.mxu0 0
  %2266 = vmatprep.subr.bf16.mxu0 0
  %2267 = vmatpush1.bf16.msra.mxu0 0
  %2268 = vmatprep.subr.bf16.mxu0 0
  %2269 = vmatpush1.bf16.msra.mxu0 0
  %2270 = vmatprep.subr.bf16.mxu0 0
  %2271 = vmatpush1.bf16.msra.mxu0 0
  %2272 = vmatprep.subr.bf16.mxu0 0
  %2273 = vmatpush1.bf16.msra.mxu0 0
  %2274 = vmatprep.subr.bf16.mxu0 0
  %2275 = vmatpush1.bf16.msra.mxu0 0
  %2276 = vmatprep.subr.bf16.mxu0 0
  %2277 = vmatpush1.bf16.msra.mxu0 0
  %2278 = vmatprep.subr.bf16.mxu0 0
  %2279 = vmatpush1.bf16.msra.mxu0 0
  %2280 = vmatprep.subr.bf16.mxu0 0
  %2281 = vmatpush1.bf16.msra.mxu0 0
  %2282 = vmatprep.subr.bf16.mxu0 0
  %2283 = vmatpush1.bf16.msra.mxu0 0
  %2284 = vmatprep.mubr.bf16.mxu0 0
  %2285 = vmatmul.mubr.bf16.gmra.mrb[0].mxu0 %v2247
  %v2286 = vpop.f32.mrb[0].mxu0
  %v2287 = vadd.f32 0.0, %v2286
  %v2288 = vpop.f32.mrb[0].mxu0
  %v2289 = vpop.f32.mrb[0].mxu0
  %v2290 = vpop.f32.mrb[0].mxu0
  %2291 = vdwg.mxu0
  %2292 = vrot.lane.b32.xlu0 %v301, 96
  %v2293 = vpop.permute.xlu0 %2292
  %v2294 = vrot.slane %v2293, 4
  %v2296 = vsel %vm640, %v2094, 0
  %v2299 = vsel %vm717, %v2294, 0
  %2301 = vmatprep.subr.bf16.mxu0 0
  %2302 = vmatpush1.bf16.msra.mxu0 %v2299
  %2303 = vmatprep.subr.bf16.mxu0 0
  %2304 = vmatpush1.bf16.msra.mxu0 0
  %2305 = vmatprep.subr.bf16.mxu0 0
  %2306 = vmatpush1.bf16.msra.mxu0 0
  %2307 = vmatprep.subr.bf16.mxu0 0
  %2308 = vmatpush1.bf16.msra.mxu0 0
  %2309 = vmatprep.subr.bf16.mxu0 0
  %2310 = vmatpush1.bf16.msra.mxu0 0
  %2311 = vmatprep.subr.bf16.mxu0 0
  %2312 = vmatpush1.bf16.msra.mxu0 0
  %2313 = vmatprep.subr.bf16.mxu0 0
  %2314 = vmatpush1.bf16.msra.mxu0 0
  %2315 = vmatprep.subr.bf16.mxu0 0
  %2316 = vmatpush1.bf16.msra.mxu0 0
  %2317 = vmatprep.subr.bf16.mxu0 0
  %2318 = vmatpush1.bf16.msra.mxu0 0
  %2319 = vmatprep.subr.bf16.mxu0 0
  %2320 = vmatpush1.bf16.msra.mxu0 0
  %2321 = vmatprep.subr.bf16.mxu0 0
  %2322 = vmatpush1.bf16.msra.mxu0 0
  %2323 = vmatprep.subr.bf16.mxu0 0
  %2324 = vmatpush1.bf16.msra.mxu0 0
  %2325 = vmatprep.subr.bf16.mxu0 0
  %2326 = vmatpush1.bf16.msra.mxu0 0
  %2327 = vmatprep.subr.bf16.mxu0 0
  %2328 = vmatpush1.bf16.msra.mxu0 0
  %2329 = vmatprep.subr.bf16.mxu0 0
  %2330 = vmatpush1.bf16.msra.mxu0 0
  %2331 = vmatprep.subr.bf16.mxu0 0
  %2332 = vmatpush1.bf16.msra.mxu0 0
  %2333 = vmatprep.mubr.bf16.mxu0 0
  %2334 = vmatmul.mubr.bf16.gmra.mrb[0].mxu0 %v2296
  %v2335 = vpop.f32.mrb[0].mxu0
  %v2336 = vadd.f32 0.0, %v2335
  %v2337 = vpop.f32.mrb[0].mxu0
  %v2338 = vpop.f32.mrb[0].mxu0
  %v2339 = vpop.f32.mrb[0].mxu0
  %2340 = vdwg.mxu0
  %2341 = vrot.lane.b32.xlu0 %v302, 96
  %v2342 = vpop.permute.xlu0 %2341
  %v2343 = vrot.slane %v2342, 4
  %v2345 = vsel %vm640, %v2095, 0
  %v2348 = vsel %vm717, %v2343, 0
  %2350 = vmatprep.subr.bf16.mxu0 0
  %2351 = vmatpush1.bf16.msra.mxu0 %v2348
  %2352 = vmatprep.subr.bf16.mxu0 0
  %2353 = vmatpush1.bf16.msra.mxu0 0
  %2354 = vmatprep.subr.bf16.mxu0 0
  %2355 = vmatpush1.bf16.msra.mxu0 0
  %2356 = vmatprep.subr.bf16.mxu0 0
  %2357 = vmatpush1.bf16.msra.mxu0 0
  %2358 = vmatprep.subr.bf16.mxu0 0
  %2359 = vmatpush1.bf16.msra.mxu0 0
  %2360 = vmatprep.subr.bf16.mxu0 0
  %2361 = vmatpush1.bf16.msra.mxu0 0
  %2362 = vmatprep.subr.bf16.mxu0 0
  %2363 = vmatpush1.bf16.msra.mxu0 0
  %2364 = vmatprep.subr.bf16.mxu0 0
  %2365 = vmatpush1.bf16.msra.mxu0 0
  %2366 = vmatprep.subr.bf16.mxu0 0
  %2367 = vmatpush1.bf16.msra.mxu0 0
  %2368 = vmatprep.subr.bf16.mxu0 0
  %2369 = vmatpush1.bf16.msra.mxu0 0
  %2370 = vmatprep.subr.bf16.mxu0 0
  %2371 = vmatpush1.bf16.msra.mxu0 0
  %2372 = vmatprep.subr.bf16.mxu0 0
  %2373 = vmatpush1.bf16.msra.mxu0 0
  %2374 = vmatprep.subr.bf16.mxu0 0
  %2375 = vmatpush1.bf16.msra.mxu0 0
  %2376 = vmatprep.subr.bf16.mxu0 0
  %2377 = vmatpush1.bf16.msra.mxu0 0
  %2378 = vmatprep.subr.bf16.mxu0 0
  %2379 = vmatpush1.bf16.msra.mxu0 0
  %2380 = vmatprep.subr.bf16.mxu0 0
  %2381 = vmatpush1.bf16.msra.mxu0 0
  %2382 = vmatprep.mubr.bf16.mxu0 0
  %2383 = vmatmul.mubr.bf16.gmra.mrb[0].mxu0 %v2345
  %v2384 = vpop.f32.mrb[0].mxu0
  %v2385 = vadd.f32 0.0, %v2384
  %v2386 = vpop.f32.mrb[0].mxu0
  %v2387 = vpop.f32.mrb[0].mxu0
  %v2388 = vpop.f32.mrb[0].mxu0
  %2389 = vdwg.mxu0
  %v2390 = vpack.c.bf16 %v2140, %v2140
  %v2391 = vpack.c.bf16 %v2189, %v2189
  %v2392 = vpack.c.bf16 %v2238, %v2238
  %v2393 = vpack.c.bf16 %v2287, %v2287
  %v2394 = vpack.c.bf16 %v2336, %v2336
  %v2395 = vpack.c.bf16 %v2385, %v2385
  %v2402 = vunpack.c.l.b16 %v2390
  %v2403 = vunpack.c.l.b16 %v2391
  %v2404 = vunpack.c.l.b16 %v2392
  %v2405 = vunpack.c.l.b16 %v2393
  %v2406 = vunpack.c.l.b16 %v2394
  %v2407 = vunpack.c.l.b16 %v2395
  %v2408 = vpack.c.b16 %v2402, %v2402
  %v2409 = vpack.c.b16 %v2403, %v2403
  %v2410 = vpack.c.b16 %v2404, %v2404
  %v2411 = vpack.c.b16 %v2405, %v2405
  %v2412 = vpack.c.b16 %v2406, %v2406
  %v2413 = vpack.c.b16 %v2407, %v2407
  %2414 = vrot.lane.b32.xlu0 %v2408, 32
  %v2415 = vpop.permute.xlu0 %2414
  %2416 = vrot.lane.b32.xlu0 %v2409, 32
  %v2417 = vpop.permute.xlu0 %2416
  %2418 = vrot.lane.b32.xlu0 %v2410, 32
  %v2419 = vpop.permute.xlu0 %2418
  %2420 = vrot.lane.b32.xlu0 %v2411, 32
  %v2421 = vpop.permute.xlu0 %2420
  %2422 = vrot.lane.b32.xlu0 %v2412, 32
  %v2423 = vpop.permute.xlu0 %2422
  %2424 = vrot.lane.b32.xlu0 %v2413, 32
  %v2425 = vpop.permute.xlu0 %2424
  %vm2432 = vcmask 388352
  %2433 = vst.msk [vmem:[#allocation2] sm:$0xf] %vm2432, %v2415
  %2434 = vst.msk [vmem:[#allocation2 + $0x4] sm:$0xf] %vm2432, %v2417
  %2435 = vst.msk [vmem:[#allocation2 + $0x8] sm:$0xf] %vm2432, %v2419
  %2436 = vst.msk [vmem:[#allocation2 + $0xc] sm:$0xf] %vm2432, %v2421
  %2437 = vst.msk [vmem:[#allocation2 + $0x10] sm:$0xf] %vm2432, %v2423
  %2438 = vst.msk [vmem:[#allocation2 + $0x14] sm:$0xf] %vm2432, %v2425
  %2439 = vrot.lane.b32.xlu0 %v345, 80
  %v2440 = vpop.permute.xlu0 %2439
  %2441 = vrot.lane.b32.xlu0 %v345, 16
  %v2442 = vpop.permute.xlu0 %2441
  %v2444 = vsel %vm348, %v2440, 0
  %v2447 = vsel %vm348, %v2442, 0
  %2449 = vmatprep.subr.bf16.mxu0 0
  %2450 = vmatpush1.bf16.xpose.msra.mxu0 %v2447
  %2451 = vmatprep.subr.bf16.mxu0 0
  %2452 = vmatpush1.bf16.xpose.msra.mxu0 0
  %2453 = vmatprep.subr.bf16.mxu0 0
  %2454 = vmatpush1.bf16.xpose.msra.mxu0 0
  %2455 = vmatprep.subr.bf16.mxu0 0
  %2456 = vmatpush1.bf16.xpose.msra.mxu0 0
  %2457 = vmatprep.subr.bf16.mxu0 0
  %2458 = vmatpush1.bf16.xpose.msra.mxu0 0
  %2459 = vmatprep.subr.bf16.mxu0 0
  %2460 = vmatpush1.bf16.xpose.msra.mxu0 0
  %2461 = vmatprep.subr.bf16.mxu0 0
  %2462 = vmatpush1.bf16.xpose.msra.mxu0 0
  %2463 = vmatprep.subr.bf16.mxu0 0
  %2464 = vmatpush1.bf16.xpose.msra.mxu0 0
  %2465 = vmatprep.subr.bf16.mxu0 0
  %2466 = vmatpush1.bf16.xpose.msra.mxu0 0
  %2467 = vmatprep.subr.bf16.mxu0 0
  %2468 = vmatpush1.bf16.xpose.msra.mxu0 0
  %2469 = vmatprep.subr.bf16.mxu0 0
  %2470 = vmatpush1.bf16.xpose.msra.mxu0 0
  %2471 = vmatprep.subr.bf16.mxu0 0
  %2472 = vmatpush1.bf16.xpose.msra.mxu0 0
  %2473 = vmatprep.subr.bf16.mxu0 0
  %2474 = vmatpush1.bf16.xpose.msra.mxu0 0
  %2475 = vmatprep.subr.bf16.mxu0 0
  %2476 = vmatpush1.bf16.xpose.msra.mxu0 0
  %2477 = vmatprep.subr.bf16.mxu0 0
  %2478 = vmatpush1.bf16.xpose.msra.mxu0 0
  %2479 = vmatprep.subr.bf16.mxu0 0
  %2480 = vmatpush1.bf16.xpose.msra.mxu0 0
  %2481 = vmatprep.mubr.bf16.mxu0 0
  %2482 = vmatmul.mubr.bf16.gmra.mrb[0].mxu0 %v2444
  %v2483 = vpop.f32.mrb[0].mxu0
  %v2484 = vadd.f32 %v318, %v2483
  %v2485 = vpop.f32.mrb[0].mxu0
  %v2486 = vpop.f32.mrb[0].mxu0
  %v2487 = vpop.f32.mrb[0].mxu0
  %2488 = vdwg.mxu0
  %2489 = vrot.lane.b32.xlu0 %v395, 80
  %v2490 = vpop.permute.xlu0 %2489
  %2491 = vrot.lane.b32.xlu0 %v395, 16
  %v2492 = vpop.permute.xlu0 %2491
  %v2494 = vsel %vm348, %v2490, 0
  %v2497 = vsel %vm348, %v2492, 0
  %2499 = vmatprep.subr.bf16.mxu0 0
  %2500 = vmatpush1.bf16.xpose.msra.mxu0 %v2497
  %2501 = vmatprep.subr.bf16.mxu0 0
  %2502 = vmatpush1.bf16.xpose.msra.mxu0 0
  %2503 = vmatprep.subr.bf16.mxu0 0
  %2504 = vmatpush1.bf16.xpose.msra.mxu0 0
  %2505 = vmatprep.subr.bf16.mxu0 0
  %2506 = vmatpush1.bf16.xpose.msra.mxu0 0
  %2507 = vmatprep.subr.bf16.mxu0 0
  %2508 = vmatpush1.bf16.xpose.msra.mxu0 0
  %2509 = vmatprep.subr.bf16.mxu0 0
  %2510 = vmatpush1.bf16.xpose.msra.mxu0 0
  %2511 = vmatprep.subr.bf16.mxu0 0
  %2512 = vmatpush1.bf16.xpose.msra.mxu0 0
  %2513 = vmatprep.subr.bf16.mxu0 0
  %2514 = vmatpush1.bf16.xpose.msra.mxu0 0
  %2515 = vmatprep.subr.bf16.mxu0 0
  %2516 = vmatpush1.bf16.xpose.msra.mxu0 0
  %2517 = vmatprep.subr.bf16.mxu0 0
  %2518 = vmatpush1.bf16.xpose.msra.mxu0 0
  %2519 = vmatprep.subr.bf16.mxu0 0
  %2520 = vmatpush1.bf16.xpose.msra.mxu0 0
  %2521 = vmatprep.subr.bf16.mxu0 0
  %2522 = vmatpush1.bf16.xpose.msra.mxu0 0
  %2523 = vmatprep.subr.bf16.mxu0 0
  %2524 = vmatpush1.bf16.xpose.msra.mxu0 0
  %2525 = vmatprep.subr.bf16.mxu0 0
  %2526 = vmatpush1.bf16.xpose.msra.mxu0 0
  %2527 = vmatprep.subr.bf16.mxu0 0
  %2528 = vmatpush1.bf16.xpose.msra.mxu0 0
  %2529 = vmatprep.subr.bf16.mxu0 0
  %2530 = vmatpush1.bf16.xpose.msra.mxu0 0
  %2531 = vmatprep.mubr.bf16.mxu0 0
  %2532 = vmatmul.mubr.bf16.gmra.mrb[0].mxu0 %v2494
  %v2533 = vpop.f32.mrb[0].mxu0
  %v2534 = vadd.f32 %v322, %v2533
  %v2535 = vpop.f32.mrb[0].mxu0
  %v2536 = vpop.f32.mrb[0].mxu0
  %v2537 = vpop.f32.mrb[0].mxu0
  %2538 = vdwg.mxu0
  %2539 = vrot.lane.b32.xlu0 %v444, 80
  %v2540 = vpop.permute.xlu0 %2539
  %2541 = vrot.lane.b32.xlu0 %v444, 16
  %v2542 = vpop.permute.xlu0 %2541
  %v2544 = vsel %vm348, %v2540, 0
  %v2547 = vsel %vm348, %v2542, 0
  %2549 = vmatprep.subr.bf16.mxu0 0
  %2550 = vmatpush1.bf16.xpose.msra.mxu0 %v2547
  %2551 = vmatprep.subr.bf16.mxu0 0
  %2552 = vmatpush1.bf16.xpose.msra.mxu0 0
  %2553 = vmatprep.subr.bf16.mxu0 0
  %2554 = vmatpush1.bf16.xpose.msra.mxu0 0
  %2555 = vmatprep.subr.bf16.mxu0 0
  %2556 = vmatpush1.bf16.xpose.msra.mxu0 0
  %2557 = vmatprep.subr.bf16.mxu0 0
  %2558 = vmatpush1.bf16.xpose.msra.mxu0 0
  %2559 = vmatprep.subr.bf16.mxu0 0
  %2560 = vmatpush1.bf16.xpose.msra.mxu0 0
  %2561 = vmatprep.subr.bf16.mxu0 0
  %2562 = vmatpush1.bf16.xpose.msra.mxu0 0
  %2563 = vmatprep.subr.bf16.mxu0 0
  %2564 = vmatpush1.bf16.xpose.msra.mxu0 0
  %2565 = vmatprep.subr.bf16.mxu0 0
  %2566 = vmatpush1.bf16.xpose.msra.mxu0 0
  %2567 = vmatprep.subr.bf16.mxu0 0
  %2568 = vmatpush1.bf16.xpose.msra.mxu0 0
  %2569 = vmatprep.subr.bf16.mxu0 0
  %2570 = vmatpush1.bf16.xpose.msra.mxu0 0
  %2571 = vmatprep.subr.bf16.mxu0 0
  %2572 = vmatpush1.bf16.xpose.msra.mxu0 0
  %2573 = vmatprep.subr.bf16.mxu0 0
  %2574 = vmatpush1.bf16.xpose.msra.mxu0 0
  %2575 = vmatprep.subr.bf16.mxu0 0
  %2576 = vmatpush1.bf16.xpose.msra.mxu0 0
  %2577 = vmatprep.subr.bf16.mxu0 0
  %2578 = vmatpush1.bf16.xpose.msra.mxu0 0
  %2579 = vmatprep.subr.bf16.mxu0 0
  %2580 = vmatpush1.bf16.xpose.msra.mxu0 0
  %2581 = vmatprep.mubr.bf16.mxu0 0
  %2582 = vmatmul.mubr.bf16.gmra.mrb[0].mxu0 %v2544
  %v2583 = vpop.f32.mrb[0].mxu0
  %v2584 = vadd.f32 %v326, %v2583
  %v2585 = vpop.f32.mrb[0].mxu0
  %v2586 = vpop.f32.mrb[0].mxu0
  %v2587 = vpop.f32.mrb[0].mxu0
  %2588 = vdwg.mxu0
  %2589 = vrot.lane.b32.xlu0 %v493, 80
  %v2590 = vpop.permute.xlu0 %2589
  %2591 = vrot.lane.b32.xlu0 %v493, 16
  %v2592 = vpop.permute.xlu0 %2591
  %v2594 = vsel %vm348, %v2590, 0
  %v2597 = vsel %vm348, %v2592, 0
  %2599 = vmatprep.subr.bf16.mxu0 0
  %2600 = vmatpush1.bf16.xpose.msra.mxu0 %v2597
  %2601 = vmatprep.subr.bf16.mxu0 0
  %2602 = vmatpush1.bf16.xpose.msra.mxu0 0
  %2603 = vmatprep.subr.bf16.mxu0 0
  %2604 = vmatpush1.bf16.xpose.msra.mxu0 0
  %2605 = vmatprep.subr.bf16.mxu0 0
  %2606 = vmatpush1.bf16.xpose.msra.mxu0 0
  %2607 = vmatprep.subr.bf16.mxu0 0
  %2608 = vmatpush1.bf16.xpose.msra.mxu0 0
  %2609 = vmatprep.subr.bf16.mxu0 0
  %2610 = vmatpush1.bf16.xpose.msra.mxu0 0
  %2611 = vmatprep.subr.bf16.mxu0 0
  %2612 = vmatpush1.bf16.xpose.msra.mxu0 0
  %2613 = vmatprep.subr.bf16.mxu0 0
  %2614 = vmatpush1.bf16.xpose.msra.mxu0 0
  %2615 = vmatprep.subr.bf16.mxu0 0
  %2616 = vmatpush1.bf16.xpose.msra.mxu0 0
  %2617 = vmatprep.subr.bf16.mxu0 0
  %2618 = vmatpush1.bf16.xpose.msra.mxu0 0
  %2619 = vmatprep.subr.bf16.mxu0 0
  %2620 = vmatpush1.bf16.xpose.msra.mxu0 0
  %2621 = vmatprep.subr.bf16.mxu0 0
  %2622 = vmatpush1.bf16.xpose.msra.mxu0 0
  %2623 = vmatprep.subr.bf16.mxu0 0
  %2624 = vmatpush1.bf16.xpose.msra.mxu0 0
  %2625 = vmatprep.subr.bf16.mxu0 0
  %2626 = vmatpush1.bf16.xpose.msra.mxu0 0
  %2627 = vmatprep.subr.bf16.mxu0 0
  %2628 = vmatpush1.bf16.xpose.msra.mxu0 0
  %2629 = vmatprep.subr.bf16.mxu0 0
  %2630 = vmatpush1.bf16.xpose.msra.mxu0 0
  %2631 = vmatprep.mubr.bf16.mxu0 0
  %2632 = vmatmul.mubr.bf16.gmra.mrb[0].mxu0 %v2594
  %v2633 = vpop.f32.mrb[0].mxu0
  %v2634 = vadd.f32 %v330, %v2633
  %v2635 = vpop.f32.mrb[0].mxu0
  %v2636 = vpop.f32.mrb[0].mxu0
  %v2637 = vpop.f32.mrb[0].mxu0
  %2638 = vdwg.mxu0
  %2639 = vrot.lane.b32.xlu0 %v542, 80
  %v2640 = vpop.permute.xlu0 %2639
  %2641 = vrot.lane.b32.xlu0 %v542, 16
  %v2642 = vpop.permute.xlu0 %2641
  %v2644 = vsel %vm348, %v2640, 0
  %v2647 = vsel %vm348, %v2642, 0
  %2649 = vmatprep.subr.bf16.mxu0 0
  %2650 = vmatpush1.bf16.xpose.msra.mxu0 %v2647
  %2651 = vmatprep.subr.bf16.mxu0 0
  %2652 = vmatpush1.bf16.xpose.msra.mxu0 0
  %2653 = vmatprep.subr.bf16.mxu0 0
  %2654 = vmatpush1.bf16.xpose.msra.mxu0 0
  %2655 = vmatprep.subr.bf16.mxu0 0
  %2656 = vmatpush1.bf16.xpose.msra.mxu0 0
  %2657 = vmatprep.subr.bf16.mxu0 0
  %2658 = vmatpush1.bf16.xpose.msra.mxu0 0
  %2659 = vmatprep.subr.bf16.mxu0 0
  %2660 = vmatpush1.bf16.xpose.msra.mxu0 0
  %2661 = vmatprep.subr.bf16.mxu0 0
  %2662 = vmatpush1.bf16.xpose.msra.mxu0 0
  %2663 = vmatprep.subr.bf16.mxu0 0
  %2664 = vmatpush1.bf16.xpose.msra.mxu0 0
  %2665 = vmatprep.subr.bf16.mxu0 0
  %2666 = vmatpush1.bf16.xpose.msra.mxu0 0
  %2667 = vmatprep.subr.bf16.mxu0 0
  %2668 = vmatpush1.bf16.xpose.msra.mxu0 0
  %2669 = vmatprep.subr.bf16.mxu0 0
  %2670 = vmatpush1.bf16.xpose.msra.mxu0 0
  %2671 = vmatprep.subr.bf16.mxu0 0
  %2672 = vmatpush1.bf16.xpose.msra.mxu0 0
  %2673 = vmatprep.subr.bf16.mxu0 0
  %2674 = vmatpush1.bf16.xpose.msra.mxu0 0
  %2675 = vmatprep.subr.bf16.mxu0 0
  %2676 = vmatpush1.bf16.xpose.msra.mxu0 0
  %2677 = vmatprep.subr.bf16.mxu0 0
  %2678 = vmatpush1.bf16.xpose.msra.mxu0 0
  %2679 = vmatprep.subr.bf16.mxu0 0
  %2680 = vmatpush1.bf16.xpose.msra.mxu0 0
  %2681 = vmatprep.mubr.bf16.mxu0 0
  %2682 = vmatmul.mubr.bf16.gmra.mrb[0].mxu0 %v2644
  %v2683 = vpop.f32.mrb[0].mxu0
  %v2684 = vadd.f32 %v334, %v2683
  %v2685 = vpop.f32.mrb[0].mxu0
  %v2686 = vpop.f32.mrb[0].mxu0
  %v2687 = vpop.f32.mrb[0].mxu0
  %2688 = vdwg.mxu0
  %2689 = vrot.lane.b32.xlu0 %v591, 80
  %v2690 = vpop.permute.xlu0 %2689
  %2691 = vrot.lane.b32.xlu0 %v591, 16
  %v2692 = vpop.permute.xlu0 %2691
  %v2694 = vsel %vm348, %v2690, 0
  %v2697 = vsel %vm348, %v2692, 0
  %2699 = vmatprep.subr.bf16.mxu0 0
  %2700 = vmatpush1.bf16.xpose.msra.mxu0 %v2697
  %2701 = vmatprep.subr.bf16.mxu0 0
  %2702 = vmatpush1.bf16.xpose.msra.mxu0 0
  %2703 = vmatprep.subr.bf16.mxu0 0
  %2704 = vmatpush1.bf16.xpose.msra.mxu0 0
  %2705 = vmatprep.subr.bf16.mxu0 0
  %2706 = vmatpush1.bf16.xpose.msra.mxu0 0
  %2707 = vmatprep.subr.bf16.mxu0 0
  %2708 = vmatpush1.bf16.xpose.msra.mxu0 0
  %2709 = vmatprep.subr.bf16.mxu0 0
  %2710 = vmatpush1.bf16.xpose.msra.mxu0 0
  %2711 = vmatprep.subr.bf16.mxu0 0
  %2712 = vmatpush1.bf16.xpose.msra.mxu0 0
  %2713 = vmatprep.subr.bf16.mxu0 0
  %2714 = vmatpush1.bf16.xpose.msra.mxu0 0
  %2715 = vmatprep.subr.bf16.mxu0 0
  %2716 = vmatpush1.bf16.xpose.msra.mxu0 0
  %2717 = vmatprep.subr.bf16.mxu0 0
  %2718 = vmatpush1.bf16.xpose.msra.mxu0 0
  %2719 = vmatprep.subr.bf16.mxu0 0
  %2720 = vmatpush1.bf16.xpose.msra.mxu0 0
  %2721 = vmatprep.subr.bf16.mxu0 0
  %2722 = vmatpush1.bf16.xpose.msra.mxu0 0
  %2723 = vmatprep.subr.bf16.mxu0 0
  %2724 = vmatpush1.bf16.xpose.msra.mxu0 0
  %2725 = vmatprep.subr.bf16.mxu0 0
  %2726 = vmatpush1.bf16.xpose.msra.mxu0 0
  %2727 = vmatprep.subr.bf16.mxu0 0
  %2728 = vmatpush1.bf16.xpose.msra.mxu0 0
  %2729 = vmatprep.subr.bf16.mxu0 0
  %2730 = vmatpush1.bf16.xpose.msra.mxu0 0
  %2731 = vmatprep.mubr.bf16.mxu0 0
  %2732 = vmatmul.mubr.bf16.gmra.mrb[0].mxu0 %v2694
  %v2733 = vpop.f32.mrb[0].mxu0
  %v2734 = vadd.f32 %v338, %v2733
  %v2735 = vpop.f32.mrb[0].mxu0
  %v2736 = vpop.f32.mrb[0].mxu0
  %v2737 = vpop.f32.mrb[0].mxu0
  %2738 = vdwg.mxu0
  %v2739 = vsel %vm640, %v2484, -inf
  %2740 = vmax.xlane.f32.xlu0 %v2739
  %v2741 = vpop.xlane.xlu0 %2740
  %v2742 = vsel %vm640, %v2534, -inf
  %2743 = vmax.xlane.f32.xlu0 %v2742
  %v2744 = vpop.xlane.xlu0 %2743
  %v2745 = vsel %vm640, %v2584, -inf
  %2746 = vmax.xlane.f32.xlu0 %v2745
  %v2747 = vpop.xlane.xlu0 %2746
  %v2748 = vsel %vm640, %v2634, -inf
  %2749 = vmax.xlane.f32.xlu0 %v2748
  %v2750 = vpop.xlane.xlu0 %2749
  %v2751 = vsel %vm640, %v2684, -inf
  %2752 = vmax.xlane.f32.xlu0 %v2751
  %v2753 = vpop.xlane.xlu0 %2752
  %v2754 = vsel %vm640, %v2734, -inf
  %2755 = vmax.xlane.f32.xlu0 %v2754
  %v2756 = vpop.xlane.xlu0 %2755
  %v2757 = vsub.f32 %v2484, %v2741
  %v2758 = vsub.f32 %v2534, %v2744
  %v2759 = vsub.f32 %v2584, %v2747
  %v2760 = vsub.f32 %v2634, %v2750
  %v2761 = vsub.f32 %v2684, %v2753
  %v2762 = vsub.f32 %v2734, %v2756
  %v2763 = vmul.f32 %v2757, 1.442695
  %v2764 = vpow.pop %v2763
  %v2765 = vmul.f32 %v2758, 1.442695
  %v2766 = vpow.pop %v2765
  %v2767 = vmul.f32 %v2759, 1.442695
  %v2768 = vpow.pop %v2767
  %v2769 = vmul.f32 %v2760, 1.442695
  %v2770 = vpow.pop %v2769
  %v2771 = vmul.f32 %v2761, 1.442695
  %v2772 = vpow.pop %v2771
  %v2773 = vmul.f32 %v2762, 1.442695
  %v2774 = vpow.pop %v2773
  %v2775 = vsel %vm640, %v2764, 0.0
  %2776 = vadd.xlane.f32.xlu0 %v2775
  %v2777 = vpop.xlane.xlu0 %2776
  %v2778 = vsel %vm640, %v2766, 0.0
  %2779 = vadd.xlane.f32.xlu0 %v2778
  %v2780 = vpop.xlane.xlu0 %2779
  %v2781 = vsel %vm640, %v2768, 0.0
  %2782 = vadd.xlane.f32.xlu0 %v2781
  %v2783 = vpop.xlane.xlu0 %2782
  %v2784 = vsel %vm640, %v2770, 0.0
  %2785 = vadd.xlane.f32.xlu0 %v2784
  %v2786 = vpop.xlane.xlu0 %2785
  %v2787 = vsel %vm640, %v2772, 0.0
  %2788 = vadd.xlane.f32.xlu0 %v2787
  %v2789 = vpop.xlane.xlu0 %2788
  %v2790 = vsel %vm640, %v2774, 0.0
  %2791 = vadd.xlane.f32.xlu0 %v2790
  %v2792 = vpop.xlane.xlu0 %2791
  %v2793 = vrcp.pop %v2777
  %v2794 = vrcp.pop %v2780
  %v2795 = vrcp.pop %v2783
  %v2796 = vrcp.pop %v2786
  %v2797 = vrcp.pop %v2789
  %v2798 = vrcp.pop %v2792
  %v2799 = vmul.f32 %v2764, %v2793
  %v2800 = vmul.f32 %v2766, %v2794
  %v2801 = vmul.f32 %v2768, %v2795
  %v2802 = vmul.f32 %v2770, %v2796
  %v2803 = vmul.f32 %v2772, %v2797
  %v2804 = vmul.f32 %v2774, %v2798
  %v2805 = vpack.c.bf16 %v2799, %v2799
  %v2806 = vpack.c.bf16 %v2800, %v2800
  %v2807 = vpack.c.bf16 %v2801, %v2801
  %v2808 = vpack.c.bf16 %v2802, %v2802
  %v2809 = vpack.c.bf16 %v2803, %v2803
  %v2810 = vpack.c.bf16 %v2804, %v2804
  %2811 = vrot.lane.b32.xlu0 %v297, 80
  %v2812 = vpop.permute.xlu0 %2811
  %v2813 = vrot.slane %v2812, 4
  %v2815 = vsel %vm640, %v2805, 0
  %v2818 = vsel %vm717, %v2813, 0
  %2820 = vmatprep.subr.bf16.mxu0 0
  %2821 = vmatpush1.bf16.msra.mxu0 %v2818
  %2822 = vmatprep.subr.bf16.mxu0 0
  %2823 = vmatpush1.bf16.msra.mxu0 0
  %2824 = vmatprep.subr.bf16.mxu0 0
  %2825 = vmatpush1.bf16.msra.mxu0 0
  %2826 = vmatprep.subr.bf16.mxu0 0
  %2827 = vmatpush1.bf16.msra.mxu0 0
  %2828 = vmatprep.subr.bf16.mxu0 0
  %2829 = vmatpush1.bf16.msra.mxu0 0
  %2830 = vmatprep.subr.bf16.mxu0 0
  %2831 = vmatpush1.bf16.msra.mxu0 0
  %2832 = vmatprep.subr.bf16.mxu0 0
  %2833 = vmatpush1.bf16.msra.mxu0 0
  %2834 = vmatprep.subr.bf16.mxu0 0
  %2835 = vmatpush1.bf16.msra.mxu0 0
  %2836 = vmatprep.subr.bf16.mxu0 0
  %2837 = vmatpush1.bf16.msra.mxu0 0
  %2838 = vmatprep.subr.bf16.mxu0 0
  %2839 = vmatpush1.bf16.msra.mxu0 0
  %2840 = vmatprep.subr.bf16.mxu0 0
  %2841 = vmatpush1.bf16.msra.mxu0 0
  %2842 = vmatprep.subr.bf16.mxu0 0
  %2843 = vmatpush1.bf16.msra.mxu0 0
  %2844 = vmatprep.subr.bf16.mxu0 0
  %2845 = vmatpush1.bf16.msra.mxu0 0
  %2846 = vmatprep.subr.bf16.mxu0 0
  %2847 = vmatpush1.bf16.msra.mxu0 0
  %2848 = vmatprep.subr.bf16.mxu0 0
  %2849 = vmatpush1.bf16.msra.mxu0 0
  %2850 = vmatprep.subr.bf16.mxu0 0
  %2851 = vmatpush1.bf16.msra.mxu0 0
  %2852 = vmatprep.mubr.bf16.mxu0 0
  %2853 = vmatmul.mubr.bf16.gmra.mrb[0].mxu0 %v2815
  %v2854 = vpop.f32.mrb[0].mxu0
  %v2855 = vadd.f32 0.0, %v2854
  %v2856 = vpop.f32.mrb[0].mxu0
  %v2857 = vpop.f32.mrb[0].mxu0
  %v2858 = vpop.f32.mrb[0].mxu0
  %2859 = vdwg.mxu0
  %2860 = vrot.lane.b32.xlu0 %v298, 80
  %v2861 = vpop.permute.xlu0 %2860
  %v2862 = vrot.slane %v2861, 4
  %v2864 = vsel %vm640, %v2806, 0
  %v2867 = vsel %vm717, %v2862, 0
  %2869 = vmatprep.subr.bf16.mxu0 0
  %2870 = vmatpush1.bf16.msra.mxu0 %v2867
  %2871 = vmatprep.subr.bf16.mxu0 0
  %2872 = vmatpush1.bf16.msra.mxu0 0
  %2873 = vmatprep.subr.bf16.mxu0 0
  %2874 = vmatpush1.bf16.msra.mxu0 0
  %2875 = vmatprep.subr.bf16.mxu0 0
  %2876 = vmatpush1.bf16.msra.mxu0 0
  %2877 = vmatprep.subr.bf16.mxu0 0
  %2878 = vmatpush1.bf16.msra.mxu0 0
  %2879 = vmatprep.subr.bf16.mxu0 0
  %2880 = vmatpush1.bf16.msra.mxu0 0
  %2881 = vmatprep.subr.bf16.mxu0 0
  %2882 = vmatpush1.bf16.msra.mxu0 0
  %2883 = vmatprep.subr.bf16.mxu0 0
  %2884 = vmatpush1.bf16.msra.mxu0 0
  %2885 = vmatprep.subr.bf16.mxu0 0
  %2886 = vmatpush1.bf16.msra.mxu0 0
  %2887 = vmatprep.subr.bf16.mxu0 0
  %2888 = vmatpush1.bf16.msra.mxu0 0
  %2889 = vmatprep.subr.bf16.mxu0 0
  %2890 = vmatpush1.bf16.msra.mxu0 0
  %2891 = vmatprep.subr.bf16.mxu0 0
  %2892 = vmatpush1.bf16.msra.mxu0 0
  %2893 = vmatprep.subr.bf16.mxu0 0
  %2894 = vmatpush1.bf16.msra.mxu0 0
  %2895 = vmatprep.subr.bf16.mxu0 0
  %2896 = vmatpush1.bf16.msra.mxu0 0
  %2897 = vmatprep.subr.bf16.mxu0 0
  %2898 = vmatpush1.bf16.msra.mxu0 0
  %2899 = vmatprep.subr.bf16.mxu0 0
  %2900 = vmatpush1.bf16.msra.mxu0 0
  %2901 = vmatprep.mubr.bf16.mxu0 0
  %2902 = vmatmul.mubr.bf16.gmra.mrb[0].mxu0 %v2864
  %v2903 = vpop.f32.mrb[0].mxu0
  %v2904 = vadd.f32 0.0, %v2903
  %v2905 = vpop.f32.mrb[0].mxu0
  %v2906 = vpop.f32.mrb[0].mxu0
  %v2907 = vpop.f32.mrb[0].mxu0
  %2908 = vdwg.mxu0
  %2909 = vrot.lane.b32.xlu0 %v299, 80
  %v2910 = vpop.permute.xlu0 %2909
  %v2911 = vrot.slane %v2910, 4
  %v2913 = vsel %vm640, %v2807, 0
  %v2916 = vsel %vm717, %v2911, 0
  %2918 = vmatprep.subr.bf16.mxu0 0
  %2919 = vmatpush1.bf16.msra.mxu0 %v2916
  %2920 = vmatprep.subr.bf16.mxu0 0
  %2921 = vmatpush1.bf16.msra.mxu0 0
  %2922 = vmatprep.subr.bf16.mxu0 0
  %2923 = vmatpush1.bf16.msra.mxu0 0
  %2924 = vmatprep.subr.bf16.mxu0 0
  %2925 = vmatpush1.bf16.msra.mxu0 0
  %2926 = vmatprep.subr.bf16.mxu0 0
  %2927 = vmatpush1.bf16.msra.mxu0 0
  %2928 = vmatprep.subr.bf16.mxu0 0
  %2929 = vmatpush1.bf16.msra.mxu0 0
  %2930 = vmatprep.subr.bf16.mxu0 0
  %2931 = vmatpush1.bf16.msra.mxu0 0
  %2932 = vmatprep.subr.bf16.mxu0 0
  %2933 = vmatpush1.bf16.msra.mxu0 0
  %2934 = vmatprep.subr.bf16.mxu0 0
  %2935 = vmatpush1.bf16.msra.mxu0 0
  %2936 = vmatprep.subr.bf16.mxu0 0
  %2937 = vmatpush1.bf16.msra.mxu0 0
  %2938 = vmatprep.subr.bf16.mxu0 0
  %2939 = vmatpush1.bf16.msra.mxu0 0
  %2940 = vmatprep.subr.bf16.mxu0 0
  %2941 = vmatpush1.bf16.msra.mxu0 0
  %2942 = vmatprep.subr.bf16.mxu0 0
  %2943 = vmatpush1.bf16.msra.mxu0 0
  %2944 = vmatprep.subr.bf16.mxu0 0
  %2945 = vmatpush1.bf16.msra.mxu0 0
  %2946 = vmatprep.subr.bf16.mxu0 0
  %2947 = vmatpush1.bf16.msra.mxu0 0
  %2948 = vmatprep.subr.bf16.mxu0 0
  %2949 = vmatpush1.bf16.msra.mxu0 0
  %2950 = vmatprep.mubr.bf16.mxu0 0
  %2951 = vmatmul.mubr.bf16.gmra.mrb[0].mxu0 %v2913
  %v2952 = vpop.f32.mrb[0].mxu0
  %v2953 = vadd.f32 0.0, %v2952
  %v2954 = vpop.f32.mrb[0].mxu0
  %v2955 = vpop.f32.mrb[0].mxu0
  %v2956 = vpop.f32.mrb[0].mxu0
  %2957 = vdwg.mxu0
  %2958 = vrot.lane.b32.xlu0 %v300, 80
  %v2959 = vpop.permute.xlu0 %2958
  %v2960 = vrot.slane %v2959, 4
  %v2962 = vsel %vm640, %v2808, 0
  %v2965 = vsel %vm717, %v2960, 0
  %2967 = vmatprep.subr.bf16.mxu0 0
  %2968 = vmatpush1.bf16.msra.mxu0 %v2965
  %2969 = vmatprep.subr.bf16.mxu0 0
  %2970 = vmatpush1.bf16.msra.mxu0 0
  %2971 = vmatprep.subr.bf16.mxu0 0
  %2972 = vmatpush1.bf16.msra.mxu0 0
  %2973 = vmatprep.subr.bf16.mxu0 0
  %2974 = vmatpush1.bf16.msra.mxu0 0
  %2975 = vmatprep.subr.bf16.mxu0 0
  %2976 = vmatpush1.bf16.msra.mxu0 0
  %2977 = vmatprep.subr.bf16.mxu0 0
  %2978 = vmatpush1.bf16.msra.mxu0 0
  %2979 = vmatprep.subr.bf16.mxu0 0
  %2980 = vmatpush1.bf16.msra.mxu0 0
  %2981 = vmatprep.subr.bf16.mxu0 0
  %2982 = vmatpush1.bf16.msra.mxu0 0
  %2983 = vmatprep.subr.bf16.mxu0 0
  %2984 = vmatpush1.bf16.msra.mxu0 0
  %2985 = vmatprep.subr.bf16.mxu0 0
  %2986 = vmatpush1.bf16.msra.mxu0 0
  %2987 = vmatprep.subr.bf16.mxu0 0
  %2988 = vmatpush1.bf16.msra.mxu0 0
  %2989 = vmatprep.subr.bf16.mxu0 0
  %2990 = vmatpush1.bf16.msra.mxu0 0
  %2991 = vmatprep.subr.bf16.mxu0 0
  %2992 = vmatpush1.bf16.msra.mxu0 0
  %2993 = vmatprep.subr.bf16.mxu0 0
  %2994 = vmatpush1.bf16.msra.mxu0 0
  %2995 = vmatprep.subr.bf16.mxu0 0
  %2996 = vmatpush1.bf16.msra.mxu0 0
  %2997 = vmatprep.subr.bf16.mxu0 0
  %2998 = vmatpush1.bf16.msra.mxu0 0
  %2999 = vmatprep.mubr.bf16.mxu0 0
  %3000 = vmatmul.mubr.bf16.gmra.mrb[0].mxu0 %v2962
  %v3001 = vpop.f32.mrb[0].mxu0
  %v3002 = vadd.f32 0.0, %v3001
  %v3003 = vpop.f32.mrb[0].mxu0
  %v3004 = vpop.f32.mrb[0].mxu0
  %v3005 = vpop.f32.mrb[0].mxu0
  %3006 = vdwg.mxu0
  %3007 = vrot.lane.b32.xlu0 %v301, 80
  %v3008 = vpop.permute.xlu0 %3007
  %v3009 = vrot.slane %v3008, 4
  %v3011 = vsel %vm640, %v2809, 0
  %v3014 = vsel %vm717, %v3009, 0
  %3016 = vmatprep.subr.bf16.mxu0 0
  %3017 = vmatpush1.bf16.msra.mxu0 %v3014
  %3018 = vmatprep.subr.bf16.mxu0 0
  %3019 = vmatpush1.bf16.msra.mxu0 0
  %3020 = vmatprep.subr.bf16.mxu0 0
  %3021 = vmatpush1.bf16.msra.mxu0 0
  %3022 = vmatprep.subr.bf16.mxu0 0
  %3023 = vmatpush1.bf16.msra.mxu0 0
  %3024 = vmatprep.subr.bf16.mxu0 0
  %3025 = vmatpush1.bf16.msra.mxu0 0
  %3026 = vmatprep.subr.bf16.mxu0 0
  %3027 = vmatpush1.bf16.msra.mxu0 0
  %3028 = vmatprep.subr.bf16.mxu0 0
  %3029 = vmatpush1.bf16.msra.mxu0 0
  %3030 = vmatprep.subr.bf16.mxu0 0
  %3031 = vmatpush1.bf16.msra.mxu0 0
  %3032 = vmatprep.subr.bf16.mxu0 0
  %3033 = vmatpush1.bf16.msra.mxu0 0
  %3034 = vmatprep.subr.bf16.mxu0 0
  %3035 = vmatpush1.bf16.msra.mxu0 0
  %3036 = vmatprep.subr.bf16.mxu0 0
  %3037 = vmatpush1.bf16.msra.mxu0 0
  %3038 = vmatprep.subr.bf16.mxu0 0
  %3039 = vmatpush1.bf16.msra.mxu0 0
  %3040 = vmatprep.subr.bf16.mxu0 0
  %3041 = vmatpush1.bf16.msra.mxu0 0
  %3042 = vmatprep.subr.bf16.mxu0 0
  %3043 = vmatpush1.bf16.msra.mxu0 0
  %3044 = vmatprep.subr.bf16.mxu0 0
  %3045 = vmatpush1.bf16.msra.mxu0 0
  %3046 = vmatprep.subr.bf16.mxu0 0
  %3047 = vmatpush1.bf16.msra.mxu0 0
  %3048 = vmatprep.mubr.bf16.mxu0 0
  %3049 = vmatmul.mubr.bf16.gmra.mrb[0].mxu0 %v3011
  %v3050 = vpop.f32.mrb[0].mxu0
  %v3051 = vadd.f32 0.0, %v3050
  %v3052 = vpop.f32.mrb[0].mxu0
  %v3053 = vpop.f32.mrb[0].mxu0
  %v3054 = vpop.f32.mrb[0].mxu0
  %3055 = vdwg.mxu0
  %3056 = vrot.lane.b32.xlu0 %v302, 80
  %v3057 = vpop.permute.xlu0 %3056
  %v3058 = vrot.slane %v3057, 4
  %v3060 = vsel %vm640, %v2810, 0
  %v3063 = vsel %vm717, %v3058, 0
  %3065 = vmatprep.subr.bf16.mxu0 0
  %3066 = vmatpush1.bf16.msra.mxu0 %v3063
  %3067 = vmatprep.subr.bf16.mxu0 0
  %3068 = vmatpush1.bf16.msra.mxu0 0
  %3069 = vmatprep.subr.bf16.mxu0 0
  %3070 = vmatpush1.bf16.msra.mxu0 0
  %3071 = vmatprep.subr.bf16.mxu0 0
  %3072 = vmatpush1.bf16.msra.mxu0 0
  %3073 = vmatprep.subr.bf16.mxu0 0
  %3074 = vmatpush1.bf16.msra.mxu0 0
  %3075 = vmatprep.subr.bf16.mxu0 0
  %3076 = vmatpush1.bf16.msra.mxu0 0
  %3077 = vmatprep.subr.bf16.mxu0 0
  %3078 = vmatpush1.bf16.msra.mxu0 0
  %3079 = vmatprep.subr.bf16.mxu0 0
  %3080 = vmatpush1.bf16.msra.mxu0 0
  %3081 = vmatprep.subr.bf16.mxu0 0
  %3082 = vmatpush1.bf16.msra.mxu0 0
  %3083 = vmatprep.subr.bf16.mxu0 0
  %3084 = vmatpush1.bf16.msra.mxu0 0
  %3085 = vmatprep.subr.bf16.mxu0 0
  %3086 = vmatpush1.bf16.msra.mxu0 0
  %3087 = vmatprep.subr.bf16.mxu0 0
  %3088 = vmatpush1.bf16.msra.mxu0 0
  %3089 = vmatprep.subr.bf16.mxu0 0
  %3090 = vmatpush1.bf16.msra.mxu0 0
  %3091 = vmatprep.subr.bf16.mxu0 0
  %3092 = vmatpush1.bf16.msra.mxu0 0
  %3093 = vmatprep.subr.bf16.mxu0 0
  %3094 = vmatpush1.bf16.msra.mxu0 0
  %3095 = vmatprep.subr.bf16.mxu0 0
  %3096 = vmatpush1.bf16.msra.mxu0 0
  %3097 = vmatprep.mubr.bf16.mxu0 0
  %3098 = vmatmul.mubr.bf16.gmra.mrb[0].mxu0 %v3060
  %v3099 = vpop.f32.mrb[0].mxu0
  %v3100 = vadd.f32 0.0, %v3099
  %v3101 = vpop.f32.mrb[0].mxu0
  %v3102 = vpop.f32.mrb[0].mxu0
  %v3103 = vpop.f32.mrb[0].mxu0
  %3104 = vdwg.mxu0
  %v3105 = vpack.c.bf16 %v2855, %v2855
  %v3106 = vpack.c.bf16 %v2904, %v2904
  %v3107 = vpack.c.bf16 %v2953, %v2953
  %v3108 = vpack.c.bf16 %v3002, %v3002
  %v3109 = vpack.c.bf16 %v3051, %v3051
  %v3110 = vpack.c.bf16 %v3100, %v3100
  %v3117 = vunpack.c.l.b16 %v3105
  %v3118 = vunpack.c.l.b16 %v3106
  %v3119 = vunpack.c.l.b16 %v3107
  %v3120 = vunpack.c.l.b16 %v3108
  %v3121 = vunpack.c.l.b16 %v3109
  %v3122 = vunpack.c.l.b16 %v3110
  %v3123 = vpack.c.b16 %v3117, %v3117
  %v3124 = vpack.c.b16 %v3118, %v3118
  %v3125 = vpack.c.b16 %v3119, %v3119
  %v3126 = vpack.c.b16 %v3120, %v3120
  %v3127 = vpack.c.b16 %v3121, %v3121
  %v3128 = vpack.c.b16 %v3122, %v3122
  %3129 = vrot.lane.b32.xlu0 %v3123, 48
  %v3130 = vpop.permute.xlu0 %3129
  %3131 = vrot.lane.b32.xlu0 %v3124, 48
  %v3132 = vpop.permute.xlu0 %3131
  %3133 = vrot.lane.b32.xlu0 %v3125, 48
  %v3134 = vpop.permute.xlu0 %3133
  %3135 = vrot.lane.b32.xlu0 %v3126, 48
  %v3136 = vpop.permute.xlu0 %3135
  %3137 = vrot.lane.b32.xlu0 %v3127, 48
  %v3138 = vpop.permute.xlu0 %3137
  %3139 = vrot.lane.b32.xlu0 %v3128, 48
  %v3140 = vpop.permute.xlu0 %3139
  %vm3147 = vcmask 519552
  %3148 = vst.msk [vmem:[#allocation2] sm:$0xf] %vm3147, %v3130
  %3149 = vst.msk [vmem:[#allocation2 + $0x4] sm:$0xf] %vm3147, %v3132
  %3150 = vst.msk [vmem:[#allocation2 + $0x8] sm:$0xf] %vm3147, %v3134
  %3151 = vst.msk [vmem:[#allocation2 + $0xc] sm:$0xf] %vm3147, %v3136
  %3152 = vst.msk [vmem:[#allocation2 + $0x10] sm:$0xf] %vm3147, %v3138
  %3153 = vst.msk [vmem:[#allocation2 + $0x14] sm:$0xf] %vm3147, %v3140
  %v3154 = vld [vmem:[#allocation2] sm:$0xf]
  %v3155 = vld [vmem:[#allocation2 + $0x4] sm:$0xf]
  %v3156 = vld [vmem:[#allocation2 + $0x8] sm:$0xf]
  %v3157 = vld [vmem:[#allocation2 + $0xc] sm:$0xf]
  %v3158 = vld [vmem:[#allocation2 + $0x10] sm:$0xf]
  %v3159 = vld [vmem:[#allocation2 + $0x14] sm:$0xf]
  %v3160 = vld [vmem:[%s5] sm:$0xf]
  %v3161 = vld [vmem:[%s5 + $0x4] sm:$0xf]
  %v3162 = vld [vmem:[%s5 + $0x8] sm:$0xf]
  %v3163 = vld [vmem:[%s5 + $0xc] sm:$0xf]
  %v3164 = vld [vmem:[%s5 + $0x10] sm:$0xf]
  %v3165 = vld [vmem:[%s5 + $0x14] sm:$0xf]
  %v3166 = vld [vmem:[%s5 + $0x18] sm:$0xf]
  %v3167 = vld [vmem:[%s5 + $0x1c] sm:$0xf]
  %v3168 = vld [vmem:[%s6] sm:$0x1]
  %v3170 = vlaneseq
  %v3171 = vshrl.u32 %v3170, 7
  %v3172 = vsub.s32 0, %v3171
  %v3173 = vrot.slane %v3168, %v3172
  %v3181 = vunpack.c.l.b16 %v3154
  %v3182 = vunpack.c.l.b16 %v3155
  %v3183 = vunpack.c.l.b16 %v3156
  %v3184 = vunpack.c.l.b16 %v3157
  %v3185 = vunpack.c.l.b16 %v3158
  %v3186 = vunpack.c.l.b16 %v3159
  %v3187 = vpack.c.b16 %v3182, %v3181
  %v3188 = vpack.c.b16 %v3184, %v3183
  %v3189 = vpack.c.b16 %v3186, %v3185
  %v3198 = vunpack.c.l.b16 %v3160
  %v3199 = vunpack.c.l.b16 %v3161
  %v3200 = vunpack.c.l.b16 %v3162
  %v3201 = vunpack.c.l.b16 %v3163
  %v3202 = vunpack.c.l.b16 %v3164
  %v3203 = vunpack.c.l.b16 %v3165
  %v3204 = vunpack.c.l.b16 %v3166
  %v3205 = vunpack.c.l.b16 %v3167
  %v3206 = vpack.c.b16 %v3199, %v3198
  %v3207 = vpack.c.b16 %v3201, %v3200
  %v3208 = vpack.c.b16 %v3203, %v3202
  %v3209 = vpack.c.b16 %v3205, %v3204
  %v3215 = vsel %vm200, %v3187, 0
  %v3218 = vsel %vm200, %v3188, 0
  %v3221 = vsel %vm200, %v3189, 0
  %3223 = vmatprep.subr.bf16.mxu0 0
  %3224 = vmatpush1.bf16.msra.mxu0 %v3206
  %3225 = vmatprep.subr.bf16.mxu0 0
  %3226 = vmatpush1.bf16.msra.mxu0 %v3207
  %3227 = vmatprep.subr.bf16.mxu0 0
  %3228 = vmatpush1.bf16.msra.mxu0 %v3208
  %3229 = vmatprep.subr.bf16.mxu0 0
  %3230 = vmatpush1.bf16.msra.mxu0 %v3209
  %3231 = vmatprep.subr.bf16.mxu0 0
  %3232 = vmatpush1.bf16.msra.mxu0 0
  %3233 = vmatprep.subr.bf16.mxu0 0
  %3234 = vmatpush1.bf16.msra.mxu0 0
  %3235 = vmatprep.subr.bf16.mxu0 0
  %3236 = vmatpush1.bf16.msra.mxu0 0
  %3237 = vmatprep.subr.bf16.mxu0 0
  %3238 = vmatpush1.bf16.msra.mxu0 0
  %3239 = vmatprep.subr.bf16.mxu0 0
  %3240 = vmatpush1.bf16.msra.mxu0 0
  %3241 = vmatprep.subr.bf16.mxu0 0
  %3242 = vmatpush1.bf16.msra.mxu0 0
  %3243 = vmatprep.subr.bf16.mxu0 0
  %3244 = vmatpush1.bf16.msra.mxu0 0
  %3245 = vmatprep.subr.bf16.mxu0 0
  %3246 = vmatpush1.bf16.msra.mxu0 0
  %3247 = vmatprep.subr.bf16.mxu0 0
  %3248 = vmatpush1.bf16.msra.mxu0 0
  %3249 = vmatprep.subr.bf16.mxu0 0
  %3250 = vmatpush1.bf16.msra.mxu0 0
  %3251 = vmatprep.subr.bf16.mxu0 0
  %3252 = vmatpush1.bf16.msra.mxu0 0
  %3253 = vmatprep.subr.bf16.mxu0 0
  %3254 = vmatpush1.bf16.msra.mxu0 0
  %3255 = vmatprep.mubr.bf16.mxu0 0
  %3256 = vmatmul.mubr.bf16.gmra.mrb[0].mxu0 %v3215
  %v3257 = vpop.f32.mrb[0].mxu0
  %v3258 = vadd.f32 %v3173, %v3257
  %v3259 = vpop.f32.mrb[0].mxu0
  %v3260 = vpop.f32.mrb[0].mxu0
  %v3261 = vadd.f32 %v3173, %v3260
  %v3262 = vpop.f32.mrb[0].mxu0
  %3263 = vmatprep.mubr.bf16.mxu0 0
  %3264 = vmatmul.mubr.bf16.gmra.mrb[0].mxu0 %v3218
  %v3265 = vpop.f32.mrb[0].mxu0
  %v3266 = vadd.f32 %v3173, %v3265
  %v3267 = vpop.f32.mrb[0].mxu0
  %v3268 = vpop.f32.mrb[0].mxu0
  %v3269 = vadd.f32 %v3173, %v3268
  %v3270 = vpop.f32.mrb[0].mxu0
  %3271 = vmatprep.mubr.bf16.mxu0 0
  %3272 = vmatmul.mubr.bf16.gmra.mrb[0].mxu0 %v3221
  %v3273 = vpop.f32.mrb[0].mxu0
  %v3274 = vadd.f32 %v3173, %v3273
  %v3275 = vpop.f32.mrb[0].mxu0
  %v3276 = vpop.f32.mrb[0].mxu0
  %v3277 = vadd.f32 %v3173, %v3276
  %v3278 = vpop.f32.mrb[0].mxu0
  %3279 = vdwg.mxu0
  %v3280 = vadd.f32 %v3258, %v119
  %v3281 = vadd.f32 %v3261, %v120
  %v3282 = vadd.f32 %v3266, %v121
  %v3283 = vadd.f32 %v3269, %v122
  %v3284 = vadd.f32 %v3274, %v123
  %v3285 = vadd.f32 %v3277, %v124
  %v3286 = vld [vmem:[%s7] sm:$0x1]
  %v3287 = vld [vmem:[%s8] sm:$0x1]
  %v3288 = vsel %vm200, %v3280, 0.0
  %3289 = vadd.xlane.f32.xlu0 %v3288
  %v3290 = vpop.xlane.xlu0 %3289
  %v3291 = vsel %vm200, %v3281, 0.0
  %3292 = vadd.xlane.f32.xlu0 %v3291
  %v3293 = vpop.xlane.xlu0 %3292
  %v3294 = vsel %vm200, %v3282, 0.0
  %3295 = vadd.xlane.f32.xlu0 %v3294
  %v3296 = vpop.xlane.xlu0 %3295
  %v3297 = vsel %vm200, %v3283, 0.0
  %3298 = vadd.xlane.f32.xlu0 %v3297
  %v3299 = vpop.xlane.xlu0 %3298
  %v3300 = vsel %vm200, %v3284, 0.0
  %3301 = vadd.xlane.f32.xlu0 %v3300
  %v3302 = vpop.xlane.xlu0 %3301
  %v3303 = vsel %vm200, %v3285, 0.0
  %3304 = vadd.xlane.f32.xlu0 %v3303
  %v3305 = vpop.xlane.xlu0 %3304
  %v3306 = vrcp.pop 64.0
  %v3307 = vmul.f32 %v3290, %v3306
  %v3308 = vmul.f32 %v3293, %v3306
  %v3309 = vmul.f32 %v3296, %v3306
  %v3310 = vmul.f32 %v3299, %v3306
  %v3311 = vmul.f32 %v3302, %v3306
  %v3312 = vmul.f32 %v3305, %v3306
  %v3313 = vsub.f32 %v3280, %v3307
  %v3314 = vsub.f32 %v3281, %v3308
  %v3315 = vsub.f32 %v3282, %v3309
  %v3316 = vsub.f32 %v3283, %v3310
  %v3317 = vsub.f32 %v3284, %v3311
  %v3318 = vsub.f32 %v3285, %v3312
  %v3319 = vmul.f32 %v3313, %v3313
  %v3320 = vmul.f32 %v3314, %v3314
  %v3321 = vmul.f32 %v3315, %v3315
  %v3322 = vmul.f32 %v3316, %v3316
  %v3323 = vmul.f32 %v3317, %v3317
  %v3324 = vmul.f32 %v3318, %v3318
  %v3325 = vsel %vm200, %v3319, 0.0
  %3326 = vadd.xlane.f32.xlu0 %v3325
  %v3327 = vpop.xlane.xlu0 %3326
  %v3328 = vsel %vm200, %v3320, 0.0
  %3329 = vadd.xlane.f32.xlu0 %v3328
  %v3330 = vpop.xlane.xlu0 %3329
  %v3331 = vsel %vm200, %v3321, 0.0
  %3332 = vadd.xlane.f32.xlu0 %v3331
  %v3333 = vpop.xlane.xlu0 %3332
  %v3334 = vsel %vm200, %v3322, 0.0
  %3335 = vadd.xlane.f32.xlu0 %v3334
  %v3336 = vpop.xlane.xlu0 %3335
  %v3337 = vsel %vm200, %v3323, 0.0
  %3338 = vadd.xlane.f32.xlu0 %v3337
  %v3339 = vpop.xlane.xlu0 %3338
  %v3340 = vsel %vm200, %v3324, 0.0
  %3341 = vadd.xlane.f32.xlu0 %v3340
  %v3342 = vpop.xlane.xlu0 %3341
  %v3343 = vmul.f32 %v3327, %v3306
  %v3344 = vmul.f32 %v3330, %v3306
  %v3345 = vmul.f32 %v3333, %v3306
  %v3346 = vmul.f32 %v3336, %v3306
  %v3347 = vmul.f32 %v3339, %v3306
  %v3348 = vmul.f32 %v3342, %v3306
  %v3349 = vadd.f32 %v3343, 1e-12
  %v3350 = vadd.f32 %v3344, 1e-12
  %v3351 = vadd.f32 %v3345, 1e-12
  %v3352 = vadd.f32 %v3346, 1e-12
  %v3353 = vadd.f32 %v3347, 1e-12
  %v3354 = vadd.f32 %v3348, 1e-12
  %v3355 = vrsqrt.pop %v3349
  %v3356 = vrsqrt.pop %v3350
  %v3357 = vrsqrt.pop %v3351
  %v3358 = vrsqrt.pop %v3352
  %v3359 = vrsqrt.pop %v3353
  %v3360 = vrsqrt.pop %v3354
  %v3361 = vmul.f32 %v3313, %v3355
  %v3362 = vmul.f32 %v3314, %v3356
  %v3363 = vmul.f32 %v3315, %v3357
  %v3364 = vmul.f32 %v3316, %v3358
  %v3365 = vmul.f32 %v3317, %v3359
  %v3366 = vmul.f32 %v3318, %v3360
  %v3368 = vlaneseq
  %v3369 = vshrl.u32 %v3368, 7
  %v3370 = vsub.s32 0, %v3369
  %v3371 = vrot.slane %v3286, %v3370
  %v3373 = vmul.f32 %v3361, %v3371
  %v3374 = vmul.f32 %v3362, %v3371
  %v3375 = vmul.f32 %v3363, %v3371
  %v3376 = vmul.f32 %v3364, %v3371
  %v3377 = vmul.f32 %v3365, %v3371
  %v3378 = vmul.f32 %v3366, %v3371
  %v3380 = vlaneseq
  %v3381 = vshrl.u32 %v3380, 7
  %v3382 = vsub.s32 0, %v3381
  %v3383 = vrot.slane %v3287, %v3382
  %v3385 = vadd.f32 %v3373, %v3383
  %v3386 = vadd.f32 %v3374, %v3383
  %v3387 = vadd.f32 %v3375, %v3383
  %v3388 = vadd.f32 %v3376, %v3383
  %v3389 = vadd.f32 %v3377, %v3383
  %v3390 = vadd.f32 %v3378, %v3383
  %v3391 = vpack.c.bf16 %v3386, %v3385
  %v3392 = vpack.c.bf16 %v3388, %v3387
  %v3393 = vpack.c.bf16 %v3390, %v3389
  %v3394 = vld [vmem:[%s9] sm:$0xf]
  %v3395 = vld [vmem:[%s9 + $0x4] sm:$0xf]
  %v3396 = vld [vmem:[%s9 + $0x8] sm:$0xf]
  %v3397 = vld [vmem:[%s9 + $0xc] sm:$0xf]
  %v3398 = vld [vmem:[%s9 + $0x10] sm:$0xf]
  %v3399 = vld [vmem:[%s9 + $0x14] sm:$0xf]
  %v3400 = vld [vmem:[%s9 + $0x18] sm:$0xf]
  %v3401 = vld [vmem:[%s9 + $0x1c] sm:$0xf]
  %v3402 = vld [vmem:[%s10] sm:$0x1]
  %v3404 = vlaneseq
  %v3405 = vshrl.u32 %v3404, 7
  %v3406 = vsub.s32 0, %v3405
  %v3407 = vrot.slane %v3402, %v3406
  %v3417 = vunpack.c.l.b16 %v3394
  %v3418 = vunpack.c.l.b16 %v3395
  %v3419 = vunpack.c.l.b16 %v3396
  %v3420 = vunpack.c.l.b16 %v3397
  %v3421 = vunpack.c.l.b16 %v3398
  %v3422 = vunpack.c.l.b16 %v3399
  %v3423 = vunpack.c.l.b16 %v3400
  %v3424 = vunpack.c.l.b16 %v3401
  %v3425 = vpack.c.b16 %v3418, %v3417
  %v3426 = vpack.c.b16 %v3420, %v3419
  %v3427 = vpack.c.b16 %v3422, %v3421
  %v3428 = vpack.c.b16 %v3424, %v3423
  %v3434 = vsel %vm200, %v3391, 0
  %v3437 = vsel %vm200, %v3392, 0
  %v3440 = vsel %vm200, %v3393, 0
  %3442 = vmatprep.subr.bf16.mxu0 0
  %3443 = vmatpush1.bf16.msra.mxu0 %v3425
  %3444 = vmatprep.subr.bf16.mxu0 0
  %3445 = vmatpush1.bf16.msra.mxu0 %v3426
  %3446 = vmatprep.subr.bf16.mxu0 0
  %3447 = vmatpush1.bf16.msra.mxu0 %v3427
  %3448 = vmatprep.subr.bf16.mxu0 0
  %3449 = vmatpush1.bf16.msra.mxu0 %v3428
  %3450 = vmatprep.subr.bf16.mxu0 0
  %3451 = vmatpush1.bf16.msra.mxu0 0
  %3452 = vmatprep.subr.bf16.mxu0 0
  %3453 = vmatpush1.bf16.msra.mxu0 0
  %3454 = vmatprep.subr.bf16.mxu0 0
  %3455 = vmatpush1.bf16.msra.mxu0 0
  %3456 = vmatprep.subr.bf16.mxu0 0
  %3457 = vmatpush1.bf16.msra.mxu0 0
  %3458 = vmatprep.subr.bf16.mxu0 0
  %3459 = vmatpush1.bf16.msra.mxu0 0
  %3460 = vmatprep.subr.bf16.mxu0 0
  %3461 = vmatpush1.bf16.msra.mxu0 0
  %3462 = vmatprep.subr.bf16.mxu0 0
  %3463 = vmatpush1.bf16.msra.mxu0 0
  %3464 = vmatprep.subr.bf16.mxu0 0
  %3465 = vmatpush1.bf16.msra.mxu0 0
  %3466 = vmatprep.subr.bf16.mxu0 0
  %3467 = vmatpush1.bf16.msra.mxu0 0
  %3468 = vmatprep.subr.bf16.mxu0 0
  %3469 = vmatpush1.bf16.msra.mxu0 0
  %3470 = vmatprep.subr.bf16.mxu0 0
  %3471 = vmatpush1.bf16.msra.mxu0 0
  %3472 = vmatprep.subr.bf16.mxu0 0
  %3473 = vmatpush1.bf16.msra.mxu0 0
  %3474 = vmatprep.mubr.bf16.mxu0 0
  %3475 = vmatmul.mubr.bf16.gmra.mrb[0].mxu0 %v3434
  %v3476 = vpop.f32.mrb[0].mxu0
  %v3477 = vadd.f32 %v3407, %v3476
  %v3478 = vpop.f32.mrb[0].mxu0
  %v3479 = vpop.f32.mrb[0].mxu0
  %v3480 = vadd.f32 %v3407, %v3479
  %v3481 = vpop.f32.mrb[0].mxu0
  %3482 = vmatprep.mubr.bf16.mxu0 0
  %3483 = vmatmul.mubr.bf16.gmra.mrb[0].mxu0 %v3437
  %v3484 = vpop.f32.mrb[0].mxu0
  %v3485 = vadd.f32 %v3407, %v3484
  %v3486 = vpop.f32.mrb[0].mxu0
  %v3487 = vpop.f32.mrb[0].mxu0
  %v3488 = vadd.f32 %v3407, %v3487
  %v3489 = vpop.f32.mrb[0].mxu0
  %3490 = vmatprep.mubr.bf16.mxu0 0
  %3491 = vmatmul.mubr.bf16.gmra.mrb[0].mxu0 %v3440
  %v3492 = vpop.f32.mrb[0].mxu0
  %v3493 = vadd.f32 %v3407, %v3492
  %v3494 = vpop.f32.mrb[0].mxu0
  %v3495 = vpop.f32.mrb[0].mxu0
  %v3496 = vadd.f32 %v3407, %v3495
  %v3497 = vpop.f32.mrb[0].mxu0
  %3498 = vdwg.mxu0
  %v3499 = vmul.f32 %v3477, %v3477
  %v3500 = vmul.f32 %v3480, %v3480
  %v3501 = vmul.f32 %v3485, %v3485
  %v3502 = vmul.f32 %v3488, %v3488
  %v3503 = vmul.f32 %v3493, %v3493
  %v3504 = vmul.f32 %v3496, %v3496
  %v3505 = vmul.f32 %v3477, %v3499
  %v3506 = vmul.f32 %v3480, %v3500
  %v3507 = vmul.f32 %v3485, %v3501
  %v3508 = vmul.f32 %v3488, %v3502
  %v3509 = vmul.f32 %v3493, %v3503
  %v3510 = vmul.f32 %v3496, %v3504
  %v3511 = vmul.f32 %v3505, 0.044715
  %v3512 = vmul.f32 %v3506, 0.044715
  %v3513 = vmul.f32 %v3507, 0.044715
  %v3514 = vmul.f32 %v3508, 0.044715
  %v3515 = vmul.f32 %v3509, 0.044715
  %v3516 = vmul.f32 %v3510, 0.044715
  %v3517 = vadd.f32 %v3477, %v3511
  %v3518 = vadd.f32 %v3480, %v3512
  %v3519 = vadd.f32 %v3485, %v3513
  %v3520 = vadd.f32 %v3488, %v3514
  %v3521 = vadd.f32 %v3493, %v3515
  %v3522 = vadd.f32 %v3496, %v3516
  %v3523 = vmul.f32 %v3517, 0.7978846
  %v3524 = vmul.f32 %v3518, 0.7978846
  %v3525 = vmul.f32 %v3519, 0.7978846
  %v3526 = vmul.f32 %v3520, 0.7978846
  %v3527 = vmul.f32 %v3521, 0.7978846
  %v3528 = vmul.f32 %v3522, 0.7978846
  %v3529 = vtanh.pop %v3523
  %v3530 = vtanh.pop %v3524
  %v3531 = vtanh.pop %v3525
  %v3532 = vtanh.pop %v3526
  %v3533 = vtanh.pop %v3527
  %v3534 = vtanh.pop %v3528
  %v3535 = vadd.f32 %v3529, 1.0
  %v3536 = vadd.f32 %v3530, 1.0
  %v3537 = vadd.f32 %v3531, 1.0
  %v3538 = vadd.f32 %v3532, 1.0
  %v3539 = vadd.f32 %v3533, 1.0
  %v3540 = vadd.f32 %v3534, 1.0
  %v3541 = vmul.f32 %v3535, 0.5
  %v3542 = vmul.f32 %v3536, 0.5
  %v3543 = vmul.f32 %v3537, 0.5
  %v3544 = vmul.f32 %v3538, 0.5
  %v3545 = vmul.f32 %v3539, 0.5
  %v3546 = vmul.f32 %v3540, 0.5
  %v3547 = vmul.f32 %v3477, %v3541
  %v3548 = vmul.f32 %v3480, %v3542
  %v3549 = vmul.f32 %v3485, %v3543
  %v3550 = vmul.f32 %v3488, %v3544
  %v3551 = vmul.f32 %v3493, %v3545
  %v3552 = vmul.f32 %v3496, %v3546
  %v3553 = vpack.c.bf16 %v3548, %v3547
  %v3554 = vpack.c.bf16 %v3550, %v3549
  %v3555 = vpack.c.bf16 %v3552, %v3551
  %v3556 = vld [vmem:[%s11] sm:$0xf]
  %v3557 = vld [vmem:[%s11 + $0x4] sm:$0xf]
  %v3558 = vld [vmem:[%s11 + $0x8] sm:$0xf]
  %v3559 = vld [vmem:[%s11 + $0xc] sm:$0xf]
  %v3560 = vld [vmem:[%s11 + $0x10] sm:$0xf]
  %v3561 = vld [vmem:[%s11 + $0x14] sm:$0xf]
  %v3562 = vld [vmem:[%s11 + $0x18] sm:$0xf]
  %v3563 = vld [vmem:[%s11 + $0x1c] sm:$0xf]
  %v3564 = vld [vmem:[%s11 + $0x20] sm:$0xf]
  %v3565 = vld [vmem:[%s11 + $0x24] sm:$0xf]
  %v3566 = vld [vmem:[%s11 + $0x28] sm:$0xf]
  %v3567 = vld [vmem:[%s11 + $0x2c] sm:$0xf]
  %v3568 = vld [vmem:[%s11 + $0x30] sm:$0xf]
  %v3569 = vld [vmem:[%s11 + $0x34] sm:$0xf]
  %v3570 = vld [vmem:[%s11 + $0x38] sm:$0xf]
  %v3571 = vld [vmem:[%s11 + $0x3c] sm:$0xf]
  %v3572 = vld [vmem:[%s12] sm:$0x1]
  %v3574 = vlaneseq
  %v3575 = vshrl.u32 %v3574, 7
  %v3576 = vsub.s32 0, %v3575
  %v3577 = vrot.slane %v3572, %v3576
  %v3595 = vunpack.c.l.b16 %v3556
  %v3596 = vunpack.c.l.b16 %v3557
  %v3597 = vunpack.c.l.b16 %v3558
  %v3598 = vunpack.c.l.b16 %v3559
  %v3599 = vunpack.c.l.b16 %v3560
  %v3600 = vunpack.c.l.b16 %v3561
  %v3601 = vunpack.c.l.b16 %v3562
  %v3602 = vunpack.c.l.b16 %v3563
  %v3603 = vunpack.c.l.b16 %v3564
  %v3604 = vunpack.c.l.b16 %v3565
  %v3605 = vunpack.c.l.b16 %v3566
  %v3606 = vunpack.c.l.b16 %v3567
  %v3607 = vunpack.c.l.b16 %v3568
  %v3608 = vunpack.c.l.b16 %v3569
  %v3609 = vunpack.c.l.b16 %v3570
  %v3610 = vunpack.c.l.b16 %v3571
  %v3611 = vpack.c.b16 %v3596, %v3595
  %v3612 = vpack.c.b16 %v3598, %v3597
  %v3613 = vpack.c.b16 %v3600, %v3599
  %v3614 = vpack.c.b16 %v3602, %v3601
  %v3615 = vpack.c.b16 %v3604, %v3603
  %v3616 = vpack.c.b16 %v3606, %v3605
  %v3617 = vpack.c.b16 %v3608, %v3607
  %v3618 = vpack.c.b16 %v3610, %v3609
  %3627 = vmatprep.subr.bf16.mxu0 0
  %3628 = vmatpush1.bf16.msra.mxu0 %v3611
  %3629 = vmatprep.subr.bf16.mxu0 0
  %3630 = vmatpush1.bf16.msra.mxu0 %v3612
  %3631 = vmatprep.subr.bf16.mxu0 0
  %3632 = vmatpush1.bf16.msra.mxu0 %v3613
  %3633 = vmatprep.subr.bf16.mxu0 0
  %3634 = vmatpush1.bf16.msra.mxu0 %v3614
  %3635 = vmatprep.subr.bf16.mxu0 0
  %3636 = vmatpush1.bf16.msra.mxu0 %v3615
  %3637 = vmatprep.subr.bf16.mxu0 0
  %3638 = vmatpush1.bf16.msra.mxu0 %v3616
  %3639 = vmatprep.subr.bf16.mxu0 0
  %3640 = vmatpush1.bf16.msra.mxu0 %v3617
  %3641 = vmatprep.subr.bf16.mxu0 0
  %3642 = vmatpush1.bf16.msra.mxu0 %v3618
  %3643 = vmatprep.subr.bf16.mxu0 0
  %3644 = vmatpush1.bf16.msra.mxu0 0
  %3645 = vmatprep.subr.bf16.mxu0 0
  %3646 = vmatpush1.bf16.msra.mxu0 0
  %3647 = vmatprep.subr.bf16.mxu0 0
  %3648 = vmatpush1.bf16.msra.mxu0 0
  %3649 = vmatprep.subr.bf16.mxu0 0
  %3650 = vmatpush1.bf16.msra.mxu0 0
  %3651 = vmatprep.subr.bf16.mxu0 0
  %3652 = vmatpush1.bf16.msra.mxu0 0
  %3653 = vmatprep.subr.bf16.mxu0 0
  %3654 = vmatpush1.bf16.msra.mxu0 0
  %3655 = vmatprep.subr.bf16.mxu0 0
  %3656 = vmatpush1.bf16.msra.mxu0 0
  %3657 = vmatprep.subr.bf16.mxu0 0
  %3658 = vmatpush1.bf16.msra.mxu0 0
  %3659 = vmatprep.mubr.bf16.mxu0 0
  %3660 = vmatmul.mubr.bf16.gmra.mrb[0].mxu0 %v3553
  %v3661 = vpop.f32.mrb[0].mxu0
  %v3662 = vadd.f32 %v3577, %v3661
  %v3663 = vpop.f32.mrb[0].mxu0
  %v3664 = vpop.f32.mrb[0].mxu0
  %v3665 = vadd.f32 %v3577, %v3664
  %v3666 = vpop.f32.mrb[0].mxu0
  %3667 = vmatprep.mubr.bf16.mxu0 0
  %3668 = vmatmul.mubr.bf16.gmra.mrb[0].mxu0 %v3554
  %v3669 = vpop.f32.mrb[0].mxu0
  %v3670 = vadd.f32 %v3577, %v3669
  %v3671 = vpop.f32.mrb[0].mxu0
  %v3672 = vpop.f32.mrb[0].mxu0
  %v3673 = vadd.f32 %v3577, %v3672
  %v3674 = vpop.f32.mrb[0].mxu0
  %3675 = vmatprep.mubr.bf16.mxu0 0
  %3676 = vmatmul.mubr.bf16.gmra.mrb[0].mxu0 %v3555
  %v3677 = vpop.f32.mrb[0].mxu0
  %v3678 = vadd.f32 %v3577, %v3677
  %v3679 = vpop.f32.mrb[0].mxu0
  %v3680 = vpop.f32.mrb[0].mxu0
  %v3681 = vadd.f32 %v3577, %v3680
  %v3682 = vpop.f32.mrb[0].mxu0
  %3683 = vdwg.mxu0
  %v3684 = vadd.f32 %v3662, %v3385
  %v3685 = vadd.f32 %v3665, %v3386
  %v3686 = vadd.f32 %v3670, %v3387
  %v3687 = vadd.f32 %v3673, %v3388
  %v3688 = vadd.f32 %v3678, %v3389
  %v3689 = vadd.f32 %v3681, %v3390
  %v3690 = vld [vmem:[%s13] sm:$0x1]
  %v3691 = vld [vmem:[%s14] sm:$0x1]
  %v3692 = vsel %vm200, %v3684, 0.0
  %3693 = vadd.xlane.f32.xlu0 %v3692
  %v3694 = vpop.xlane.xlu0 %3693
  %v3695 = vsel %vm200, %v3685, 0.0
  %3696 = vadd.xlane.f32.xlu0 %v3695
  %v3697 = vpop.xlane.xlu0 %3696
  %v3698 = vsel %vm200, %v3686, 0.0
  %3699 = vadd.xlane.f32.xlu0 %v3698
  %v3700 = vpop.xlane.xlu0 %3699
  %v3701 = vsel %vm200, %v3687, 0.0
  %3702 = vadd.xlane.f32.xlu0 %v3701
  %v3703 = vpop.xlane.xlu0 %3702
  %v3704 = vsel %vm200, %v3688, 0.0
  %3705 = vadd.xlane.f32.xlu0 %v3704
  %v3706 = vpop.xlane.xlu0 %3705
  %v3707 = vsel %vm200, %v3689, 0.0
  %3708 = vadd.xlane.f32.xlu0 %v3707
  %v3709 = vpop.xlane.xlu0 %3708
  %v3710 = vmul.f32 %v3694, %v3306
  %v3711 = vmul.f32 %v3697, %v3306
  %v3712 = vmul.f32 %v3700, %v3306
  %v3713 = vmul.f32 %v3703, %v3306
  %v3714 = vmul.f32 %v3706, %v3306
  %v3715 = vmul.f32 %v3709, %v3306
  %v3716 = vsub.f32 %v3684, %v3710
  %v3717 = vsub.f32 %v3685, %v3711
  %v3718 = vsub.f32 %v3686, %v3712
  %v3719 = vsub.f32 %v3687, %v3713
  %v3720 = vsub.f32 %v3688, %v3714
  %v3721 = vsub.f32 %v3689, %v3715
  %v3722 = vmul.f32 %v3716, %v3716
  %v3723 = vmul.f32 %v3717, %v3717
  %v3724 = vmul.f32 %v3718, %v3718
  %v3725 = vmul.f32 %v3719, %v3719
  %v3726 = vmul.f32 %v3720, %v3720
  %v3727 = vmul.f32 %v3721, %v3721
  %v3728 = vsel %vm200, %v3722, 0.0
  %3729 = vadd.xlane.f32.xlu0 %v3728
  %v3730 = vpop.xlane.xlu0 %3729
  %v3731 = vsel %vm200, %v3723, 0.0
  %3732 = vadd.xlane.f32.xlu0 %v3731
  %v3733 = vpop.xlane.xlu0 %3732
  %v3734 = vsel %vm200, %v3724, 0.0
  %3735 = vadd.xlane.f32.xlu0 %v3734
  %v3736 = vpop.xlane.xlu0 %3735
  %v3737 = vsel %vm200, %v3725, 0.0
  %3738 = vadd.xlane.f32.xlu0 %v3737
  %v3739 = vpop.xlane.xlu0 %3738
  %v3740 = vsel %vm200, %v3726, 0.0
  %3741 = vadd.xlane.f32.xlu0 %v3740
  %v3742 = vpop.xlane.xlu0 %3741
  %v3743 = vsel %vm200, %v3727, 0.0
  %3744 = vadd.xlane.f32.xlu0 %v3743
  %v3745 = vpop.xlane.xlu0 %3744
  %v3746 = vmul.f32 %v3730, %v3306
  %v3747 = vmul.f32 %v3733, %v3306
  %v3748 = vmul.f32 %v3736, %v3306
  %v3749 = vmul.f32 %v3739, %v3306
  %v3750 = vmul.f32 %v3742, %v3306
  %v3751 = vmul.f32 %v3745, %v3306
  %v3752 = vadd.f32 %v3746, 1e-12
  %v3753 = vadd.f32 %v3747, 1e-12
  %v3754 = vadd.f32 %v3748, 1e-12
  %v3755 = vadd.f32 %v3749, 1e-12
  %v3756 = vadd.f32 %v3750, 1e-12
  %v3757 = vadd.f32 %v3751, 1e-12
  %v3758 = vrsqrt.pop %v3752
  %v3759 = vrsqrt.pop %v3753
  %v3760 = vrsqrt.pop %v3754
  %v3761 = vrsqrt.pop %v3755
  %v3762 = vrsqrt.pop %v3756
  %v3763 = vrsqrt.pop %v3757
  %v3764 = vmul.f32 %v3716, %v3758
  %v3765 = vmul.f32 %v3717, %v3759
  %v3766 = vmul.f32 %v3718, %v3760
  %v3767 = vmul.f32 %v3719, %v3761
  %v3768 = vmul.f32 %v3720, %v3762
  %v3769 = vmul.f32 %v3721, %v3763
  %v3771 = vlaneseq
  %v3772 = vshrl.u32 %v3771, 7
  %v3773 = vsub.s32 0, %v3772
  %v3774 = vrot.slane %v3690, %v3773
  %v3776 = vmul.f32 %v3764, %v3774
  %v3777 = vmul.f32 %v3765, %v3774
  %v3778 = vmul.f32 %v3766, %v3774
  %v3779 = vmul.f32 %v3767, %v3774
  %v3780 = vmul.f32 %v3768, %v3774
  %v3781 = vmul.f32 %v3769, %v3774
  %v3783 = vlaneseq
  %v3784 = vshrl.u32 %v3783, 7
  %v3785 = vsub.s32 0, %v3784
  %v3786 = vrot.slane %v3691, %v3785
  %v3788 = vadd.f32 %v3776, %v3786
  %v3789 = vadd.f32 %v3777, %v3786
  %v3790 = vadd.f32 %v3778, %v3786
  %v3791 = vadd.f32 %v3779, %v3786
  %v3792 = vadd.f32 %v3780, %v3786
  %v3793 = vadd.f32 %v3781, %v3786
  %v3794 = vpack.c.bf16 %v3788, %v3788
  %v3795 = vpack.c.bf16 %v3789, %v3789
  %v3796 = vpack.c.bf16 %v3790, %v3790
  %v3797 = vpack.c.bf16 %v3791, %v3791
  %v3798 = vpack.c.bf16 %v3792, %v3792
  %v3799 = vpack.c.bf16 %v3793, %v3793
  %vm3800 = vcmask 519168
  %3801 = vst.msk [vmem:[%s15] sm:$0xf] %vm3800, %v3794
  %3802 = vst.msk [vmem:[%s15 + $0x4] sm:$0xf] %vm3800, %v3795
  %3803 = vst.msk [vmem:[%s15 + $0x8] sm:$0xf] %vm3800, %v3796
  %3804 = vst.msk [vmem:[%s15 + $0xc] sm:$0xf] %vm3800, %v3797
  %3805 = vst.msk [vmem:[%s15 + $0x10] sm:$0xf] %vm3800, %v3798
  %3806 = vst.msk [vmem:[%s15 + $0x14] sm:$0xf] %vm3800, %v3799
  %v3814 = vunpack.c.l.s4 1966171168
  %v3815 = vunpack.c.0.s8 %v3814
  %v3816 = vlaneseq
  %v3817 = vshrl.u32 %v3816, 7
  %v3818 = vsub.s32 %v3815, %v3817
  %v3819 = vrot.slane %v3794, %v3818
  %v3821 = vunpack.c.l.s4 1966171168
  %v3822 = vunpack.c.0.s8 %v3821
  %v3823 = vlaneseq
  %v3824 = vshrl.u32 %v3823, 7
  %v3825 = vsub.s32 %v3822, %v3824
  %v3826 = vrot.slane %v3819, %v3825
  %v3828 = vunpack.c.l.s4 1966171168
  %v3829 = vunpack.c.0.s8 %v3828
  %v3830 = vlaneseq
  %v3831 = vshrl.u32 %v3830, 7
  %v3832 = vsub.s32 %v3829, %v3831
  %v3833 = vrot.slane %v3795, %v3832
  %v3835 = vunpack.c.l.s4 1966171168
  %v3836 = vunpack.c.0.s8 %v3835
  %v3837 = vlaneseq
  %v3838 = vshrl.u32 %v3837, 7
  %v3839 = vsub.s32 %v3836, %v3838
  %v3840 = vrot.slane %v3833, %v3839
  %v3842 = vunpack.c.l.s4 1966171168
  %v3843 = vunpack.c.0.s8 %v3842
  %v3844 = vlaneseq
  %v3845 = vshrl.u32 %v3844, 7
  %v3846 = vsub.s32 %v3843, %v3845
  %v3847 = vrot.slane %v3796, %v3846
  %v3849 = vunpack.c.l.s4 1966171168
  %v3850 = vunpack.c.0.s8 %v3849
  %v3851 = vlaneseq
  %v3852 = vshrl.u32 %v3851, 7
  %v3853 = vsub.s32 %v3850, %v3852
  %v3854 = vrot.slane %v3847, %v3853
  %v3856 = vunpack.c.l.s4 1966171168
  %v3857 = vunpack.c.0.s8 %v3856
  %v3858 = vlaneseq
  %v3859 = vshrl.u32 %v3858, 7
  %v3860 = vsub.s32 %v3857, %v3859
  %v3861 = vrot.slane %v3797, %v3860
  %v3863 = vunpack.c.l.s4 1966171168
  %v3864 = vunpack.c.0.s8 %v3863
  %v3865 = vlaneseq
  %v3866 = vshrl.u32 %v3865, 7
  %v3867 = vsub.s32 %v3864, %v3866
  %v3868 = vrot.slane %v3861, %v3867
  %v3870 = vunpack.c.l.s4 1966171168
  %v3871 = vunpack.c.0.s8 %v3870
  %v3872 = vlaneseq
  %v3873 = vshrl.u32 %v3872, 7
  %v3874 = vsub.s32 %v3871, %v3873
  %v3875 = vrot.slane %v3798, %v3874
  %v3877 = vunpack.c.l.s4 1966171168
  %v3878 = vunpack.c.0.s8 %v3877
  %v3879 = vlaneseq
  %v3880 = vshrl.u32 %v3879, 7
  %v3881 = vsub.s32 %v3878, %v3880
  %v3882 = vrot.slane %v3875, %v3881
  %v3884 = vunpack.c.l.s4 1966171168
  %v3885 = vunpack.c.0.s8 %v3884
  %v3886 = vlaneseq
  %v3887 = vshrl.u32 %v3886, 7
  %v3888 = vsub.s32 %v3885, %v3887
  %v3889 = vrot.slane %v3799, %v3888
  %v3891 = vunpack.c.l.s4 1966171168
  %v3892 = vunpack.c.0.s8 %v3891
  %v3893 = vlaneseq
  %v3894 = vshrl.u32 %v3893, 7
  %v3895 = vsub.s32 %v3892, %v3894
  %v3896 = vrot.slane %v3889, %v3895
  %v3898 = vshrl.u32 %v3826, 16
  %v3900 = vrot.slane %v3898, 7
  %v3901 = vrot.slane %v3900, 1
  %v3903 = vshrl.u32 %v3840, 16
  %v3905 = vrot.slane %v3903, 7
  %v3906 = vrot.slane %v3905, 1
  %v3908 = vshrl.u32 %v3854, 16
  %v3910 = vrot.slane %v3908, 7
  %v3911 = vrot.slane %v3910, 1
  %v3913 = vshrl.u32 %v3868, 16
  %v3915 = vrot.slane %v3913, 7
  %v3916 = vrot.slane %v3915, 1
  %v3918 = vshrl.u32 %v3882, 16
  %v3920 = vrot.slane %v3918, 7
  %v3921 = vrot.slane %v3920, 1
  %v3923 = vshrl.u32 %v3896, 16
  %v3925 = vrot.slane %v3923, 7
  %v3926 = vrot.slane %v3925, 1
  %vm3933 = vcmask 516096
  %vm3934 = vsmask.f32 256
  %vm3935 = vmand %vm3933, %vm3934
  %v3936 = vld [vmem:[%s16] sm:$0x1]
  %v3937 = vsel %vm3935, %v3901, %v3936
  %3938 = vst [vmem:[%s16] sm:$0x1] %v3937
  %v3939 = vld [vmem:[%s16 + $0x1] sm:$0x1]
  %v3940 = vsel %vm3935, %v3906, %v3939
  %3941 = vst [vmem:[%s16 + $0x1] sm:$0x1] %v3940
  %v3942 = vld [vmem:[%s16 + $0x2] sm:$0x1]
  %v3943 = vsel %vm3935, %v3911, %v3942
  %3944 = vst [vmem:[%s16 + $0x2] sm:$0x1] %v3943
  %v3945 = vld [vmem:[%s16 + $0x3] sm:$0x1]
  %v3946 = vsel %vm3935, %v3916, %v3945
  %3947 = vst [vmem:[%s16 + $0x3] sm:$0x1] %v3946
  %v3948 = vld [vmem:[%s16 + $0x4] sm:$0x1]
  %v3949 = vsel %vm3935, %v3921, %v3948
  %3950 = vst [vmem:[%s16 + $0x4] sm:$0x1] %v3949
  %v3951 = vld [vmem:[%s16 + $0x5] sm:$0x1]
  %v3952 = vsel %vm3935, %v3926, %v3951
  %3953 = vst [vmem:[%s16 + $0x5] sm:$0x1] %v3952
  // Predicated region
  $region62: #{_lambda_.6} parent=0 // pred_check
    _
  $region63: #{_lambda_.6} parent=0 // pred_check_branch
    %3955 = sbr.rel (0) target = $region65
  $region64: #{_lambda_.6} parent=0 // pred_region
    _
  $region65: #{_lambda_.6} parent=0 // pred_fallthru
    _
  // Predicated region
  $region66: #{_lambda_.6} parent=0 // pred_check
    _
  $region67: #{_lambda_.6} parent=0 // pred_check_branch
    %3957 = sbr.rel (0) target = $region69
  $region68: #{_lambda_.6} parent=0 // pred_region
    _
  $region69: #{_lambda_.6} parent=0 // pred_fallthru
    _
  // Predicated region
  $region70: #{_lambda_.6} parent=0 // pred_check
    _
  $region71: #{_lambda_.6} parent=0 // pred_check_branch
    %3959 = sbr.rel (0) target = $region73
  $region72: #{_lambda_.6} parent=0 // pred_region
    _
  $region73: #{_lambda_.6} parent=0 // pred_fallthru
    _
  // Predicated region
  $region74: #{_lambda_.6} parent=0 // pred_check
    _
  $region75: #{_lambda_.6} parent=0 // pred_check_branch
    %3961 = sbr.rel (0) target = $region77
  $region76: #{_lambda_.6} parent=0 // pred_region
    _
  $region77: #{_lambda_.6} parent=0 // pred_fallthru
    _

</llo_original>
